<compile_context>
chip_gen: v6e
topology: v6e:2x2x1
jax: 0.10.0
libtpu: 0.0.40
codegen_flags: <defaults>
</compile_context>

<pallas_src>
import functools

import jax
import jax.numpy as jnp
from jax.experimental import pallas as pl
from jax.experimental.pallas import tpu as pltpu


def _round_up(x, m):
    return (x + m - 1) // m * m


# ----------------------------------------------------------------------------
# Tiled matmul kernel (MXU) with fused bias + optional relu/tanh epilogue
# ----------------------------------------------------------------------------
def _matmul_kernel(x_ref, w_ref, b_ref, o_ref, acc_ref, *, act):
    k = pl.program_id(2)

    @pl.when(k == 0)
    def _init():
        acc_ref[...] = jnp.zeros_like(acc_ref)

    acc_ref[...] += jnp.dot(x_ref[...], w_ref[...],
                            preferred_element_type=jnp.float32)

    @pl.when(k == pl.num_programs(2) - 1)
    def _finalize():
        out = acc_ref[...] + b_ref[...]          # bias only once, at the end
        if act == "relu":
            out = jnp.maximum(out, 0.0)
        elif act == "tanh":
            out = jnp.tanh(out)
        o_ref[...] = out.astype(o_ref.dtype)


def matmul_bias_act(x, w, b=None, act="none"):
    """x: (M, K), w: (K, N), b: (N,) or None -> (M, N) f32.

    Inputs are cast to bf16 for the MXU; K and N are zero-padded to multiples
    of 128, M to a multiple of 16 (bf16 sublane packing).
    """
    M, K = x.shape
    _, N = w.shape

    tm = min(512, _round_up(M, 16))
    tk = min(1024, _round_up(K, 128))
    tn = min(512, _round_up(N, 128))
    Mp = _round_up(M, tm)
    Kp = _round_up(K, tk)
    Np = _round_up(N, tn)

    xb = jnp.pad(x.astype(jnp.bfloat16), ((0, Mp - M), (0, Kp - K)))
    wb = jnp.pad(w.astype(jnp.bfloat16), ((0, Kp - K), (0, Np - N)))
    if b is None:
        bb = jnp.zeros((1, Np), jnp.float32)
    else:
        bb = jnp.pad(b.astype(jnp.float32), (0, Np - N)).reshape(1, Np)

    grid = (Mp // tm, Np // tn, Kp // tk)

    out = pl.pallas_call(
        functools.partial(_matmul_kernel, act=act),
        out_shape=jax.ShapeDtypeStruct((Mp, Np), jnp.float32),
        grid=grid,
        in_specs=[
            pl.BlockSpec((tm, tk), lambda i, j, k: (i, k)),
            pl.BlockSpec((tk, tn), lambda i, j, k: (k, j)),
            pl.BlockSpec((1, tn), lambda i, j, k: (0, j)),
        ],
        out_specs=pl.BlockSpec((tm, tn), lambda i, j, k: (i, j)),
        scratch_shapes=[pltpu.VMEM((tm, tn), jnp.float32)],
        compiler_params=pltpu.CompilerParams(
            dimension_semantics=("parallel", "parallel", "arbitrary"),
            vmem_limit_bytes=48 * 1024 * 1024,
        ),
        cost_estimate=pl.CostEstimate(
            flops=2 * Mp * Kp * Np,
            transcendentals=Mp * Np if act == "tanh" else 0,
            bytes_accessed=2 * (Mp * Kp + Kp * Np) + 4 * Mp * Np,
        ),
    )(xb, wb, bb)
    return out[:M, :N]


# ----------------------------------------------------------------------------
# Fused depthwise 3x3 (bias) + InstanceNorm(affine=False) kernel
# ----------------------------------------------------------------------------
def _dw3x3_in_kernel(x_ref, w_ref, b_ref, o_ref, *, eps):
    # x_ref: (1, H+2, W+2, C), w_ref: (3, 3, C), b_ref: (1, C)
    H = o_ref.shape[1]
    W = o_ref.shape[2]
    xp = x_ref[0]
    acc = xp[0:H, 0:W, :] * w_ref[0, 0, :]
    for dh in range(3):
        for dw in range(3):
            if dh == 0 and dw == 0:
                continue
            acc = acc + xp[dh:dh + H, dw:dw + W, :] * w_ref[dh, dw, :]
    acc = acc + b_ref[0]
    mean = jnp.mean(acc, axis=(0, 1), keepdims=True)
    centered = acc - mean
    var = jnp.mean(centered * centered, axis=(0, 1), keepdims=True)  # biased (PyTorch)
    o_ref[0] = (centered * jax.lax.rsqrt(var + eps)).astype(o_ref.dtype)


def dw3x3_instnorm(x, w, b, eps=1e-5):
    """Depthwise 3x3 (pad=1, stride=1, bias) + InstanceNorm(affine=False)."""
    N, H, W, C = x.shape
    xp = jnp.pad(x.astype(jnp.float32), ((0, 0), (1, 1), (1, 1), (0, 0)))
    return pl.pallas_call(
        functools.partial(_dw3x3_in_kernel, eps=eps),
        out_shape=jax.ShapeDtypeStruct((N, H, W, C), jnp.float32),
        grid=(N,),
        in_specs=[
            pl.BlockSpec((1, H + 2, W + 2, C), lambda n: (n, 0, 0, 0)),
            pl.BlockSpec((3, 3, C), lambda n: (0, 0, 0)),
            pl.BlockSpec((1, C), lambda n: (0, 0)),
        ],
        out_specs=pl.BlockSpec((1, H, W, C), lambda n: (n, 0, 0, 0)),
        compiler_params=pltpu.CompilerParams(dimension_semantics=("parallel",)),
    )(xp, w.astype(jnp.float32), b.reshape(1, C).astype(jnp.float32))


# ----------------------------------------------------------------------------
# Affine InstanceNorm kernels (+optional fused ReLU or fused residual add)
# ----------------------------------------------------------------------------
def _instnorm_kernel(x_ref, g_ref, b_ref, o_ref, *, eps, relu):
    x = x_ref[0].astype(jnp.float32)
    mean = jnp.mean(x, axis=(0, 1), keepdims=True)
    centered = x - mean
    var = jnp.mean(centered * centered, axis=(0, 1), keepdims=True)
    y = centered * jax.lax.rsqrt(var + eps)
    y = y * g_ref[0] + b_ref[0]
    if relu:
        y = jnp.maximum(y, 0.0)
    o_ref[0] = y.astype(o_ref.dtype)


def _instnorm_res_kernel(x_ref, r_ref, g_ref, b_ref, o_ref, *, eps):
    x = x_ref[0].astype(jnp.float32)
    mean = jnp.mean(x, axis=(0, 1), keepdims=True)
    centered = x - mean
    var = jnp.mean(centered * centered, axis=(0, 1), keepdims=True)
    y = centered * jax.lax.rsqrt(var + eps)
    y = y * g_ref[0] + b_ref[0]
    o_ref[0] = (r_ref[0].astype(jnp.float32) + y).astype(o_ref.dtype)


def instance_norm(x, gamma=None, beta=None, relu=False, residual=None, eps=1e-5):
    """Per-(n, c) normalization over H, W. Optionally fuses ReLU or a residual add."""
    N, H, W, C = x.shape
    g = (gamma if gamma is not None else jnp.ones((C,), jnp.float32))
    b = (beta if beta is not None else jnp.zeros((C,), jnp.float32))
    g = g.reshape(1, C).astype(jnp.float32)
    b = b.reshape(1, C).astype(jnp.float32)

    img_spec = pl.BlockSpec((1, H, W, C), lambda n: (n, 0, 0, 0))
    vec_spec = pl.BlockSpec((1, C), lambda n: (0, 0))
    common = dict(
        out_shape=jax.ShapeDtypeStruct((N, H, W, C), jnp.float32),
        grid=(N,),
        out_specs=pl.BlockSpec((1, H, W, C), lambda n: (n, 0, 0, 0)),
        compiler_params=pltpu.CompilerParams(dimension_semantics=("parallel",)),
    )
    if residual is None:
        return pl.pallas_call(
            functools.partial(_instnorm_kernel, eps=eps, relu=relu),
            in_specs=[img_spec, vec_spec, vec_spec],
            **common,
        )(x.astype(jnp.float32), g, b)
    return pl.pallas_call(
        functools.partial(_instnorm_res_kernel, eps=eps),
        in_specs=[img_spec, img_spec, vec_spec, vec_spec],
        **common,
    )(x.astype(jnp.float32), residual.astype(jnp.float32), g, b)


# ----------------------------------------------------------------------------
# Conv helpers (bf16 im2col glue in JAX; tiled Pallas matmul hot-path)
# ----------------------------------------------------------------------------
def conv2d(x, w, b=None, stride=1, padding=0, act="none"):
    """x: (N,H,W,Cin) NHWC; w: PyTorch layout (Cout, Cin, Kh, Kw)."""
    N, H, W, Cin = x.shape
    Cout, _, Kh, Kw = w.shape
    xb = x.astype(jnp.bfloat16)
    xp = jnp.pad(xb, ((0, 0), (padding, padding), (padding, padding), (0, 0)))
    Hout = (H + 2 * padding - Kh) // stride + 1
    Wout = (W + 2 * padding - Kw) // stride + 1
    cols = []
    for dh in range(Kh):
        for dw in range(Kw):
            cols.append(
                xp[:, dh:dh + (Hout - 1) * stride + 1:stride,
                      dw:dw + (Wout - 1) * stride + 1:stride, :]
            )
    patches = jnp.stack(cols, axis=3)  # (N, Hout, Wout, Kh*Kw, Cin) bf16
    patches = patches.reshape(N * Hout * Wout, Kh * Kw * Cin)
    wmat = jnp.transpose(w, (2, 3, 1, 0)).reshape(Kh * Kw * Cin, Cout)
    wmat = wmat.astype(jnp.bfloat16)
    out = matmul_bias_act(patches, wmat, b, act=act)
    return out.reshape(N, Hout, Wout, Cout)


def conv_transpose2d(x, w, stride=2, padding=1):
    """ConvTranspose2d(k=4, s=2, p=1) via subpixel decomposition: four 2x2
    stride-1 phase convolutions whose outputs interleave into the 2x output.

    x: (N,H,W,Cin); w: PyTorch ConvTranspose2d layout (Cin, Cout, 4, 4).
    """
    N, H, W, Cin = x.shape
    _, Cout, Kh, Kw = w.shape
    assert stride == 2 and padding == 1 and Kh == 4 and Kw == 4
    xp = jnp.pad(x, ((0, 0), (1, 1), (1, 1), (0, 0)))
    phases = []
    for a in range(2):
        for b_ in range(2):
            # Output phase (a,b): out[2m+a, 2p+b] = sum_{t,s} xp[m+a+t, p+b+s] *
            #                                       w[:, :, 3-a-2t, 3-b-2s]
            w_sub = w[:, :, (3 - a)::-2, (3 - b_)::-2]        # (Cin, Cout, 2, 2)
            w_ph = jnp.transpose(w_sub, (1, 0, 2, 3))          # (Cout, Cin, 2, 2)
            x_sl = xp[:, a:a + H + 1, b_:b_ + W + 1, :]        # (N, H+1, W+1, Cin)
            phases.append(conv2d(x_sl, w_ph, b=None, stride=1, padding=0))
    ph = jnp.stack(phases, axis=0).reshape(2, 2, N, H, W, Cout)  # [a, b, n, i, j, c]
    out = jnp.transpose(ph, (2, 3, 0, 4, 1, 5)).reshape(N, 2 * H, 2 * W, Cout)
    return out


# ----------------------------------------------------------------------------
# Network building blocks
# ----------------------------------------------------------------------------
def residual_block(x, rb):
    # SeparableConv2d = depthwise(bias) -> IN(affine=False) -> 1x1 conv(bias)
    h = dw3x3_instnorm(x, rb["sep1"]["dw_w"], rb["sep1"]["dw_b"])
    h = conv2d(h, rb["sep1"]["pw_w"], b=rb["sep1"]["pw_b"], stride=1, padding=0)
    h = instance_norm(h, rb["in1_g"], rb["in1_b"], relu=True)
    h = dw3x3_instnorm(h, rb["sep2"]["dw_w"], rb["sep2"]["dw_b"])
    h = conv2d(h, rb["sep2"]["pw_w"], b=rb["sep2"]["pw_b"], stride=1, padding=0)
    # trailing affine IN with the residual add fused into the same kernel
    return instance_norm(h, rb["in2_g"], rb["in2_b"], relu=False, residual=x)


# ----------------------------------------------------------------------------
# Parameter init (deterministic, synthetic)
# ----------------------------------------------------------------------------
def make_params(conv_dim=8, repeat_num=2, input_nc=3, key=jax.random.PRNGKey(42)):
    keys = iter(jax.random.split(key, 4096))

    def conv_w(cout, cin, kh, kw):
        return 0.05 * jax.random.normal(next(keys), (cout, cin, kh, kw), jnp.float32)

    def convT_w(cin, cout, kh, kw):
        return 0.05 * jax.random.normal(next(keys), (cin, cout, kh, kw), jnp.float32)

    def dw_w(c):
        return 0.1 * jax.random.normal(next(keys), (3, 3, c), jnp.float32)

    def bias(c):
        return 0.05 * jax.random.normal(next(keys), (c,), jnp.float32)

    def gamma(c):
        return 1.0 + 0.1 * jax.random.normal(next(keys), (c,), jnp.float32)

    def beta(c):
        return 0.1 * jax.random.normal(next(keys), (c,), jnp.float32)

    p = {}
    for bname in ("Branch_0", "Branch_1"):
        p[bname] = {
            "c1_w": conv_w(conv_dim, input_nc, 7, 7),
            "in1_g": gamma(conv_dim), "in1_b": beta(conv_dim),
            "c2_w": conv_w(conv_dim * 2, conv_dim, 4, 4),
            "in2_g": gamma(conv_dim * 2), "in2_b": beta(conv_dim * 2),
        }

    cdim = conv_dim * 2
    main = {
        "c0_w": conv_w(cdim * 2, cdim * 2, 4, 4),
        "in0_g": gamma(cdim * 2), "in0_b": beta(cdim * 2),
    }
    cdim *= 2
    res = []
    for _ in range(repeat_num):
        rb = {}
        for s in ("sep1", "sep2"):
            rb[s] = {
                "dw_w": dw_w(cdim), "dw_b": bias(cdim),
                "pw_w": conv_w(cdim, cdim, 1, 1), "pw_b": bias(cdim),
            }
        rb["in1_g"], rb["in1_b"] = gamma(cdim), beta(cdim)
        rb["in2_g"], rb["in2_b"] = gamma(cdim), beta(cdim)
        res.append(rb)
    main["res"] = res
    ups = []
    for _ in range(2):
        ups.append({"w": convT_w(cdim, cdim // 2, 4, 4),
                    "g": gamma(cdim // 2), "b": beta(cdim // 2)})
        cdim //= 2
    main["ups"] = ups
    p["main"] = main

    for bname in ("branch_1", "branch_2"):
        p[bname] = {
            "c1_w": conv_w(cdim, cdim, 3, 3), "in1_g": gamma(cdim), "in1_b": beta(cdim),
            "c2_w": conv_w(cdim, cdim, 3, 3), "in2_g": gamma(cdim), "in2_b": beta(cdim),
            "c3_w": conv_w(3, cdim, 7, 7),
        }
    return p


# ----------------------------------------------------------------------------
# Generator forward (matches PyTorch `generator.forward(x, y)`)
# ----------------------------------------------------------------------------
def generator_forward(params, x_nchw, y_nchw):
    x = jnp.transpose(x_nchw, (0, 2, 3, 1)).astype(jnp.float32)  # NCHW -> NHWC
    y = jnp.transpose(y_nchw, (0, 2, 3, 1)).astype(jnp.float32)

    def encoder(inp, bp):
        h = conv2d(inp, bp["c1_w"], b=None, stride=1, padding=3)
        h = instance_norm(h, bp["in1_g"], bp["in1_b"], relu=True)
        h = conv2d(h, bp["c2_w"], b=None, stride=2, padding=1)
        h = instance_norm(h, bp["in2_g"], bp["in2_b"], relu=True)
        return h

    input_x = encoder(x, params["Branch_0"])
    input_y = encoder(y, params["Branch_1"])
    # torch.cat((x, y), dim=1) in NCHW == channel (last-axis) concat in NHWC
    fuse = jnp.concatenate([input_x, input_y], axis=-1)

    m = params["main"]
    h = conv2d(fuse, m["c0_w"], b=None, stride=2, padding=1)
    h = instance_norm(h, m["in0_g"], m["in0_b"], relu=True)
    for rb in m["res"]:
        h = residual_block(h, rb)
    for up in m["ups"]:
        h = conv_transpose2d(h, up["w"], stride=2, padding=1)
        h = instance_norm(h, up["g"], up["b"], relu=True)

    # ---- fused output branches (A and B) --------------------------------
    # Independence of the two branches is preserved with concatenated /
    # block-diagonal weights; InstanceNorm and ReLU are per-channel so the
    # concatenated parameterization is exact.
    pA, pB = params["branch_1"], params["branch_2"]
    cd = pA["c1_w"].shape[0]

    c1_w = jnp.concatenate([pA["c1_w"], pB["c1_w"]], axis=0)          # (2cd, cd, 3, 3)
    g1 = jnp.concatenate([pA["in1_g"], pB["in1_g"]])
    b1 = jnp.concatenate([pA["in1_b"], pB["in1_b"]])

    c2_w = jnp.zeros((2 * cd, 2 * cd, 3, 3), jnp.float32)
    c2_w = c2_w.at[:cd, :cd].set(pA["c2_w"]).at[cd:, cd:].set(pB["c2_w"])
    g2 = jnp.concatenate([pA["in2_g"], pB["in2_g"]])
    b2 = jnp.concatenate([pA["in2_b"], pB["in2_b"]])

    c3_w = jnp.zeros((6, 2 * cd, 7, 7), jnp.float32)
    c3_w = c3_w.at[:3, :cd].set(pA["c3_w"]).at[3:, cd:].set(pB["c3_w"])

    t = conv2d(h, c1_w, b=None, stride=1, padding=1)
    t = instance_norm(t, g1, b1, relu=True)
    t = conv2d(t, c2_w, b=None, stride=1, padding=1)
    t = instance_norm(t, g2, b2, relu=True)
    t = conv2d(t, c3_w, b=None, stride=1, padding=3, act="tanh")

    out_A, out_B = t[..., :3], t[..., 3:]
    # NHWC -> NCHW
    return jnp.transpose(out_A, (0, 3, 1, 2)), jnp.transpose(out_B, (0, 3, 1, 2))


# ----------------------------------------------------------------------------
# Demo
# ----------------------------------------------------------------------------
if __name__ == "__main__":
    # Small config consistent with the module: conv_dim=8, repeat_num=2, input_nc=3
    B, C_IN, H, W = 2, 3, 16, 16
    params = make_params(conv_dim=8, repeat_num=2, input_nc=3)

    key = jax.random.PRNGKey(0)
    kx, ky = jax.random.split(key)
    x = jax.random.normal(kx, (B, C_IN, H, W), jnp.float32)
    y = jax.random.normal(ky, (B, C_IN, H, W), jnp.float32)

    fwd = jax.jit(generator_forward)
    out_A, out_B = fwd(params, x, y)
    out_A = jax.block_until_ready(out_A)
    out_B = jax.block_until_ready(out_B)

    assert out_A.shape == (B, 3, H, W), out_A.shape
    assert out_B.shape == (B, 3, H, W), out_B.shape
    assert bool(jnp.all(jnp.isfinite(out_A))) and bool(jnp.all(jnp.isfinite(out_B)))
    # tanh output range sanity
    assert float(jnp.max(jnp.abs(out_A))) <= 1.0 + 1e-5
    print("KERNEL_OK")
</pallas_src>

<mosaic_0001>
module attributes {stable_mosaic.version = 11 : i64} {
  func.func @_instnorm_kernel(%arg0: i32, %arg1: memref<1x16x16x8xf32, #tpu.memory_space<vmem>>, %arg2: memref<1x8xf32, #tpu.memory_space<vmem>>, %arg3: memref<1x8xf32, #tpu.memory_space<vmem>>, %arg4: memref<1x16x16x8xf32, #tpu.memory_space<vmem>>) attributes {dimension_semantics = [#tpu.dimension_semantics<parallel>], iteration_bounds = array<i64: 2>, scalar_prefetch = 0 : i64, scratch_operands = 0 : i64, tpu.core_type = #tpu.core_type<tc>, window_params = [{transform_indices = @transform_0, window_bounds = array<i64: 1, 16, 16, 8>}, {pipeline_mode = #tpu.pipeline_mode<synchronous>, transform_indices = @transform_1, window_bounds = array<i64: 1, 8>}, {pipeline_mode = #tpu.pipeline_mode<synchronous>, transform_indices = @transform_2, window_bounds = array<i64: 1, 8>}, {transform_indices = @transform_3, window_bounds = array<i64: 1, 16, 16, 8>}]} {
    %c0 = arith.constant 0 : index
    %c0_0 = arith.constant 0 : index
    %c0_1 = arith.constant 0 : index
    %c0_2 = arith.constant 0 : index
    %0 = vector.load %arg1[%c0, %c0_0, %c0_1, %c0_2] : memref<1x16x16x8xf32, #tpu.memory_space<vmem>>, vector<1x16x16x8xf32>
    %1 = vector.shape_cast %0 : vector<1x16x16x8xf32> to vector<16x16x8xf32>
    %cst = arith.constant dense<0.000000e+00> : vector<8xf32>
    %2 = vector.multi_reduction <add>, %1, %cst [0, 1] : vector<16x16x8xf32> to vector<8xf32>
    %3 = vector.shape_cast %2 : vector<8xf32> to vector<1x1x8xf32>
    %cst_3 = arith.constant 2.560000e+02 : f32
    %4 = vector.broadcast %cst_3 : f32 to vector<1x1x8xf32>
    %5 = arith.divf %3, %4 : vector<1x1x8xf32>
    %6 = vector.broadcast %5 : vector<1x1x8xf32> to vector<16x16x8xf32>
    %7 = arith.subf %1, %6 : vector<16x16x8xf32>
    %8 = arith.mulf %7, %7 : vector<16x16x8xf32>
    %cst_4 = arith.constant dense<0.000000e+00> : vector<8xf32>
    %9 = vector.multi_reduction <add>, %8, %cst_4 [0, 1] : vector<16x16x8xf32> to vector<8xf32>
    %10 = vector.shape_cast %9 : vector<8xf32> to vector<1x1x8xf32>
    %cst_5 = arith.constant 2.560000e+02 : f32
    %11 = vector.broadcast %cst_5 : f32 to vector<1x1x8xf32>
    %12 = arith.divf %10, %11 : vector<1x1x8xf32>
    %cst_6 = arith.constant 9.99999974E-6 : f32
    %13 = vector.broadcast %cst_6 : f32 to vector<1x1x8xf32>
    %14 = arith.addf %12, %13 : vector<1x1x8xf32>
    %15 = math.rsqrt %14 : vector<1x1x8xf32>
    %16 = vector.broadcast %15 : vector<1x1x8xf32> to vector<16x16x8xf32>
    %17 = arith.mulf %7, %16 : vector<16x16x8xf32>
    %c0_7 = arith.constant 0 : index
    %c0_8 = arith.constant 0 : index
    %18 = vector.load %arg2[%c0_7, %c0_8] : memref<1x8xf32, #tpu.memory_space<vmem>>, vector<1x8xf32>
    %19 = vector.shape_cast %18 : vector<1x8xf32> to vector<8xf32>
    %20 = vector.shape_cast %19 : vector<8xf32> to vector<1x1x8xf32>
    %21 = vector.broadcast %20 : vector<1x1x8xf32> to vector<16x16x8xf32>
    %22 = arith.mulf %17, %21 : vector<16x16x8xf32>
    %c0_9 = arith.constant 0 : index
    %c0_10 = arith.constant 0 : index
    %23 = vector.load %arg3[%c0_9, %c0_10] : memref<1x8xf32, #tpu.memory_space<vmem>>, vector<1x8xf32>
    %24 = vector.shape_cast %23 : vector<1x8xf32> to vector<8xf32>
    %25 = vector.shape_cast %24 : vector<8xf32> to vector<1x1x8xf32>
    %26 = vector.broadcast %25 : vector<1x1x8xf32> to vector<16x16x8xf32>
    %27 = arith.addf %22, %26 : vector<16x16x8xf32>
    %cst_11 = arith.constant 0.000000e+00 : f32
    %28 = vector.broadcast %cst_11 : f32 to vector<16x16x8xf32>
    %29 = arith.maximumf %27, %28 : vector<16x16x8xf32>
    %c0_12 = arith.constant 0 : index
    %c0_13 = arith.constant 0 : index
    %c0_14 = arith.constant 0 : index
    %c0_15 = arith.constant 0 : index
    %30 = vector.load %arg4[%c0_12, %c0_13, %c0_14, %c0_15] : memref<1x16x16x8xf32, #tpu.memory_space<vmem>>, vector<1x16x16x8xf32>
    %31 = vector.shape_cast %30 : vector<1x16x16x8xf32> to vector<16x16x8xf32>
    %32 = vector.shape_cast %29 : vector<16x16x8xf32> to vector<1x16x16x8xf32>
    tpu.vector_store %arg4[%c0_12, %c0_13, %c0_14, %c0_15], %32 {strides = array<i32>} : memref<1x16x16x8xf32, #tpu.memory_space<vmem>>, vector<1x16x16x8xf32>,
    return
  }
  func.func @transform_0(%arg0: i32) -> (i32, i32, i32, i32) {
    %c0_i32 = arith.constant 0 : i32
    %c0_i32_0 = arith.constant 0 : i32
    %c0_i32_1 = arith.constant 0 : i32
    %c0_i32_2 = arith.constant 0 : i32
    return %arg0, %c0_i32, %c0_i32_0, %c0_i32_1 : i32, i32, i32, i32
  }
  func.func @transform_1(%arg0: i32) -> (i32, i32) {
    %c0_i32 = arith.constant 0 : i32
    %c0_i32_0 = arith.constant 0 : i32
    %c0_i32_1 = arith.constant 0 : i32
    return %c0_i32, %c0_i32_0 : i32, i32
  }
  func.func @transform_2(%arg0: i32) -> (i32, i32) {
    %c0_i32 = arith.constant 0 : i32
    %c0_i32_0 = arith.constant 0 : i32
    %c0_i32_1 = arith.constant 0 : i32
    return %c0_i32, %c0_i32_0 : i32, i32
  }
  func.func @transform_3(%arg0: i32) -> (i32, i32, i32, i32) {
    %c0_i32 = arith.constant 0 : i32
    %c0_i32_0 = arith.constant 0 : i32
    %c0_i32_1 = arith.constant 0 : i32
    %c0_i32_2 = arith.constant 0 : i32
    return %arg0, %c0_i32, %c0_i32_0, %c0_i32_1 : i32, i32, i32, i32
  }
}

module attributes {stable_mosaic.version = 11 : i64} {
  func.func @_matmul_kernel(%arg0: i32, %arg1: i32, %arg2: i32, %arg3: memref<512x256xbf16, #tpu.memory_space<vmem>>, %arg4: memref<256x128xbf16, #tpu.memory_space<vmem>>, %arg5: memref<1x128xf32, #tpu.memory_space<vmem>>, %arg6: memref<512x128xf32, #tpu.memory_space<vmem>>, %arg7: memref<512x128xf32, #tpu.memory_space<vmem>>) attributes {dimension_semantics = [#tpu.dimension_semantics<parallel>, #tpu.dimension_semantics<parallel>, #tpu.dimension_semantics<arbitrary>], iteration_bounds = array<i64: 1, 1, 1>, scalar_prefetch = 0 : i64, scratch_operands = 1 : i64, tpu.core_type = #tpu.core_type<tc>, window_params = [{transform_indices = @transform_0, window_bounds = array<i64: 512, 256>}, {transform_indices = @transform_1, window_bounds = array<i64: 256, 128>}, {transform_indices = @transform_2, window_bounds = array<i64: 1, 128>}, {transform_indices = @transform_3, window_bounds = array<i64: 512, 128>}]} {
    %c0_i32 = arith.constant 0 : i32
    %0 = arith.cmpi eq, %arg2, %c0_i32 : i32
    %1 = arith.extui %0 : i1 to i32
    %c0_i32_0 = arith.constant 0 : i32
    %2 = arith.cmpi ne, %1, %c0_i32_0 : i32
    scf.if %2 {
      %cst_10 = arith.constant 0.000000e+00 : f32
      %12 = vector.broadcast %cst_10 : f32 to vector<512x128xf32>
      %c0_11 = arith.constant 0 : index
      %c0_12 = arith.constant 0 : index
      %13 = vector.load %arg7[%c0_11, %c0_12] : memref<512x128xf32, #tpu.memory_space<vmem>>, vector<512x128xf32>
      tpu.vector_store %arg7[%c0_11, %c0_12], %12 {strides = array<i32>} : memref<512x128xf32, #tpu.memory_space<vmem>>, vector<512x128xf32>,
    } else {
    }
    %c0 = arith.constant 0 : index
    %c0_1 = arith.constant 0 : index
    %3 = vector.load %arg7[%c0, %c0_1] : memref<512x128xf32, #tpu.memory_space<vmem>>, vector<512x128xf32>
    %c0_2 = arith.constant 0 : index
    %c0_3 = arith.constant 0 : index
    %4 = vector.load %arg3[%c0_2, %c0_3] : memref<512x256xbf16, #tpu.memory_space<vmem>>, vector<512x256xbf16>
    %c0_4 = arith.constant 0 : index
    %c0_5 = arith.constant 0 : index
    %5 = vector.load %arg4[%c0_4, %c0_5] : memref<256x128xbf16, #tpu.memory_space<vmem>>, vector<256x128xbf16>
    %cst = arith.constant dense<0.000000e+00> : vector<512x128xf32>
    %6 = tpu.matmul %4, %5, %cst {dimension_numbers = #tpu.dot_dimension_numbers<[1], [0], [0], [1], [0, 0, 1, 1], [], []>} : vector<512x256xbf16>, vector<256x128xbf16>, vector<512x128xf32> -> vector<512x128xf32>
    %7 = arith.addf %3, %6 : vector<512x128xf32>
    %c0_6 = arith.constant 0 : index
    %c0_7 = arith.constant 0 : index
    %8 = vector.load %arg7[%c0_6, %c0_7] : memref<512x128xf32, #tpu.memory_space<vmem>>, vector<512x128xf32>
    tpu.vector_store %arg7[%c0_6, %c0_7], %7 {strides = array<i32>} : memref<512x128xf32, #tpu.memory_space<vmem>>, vector<512x128xf32>,
    %c0_i32_8 = arith.constant 0 : i32
    %9 = arith.cmpi eq, %arg2, %c0_i32_8 : i32
    %10 = arith.extui %9 : i1 to i32
    %c0_i32_9 = arith.constant 0 : i32
    %11 = arith.cmpi ne, %10, %c0_i32_9 : i32
    scf.if %11 {
      %c0_10 = arith.constant 0 : index
      %c0_11 = arith.constant 0 : index
      %12 = vector.load %arg7[%c0_10, %c0_11] : memref<512x128xf32, #tpu.memory_space<vmem>>, vector<512x128xf32>
      %c0_12 = arith.constant 0 : index
      %c0_13 = arith.constant 0 : index
      %13 = vector.load %arg5[%c0_12, %c0_13] : memref<1x128xf32, #tpu.memory_space<vmem>>, vector<1x128xf32>
      %14 = vector.broadcast %13 : vector<1x128xf32> to vector<512x128xf32>
      %15 = arith.addf %12, %14 : vector<512x128xf32>
      %c0_14 = arith.constant 0 : index
      %c0_15 = arith.constant 0 : index
      %16 = vector.load %arg6[%c0_14, %c0_15] : memref<512x128xf32, #tpu.memory_space<vmem>>, vector<512x128xf32>
      tpu.vector_store %arg6[%c0_14, %c0_15], %15 {strides = array<i32>} : memref<512x128xf32, #tpu.memory_space<vmem>>, vector<512x128xf32>,
    } else {
    }
    return
  }
  func.func @transform_0(%arg0: i32, %arg1: i32, %arg2: i32) -> (i32, i32) {
    %c0_i32 = arith.constant 0 : i32
    return %arg0, %arg2 : i32, i32
  }
  func.func @transform_1(%arg0: i32, %arg1: i32, %arg2: i32) -> (i32, i32) {
    %c0_i32 = arith.constant 0 : i32
    return %arg2, %arg1 : i32, i32
  }
  func.func @transform_2(%arg0: i32, %arg1: i32, %arg2: i32) -> (i32, i32) {
    %c0_i32 = arith.constant 0 : i32
    %c0_i32_0 = arith.constant 0 : i32
    return %c0_i32, %arg1 : i32, i32
  }
  func.func @transform_3(%arg0: i32, %arg1: i32, %arg2: i32) -> (i32, i32) {
    %c0_i32 = arith.constant 0 : i32
    return %arg0, %arg1 : i32, i32
  }
}

module attributes {stable_mosaic.version = 11 : i64} {
  func.func @_matmul_kernel(%arg0: i32, %arg1: i32, %arg2: i32, %arg3: memref<128x128xbf16, #tpu.memory_space<vmem>>, %arg4: memref<128x128xbf16, #tpu.memory_space<vmem>>, %arg5: memref<1x128xf32, #tpu.memory_space<vmem>>, %arg6: memref<128x128xf32, #tpu.memory_space<vmem>>, %arg7: memref<128x128xf32, #tpu.memory_space<vmem>>) attributes {dimension_semantics = [#tpu.dimension_semantics<parallel>, #tpu.dimension_semantics<parallel>, #tpu.dimension_semantics<arbitrary>], iteration_bounds = array<i64: 1, 1, 1>, scalar_prefetch = 0 : i64, scratch_operands = 1 : i64, tpu.core_type = #tpu.core_type<tc>, window_params = [{transform_indices = @transform_0, window_bounds = array<i64: 128, 128>}, {transform_indices = @transform_1, window_bounds = array<i64: 128, 128>}, {transform_indices = @transform_2, window_bounds = array<i64: 1, 128>}, {transform_indices = @transform_3, window_bounds = array<i64: 128, 128>}]} {
    %c0_i32 = arith.constant 0 : i32
    %0 = arith.cmpi eq, %arg2, %c0_i32 : i32
    %1 = arith.extui %0 : i1 to i32
    %c0_i32_0 = arith.constant 0 : i32
    %2 = arith.cmpi ne, %1, %c0_i32_0 : i32
    scf.if %2 {
      %cst_10 = arith.constant 0.000000e+00 : f32
      %12 = vector.broadcast %cst_10 : f32 to vector<128x128xf32>
      %c0_11 = arith.constant 0 : index
      %c0_12 = arith.constant 0 : index
      %13 = vector.load %arg7[%c0_11, %c0_12] : memref<128x128xf32, #tpu.memory_space<vmem>>, vector<128x128xf32>
      tpu.vector_store %arg7[%c0_11, %c0_12], %12 {strides = array<i32>} : memref<128x128xf32, #tpu.memory_space<vmem>>, vector<128x128xf32>,
    } else {
    }
    %c0 = arith.constant 0 : index
    %c0_1 = arith.constant 0 : index
    %3 = vector.load %arg7[%c0, %c0_1] : memref<128x128xf32, #tpu.memory_space<vmem>>, vector<128x128xf32>
    %c0_2 = arith.constant 0 : index
    %c0_3 = arith.constant 0 : index
    %4 = vector.load %arg3[%c0_2, %c0_3] : memref<128x128xbf16, #tpu.memory_space<vmem>>, vector<128x128xbf16>
    %c0_4 = arith.constant 0 : index
    %c0_5 = arith.constant 0 : index
    %5 = vector.load %arg4[%c0_4, %c0_5] : memref<128x128xbf16, #tpu.memory_space<vmem>>, vector<128x128xbf16>
    %cst = arith.constant dense<0.000000e+00> : vector<128x128xf32>
    %6 = tpu.matmul %4, %5, %cst {dimension_numbers = #tpu.dot_dimension_numbers<[1], [0], [0], [1], [0, 0, 1, 1], [], []>} : vector<128x128xbf16>, vector<128x128xbf16>, vector<128x128xf32> -> vector<128x128xf32>
    %7 = arith.addf %3, %6 : vector<128x128xf32>
    %c0_6 = arith.constant 0 : index
    %c0_7 = arith.constant 0 : index
    %8 = vector.load %arg7[%c0_6, %c0_7] : memref<128x128xf32, #tpu.memory_space<vmem>>, vector<128x128xf32>
    tpu.vector_store %arg7[%c0_6, %c0_7], %7 {strides = array<i32>} : memref<128x128xf32, #tpu.memory_space<vmem>>, vector<128x128xf32>,
    %c0_i32_8 = arith.constant 0 : i32
    %9 = arith.cmpi eq, %arg2, %c0_i32_8 : i32
    %10 = arith.extui %9 : i1 to i32
    %c0_i32_9 = arith.constant 0 : i32
    %11 = arith.cmpi ne, %10, %c0_i32_9 : i32
    scf.if %11 {
      %c0_10 = arith.constant 0 : index
      %c0_11 = arith.constant 0 : index
      %12 = vector.load %arg7[%c0_10, %c0_11] : memref<128x128xf32, #tpu.memory_space<vmem>>, vector<128x128xf32>
      %c0_12 = arith.constant 0 : index
      %c0_13 = arith.constant 0 : index
      %13 = vector.load %arg5[%c0_12, %c0_13] : memref<1x128xf32, #tpu.memory_space<vmem>>, vector<1x128xf32>
      %14 = vector.broadcast %13 : vector<1x128xf32> to vector<128x128xf32>
      %15 = arith.addf %12, %14 : vector<128x128xf32>
      %c0_14 = arith.constant 0 : index
      %c0_15 = arith.constant 0 : index
      %16 = vector.load %arg6[%c0_14, %c0_15] : memref<128x128xf32, #tpu.memory_space<vmem>>, vector<128x128xf32>
      tpu.vector_store %arg6[%c0_14, %c0_15], %15 {strides = array<i32>} : memref<128x128xf32, #tpu.memory_space<vmem>>, vector<128x128xf32>,
    } else {
    }
    return
  }
  func.func @transform_0(%arg0: i32, %arg1: i32, %arg2: i32) -> (i32, i32) {
    %c0_i32 = arith.constant 0 : i32
    return %arg0, %arg2 : i32, i32
  }
  func.func @transform_1(%arg0: i32, %arg1: i32, %arg2: i32) -> (i32, i32) {
    %c0_i32 = arith.constant 0 : i32
    return %arg2, %arg1 : i32, i32
  }
  func.func @transform_2(%arg0: i32, %arg1: i32, %arg2: i32) -> (i32, i32) {
    %c0_i32 = arith.constant 0 : i32
    %c0_i32_0 = arith.constant 0 : i32
    return %c0_i32, %arg1 : i32, i32
  }
  func.func @transform_3(%arg0: i32, %arg1: i32, %arg2: i32) -> (i32, i32) {
    %c0_i32 = arith.constant 0 : i32
    return %arg0, %arg1 : i32, i32
  }
}

module attributes {stable_mosaic.version = 11 : i64} {
  func.func @_instnorm_kernel(%arg0: i32, %arg1: memref<1x8x8x16xf32, #tpu.memory_space<vmem>>, %arg2: memref<1x16xf32, #tpu.memory_space<vmem>>, %arg3: memref<1x16xf32, #tpu.memory_space<vmem>>, %arg4: memref<1x8x8x16xf32, #tpu.memory_space<vmem>>) attributes {dimension_semantics = [#tpu.dimension_semantics<parallel>], iteration_bounds = array<i64: 2>, scalar_prefetch = 0 : i64, scratch_operands = 0 : i64, tpu.core_type = #tpu.core_type<tc>, window_params = [{transform_indices = @transform_0, window_bounds = array<i64: 1, 8, 8, 16>}, {pipeline_mode = #tpu.pipeline_mode<synchronous>, transform_indices = @transform_1, window_bounds = array<i64: 1, 16>}, {pipeline_mode = #tpu.pipeline_mode<synchronous>, transform_indices = @transform_2, window_bounds = array<i64: 1, 16>}, {transform_indices = @transform_3, window_bounds = array<i64: 1, 8, 8, 16>}]} {
    %c0 = arith.constant 0 : index
    %c0_0 = arith.constant 0 : index
    %c0_1 = arith.constant 0 : index
    %c0_2 = arith.constant 0 : index
    %0 = vector.load %arg1[%c0, %c0_0, %c0_1, %c0_2] : memref<1x8x8x16xf32, #tpu.memory_space<vmem>>, vector<1x8x8x16xf32>
    %1 = vector.shape_cast %0 : vector<1x8x8x16xf32> to vector<8x8x16xf32>
    %cst = arith.constant dense<0.000000e+00> : vector<16xf32>
    %2 = vector.multi_reduction <add>, %1, %cst [0, 1] : vector<8x8x16xf32> to vector<16xf32>
    %3 = vector.shape_cast %2 : vector<16xf32> to vector<1x1x16xf32>
    %cst_3 = arith.constant 6.400000e+01 : f32
    %4 = vector.broadcast %cst_3 : f32 to vector<1x1x16xf32>
    %5 = arith.divf %3, %4 : vector<1x1x16xf32>
    %6 = vector.broadcast %5 : vector<1x1x16xf32> to vector<8x8x16xf32>
    %7 = arith.subf %1, %6 : vector<8x8x16xf32>
    %8 = arith.mulf %7, %7 : vector<8x8x16xf32>
    %cst_4 = arith.constant dense<0.000000e+00> : vector<16xf32>
    %9 = vector.multi_reduction <add>, %8, %cst_4 [0, 1] : vector<8x8x16xf32> to vector<16xf32>
    %10 = vector.shape_cast %9 : vector<16xf32> to vector<1x1x16xf32>
    %cst_5 = arith.constant 6.400000e+01 : f32
    %11 = vector.broadcast %cst_5 : f32 to vector<1x1x16xf32>
    %12 = arith.divf %10, %11 : vector<1x1x16xf32>
    %cst_6 = arith.constant 9.99999974E-6 : f32
    %13 = vector.broadcast %cst_6 : f32 to vector<1x1x16xf32>
    %14 = arith.addf %12, %13 : vector<1x1x16xf32>
    %15 = math.rsqrt %14 : vector<1x1x16xf32>
    %16 = vector.broadcast %15 : vector<1x1x16xf32> to vector<8x8x16xf32>
    %17 = arith.mulf %7, %16 : vector<8x8x16xf32>
    %c0_7 = arith.constant 0 : index
    %c0_8 = arith.constant 0 : index
    %18 = vector.load %arg2[%c0_7, %c0_8] : memref<1x16xf32, #tpu.memory_space<vmem>>, vector<1x16xf32>
    %19 = vector.shape_cast %18 : vector<1x16xf32> to vector<16xf32>
    %20 = vector.shape_cast %19 : vector<16xf32> to vector<1x1x16xf32>
    %21 = vector.broadcast %20 : vector<1x1x16xf32> to vector<8x8x16xf32>
    %22 = arith.mulf %17, %21 : vector<8x8x16xf32>
    %c0_9 = arith.constant 0 : index
    %c0_10 = arith.constant 0 : index
    %23 = vector.load %arg3[%c0_9, %c0_10] : memref<1x16xf32, #tpu.memory_space<vmem>>, vector<1x16xf32>
    %24 = vector.shape_cast %23 : vector<1x16xf32> to vector<16xf32>
    %25 = vector.shape_cast %24 : vector<16xf32> to vector<1x1x16xf32>
    %26 = vector.broadcast %25 : vector<1x1x16xf32> to vector<8x8x16xf32>
    %27 = arith.addf %22, %26 : vector<8x8x16xf32>
    %cst_11 = arith.constant 0.000000e+00 : f32
    %28 = vector.broadcast %cst_11 : f32 to vector<8x8x16xf32>
    %29 = arith.maximumf %27, %28 : vector<8x8x16xf32>
    %c0_12 = arith.constant 0 : index
    %c0_13 = arith.constant 0 : index
    %c0_14 = arith.constant 0 : index
    %c0_15 = arith.constant 0 : index
    %30 = vector.load %arg4[%c0_12, %c0_13, %c0_14, %c0_15] : memref<1x8x8x16xf32, #tpu.memory_space<vmem>>, vector<1x8x8x16xf32>
    %31 = vector.shape_cast %30 : vector<1x8x8x16xf32> to vector<8x8x16xf32>
    %32 = vector.shape_cast %29 : vector<8x8x16xf32> to vector<1x8x8x16xf32>
    tpu.vector_store %arg4[%c0_12, %c0_13, %c0_14, %c0_15], %32 {strides = array<i32>} : memref<1x8x8x16xf32, #tpu.memory_space<vmem>>, vector<1x8x8x16xf32>,
    return
  }
  func.func @transform_0(%arg0: i32) -> (i32, i32, i32, i32) {
    %c0_i32 = arith.constant 0 : i32
    %c0_i32_0 = arith.constant 0 : i32
    %c0_i32_1 = arith.constant 0 : i32
    %c0_i32_2 = arith.constant 0 : i32
    return %arg0, %c0_i32, %c0_i32_0, %c0_i32_1 : i32, i32, i32, i32
  }
  func.func @transform_1(%arg0: i32) -> (i32, i32) {
    %c0_i32 = arith.constant 0 : i32
    %c0_i32_0 = arith.constant 0 : i32
    %c0_i32_1 = arith.constant 0 : i32
    return %c0_i32, %c0_i32_0 : i32, i32
  }
  func.func @transform_2(%arg0: i32) -> (i32, i32) {
    %c0_i32 = arith.constant 0 : i32
    %c0_i32_0 = arith.constant 0 : i32
    %c0_i32_1 = arith.constant 0 : i32
    return %c0_i32, %c0_i32_0 : i32, i32
  }
  func.func @transform_3(%arg0: i32) -> (i32, i32, i32, i32) {
    %c0_i32 = arith.constant 0 : i32
    %c0_i32_0 = arith.constant 0 : i32
    %c0_i32_1 = arith.constant 0 : i32
    %c0_i32_2 = arith.constant 0 : i32
    return %arg0, %c0_i32, %c0_i32_0, %c0_i32_1 : i32, i32, i32, i32
  }
}

module attributes {stable_mosaic.version = 11 : i64} {
  func.func @_matmul_kernel(%arg0: i32, %arg1: i32, %arg2: i32, %arg3: memref<32x512xbf16, #tpu.memory_space<vmem>>, %arg4: memref<512x128xbf16, #tpu.memory_space<vmem>>, %arg5: memref<1x128xf32, #tpu.memory_space<vmem>>, %arg6: memref<32x128xf32, #tpu.memory_space<vmem>>, %arg7: memref<32x128xf32, #tpu.memory_space<vmem>>) attributes {dimension_semantics = [#tpu.dimension_semantics<parallel>, #tpu.dimension_semantics<parallel>, #tpu.dimension_semantics<arbitrary>], iteration_bounds = array<i64: 1, 1, 1>, scalar_prefetch = 0 : i64, scratch_operands = 1 : i64, tpu.core_type = #tpu.core_type<tc>, window_params = [{transform_indices = @transform_0, window_bounds = array<i64: 32, 512>}, {transform_indices = @transform_1, window_bounds = array<i64: 512, 128>}, {transform_indices = @transform_2, window_bounds = array<i64: 1, 128>}, {transform_indices = @transform_3, window_bounds = array<i64: 32, 128>}]} {
    %c0_i32 = arith.constant 0 : i32
    %0 = arith.cmpi eq, %arg2, %c0_i32 : i32
    %1 = arith.extui %0 : i1 to i32
    %c0_i32_0 = arith.constant 0 : i32
    %2 = arith.cmpi ne, %1, %c0_i32_0 : i32
    scf.if %2 {
      %cst_10 = arith.constant 0.000000e+00 : f32
      %12 = vector.broadcast %cst_10 : f32 to vector<32x128xf32>
      %c0_11 = arith.constant 0 : index
      %c0_12 = arith.constant 0 : index
      %13 = vector.load %arg7[%c0_11, %c0_12] : memref<32x128xf32, #tpu.memory_space<vmem>>, vector<32x128xf32>
      tpu.vector_store %arg7[%c0_11, %c0_12], %12 {strides = array<i32>} : memref<32x128xf32, #tpu.memory_space<vmem>>, vector<32x128xf32>,
    } else {
    }
    %c0 = arith.constant 0 : index
    %c0_1 = arith.constant 0 : index
    %3 = vector.load %arg7[%c0, %c0_1] : memref<32x128xf32, #tpu.memory_space<vmem>>, vector<32x128xf32>
    %c0_2 = arith.constant 0 : index
    %c0_3 = arith.constant 0 : index
    %4 = vector.load %arg3[%c0_2, %c0_3] : memref<32x512xbf16, #tpu.memory_space<vmem>>, vector<32x512xbf16>
    %c0_4 = arith.constant 0 : index
    %c0_5 = arith.constant 0 : index
    %5 = vector.load %arg4[%c0_4, %c0_5] : memref<512x128xbf16, #tpu.memory_space<vmem>>, vector<512x128xbf16>
    %cst = arith.constant dense<0.000000e+00> : vector<32x128xf32>
    %6 = tpu.matmul %4, %5, %cst {dimension_numbers = #tpu.dot_dimension_numbers<[1], [0], [0], [1], [0, 0, 1, 1], [], []>} : vector<32x512xbf16>, vector<512x128xbf16>, vector<32x128xf32> -> vector<32x128xf32>
    %7 = arith.addf %3, %6 : vector<32x128xf32>
    %c0_6 = arith.constant 0 : index
    %c0_7 = arith.constant 0 : index
    %8 = vector.load %arg7[%c0_6, %c0_7] : memref<32x128xf32, #tpu.memory_space<vmem>>, vector<32x128xf32>
    tpu.vector_store %arg7[%c0_6, %c0_7], %7 {strides = array<i32>} : memref<32x128xf32, #tpu.memory_space<vmem>>, vector<32x128xf32>,
    %c0_i32_8 = arith.constant 0 : i32
    %9 = arith.cmpi eq, %arg2, %c0_i32_8 : i32
    %10 = arith.extui %9 : i1 to i32
    %c0_i32_9 = arith.constant 0 : i32
    %11 = arith.cmpi ne, %10, %c0_i32_9 : i32
    scf.if %11 {
      %c0_10 = arith.constant 0 : index
      %c0_11 = arith.constant 0 : index
      %12 = vector.load %arg7[%c0_10, %c0_11] : memref<32x128xf32, #tpu.memory_space<vmem>>, vector<32x128xf32>
      %c0_12 = arith.constant 0 : index
      %c0_13 = arith.constant 0 : index
      %13 = vector.load %arg5[%c0_12, %c0_13] : memref<1x128xf32, #tpu.memory_space<vmem>>, vector<1x128xf32>
      %14 = vector.broadcast %13 : vector<1x128xf32> to vector<32x128xf32>
      %15 = arith.addf %12, %14 : vector<32x128xf32>
      %c0_14 = arith.constant 0 : index
      %c0_15 = arith.constant 0 : index
      %16 = vector.load %arg6[%c0_14, %c0_15] : memref<32x128xf32, #tpu.memory_space<vmem>>, vector<32x128xf32>
      tpu.vector_store %arg6[%c0_14, %c0_15], %15 {strides = array<i32>} : memref<32x128xf32, #tpu.memory_space<vmem>>, vector<32x128xf32>,
    } else {
    }
    return
  }
  func.func @transform_0(%arg0: i32, %arg1: i32, %arg2: i32) -> (i32, i32) {
    %c0_i32 = arith.constant 0 : i32
    return %arg0, %arg2 : i32, i32
  }
  func.func @transform_1(%arg0: i32, %arg1: i32, %arg2: i32) -> (i32, i32) {
    %c0_i32 = arith.constant 0 : i32
    return %arg2, %arg1 : i32, i32
  }
  func.func @transform_2(%arg0: i32, %arg1: i32, %arg2: i32) -> (i32, i32) {
    %c0_i32 = arith.constant 0 : i32
    %c0_i32_0 = arith.constant 0 : i32
    return %c0_i32, %arg1 : i32, i32
  }
  func.func @transform_3(%arg0: i32, %arg1: i32, %arg2: i32) -> (i32, i32) {
    %c0_i32 = arith.constant 0 : i32
    return %arg0, %arg1 : i32, i32
  }
}

module attributes {stable_mosaic.version = 11 : i64} {
  func.func @_instnorm_kernel(%arg0: i32, %arg1: memref<1x4x4x32xf32, #tpu.memory_space<vmem>>, %arg2: memref<1x32xf32, #tpu.memory_space<vmem>>, %arg3: memref<1x32xf32, #tpu.memory_space<vmem>>, %arg4: memref<1x4x4x32xf32, #tpu.memory_space<vmem>>) attributes {dimension_semantics = [#tpu.dimension_semantics<parallel>], iteration_bounds = array<i64: 2>, scalar_prefetch = 0 : i64, scratch_operands = 0 : i64, tpu.core_type = #tpu.core_type<tc>, window_params = [{transform_indices = @transform_0, window_bounds = array<i64: 1, 4, 4, 32>}, {pipeline_mode = #tpu.pipeline_mode<synchronous>, transform_indices = @transform_1, window_bounds = array<i64: 1, 32>}, {pipeline_mode = #tpu.pipeline_mode<synchronous>, transform_indices = @transform_2, window_bounds = array<i64: 1, 32>}, {transform_indices = @transform_3, window_bounds = array<i64: 1, 4, 4, 32>}]} {
    %c0 = arith.constant 0 : index
    %c0_0 = arith.constant 0 : index
    %c0_1 = arith.constant 0 : index
    %c0_2 = arith.constant 0 : index
    %0 = vector.load %arg1[%c0, %c0_0, %c0_1, %c0_2] : memref<1x4x4x32xf32, #tpu.memory_space<vmem>>, vector<1x4x4x32xf32>
    %1 = vector.shape_cast %0 : vector<1x4x4x32xf32> to vector<4x4x32xf32>
    %cst = arith.constant dense<0.000000e+00> : vector<32xf32>
    %2 = vector.multi_reduction <add>, %1, %cst [0, 1] : vector<4x4x32xf32> to vector<32xf32>
    %3 = vector.shape_cast %2 : vector<32xf32> to vector<1x1x32xf32>
    %cst_3 = arith.constant 1.600000e+01 : f32
    %4 = vector.broadcast %cst_3 : f32 to vector<1x1x32xf32>
    %5 = arith.divf %3, %4 : vector<1x1x32xf32>
    %6 = vector.broadcast %5 : vector<1x1x32xf32> to vector<4x4x32xf32>
    %7 = arith.subf %1, %6 : vector<4x4x32xf32>
    %8 = arith.mulf %7, %7 : vector<4x4x32xf32>
    %cst_4 = arith.constant dense<0.000000e+00> : vector<32xf32>
    %9 = vector.multi_reduction <add>, %8, %cst_4 [0, 1] : vector<4x4x32xf32> to vector<32xf32>
    %10 = vector.shape_cast %9 : vector<32xf32> to vector<1x1x32xf32>
    %cst_5 = arith.constant 1.600000e+01 : f32
    %11 = vector.broadcast %cst_5 : f32 to vector<1x1x32xf32>
    %12 = arith.divf %10, %11 : vector<1x1x32xf32>
    %cst_6 = arith.constant 9.99999974E-6 : f32
    %13 = vector.broadcast %cst_6 : f32 to vector<1x1x32xf32>
    %14 = arith.addf %12, %13 : vector<1x1x32xf32>
    %15 = math.rsqrt %14 : vector<1x1x32xf32>
    %16 = vector.broadcast %15 : vector<1x1x32xf32> to vector<4x4x32xf32>
    %17 = arith.mulf %7, %16 : vector<4x4x32xf32>
    %c0_7 = arith.constant 0 : index
    %c0_8 = arith.constant 0 : index
    %18 = vector.load %arg2[%c0_7, %c0_8] : memref<1x32xf32, #tpu.memory_space<vmem>>, vector<1x32xf32>
    %19 = vector.shape_cast %18 : vector<1x32xf32> to vector<32xf32>
    %20 = vector.shape_cast %19 : vector<32xf32> to vector<1x1x32xf32>
    %21 = vector.broadcast %20 : vector<1x1x32xf32> to vector<4x4x32xf32>
    %22 = arith.mulf %17, %21 : vector<4x4x32xf32>
    %c0_9 = arith.constant 0 : index
    %c0_10 = arith.constant 0 : index
    %23 = vector.load %arg3[%c0_9, %c0_10] : memref<1x32xf32, #tpu.memory_space<vmem>>, vector<1x32xf32>
    %24 = vector.shape_cast %23 : vector<1x32xf32> to vector<32xf32>
    %25 = vector.shape_cast %24 : vector<32xf32> to vector<1x1x32xf32>
    %26 = vector.broadcast %25 : vector<1x1x32xf32> to vector<4x4x32xf32>
    %27 = arith.addf %22, %26 : vector<4x4x32xf32>
    %cst_11 = arith.constant 0.000000e+00 : f32
    %28 = vector.broadcast %cst_11 : f32 to vector<4x4x32xf32>
    %29 = arith.maximumf %27, %28 : vector<4x4x32xf32>
    %c0_12 = arith.constant 0 : index
    %c0_13 = arith.constant 0 : index
    %c0_14 = arith.constant 0 : index
    %c0_15 = arith.constant 0 : index
    %30 = vector.load %arg4[%c0_12, %c0_13, %c0_14, %c0_15] : memref<1x4x4x32xf32, #tpu.memory_space<vmem>>, vector<1x4x4x32xf32>
    %31 = vector.shape_cast %30 : vector<1x4x4x32xf32> to vector<4x4x32xf32>
    %32 = vector.shape_cast %29 : vector<4x4x32xf32> to vector<1x4x4x32xf32>
    tpu.vector_store %arg4[%c0_12, %c0_13, %c0_14, %c0_15], %32 {strides = array<i32>} : memref<1x4x4x32xf32, #tpu.memory_space<vmem>>, vector<1x4x4x32xf32>,
    return
  }
  func.func @transform_0(%arg0: i32) -> (i32, i32, i32, i32) {
    %c0_i32 = arith.constant 0 : i32
    %c0_i32_0 = arith.constant 0 : i32
    %c0_i32_1 = arith.constant 0 : i32
    %c0_i32_2 = arith.constant 0 : i32
    return %arg0, %c0_i32, %c0_i32_0, %c0_i32_1 : i32, i32, i32, i32
  }
  func.func @transform_1(%arg0: i32) -> (i32, i32) {
    %c0_i32 = arith.constant 0 : i32
    %c0_i32_0 = arith.constant 0 : i32
    %c0_i32_1 = arith.constant 0 : i32
    return %c0_i32, %c0_i32_0 : i32, i32
  }
  func.func @transform_2(%arg0: i32) -> (i32, i32) {
    %c0_i32 = arith.constant 0 : i32
    %c0_i32_0 = arith.constant 0 : i32
    %c0_i32_1 = arith.constant 0 : i32
    return %c0_i32, %c0_i32_0 : i32, i32
  }
  func.func @transform_3(%arg0: i32) -> (i32, i32, i32, i32) {
    %c0_i32 = arith.constant 0 : i32
    %c0_i32_0 = arith.constant 0 : i32
    %c0_i32_1 = arith.constant 0 : i32
    %c0_i32_2 = arith.constant 0 : i32
    return %arg0, %c0_i32, %c0_i32_0, %c0_i32_1 : i32, i32, i32, i32
  }
}

module attributes {stable_mosaic.version = 11 : i64} {
  func.func @_dw3x3_in_kernel(%arg0: i32, %arg1: memref<1x6x6x32xf32, #tpu.memory_space<vmem>>, %arg2: memref<3x3x32xf32, #tpu.memory_space<vmem>>, %arg3: memref<1x32xf32, #tpu.memory_space<vmem>>, %arg4: memref<1x4x4x32xf32, #tpu.memory_space<vmem>>) attributes {dimension_semantics = [#tpu.dimension_semantics<parallel>], iteration_bounds = array<i64: 2>, scalar_prefetch = 0 : i64, scratch_operands = 0 : i64, tpu.core_type = #tpu.core_type<tc>, window_params = [{transform_indices = @transform_0, window_bounds = array<i64: 1, 6, 6, 32>}, {pipeline_mode = #tpu.pipeline_mode<synchronous>, transform_indices = @transform_1, window_bounds = array<i64: 3, 3, 32>}, {pipeline_mode = #tpu.pipeline_mode<synchronous>, transform_indices = @transform_2, window_bounds = array<i64: 1, 32>}, {transform_indices = @transform_3, window_bounds = array<i64: 1, 4, 4, 32>}]} {
    %c0 = arith.constant 0 : index
    %c0_0 = arith.constant 0 : index
    %c0_1 = arith.constant 0 : index
    %c0_2 = arith.constant 0 : index
    %0 = vector.load %arg1[%c0, %c0_0, %c0_1, %c0_2] : memref<1x6x6x32xf32, #tpu.memory_space<vmem>>, vector<1x6x6x32xf32>
    %1 = vector.shape_cast %0 : vector<1x6x6x32xf32> to vector<6x6x32xf32>
    %2 = vector.extract_strided_slice %1 {offsets = [0, 0, 0], sizes = [4, 4, 32], strides = [1, 1, 1]} : vector<6x6x32xf32> to vector<4x4x32xf32>
    %c0_3 = arith.constant 0 : index
    %c0_4 = arith.constant 0 : index
    %c0_5 = arith.constant 0 : index
    %3 = vector.load %arg2[%c0_3, %c0_4, %c0_5] : memref<3x3x32xf32, #tpu.memory_space<vmem>>, vector<1x1x32xf32>
    %4 = vector.shape_cast %3 : vector<1x1x32xf32> to vector<32xf32>
    %5 = vector.shape_cast %4 : vector<32xf32> to vector<1x1x32xf32>
    %6 = vector.broadcast %5 : vector<1x1x32xf32> to vector<4x4x32xf32>
    %7 = arith.mulf %2, %6 : vector<4x4x32xf32>
    %8 = vector.extract_strided_slice %1 {offsets = [0, 1, 0], sizes = [4, 4, 32], strides = [1, 1, 1]} : vector<6x6x32xf32> to vector<4x4x32xf32>
    %c0_6 = arith.constant 0 : index
    %c1 = arith.constant 1 : index
    %c0_7 = arith.constant 0 : index
    %9 = vector.load %arg2[%c0_6, %c1, %c0_7] : memref<3x3x32xf32, #tpu.memory_space<vmem>>, vector<1x1x32xf32>
    %10 = vector.shape_cast %9 : vector<1x1x32xf32> to vector<32xf32>
    %11 = vector.shape_cast %10 : vector<32xf32> to vector<1x1x32xf32>
    %12 = vector.broadcast %11 : vector<1x1x32xf32> to vector<4x4x32xf32>
    %13 = arith.mulf %8, %12 : vector<4x4x32xf32>
    %14 = arith.addf %7, %13 : vector<4x4x32xf32>
    %15 = vector.extract_strided_slice %1 {offsets = [0, 2, 0], sizes = [4, 4, 32], strides = [1, 1, 1]} : vector<6x6x32xf32> to vector<4x4x32xf32>
    %c0_8 = arith.constant 0 : index
    %c2 = arith.constant 2 : index
    %c0_9 = arith.constant 0 : index
    %16 = vector.load %arg2[%c0_8, %c2, %c0_9] : memref<3x3x32xf32, #tpu.memory_space<vmem>>, vector<1x1x32xf32>
    %17 = vector.shape_cast %16 : vector<1x1x32xf32> to vector<32xf32>
    %18 = vector.shape_cast %17 : vector<32xf32> to vector<1x1x32xf32>
    %19 = vector.broadcast %18 : vector<1x1x32xf32> to vector<4x4x32xf32>
    %20 = arith.mulf %15, %19 : vector<4x4x32xf32>
    %21 = arith.addf %14, %20 : vector<4x4x32xf32>
    %22 = vector.extract_strided_slice %1 {offsets = [1, 0, 0], sizes = [4, 4, 32], strides = [1, 1, 1]} : vector<6x6x32xf32> to vector<4x4x32xf32>
    %c1_10 = arith.constant 1 : index
    %c0_11 = arith.constant 0 : index
    %c0_12 = arith.constant 0 : index
    %23 = vector.load %arg2[%c1_10, %c0_11, %c0_12] : memref<3x3x32xf32, #tpu.memory_space<vmem>>, vector<1x1x32xf32>
    %24 = vector.shape_cast %23 : vector<1x1x32xf32> to vector<32xf32>
    %25 = vector.shape_cast %24 : vector<32xf32> to vector<1x1x32xf32>
    %26 = vector.broadcast %25 : vector<1x1x32xf32> to vector<4x4x32xf32>
    %27 = arith.mulf %22, %26 : vector<4x4x32xf32>
    %28 = arith.addf %21, %27 : vector<4x4x32xf32>
    %29 = vector.extract_strided_slice %1 {offsets = [1, 1, 0], sizes = [4, 4, 32], strides = [1, 1, 1]} : vector<6x6x32xf32> to vector<4x4x32xf32>
    %c1_13 = arith.constant 1 : index
    %c1_14 = arith.constant 1 : index
    %c0_15 = arith.constant 0 : index
    %30 = vector.load %arg2[%c1_13, %c1_14, %c0_15] : memref<3x3x32xf32, #tpu.memory_space<vmem>>, vector<1x1x32xf32>
    %31 = vector.shape_cast %30 : vector<1x1x32xf32> to vector<32xf32>
    %32 = vector.shape_cast %31 : vector<32xf32> to vector<1x1x32xf32>
    %33 = vector.broadcast %32 : vector<1x1x32xf32> to vector<4x4x32xf32>
    %34 = arith.mulf %29, %33 : vector<4x4x32xf32>
    %35 = arith.addf %28, %34 : vector<4x4x32xf32>
    %36 = vector.extract_strided_slice %1 {offsets = [1, 2, 0], sizes = [4, 4, 32], strides = [1, 1, 1]} : vector<6x6x32xf32> to vector<4x4x32xf32>
    %c1_16 = arith.constant 1 : index
    %c2_17 = arith.constant 2 : index
    %c0_18 = arith.constant 0 : index
    %37 = vector.load %arg2[%c1_16, %c2_17, %c0_18] : memref<3x3x32xf32, #tpu.memory_space<vmem>>, vector<1x1x32xf32>
    %38 = vector.shape_cast %37 : vector<1x1x32xf32> to vector<32xf32>
    %39 = vector.shape_cast %38 : vector<32xf32> to vector<1x1x32xf32>
    %40 = vector.broadcast %39 : vector<1x1x32xf32> to vector<4x4x32xf32>
    %41 = arith.mulf %36, %40 : vector<4x4x32xf32>
    %42 = arith.addf %35, %41 : vector<4x4x32xf32>
    %43 = vector.extract_strided_slice %1 {offsets = [2, 0, 0], sizes = [4, 4, 32], strides = [1, 1, 1]} : vector<6x6x32xf32> to vector<4x4x32xf32>
    %c2_19 = arith.constant 2 : index
    %c0_20 = arith.constant 0 : index
    %c0_21 = arith.constant 0 : index
    %44 = vector.load %arg2[%c2_19, %c0_20, %c0_21] : memref<3x3x32xf32, #tpu.memory_space<vmem>>, vector<1x1x32xf32>
    %45 = vector.shape_cast %44 : vector<1x1x32xf32> to vector<32xf32>
    %46 = vector.shape_cast %45 : vector<32xf32> to vector<1x1x32xf32>
    %47 = vector.broadcast %46 : vector<1x1x32xf32> to vector<4x4x32xf32>
    %48 = arith.mulf %43, %47 : vector<4x4x32xf32>
    %49 = arith.addf %42, %48 : vector<4x4x32xf32>
    %50 = vector.extract_strided_slice %1 {offsets = [2, 1, 0], sizes = [4, 4, 32], strides = [1, 1, 1]} : vector<6x6x32xf32> to vector<4x4x32xf32>
    %c2_22 = arith.constant 2 : index
    %c1_23 = arith.constant 1 : index
    %c0_24 = arith.constant 0 : index
    %51 = vector.load %arg2[%c2_22, %c1_23, %c0_24] : memref<3x3x32xf32, #tpu.memory_space<vmem>>, vector<1x1x32xf32>
    %52 = vector.shape_cast %51 : vector<1x1x32xf32> to vector<32xf32>
    %53 = vector.shape_cast %52 : vector<32xf32> to vector<1x1x32xf32>
    %54 = vector.broadcast %53 : vector<1x1x32xf32> to vector<4x4x32xf32>
    %55 = arith.mulf %50, %54 : vector<4x4x32xf32>
    %56 = arith.addf %49, %55 : vector<4x4x32xf32>
    %57 = vector.extract_strided_slice %1 {offsets = [2, 2, 0], sizes = [4, 4, 32], strides = [1, 1, 1]} : vector<6x6x32xf32> to vector<4x4x32xf32>
    %c2_25 = arith.constant 2 : index
    %c2_26 = arith.constant 2 : index
    %c0_27 = arith.constant 0 : index
    %58 = vector.load %arg2[%c2_25, %c2_26, %c0_27] : memref<3x3x32xf32, #tpu.memory_space<vmem>>, vector<1x1x32xf32>
    %59 = vector.shape_cast %58 : vector<1x1x32xf32> to vector<32xf32>
    %60 = vector.shape_cast %59 : vector<32xf32> to vector<1x1x32xf32>
    %61 = vector.broadcast %60 : vector<1x1x32xf32> to vector<4x4x32xf32>
    %62 = arith.mulf %57, %61 : vector<4x4x32xf32>
    %63 = arith.addf %56, %62 : vector<4x4x32xf32>
    %c0_28 = arith.constant 0 : index
    %c0_29 = arith.constant 0 : index
    %64 = vector.load %arg3[%c0_28, %c0_29] : memref<1x32xf32, #tpu.memory_space<vmem>>, vector<1x32xf32>
    %65 = vector.shape_cast %64 : vector<1x32xf32> to vector<32xf32>
    %66 = vector.shape_cast %65 : vector<32xf32> to vector<1x1x32xf32>
    %67 = vector.broadcast %66 : vector<1x1x32xf32> to vector<4x4x32xf32>
    %68 = arith.addf %63, %67 : vector<4x4x32xf32>
    %cst = arith.constant dense<0.000000e+00> : vector<32xf32>
    %69 = vector.multi_reduction <add>, %68, %cst [0, 1] : vector<4x4x32xf32> to vector<32xf32>
    %70 = vector.shape_cast %69 : vector<32xf32> to vector<1x1x32xf32>
    %cst_30 = arith.constant 1.600000e+01 : f32
    %71 = vector.broadcast %cst_30 : f32 to vector<1x1x32xf32>
    %72 = arith.divf %70, %71 : vector<1x1x32xf32>
    %73 = vector.broadcast %72 : vector<1x1x32xf32> to vector<4x4x32xf32>
    %74 = arith.subf %68, %73 : vector<4x4x32xf32>
    %75 = arith.mulf %74, %74 : vector<4x4x32xf32>
    %cst_31 = arith.constant dense<0.000000e+00> : vector<32xf32>
    %76 = vector.multi_reduction <add>, %75, %cst_31 [0, 1] : vector<4x4x32xf32> to vector<32xf32>
    %77 = vector.shape_cast %76 : vector<32xf32> to vector<1x1x32xf32>
    %cst_32 = arith.constant 1.600000e+01 : f32
    %78 = vector.broadcast %cst_32 : f32 to vector<1x1x32xf32>
    %79 = arith.divf %77, %78 : vector<1x1x32xf32>
    %cst_33 = arith.constant 9.99999974E-6 : f32
    %80 = vector.broadcast %cst_33 : f32 to vector<1x1x32xf32>
    %81 = arith.addf %79, %80 : vector<1x1x32xf32>
    %82 = math.rsqrt %81 : vector<1x1x32xf32>
    %83 = vector.broadcast %82 : vector<1x1x32xf32> to vector<4x4x32xf32>
    %84 = arith.mulf %74, %83 : vector<4x4x32xf32>
    %c0_34 = arith.constant 0 : index
    %c0_35 = arith.constant 0 : index
    %c0_36 = arith.constant 0 : index
    %c0_37 = arith.constant 0 : index
    %85 = vector.load %arg4[%c0_34, %c0_35, %c0_36, %c0_37] : memref<1x4x4x32xf32, #tpu.memory_space<vmem>>, vector<1x4x4x32xf32>
    %86 = vector.shape_cast %85 : vector<1x4x4x32xf32> to vector<4x4x32xf32>
    %87 = vector.shape_cast %84 : vector<4x4x32xf32> to vector<1x4x4x32xf32>
    tpu.vector_store %arg4[%c0_34, %c0_35, %c0_36, %c0_37], %87 {strides = array<i32>} : memref<1x4x4x32xf32, #tpu.memory_space<vmem>>, vector<1x4x4x32xf32>,
    return
  }
  func.func @transform_0(%arg0: i32) -> (i32, i32, i32, i32) {
    %c0_i32 = arith.constant 0 : i32
    %c0_i32_0 = arith.constant 0 : i32
    %c0_i32_1 = arith.constant 0 : i32
    %c0_i32_2 = arith.constant 0 : i32
    return %arg0, %c0_i32, %c0_i32_0, %c0_i32_1 : i32, i32, i32, i32
  }
  func.func @transform_1(%arg0: i32) -> (i32, i32, i32) {
    %c0_i32 = arith.constant 0 : i32
    %c0_i32_0 = arith.constant 0 : i32
    %c0_i32_1 = arith.constant 0 : i32
    %c0_i32_2 = arith.constant 0 : i32
    return %c0_i32, %c0_i32_0, %c0_i32_1 : i32, i32, i32
  }
  func.func @transform_2(%arg0: i32) -> (i32, i32) {
    %c0_i32 = arith.constant 0 : i32
    %c0_i32_0 = arith.constant 0 : i32
    %c0_i32_1 = arith.constant 0 : i32
    return %c0_i32, %c0_i32_0 : i32, i32
  }
  func.func @transform_3(%arg0: i32) -> (i32, i32, i32, i32) {
    %c0_i32 = arith.constant 0 : i32
    %c0_i32_0 = arith.constant 0 : i32
    %c0_i32_1 = arith.constant 0 : i32
    %c0_i32_2 = arith.constant 0 : i32
    return %arg0, %c0_i32, %c0_i32_0, %c0_i32_1 : i32, i32, i32, i32
  }
}

module attributes {stable_mosaic.version = 11 : i64} {
  func.func @_matmul_kernel(%arg0: i32, %arg1: i32, %arg2: i32, %arg3: memref<32x128xbf16, #tpu.memory_space<vmem>>, %arg4: memref<128x128xbf16, #tpu.memory_space<vmem>>, %arg5: memref<1x128xf32, #tpu.memory_space<vmem>>, %arg6: memref<32x128xf32, #tpu.memory_space<vmem>>, %arg7: memref<32x128xf32, #tpu.memory_space<vmem>>) attributes {dimension_semantics = [#tpu.dimension_semantics<parallel>, #tpu.dimension_semantics<parallel>, #tpu.dimension_semantics<arbitrary>], iteration_bounds = array<i64: 1, 1, 1>, scalar_prefetch = 0 : i64, scratch_operands = 1 : i64, tpu.core_type = #tpu.core_type<tc>, window_params = [{transform_indices = @transform_0, window_bounds = array<i64: 32, 128>}, {transform_indices = @transform_1, window_bounds = array<i64: 128, 128>}, {transform_indices = @transform_2, window_bounds = array<i64: 1, 128>}, {transform_indices = @transform_3, window_bounds = array<i64: 32, 128>}]} {
    %c0_i32 = arith.constant 0 : i32
    %0 = arith.cmpi eq, %arg2, %c0_i32 : i32
    %1 = arith.extui %0 : i1 to i32
    %c0_i32_0 = arith.constant 0 : i32
    %2 = arith.cmpi ne, %1, %c0_i32_0 : i32
    scf.if %2 {
      %cst_10 = arith.constant 0.000000e+00 : f32
      %12 = vector.broadcast %cst_10 : f32 to vector<32x128xf32>
      %c0_11 = arith.constant 0 : index
      %c0_12 = arith.constant 0 : index
      %13 = vector.load %arg7[%c0_11, %c0_12] : memref<32x128xf32, #tpu.memory_space<vmem>>, vector<32x128xf32>
      tpu.vector_store %arg7[%c0_11, %c0_12], %12 {strides = array<i32>} : memref<32x128xf32, #tpu.memory_space<vmem>>, vector<32x128xf32>,
    } else {
    }
    %c0 = arith.constant 0 : index
    %c0_1 = arith.constant 0 : index
    %3 = vector.load %arg7[%c0, %c0_1] : memref<32x128xf32, #tpu.memory_space<vmem>>, vector<32x128xf32>
    %c0_2 = arith.constant 0 : index
    %c0_3 = arith.constant 0 : index
    %4 = vector.load %arg3[%c0_2, %c0_3] : memref<32x128xbf16, #tpu.memory_space<vmem>>, vector<32x128xbf16>
    %c0_4 = arith.constant 0 : index
    %c0_5 = arith.constant 0 : index
    %5 = vector.load %arg4[%c0_4, %c0_5] : memref<128x128xbf16, #tpu.memory_space<vmem>>, vector<128x128xbf16>
    %cst = arith.constant dense<0.000000e+00> : vector<32x128xf32>
    %6 = tpu.matmul %4, %5, %cst {dimension_numbers = #tpu.dot_dimension_numbers<[1], [0], [0], [1], [0, 0, 1, 1], [], []>} : vector<32x128xbf16>, vector<128x128xbf16>, vector<32x128xf32> -> vector<32x128xf32>
    %7 = arith.addf %3, %6 : vector<32x128xf32>
    %c0_6 = arith.constant 0 : index
    %c0_7 = arith.constant 0 : index
    %8 = vector.load %arg7[%c0_6, %c0_7] : memref<32x128xf32, #tpu.memory_space<vmem>>, vector<32x128xf32>
    tpu.vector_store %arg7[%c0_6, %c0_7], %7 {strides = array<i32>} : memref<32x128xf32, #tpu.memory_space<vmem>>, vector<32x128xf32>,
    %c0_i32_8 = arith.constant 0 : i32
    %9 = arith.cmpi eq, %arg2, %c0_i32_8 : i32
    %10 = arith.extui %9 : i1 to i32
    %c0_i32_9 = arith.constant 0 : i32
    %11 = arith.cmpi ne, %10, %c0_i32_9 : i32
    scf.if %11 {
      %c0_10 = arith.constant 0 : index
      %c0_11 = arith.constant 0 : index
      %12 = vector.load %arg7[%c0_10, %c0_11] : memref<32x128xf32, #tpu.memory_space<vmem>>, vector<32x128xf32>
      %c0_12 = arith.constant 0 : index
      %c0_13 = arith.constant 0 : index
      %13 = vector.load %arg5[%c0_12, %c0_13] : memref<1x128xf32, #tpu.memory_space<vmem>>, vector<1x128xf32>
      %14 = vector.broadcast %13 : vector<1x128xf32> to vector<32x128xf32>
      %15 = arith.addf %12, %14 : vector<32x128xf32>
      %c0_14 = arith.constant 0 : index
      %c0_15 = arith.constant 0 : index
      %16 = vector.load %arg6[%c0_14, %c0_15] : memref<32x128xf32, #tpu.memory_space<vmem>>, vector<32x128xf32>
      tpu.vector_store %arg6[%c0_14, %c0_15], %15 {strides = array<i32>} : memref<32x128xf32, #tpu.memory_space<vmem>>, vector<32x128xf32>,
    } else {
    }
    return
  }
  func.func @transform_0(%arg0: i32, %arg1: i32, %arg2: i32) -> (i32, i32) {
    %c0_i32 = arith.constant 0 : i32
    return %arg0, %arg2 : i32, i32
  }
  func.func @transform_1(%arg0: i32, %arg1: i32, %arg2: i32) -> (i32, i32) {
    %c0_i32 = arith.constant 0 : i32
    return %arg2, %arg1 : i32, i32
  }
  func.func @transform_2(%arg0: i32, %arg1: i32, %arg2: i32) -> (i32, i32) {
    %c0_i32 = arith.constant 0 : i32
    %c0_i32_0 = arith.constant 0 : i32
    return %c0_i32, %arg1 : i32, i32
  }
  func.func @transform_3(%arg0: i32, %arg1: i32, %arg2: i32) -> (i32, i32) {
    %c0_i32 = arith.constant 0 : i32
    return %arg0, %arg1 : i32, i32
  }
}

module attributes {stable_mosaic.version = 11 : i64} {
  func.func @_instnorm_res_kernel(%arg0: i32, %arg1: memref<1x4x4x32xf32, #tpu.memory_space<vmem>>, %arg2: memref<1x4x4x32xf32, #tpu.memory_space<vmem>>, %arg3: memref<1x32xf32, #tpu.memory_space<vmem>>, %arg4: memref<1x32xf32, #tpu.memory_space<vmem>>, %arg5: memref<1x4x4x32xf32, #tpu.memory_space<vmem>>) attributes {dimension_semantics = [#tpu.dimension_semantics<parallel>], iteration_bounds = array<i64: 2>, scalar_prefetch = 0 : i64, scratch_operands = 0 : i64, tpu.core_type = #tpu.core_type<tc>, window_params = [{transform_indices = @transform_0, window_bounds = array<i64: 1, 4, 4, 32>}, {transform_indices = @transform_1, window_bounds = array<i64: 1, 4, 4, 32>}, {pipeline_mode = #tpu.pipeline_mode<synchronous>, transform_indices = @transform_2, window_bounds = array<i64: 1, 32>}, {pipeline_mode = #tpu.pipeline_mode<synchronous>, transform_indices = @transform_3, window_bounds = array<i64: 1, 32>}, {transform_indices = @transform_4, window_bounds = array<i64: 1, 4, 4, 32>}]} {
    %c0 = arith.constant 0 : index
    %c0_0 = arith.constant 0 : index
    %c0_1 = arith.constant 0 : index
    %c0_2 = arith.constant 0 : index
    %0 = vector.load %arg1[%c0, %c0_0, %c0_1, %c0_2] : memref<1x4x4x32xf32, #tpu.memory_space<vmem>>, vector<1x4x4x32xf32>
    %1 = vector.shape_cast %0 : vector<1x4x4x32xf32> to vector<4x4x32xf32>
    %cst = arith.constant dense<0.000000e+00> : vector<32xf32>
    %2 = vector.multi_reduction <add>, %1, %cst [0, 1] : vector<4x4x32xf32> to vector<32xf32>
    %3 = vector.shape_cast %2 : vector<32xf32> to vector<1x1x32xf32>
    %cst_3 = arith.constant 1.600000e+01 : f32
    %4 = vector.broadcast %cst_3 : f32 to vector<1x1x32xf32>
    %5 = arith.divf %3, %4 : vector<1x1x32xf32>
    %6 = vector.broadcast %5 : vector<1x1x32xf32> to vector<4x4x32xf32>
    %7 = arith.subf %1, %6 : vector<4x4x32xf32>
    %8 = arith.mulf %7, %7 : vector<4x4x32xf32>
    %cst_4 = arith.constant dense<0.000000e+00> : vector<32xf32>
    %9 = vector.multi_reduction <add>, %8, %cst_4 [0, 1] : vector<4x4x32xf32> to vector<32xf32>
    %10 = vector.shape_cast %9 : vector<32xf32> to vector<1x1x32xf32>
    %cst_5 = arith.constant 1.600000e+01 : f32
    %11 = vector.broadcast %cst_5 : f32 to vector<1x1x32xf32>
    %12 = arith.divf %10, %11 : vector<1x1x32xf32>
    %cst_6 = arith.constant 9.99999974E-6 : f32
    %13 = vector.broadcast %cst_6 : f32 to vector<1x1x32xf32>
    %14 = arith.addf %12, %13 : vector<1x1x32xf32>
    %15 = math.rsqrt %14 : vector<1x1x32xf32>
    %16 = vector.broadcast %15 : vector<1x1x32xf32> to vector<4x4x32xf32>
    %17 = arith.mulf %7, %16 : vector<4x4x32xf32>
    %c0_7 = arith.constant 0 : index
    %c0_8 = arith.constant 0 : index
    %18 = vector.load %arg3[%c0_7, %c0_8] : memref<1x32xf32, #tpu.memory_space<vmem>>, vector<1x32xf32>
    %19 = vector.shape_cast %18 : vector<1x32xf32> to vector<32xf32>
    %20 = vector.shape_cast %19 : vector<32xf32> to vector<1x1x32xf32>
    %21 = vector.broadcast %20 : vector<1x1x32xf32> to vector<4x4x32xf32>
    %22 = arith.mulf %17, %21 : vector<4x4x32xf32>
    %c0_9 = arith.constant 0 : index
    %c0_10 = arith.constant 0 : index
    %23 = vector.load %arg4[%c0_9, %c0_10] : memref<1x32xf32, #tpu.memory_space<vmem>>, vector<1x32xf32>
    %24 = vector.shape_cast %23 : vector<1x32xf32> to vector<32xf32>
    %25 = vector.shape_cast %24 : vector<32xf32> to vector<1x1x32xf32>
    %26 = vector.broadcast %25 : vector<1x1x32xf32> to vector<4x4x32xf32>
    %27 = arith.addf %22, %26 : vector<4x4x32xf32>
    %c0_11 = arith.constant 0 : index
    %c0_12 = arith.constant 0 : index
    %c0_13 = arith.constant 0 : index
    %c0_14 = arith.constant 0 : index
    %28 = vector.load %arg2[%c0_11, %c0_12, %c0_13, %c0_14] : memref<1x4x4x32xf32, #tpu.memory_space<vmem>>, vector<1x4x4x32xf32>
    %29 = vector.shape_cast %28 : vector<1x4x4x32xf32> to vector<4x4x32xf32>
    %30 = arith.addf %29, %27 : vector<4x4x32xf32>
    %c0_15 = arith.constant 0 : index
    %c0_16 = arith.constant 0 : index
    %c0_17 = arith.constant 0 : index
    %c0_18 = arith.constant 0 : index
    %31 = vector.load %arg5[%c0_15, %c0_16, %c0_17, %c0_18] : memref<1x4x4x32xf32, #tpu.memory_space<vmem>>, vector<1x4x4x32xf32>
    %32 = vector.shape_cast %31 : vector<1x4x4x32xf32> to vector<4x4x32xf32>
    %33 = vector.shape_cast %30 : vector<4x4x32xf32> to vector<1x4x4x32xf32>
    tpu.vector_store %arg5[%c0_15, %c0_16, %c0_17, %c0_18], %33 {strides = array<i32>} : memref<1x4x4x32xf32, #tpu.memory_space<vmem>>, vector<1x4x4x32xf32>,
    return
  }
  func.func @transform_0(%arg0: i32) -> (i32, i32, i32, i32) {
    %c0_i32 = arith.constant 0 : i32
    %c0_i32_0 = arith.constant 0 : i32
    %c0_i32_1 = arith.constant 0 : i32
    %c0_i32_2 = arith.constant 0 : i32
    return %arg0, %c0_i32, %c0_i32_0, %c0_i32_1 : i32, i32, i32, i32
  }
  func.func @transform_1(%arg0: i32) -> (i32, i32, i32, i32) {
    %c0_i32 = arith.constant 0 : i32
    %c0_i32_0 = arith.constant 0 : i32
    %c0_i32_1 = arith.constant 0 : i32
    %c0_i32_2 = arith.constant 0 : i32
    return %arg0, %c0_i32, %c0_i32_0, %c0_i32_1 : i32, i32, i32, i32
  }
  func.func @transform_2(%arg0: i32) -> (i32, i32) {
    %c0_i32 = arith.constant 0 : i32
    %c0_i32_0 = arith.constant 0 : i32
    %c0_i32_1 = arith.constant 0 : i32
    return %c0_i32, %c0_i32_0 : i32, i32
  }
  func.func @transform_3(%arg0: i32) -> (i32, i32) {
    %c0_i32 = arith.constant 0 : i32
    %c0_i32_0 = arith.constant 0 : i32
    %c0_i32_1 = arith.constant 0 : i32
    return %c0_i32, %c0_i32_0 : i32, i32
  }
  func.func @transform_4(%arg0: i32) -> (i32, i32, i32, i32) {
    %c0_i32 = arith.constant 0 : i32
    %c0_i32_0 = arith.constant 0 : i32
    %c0_i32_1 = arith.constant 0 : i32
    %c0_i32_2 = arith.constant 0 : i32
    return %arg0, %c0_i32, %c0_i32_0, %c0_i32_1 : i32, i32, i32, i32
  }
}

module attributes {stable_mosaic.version = 11 : i64} {
  func.func @_matmul_kernel(%arg0: i32, %arg1: i32, %arg2: i32, %arg3: memref<512x128xbf16, #tpu.memory_space<vmem>>, %arg4: memref<128x128xbf16, #tpu.memory_space<vmem>>, %arg5: memref<1x128xf32, #tpu.memory_space<vmem>>, %arg6: memref<512x128xf32, #tpu.memory_space<vmem>>, %arg7: memref<512x128xf32, #tpu.memory_space<vmem>>) attributes {dimension_semantics = [#tpu.dimension_semantics<parallel>, #tpu.dimension_semantics<parallel>, #tpu.dimension_semantics<arbitrary>], iteration_bounds = array<i64: 1, 1, 1>, scalar_prefetch = 0 : i64, scratch_operands = 1 : i64, tpu.core_type = #tpu.core_type<tc>, window_params = [{transform_indices = @transform_0, window_bounds = array<i64: 512, 128>}, {transform_indices = @transform_1, window_bounds = array<i64: 128, 128>}, {transform_indices = @transform_2, window_bounds = array<i64: 1, 128>}, {transform_indices = @transform_3, window_bounds = array<i64: 512, 128>}]} {
    %c0_i32 = arith.constant 0 : i32
    %0 = arith.cmpi eq, %arg2, %c0_i32 : i32
    %1 = arith.extui %0 : i1 to i32
    %c0_i32_0 = arith.constant 0 : i32
    %2 = arith.cmpi ne, %1, %c0_i32_0 : i32
    scf.if %2 {
      %cst_10 = arith.constant 0.000000e+00 : f32
      %12 = vector.broadcast %cst_10 : f32 to vector<512x128xf32>
      %c0_11 = arith.constant 0 : index
      %c0_12 = arith.constant 0 : index
      %13 = vector.load %arg7[%c0_11, %c0_12] : memref<512x128xf32, #tpu.memory_space<vmem>>, vector<512x128xf32>
      tpu.vector_store %arg7[%c0_11, %c0_12], %12 {strides = array<i32>} : memref<512x128xf32, #tpu.memory_space<vmem>>, vector<512x128xf32>,
    } else {
    }
    %c0 = arith.constant 0 : index
    %c0_1 = arith.constant 0 : index
    %3 = vector.load %arg7[%c0, %c0_1] : memref<512x128xf32, #tpu.memory_space<vmem>>, vector<512x128xf32>
    %c0_2 = arith.constant 0 : index
    %c0_3 = arith.constant 0 : index
    %4 = vector.load %arg3[%c0_2, %c0_3] : memref<512x128xbf16, #tpu.memory_space<vmem>>, vector<512x128xbf16>
    %c0_4 = arith.constant 0 : index
    %c0_5 = arith.constant 0 : index
    %5 = vector.load %arg4[%c0_4, %c0_5] : memref<128x128xbf16, #tpu.memory_space<vmem>>, vector<128x128xbf16>
    %cst = arith.constant dense<0.000000e+00> : vector<512x128xf32>
    %6 = tpu.matmul %4, %5, %cst {dimension_numbers = #tpu.dot_dimension_numbers<[1], [0], [0], [1], [0, 0, 1, 1], [], []>} : vector<512x128xbf16>, vector<128x128xbf16>, vector<512x128xf32> -> vector<512x128xf32>
    %7 = arith.addf %3, %6 : vector<512x128xf32>
    %c0_6 = arith.constant 0 : index
    %c0_7 = arith.constant 0 : index
    %8 = vector.load %arg7[%c0_6, %c0_7] : memref<512x128xf32, #tpu.memory_space<vmem>>, vector<512x128xf32>
    tpu.vector_store %arg7[%c0_6, %c0_7], %7 {strides = array<i32>} : memref<512x128xf32, #tpu.memory_space<vmem>>, vector<512x128xf32>,
    %c0_i32_8 = arith.constant 0 : i32
    %9 = arith.cmpi eq, %arg2, %c0_i32_8 : i32
    %10 = arith.extui %9 : i1 to i32
    %c0_i32_9 = arith.constant 0 : i32
    %11 = arith.cmpi ne, %10, %c0_i32_9 : i32
    scf.if %11 {
      %c0_10 = arith.constant 0 : index
      %c0_11 = arith.constant 0 : index
      %12 = vector.load %arg7[%c0_10, %c0_11] : memref<512x128xf32, #tpu.memory_space<vmem>>, vector<512x128xf32>
      %c0_12 = arith.constant 0 : index
      %c0_13 = arith.constant 0 : index
      %13 = vector.load %arg5[%c0_12, %c0_13] : memref<1x128xf32, #tpu.memory_space<vmem>>, vector<1x128xf32>
      %14 = vector.broadcast %13 : vector<1x128xf32> to vector<512x128xf32>
      %15 = arith.addf %12, %14 : vector<512x128xf32>
      %c0_14 = arith.constant 0 : index
      %c0_15 = arith.constant 0 : index
      %16 = vector.load %arg6[%c0_14, %c0_15] : memref<512x128xf32, #tpu.memory_space<vmem>>, vector<512x128xf32>
      tpu.vector_store %arg6[%c0_14, %c0_15], %15 {strides = array<i32>} : memref<512x128xf32, #tpu.memory_space<vmem>>, vector<512x128xf32>,
    } else {
    }
    return
  }
  func.func @transform_0(%arg0: i32, %arg1: i32, %arg2: i32) -> (i32, i32) {
    %c0_i32 = arith.constant 0 : i32
    return %arg0, %arg2 : i32, i32
  }
  func.func @transform_1(%arg0: i32, %arg1: i32, %arg2: i32) -> (i32, i32) {
    %c0_i32 = arith.constant 0 : i32
    return %arg2, %arg1 : i32, i32
  }
  func.func @transform_2(%arg0: i32, %arg1: i32, %arg2: i32) -> (i32, i32) {
    %c0_i32 = arith.constant 0 : i32
    %c0_i32_0 = arith.constant 0 : i32
    return %c0_i32, %arg1 : i32, i32
  }
  func.func @transform_3(%arg0: i32, %arg1: i32, %arg2: i32) -> (i32, i32) {
    %c0_i32 = arith.constant 0 : i32
    return %arg0, %arg1 : i32, i32
  }
}

module attributes {stable_mosaic.version = 11 : i64} {
  func.func @_instnorm_kernel(%arg0: i32, %arg1: memref<1x16x16x16xf32, #tpu.memory_space<vmem>>, %arg2: memref<1x16xf32, #tpu.memory_space<vmem>>, %arg3: memref<1x16xf32, #tpu.memory_space<vmem>>, %arg4: memref<1x16x16x16xf32, #tpu.memory_space<vmem>>) attributes {dimension_semantics = [#tpu.dimension_semantics<parallel>], iteration_bounds = array<i64: 2>, scalar_prefetch = 0 : i64, scratch_operands = 0 : i64, tpu.core_type = #tpu.core_type<tc>, window_params = [{transform_indices = @transform_0, window_bounds = array<i64: 1, 16, 16, 16>}, {pipeline_mode = #tpu.pipeline_mode<synchronous>, transform_indices = @transform_1, window_bounds = array<i64: 1, 16>}, {pipeline_mode = #tpu.pipeline_mode<synchronous>, transform_indices = @transform_2, window_bounds = array<i64: 1, 16>}, {transform_indices = @transform_3, window_bounds = array<i64: 1, 16, 16, 16>}]} {
    %c0 = arith.constant 0 : index
    %c0_0 = arith.constant 0 : index
    %c0_1 = arith.constant 0 : index
    %c0_2 = arith.constant 0 : index
    %0 = vector.load %arg1[%c0, %c0_0, %c0_1, %c0_2] : memref<1x16x16x16xf32, #tpu.memory_space<vmem>>, vector<1x16x16x16xf32>
    %1 = vector.shape_cast %0 : vector<1x16x16x16xf32> to vector<16x16x16xf32>
    %cst = arith.constant dense<0.000000e+00> : vector<16xf32>
    %2 = vector.multi_reduction <add>, %1, %cst [0, 1] : vector<16x16x16xf32> to vector<16xf32>
    %3 = vector.shape_cast %2 : vector<16xf32> to vector<1x1x16xf32>
    %cst_3 = arith.constant 2.560000e+02 : f32
    %4 = vector.broadcast %cst_3 : f32 to vector<1x1x16xf32>
    %5 = arith.divf %3, %4 : vector<1x1x16xf32>
    %6 = vector.broadcast %5 : vector<1x1x16xf32> to vector<16x16x16xf32>
    %7 = arith.subf %1, %6 : vector<16x16x16xf32>
    %8 = arith.mulf %7, %7 : vector<16x16x16xf32>
    %cst_4 = arith.constant dense<0.000000e+00> : vector<16xf32>
    %9 = vector.multi_reduction <add>, %8, %cst_4 [0, 1] : vector<16x16x16xf32> to vector<16xf32>
    %10 = vector.shape_cast %9 : vector<16xf32> to vector<1x1x16xf32>
    %cst_5 = arith.constant 2.560000e+02 : f32
    %11 = vector.broadcast %cst_5 : f32 to vector<1x1x16xf32>
    %12 = arith.divf %10, %11 : vector<1x1x16xf32>
    %cst_6 = arith.constant 9.99999974E-6 : f32
    %13 = vector.broadcast %cst_6 : f32 to vector<1x1x16xf32>
    %14 = arith.addf %12, %13 : vector<1x1x16xf32>
    %15 = math.rsqrt %14 : vector<1x1x16xf32>
    %16 = vector.broadcast %15 : vector<1x1x16xf32> to vector<16x16x16xf32>
    %17 = arith.mulf %7, %16 : vector<16x16x16xf32>
    %c0_7 = arith.constant 0 : index
    %c0_8 = arith.constant 0 : index
    %18 = vector.load %arg2[%c0_7, %c0_8] : memref<1x16xf32, #tpu.memory_space<vmem>>, vector<1x16xf32>
    %19 = vector.shape_cast %18 : vector<1x16xf32> to vector<16xf32>
    %20 = vector.shape_cast %19 : vector<16xf32> to vector<1x1x16xf32>
    %21 = vector.broadcast %20 : vector<1x1x16xf32> to vector<16x16x16xf32>
    %22 = arith.mulf %17, %21 : vector<16x16x16xf32>
    %c0_9 = arith.constant 0 : index
    %c0_10 = arith.constant 0 : index
    %23 = vector.load %arg3[%c0_9, %c0_10] : memref<1x16xf32, #tpu.memory_space<vmem>>, vector<1x16xf32>
    %24 = vector.shape_cast %23 : vector<1x16xf32> to vector<16xf32>
    %25 = vector.shape_cast %24 : vector<16xf32> to vector<1x1x16xf32>
    %26 = vector.broadcast %25 : vector<1x1x16xf32> to vector<16x16x16xf32>
    %27 = arith.addf %22, %26 : vector<16x16x16xf32>
    %cst_11 = arith.constant 0.000000e+00 : f32
    %28 = vector.broadcast %cst_11 : f32 to vector<16x16x16xf32>
    %29 = arith.maximumf %27, %28 : vector<16x16x16xf32>
    %c0_12 = arith.constant 0 : index
    %c0_13 = arith.constant 0 : index
    %c0_14 = arith.constant 0 : index
    %c0_15 = arith.constant 0 : index
    %30 = vector.load %arg4[%c0_12, %c0_13, %c0_14, %c0_15] : memref<1x16x16x16xf32, #tpu.memory_space<vmem>>, vector<1x16x16x16xf32>
    %31 = vector.shape_cast %30 : vector<1x16x16x16xf32> to vector<16x16x16xf32>
    %32 = vector.shape_cast %29 : vector<16x16x16xf32> to vector<1x16x16x16xf32>
    tpu.vector_store %arg4[%c0_12, %c0_13, %c0_14, %c0_15], %32 {strides = array<i32>} : memref<1x16x16x16xf32, #tpu.memory_space<vmem>>, vector<1x16x16x16xf32>,
    return
  }
  func.func @transform_0(%arg0: i32) -> (i32, i32, i32, i32) {
    %c0_i32 = arith.constant 0 : i32
    %c0_i32_0 = arith.constant 0 : i32
    %c0_i32_1 = arith.constant 0 : i32
    %c0_i32_2 = arith.constant 0 : i32
    return %arg0, %c0_i32, %c0_i32_0, %c0_i32_1 : i32, i32, i32, i32
  }
  func.func @transform_1(%arg0: i32) -> (i32, i32) {
    %c0_i32 = arith.constant 0 : i32
    %c0_i32_0 = arith.constant 0 : i32
    %c0_i32_1 = arith.constant 0 : i32
    return %c0_i32, %c0_i32_0 : i32, i32
  }
  func.func @transform_2(%arg0: i32) -> (i32, i32) {
    %c0_i32 = arith.constant 0 : i32
    %c0_i32_0 = arith.constant 0 : i32
    %c0_i32_1 = arith.constant 0 : i32
    return %c0_i32, %c0_i32_0 : i32, i32
  }
  func.func @transform_3(%arg0: i32) -> (i32, i32, i32, i32) {
    %c0_i32 = arith.constant 0 : i32
    %c0_i32_0 = arith.constant 0 : i32
    %c0_i32_1 = arith.constant 0 : i32
    %c0_i32_2 = arith.constant 0 : i32
    return %arg0, %c0_i32, %c0_i32_0, %c0_i32_1 : i32, i32, i32, i32
  }
}

module attributes {stable_mosaic.version = 11 : i64} {
  func.func @_matmul_kernel(%arg0: i32, %arg1: i32, %arg2: i32, %arg3: memref<512x896xbf16, #tpu.memory_space<vmem>>, %arg4: memref<896x128xbf16, #tpu.memory_space<vmem>>, %arg5: memref<1x128xf32, #tpu.memory_space<vmem>>, %arg6: memref<512x128xf32, #tpu.memory_space<vmem>>, %arg7: memref<512x128xf32, #tpu.memory_space<vmem>>) attributes {dimension_semantics = [#tpu.dimension_semantics<parallel>, #tpu.dimension_semantics<parallel>, #tpu.dimension_semantics<arbitrary>], iteration_bounds = array<i64: 1, 1, 1>, scalar_prefetch = 0 : i64, scratch_operands = 1 : i64, tpu.core_type = #tpu.core_type<tc>, window_params = [{transform_indices = @transform_0, window_bounds = array<i64: 512, 896>}, {transform_indices = @transform_1, window_bounds = array<i64: 896, 128>}, {transform_indices = @transform_2, window_bounds = array<i64: 1, 128>}, {transform_indices = @transform_3, window_bounds = array<i64: 512, 128>}]} {
    %c0_i32 = arith.constant 0 : i32
    %0 = arith.cmpi eq, %arg2, %c0_i32 : i32
    %1 = arith.extui %0 : i1 to i32
    %c0_i32_0 = arith.constant 0 : i32
    %2 = arith.cmpi ne, %1, %c0_i32_0 : i32
    scf.if %2 {
      %cst_10 = arith.constant 0.000000e+00 : f32
      %12 = vector.broadcast %cst_10 : f32 to vector<512x128xf32>
      %c0_11 = arith.constant 0 : index
      %c0_12 = arith.constant 0 : index
      %13 = vector.load %arg7[%c0_11, %c0_12] : memref<512x128xf32, #tpu.memory_space<vmem>>, vector<512x128xf32>
      tpu.vector_store %arg7[%c0_11, %c0_12], %12 {strides = array<i32>} : memref<512x128xf32, #tpu.memory_space<vmem>>, vector<512x128xf32>,
    } else {
    }
    %c0 = arith.constant 0 : index
    %c0_1 = arith.constant 0 : index
    %3 = vector.load %arg7[%c0, %c0_1] : memref<512x128xf32, #tpu.memory_space<vmem>>, vector<512x128xf32>
    %c0_2 = arith.constant 0 : index
    %c0_3 = arith.constant 0 : index
    %4 = vector.load %arg3[%c0_2, %c0_3] : memref<512x896xbf16, #tpu.memory_space<vmem>>, vector<512x896xbf16>
    %c0_4 = arith.constant 0 : index
    %c0_5 = arith.constant 0 : index
    %5 = vector.load %arg4[%c0_4, %c0_5] : memref<896x128xbf16, #tpu.memory_space<vmem>>, vector<896x128xbf16>
    %cst = arith.constant dense<0.000000e+00> : vector<512x128xf32>
    %6 = tpu.matmul %4, %5, %cst {dimension_numbers = #tpu.dot_dimension_numbers<[1], [0], [0], [1], [0, 0, 1, 1], [], []>} : vector<512x896xbf16>, vector<896x128xbf16>, vector<512x128xf32> -> vector<512x128xf32>
    %7 = arith.addf %3, %6 : vector<512x128xf32>
    %c0_6 = arith.constant 0 : index
    %c0_7 = arith.constant 0 : index
    %8 = vector.load %arg7[%c0_6, %c0_7] : memref<512x128xf32, #tpu.memory_space<vmem>>, vector<512x128xf32>
    tpu.vector_store %arg7[%c0_6, %c0_7], %7 {strides = array<i32>} : memref<512x128xf32, #tpu.memory_space<vmem>>, vector<512x128xf32>,
    %c0_i32_8 = arith.constant 0 : i32
    %9 = arith.cmpi eq, %arg2, %c0_i32_8 : i32
    %10 = arith.extui %9 : i1 to i32
    %c0_i32_9 = arith.constant 0 : i32
    %11 = arith.cmpi ne, %10, %c0_i32_9 : i32
    scf.if %11 {
      %c0_10 = arith.constant 0 : index
      %c0_11 = arith.constant 0 : index
      %12 = vector.load %arg7[%c0_10, %c0_11] : memref<512x128xf32, #tpu.memory_space<vmem>>, vector<512x128xf32>
      %c0_12 = arith.constant 0 : index
      %c0_13 = arith.constant 0 : index
      %13 = vector.load %arg5[%c0_12, %c0_13] : memref<1x128xf32, #tpu.memory_space<vmem>>, vector<1x128xf32>
      %14 = vector.broadcast %13 : vector<1x128xf32> to vector<512x128xf32>
      %15 = arith.addf %12, %14 : vector<512x128xf32>
      %16 = math.tanh %15 : vector<512x128xf32>
      %c0_14 = arith.constant 0 : index
      %c0_15 = arith.constant 0 : index
      %17 = vector.load %arg6[%c0_14, %c0_15] : memref<512x128xf32, #tpu.memory_space<vmem>>, vector<512x128xf32>
      tpu.vector_store %arg6[%c0_14, %c0_15], %16 {strides = array<i32>} : memref<512x128xf32, #tpu.memory_space<vmem>>, vector<512x128xf32>,
    } else {
    }
    return
  }
  func.func @transform_0(%arg0: i32, %arg1: i32, %arg2: i32) -> (i32, i32) {
    %c0_i32 = arith.constant 0 : i32
    return %arg0, %arg2 : i32, i32
  }
  func.func @transform_1(%arg0: i32, %arg1: i32, %arg2: i32) -> (i32, i32) {
    %c0_i32 = arith.constant 0 : i32
    return %arg2, %arg1 : i32, i32
  }
  func.func @transform_2(%arg0: i32, %arg1: i32, %arg2: i32) -> (i32, i32) {
    %c0_i32 = arith.constant 0 : i32
    %c0_i32_0 = arith.constant 0 : i32
    return %c0_i32, %arg1 : i32, i32
  }
  func.func @transform_3(%arg0: i32, %arg1: i32, %arg2: i32) -> (i32, i32) {
    %c0_i32 = arith.constant 0 : i32
    return %arg0, %arg1 : i32, i32
  }
}

</mosaic_0001>

<llo_original>
// kernel: generator_forward.38
$region0: #{generator_forward.38}
  #allocation0 [shape = 'u32[]', space=smem, size = 0x4, offset = 0x4, fixed_abs, tag = 'smem constant byte address 0x4 - core index']
  #allocation1 [shape = 'u32[144,128]{1,0:T(1,128)}', space=vmem, size = 0x12000, scoped, tag = 'internal scratch']
  %s0 = inlined_call_operand.vmem [shape: f32[2,16,16,8], index: 0, kind: input, shape index: {}]
  %s1 = inlined_call_operand.vmem [shape: f32[1,8], index: 1, kind: input, shape index: {}]
  %s2 = inlined_call_operand.vmem [shape: f32[1,8], index: 2, kind: input, shape index: {}]
  %s3 = inlined_call_operand.vmem [shape: f32[2,16,16,8], index: 3, kind: output, shape index: {}]
  %s4 = sld [smem:[#allocation0]]
  $region45: #{generator_forward.38} parent=0
    _
  %s6 = ssub.s32 1, %s4
  %s7 = scalar_select 0, %s6, %s4
  loop: start=0, step=1, limit=4
  $region2: #{generator_forward.38} parent=0 // loop_pre_header
    _
  $region3: #{generator_forward.38} parent=0 // loop_header
    %s9 = sphi 0, %s13
    %p10 = scmp.ge.s32.totalorder %s9, 4
    %s19 = sphi 0, %s21
    %s22 = sphi 0, %s19
    %s23 = sphi 0, %s22
    %s39 = sphi 0, %s23
    %s43 = sphi 0, %s43
    %s45 = sphi 0, %s43
    %s46 = sphi 0, %s45
    %s60 = sphi 0, %s46
    %s64 = sphi 0, %s64
    %s66 = sphi 0, %s64
    %s67 = sphi 0, %s66
    %s81 = sphi 0, %s67
    %s87 = sphi 0, %s89
    %s90 = sphi 0, %s87
    %s91 = sphi 0, %s90
    %s107 = sphi 0, %s91
  $region4: #{generator_forward.38} parent=0 // loop_header_branch
    %12 = sbr.rel (%p10) target = $region8
  $region5: #{generator_forward.38} parent=0 // loop_body
    %s14 = ssub.s32 %s9, 1
    %s15 = ssub.s32 %s9, 2
    %s16 = sadd.s32 %s9, 1
    %s17 = ssub.s32 %s9, %s16
    %p18 = scmp.eq.s32.totalorder %s17, 0
    %s20 = sadd.s32 %s19, 1
    %s21 = scalar_select %p18, %s19, %s20
    %p24 = pneg %p18
    %p25 = scmp.eq.s32.totalorder %s9, 1
    %p26 = por %p24, %p25
    %p27 = scmp.ne.s32.totalorder %s19, %s22
    %p28 = scmp.eq.s32.totalorder %s9, 0
    %p29 = por %p27, %p28
    %p30 = scmp.ne.s32.totalorder %s19, %s22
    %p31 = scmp.eq.s32.totalorder %s14, 1
    %p32 = por %p30, %p31
    %p33 = scmp.ne.s32.totalorder %s22, %s23
    %p34 = scmp.eq.s32.totalorder %s14, 0
    %p35 = por %p33, %p34
    %p36 = scmp.ne.s32.totalorder %s22, %s23
    %p37 = scmp.eq.s32.totalorder %s15, 1
    %p38 = por %p36, %p37
    %p40 = scmp.ne.s32.totalorder %s23, %s39
    %p41 = scmp.eq.s32.totalorder %s15, 0
    %p42 = por %p40, %p41
    %s44 = sadd.s32 %s43, 1
    %p47 = scmp.eq.s32.totalorder %s9, 1
    %p48 = scmp.ne.s32.totalorder %s43, %s45
    %p49 = scmp.eq.s32.totalorder %s9, 0
    %p50 = por %p48, %p49
    %p51 = scmp.ne.s32.totalorder %s43, %s45
    %p52 = scmp.eq.s32.totalorder %s14, 1
    %p53 = por %p51, %p52
    %p54 = scmp.ne.s32.totalorder %s45, %s46
    %p55 = scmp.eq.s32.totalorder %s14, 0
    %p56 = por %p54, %p55
    %p57 = scmp.ne.s32.totalorder %s45, %s46
    %p58 = scmp.eq.s32.totalorder %s15, 1
    %p59 = por %p57, %p58
    %p61 = scmp.ne.s32.totalorder %s46, %s60
    %p62 = scmp.eq.s32.totalorder %s15, 0
    %p63 = por %p61, %p62
    %s65 = sadd.s32 %s64, 1
    %p68 = scmp.eq.s32.totalorder %s9, 1
    %p69 = scmp.ne.s32.totalorder %s64, %s66
    %p70 = scmp.eq.s32.totalorder %s9, 0
    %p71 = por %p69, %p70
    %p72 = scmp.ne.s32.totalorder %s64, %s66
    %p73 = scmp.eq.s32.totalorder %s14, 1
    %p74 = por %p72, %p73
    %p75 = scmp.ne.s32.totalorder %s66, %s67
    %p76 = scmp.eq.s32.totalorder %s14, 0
    %p77 = por %p75, %p76
    %p78 = scmp.ne.s32.totalorder %s66, %s67
    %p79 = scmp.eq.s32.totalorder %s15, 1
    %p80 = por %p78, %p79
    %p82 = scmp.ne.s32.totalorder %s67, %s81
    %p83 = scmp.eq.s32.totalorder %s15, 0
    %p84 = por %p82, %p83
    %s85 = ssub.s32 %s9, %s16
    %p86 = scmp.eq.s32.totalorder %s85, 0
    %s88 = sadd.s32 %s87, 1
    %s89 = scalar_select %p86, %s87, %s88
    %p92 = pneg %p86
    %p93 = scmp.eq.s32.totalorder %s9, 1
    %p94 = por %p92, %p93
    %p95 = scmp.ne.s32.totalorder %s87, %s90
    %p96 = scmp.eq.s32.totalorder %s9, 0
    %p97 = por %p95, %p96
    %p98 = scmp.ne.s32.totalorder %s87, %s90
    %p99 = scmp.eq.s32.totalorder %s14, 1
    %p100 = por %p98, %p99
    %p101 = scmp.ne.s32.totalorder %s90, %s91
    %p102 = scmp.eq.s32.totalorder %s14, 0
    %p103 = por %p101, %p102
    %p104 = scmp.ne.s32.totalorder %s90, %s91
    %p105 = scmp.eq.s32.totalorder %s15, 1
    %p106 = por %p104, %p105
    %p108 = scmp.ne.s32.totalorder %s91, %s107
    %p109 = scmp.eq.s32.totalorder %s15, 0
    %p110 = por %p108, %p109
    %p111 = scmp.le.s32.totalorder 1, %s9
    %p112 = scmp.lt.s32.totalorder %s9, 3
    %p113 = pnand %p111, %p112
    %p114 = pneg %p113
    // Predicated region
    $region9: #{generator_forward.38} parent=5 // pred_check
      _
    $region10: #{generator_forward.38} parent=5 // pred_check_branch
      %116 = sbr.rel (%p113) target = $region12
    $region11: #{generator_forward.38} parent=5 // pred_region
      %s117 = ssub.s32 %s9, 1
      // Predicated region
      $region13: #{generator_forward.38} parent=11 // pred_check
        %p118 = pneg %p56
      $region14: #{generator_forward.38} parent=11 // pred_check_branch
        %120 = sbr.rel (%p118) target = $region16
      $region15: #{generator_forward.38} parent=11 // pred_region
        _
      $region16: #{generator_forward.38} parent=11 // pred_fallthru
        _
      // Predicated region
      $region17: #{generator_forward.38} parent=11 // pred_check
        %p121 = pneg %p77
      $region18: #{generator_forward.38} parent=11 // pred_check_branch
        %123 = sbr.rel (%p121) target = $region20
      $region19: #{generator_forward.38} parent=11 // pred_region
        _
      $region20: #{generator_forward.38} parent=11 // pred_fallthru
        _
    $region12: #{generator_forward.38} parent=5 // pred_fallthru
      _
    %p124 = scmp.lt.s32.totalorder %s9, 2
    // Predicated region
    $region21: #{generator_forward.38} parent=5 // pred_check
      %p125 = pneg %p124
    $region22: #{generator_forward.38} parent=5 // pred_check_branch
      %127 = sbr.rel (%p125) target = $region24
    $region23: #{generator_forward.38} parent=5 // pred_region
      // Predicated region
      $region25: #{generator_forward.38} parent=23 // pred_check
        %p128 = pneg %p29
      $region26: #{generator_forward.38} parent=23 // pred_check_branch
        %130 = sbr.rel (%p128) target = $region28
      $region27: #{generator_forward.38} parent=23 // pred_region
        %p131 = scmp.lt.s32.totalorder %s9, 1
        %s132 = scalar_select %p131, %s9, 1
        %s133 = smul.addr %s132, 32
        %s134 = smul.addr %s133, 8
        %s135 = scalar_lea.vmem %s0, %s134
      $region28: #{generator_forward.38} parent=23 // pred_fallthru
        _
    $region24: #{generator_forward.38} parent=5 // pred_fallthru
      _
    %p136 = scmp.le.s32.totalorder 1, %s9
    %p137 = scmp.lt.s32.totalorder %s9, 3
    %p138 = pnand %p136, %p137
    %p139 = pneg %p138
    // Predicated region
    $region29: #{generator_forward.38} parent=5 // pred_check
      _
    $region30: #{generator_forward.38} parent=5 // pred_check_branch
      %141 = sbr.rel (%p138) target = $region32
    $region31: #{generator_forward.38} parent=5 // pred_region
      %s142 = ssub.s32 %s9, 1
      %p143 = scmp.lt.s32.totalorder %s14, 1
      %s144 = scalar_select %p143, %s14, 1
      %s145 = smul.addr %s144, 32
      %s146 = smul.addr %s145, 8
      %s147 = scalar_lea.vmem %s0, %s146
      %p148 = pneg %p35
      %p149 = pneg %p32
      %p150 = pneg %p56
      %p151 = pneg %p53
      %p152 = pneg %p77
      %p153 = pneg %p74
      %p154 = pneg %p103
      %p155 = pneg %p100
      %p156 = scmp.lt.s32.totalorder %s14, 1
      %s157 = scalar_select %p156, %s14, 1
      %s158 = smul.addr %s157, 32
      %s159 = smul.addr %s158, 8
      %s160 = scalar_lea.vmem %s3, %s159
      %p161 = scmp.lt.s32.totalorder %s14, 1
      %s162 = scalar_select %p161, %s14, 1
      %s163 = smul.addr %s162, 32
      %s164 = smul.addr %s163, 8
      %s165 = scalar_lea.vmem %s0, %s164
      %p166 = scmp.lt.s32.totalorder %s14, 1
      %s167 = scalar_select %p166, %s14, 1
      %s168 = smul.addr %s167, 32
      %s169 = smul.addr %s168, 8
      %s170 = scalar_lea.vmem %s3, %s169
      %v171 = vld [vmem:[%s165] sm:$0xff]
      %v172 = vld [vmem:[%s165 + $0x8] sm:$0xff]
      %v173 = vld [vmem:[%s165 + $0x10] sm:$0xff]
      %v174 = vld [vmem:[%s165 + $0x18] sm:$0xff]
      %v175 = vld [vmem:[%s165 + $0x20] sm:$0xff]
      %v176 = vld [vmem:[%s165 + $0x28] sm:$0xff]
      %v177 = vld [vmem:[%s165 + $0x30] sm:$0xff]
      %v178 = vld [vmem:[%s165 + $0x38] sm:$0xff]
      %v179 = vld [vmem:[%s165 + $0x40] sm:$0xff]
      %v180 = vld [vmem:[%s165 + $0x48] sm:$0xff]
      %v181 = vld [vmem:[%s165 + $0x50] sm:$0xff]
      %v182 = vld [vmem:[%s165 + $0x58] sm:$0xff]
      %v183 = vld [vmem:[%s165 + $0x60] sm:$0xff]
      %v184 = vld [vmem:[%s165 + $0x68] sm:$0xff]
      %v185 = vld [vmem:[%s165 + $0x70] sm:$0xff]
      %v186 = vld [vmem:[%s165 + $0x78] sm:$0xff]
      %v187 = vld [vmem:[%s165 + $0x80] sm:$0xff]
      %v188 = vld [vmem:[%s165 + $0x88] sm:$0xff]
      %v189 = vld [vmem:[%s165 + $0x90] sm:$0xff]
      %v190 = vld [vmem:[%s165 + $0x98] sm:$0xff]
      %v191 = vld [vmem:[%s165 + $0xa0] sm:$0xff]
      %v192 = vld [vmem:[%s165 + $0xa8] sm:$0xff]
      %v193 = vld [vmem:[%s165 + $0xb0] sm:$0xff]
      %v194 = vld [vmem:[%s165 + $0xb8] sm:$0xff]
      %v195 = vld [vmem:[%s165 + $0xc0] sm:$0xff]
      %v196 = vld [vmem:[%s165 + $0xc8] sm:$0xff]
      %v197 = vld [vmem:[%s165 + $0xd0] sm:$0xff]
      %v198 = vld [vmem:[%s165 + $0xd8] sm:$0xff]
      %v199 = vld [vmem:[%s165 + $0xe0] sm:$0xff]
      %v200 = vld [vmem:[%s165 + $0xe8] sm:$0xff]
      %v201 = vld [vmem:[%s165 + $0xf0] sm:$0xff]
      %v202 = vld [vmem:[%s165 + $0xf8] sm:$0xff]
      %vm203 = vcmask 64512
      %v204 = vsel %vm203, %v171, 0.0
      %v205 = vsel %vm203, %v172, 0.0
      %v206 = vadd.f32 %v204, %v205
      %v207 = vsel %vm203, %v173, 0.0
      %v208 = vadd.f32 %v206, %v207
      %v209 = vsel %vm203, %v174, 0.0
      %v210 = vadd.f32 %v208, %v209
      %v211 = vsel %vm203, %v175, 0.0
      %v212 = vadd.f32 %v210, %v211
      %v213 = vsel %vm203, %v176, 0.0
      %v214 = vadd.f32 %v212, %v213
      %v215 = vsel %vm203, %v177, 0.0
      %v216 = vadd.f32 %v214, %v215
      %v217 = vsel %vm203, %v178, 0.0
      %v218 = vadd.f32 %v216, %v217
      %v219 = vsel %vm203, %v179, 0.0
      %v220 = vadd.f32 %v218, %v219
      %v221 = vsel %vm203, %v180, 0.0
      %v222 = vadd.f32 %v220, %v221
      %v223 = vsel %vm203, %v181, 0.0
      %v224 = vadd.f32 %v222, %v223
      %v225 = vsel %vm203, %v182, 0.0
      %v226 = vadd.f32 %v224, %v225
      %v227 = vsel %vm203, %v183, 0.0
      %v228 = vadd.f32 %v226, %v227
      %v229 = vsel %vm203, %v184, 0.0
      %v230 = vadd.f32 %v228, %v229
      %v231 = vsel %vm203, %v185, 0.0
      %v232 = vadd.f32 %v230, %v231
      %v233 = vsel %vm203, %v186, 0.0
      %v234 = vadd.f32 %v232, %v233
      %v235 = vsel %vm203, %v187, 0.0
      %v236 = vadd.f32 %v234, %v235
      %v237 = vsel %vm203, %v188, 0.0
      %v238 = vadd.f32 %v236, %v237
      %v239 = vsel %vm203, %v189, 0.0
      %v240 = vadd.f32 %v238, %v239
      %v241 = vsel %vm203, %v190, 0.0
      %v242 = vadd.f32 %v240, %v241
      %v243 = vsel %vm203, %v191, 0.0
      %v244 = vadd.f32 %v242, %v243
      %v245 = vsel %vm203, %v192, 0.0
      %v246 = vadd.f32 %v244, %v245
      %v247 = vsel %vm203, %v193, 0.0
      %v248 = vadd.f32 %v246, %v247
      %v249 = vsel %vm203, %v194, 0.0
      %v250 = vadd.f32 %v248, %v249
      %v251 = vsel %vm203, %v195, 0.0
      %v252 = vadd.f32 %v250, %v251
      %v253 = vsel %vm203, %v196, 0.0
      %v254 = vadd.f32 %v252, %v253
      %v255 = vsel %vm203, %v197, 0.0
      %v256 = vadd.f32 %v254, %v255
      %v257 = vsel %vm203, %v198, 0.0
      %v258 = vadd.f32 %v256, %v257
      %v259 = vsel %vm203, %v199, 0.0
      %v260 = vadd.f32 %v258, %v259
      %v261 = vsel %vm203, %v200, 0.0
      %v262 = vadd.f32 %v260, %v261
      %v263 = vsel %vm203, %v201, 0.0
      %v264 = vadd.f32 %v262, %v263
      %v265 = vsel %vm203, %v202, 0.0
      %v266 = vadd.f32 %v264, %v265
      %v267 = vrot.slane %v266, 4
      %v268 = vadd.f32 %v266, %v267
      %v269 = vrot.slane %v268, 2
      %v270 = vadd.f32 %v268, %v269
      %v271 = vrot.slane %v270, 1
      %v272 = vadd.f32 %v270, %v271
      %v273 = vrcp.pop 256.0
      %v274 = vmul.f32 %v272, %v273
      %v275 = vsub.f32 %v171, %v274
      %v276 = vsub.f32 %v172, %v274
      %v277 = vsub.f32 %v173, %v274
      %v278 = vsub.f32 %v174, %v274
      %v279 = vsub.f32 %v175, %v274
      %v280 = vsub.f32 %v176, %v274
      %v281 = vsub.f32 %v177, %v274
      %v282 = vsub.f32 %v178, %v274
      %v283 = vsub.f32 %v179, %v274
      %v284 = vsub.f32 %v180, %v274
      %v285 = vsub.f32 %v181, %v274
      %v286 = vsub.f32 %v182, %v274
      %v287 = vsub.f32 %v183, %v274
      %v288 = vsub.f32 %v184, %v274
      %v289 = vsub.f32 %v185, %v274
      %v290 = vsub.f32 %v186, %v274
      %v291 = vsub.f32 %v187, %v274
      %v292 = vsub.f32 %v188, %v274
      %v293 = vsub.f32 %v189, %v274
      %v294 = vsub.f32 %v190, %v274
      %v295 = vsub.f32 %v191, %v274
      %v296 = vsub.f32 %v192, %v274
      %v297 = vsub.f32 %v193, %v274
      %v298 = vsub.f32 %v194, %v274
      %v299 = vsub.f32 %v195, %v274
      %v300 = vsub.f32 %v196, %v274
      %v301 = vsub.f32 %v197, %v274
      %v302 = vsub.f32 %v198, %v274
      %v303 = vsub.f32 %v199, %v274
      %v304 = vsub.f32 %v200, %v274
      %v305 = vsub.f32 %v201, %v274
      %v306 = vsub.f32 %v202, %v274
      %v307 = vmul.f32 %v275, %v275
      %v308 = vmul.f32 %v276, %v276
      %v309 = vmul.f32 %v277, %v277
      %v310 = vmul.f32 %v278, %v278
      %v311 = vmul.f32 %v279, %v279
      %v312 = vmul.f32 %v280, %v280
      %v313 = vmul.f32 %v281, %v281
      %v314 = vmul.f32 %v282, %v282
      %v315 = vmul.f32 %v283, %v283
      %v316 = vmul.f32 %v284, %v284
      %v317 = vmul.f32 %v285, %v285
      %v318 = vmul.f32 %v286, %v286
      %v319 = vmul.f32 %v287, %v287
      %v320 = vmul.f32 %v288, %v288
      %v321 = vmul.f32 %v289, %v289
      %v322 = vmul.f32 %v290, %v290
      %v323 = vmul.f32 %v291, %v291
      %v324 = vmul.f32 %v292, %v292
      %v325 = vmul.f32 %v293, %v293
      %v326 = vmul.f32 %v294, %v294
      %v327 = vmul.f32 %v295, %v295
      %v328 = vmul.f32 %v296, %v296
      %v329 = vmul.f32 %v297, %v297
      %v330 = vmul.f32 %v298, %v298
      %v331 = vmul.f32 %v299, %v299
      %v332 = vmul.f32 %v300, %v300
      %v333 = vmul.f32 %v301, %v301
      %v334 = vmul.f32 %v302, %v302
      %v335 = vmul.f32 %v303, %v303
      %v336 = vmul.f32 %v304, %v304
      %v337 = vmul.f32 %v305, %v305
      %v338 = vmul.f32 %v306, %v306
      %v339 = vsel %vm203, %v307, 0.0
      %v340 = vsel %vm203, %v308, 0.0
      %v341 = vadd.f32 %v339, %v340
      %v342 = vsel %vm203, %v309, 0.0
      %v343 = vadd.f32 %v341, %v342
      %v344 = vsel %vm203, %v310, 0.0
      %v345 = vadd.f32 %v343, %v344
      %v346 = vsel %vm203, %v311, 0.0
      %v347 = vadd.f32 %v345, %v346
      %v348 = vsel %vm203, %v312, 0.0
      %v349 = vadd.f32 %v347, %v348
      %v350 = vsel %vm203, %v313, 0.0
      %v351 = vadd.f32 %v349, %v350
      %v352 = vsel %vm203, %v314, 0.0
      %v353 = vadd.f32 %v351, %v352
      %v354 = vsel %vm203, %v315, 0.0
      %v355 = vadd.f32 %v353, %v354
      %v356 = vsel %vm203, %v316, 0.0
      %v357 = vadd.f32 %v355, %v356
      %v358 = vsel %vm203, %v317, 0.0
      %v359 = vadd.f32 %v357, %v358
      %v360 = vsel %vm203, %v318, 0.0
      %v361 = vadd.f32 %v359, %v360
      %v362 = vsel %vm203, %v319, 0.0
      %v363 = vadd.f32 %v361, %v362
      %v364 = vsel %vm203, %v320, 0.0
      %v365 = vadd.f32 %v363, %v364
      %v366 = vsel %vm203, %v321, 0.0
      %v367 = vadd.f32 %v365, %v366
      %v368 = vsel %vm203, %v322, 0.0
      %v369 = vadd.f32 %v367, %v368
      %v370 = vsel %vm203, %v323, 0.0
      %v371 = vadd.f32 %v369, %v370
      %v372 = vsel %vm203, %v324, 0.0
      %v373 = vadd.f32 %v371, %v372
      %v374 = vsel %vm203, %v325, 0.0
      %v375 = vadd.f32 %v373, %v374
      %v376 = vsel %vm203, %v326, 0.0
      %v377 = vadd.f32 %v375, %v376
      %v378 = vsel %vm203, %v327, 0.0
      %v379 = vadd.f32 %v377, %v378
      %v380 = vsel %vm203, %v328, 0.0
      %v381 = vadd.f32 %v379, %v380
      %v382 = vsel %vm203, %v329, 0.0
      %v383 = vadd.f32 %v381, %v382
      %v384 = vsel %vm203, %v330, 0.0
      %v385 = vadd.f32 %v383, %v384
      %v386 = vsel %vm203, %v331, 0.0
      %v387 = vadd.f32 %v385, %v386
      %v388 = vsel %vm203, %v332, 0.0
      %v389 = vadd.f32 %v387, %v388
      %v390 = vsel %vm203, %v333, 0.0
      %v391 = vadd.f32 %v389, %v390
      %v392 = vsel %vm203, %v334, 0.0
      %v393 = vadd.f32 %v391, %v392
      %v394 = vsel %vm203, %v335, 0.0
      %v395 = vadd.f32 %v393, %v394
      %v396 = vsel %vm203, %v336, 0.0
      %v397 = vadd.f32 %v395, %v396
      %v398 = vsel %vm203, %v337, 0.0
      %v399 = vadd.f32 %v397, %v398
      %v400 = vsel %vm203, %v338, 0.0
      %v401 = vadd.f32 %v399, %v400
      %v402 = vrot.slane %v401, 4
      %v403 = vadd.f32 %v401, %v402
      %v404 = vrot.slane %v403, 2
      %v405 = vadd.f32 %v403, %v404
      %v406 = vrot.slane %v405, 1
      %v407 = vadd.f32 %v405, %v406
      %v408 = vmul.f32 %v407, %v273
      %v409 = vadd.f32 %v408, 1e-05
      %v410 = vrsqrt.pop %v409
      %v411 = vmul.f32 %v275, %v410
      %v412 = vmul.f32 %v276, %v410
      %v413 = vmul.f32 %v277, %v410
      %v414 = vmul.f32 %v278, %v410
      %v415 = vmul.f32 %v279, %v410
      %v416 = vmul.f32 %v280, %v410
      %v417 = vmul.f32 %v281, %v410
      %v418 = vmul.f32 %v282, %v410
      %v419 = vmul.f32 %v283, %v410
      %v420 = vmul.f32 %v284, %v410
      %v421 = vmul.f32 %v285, %v410
      %v422 = vmul.f32 %v286, %v410
      %v423 = vmul.f32 %v287, %v410
      %v424 = vmul.f32 %v288, %v410
      %v425 = vmul.f32 %v289, %v410
      %v426 = vmul.f32 %v290, %v410
      %v427 = vmul.f32 %v291, %v410
      %v428 = vmul.f32 %v292, %v410
      %v429 = vmul.f32 %v293, %v410
      %v430 = vmul.f32 %v294, %v410
      %v431 = vmul.f32 %v295, %v410
      %v432 = vmul.f32 %v296, %v410
      %v433 = vmul.f32 %v297, %v410
      %v434 = vmul.f32 %v298, %v410
      %v435 = vmul.f32 %v299, %v410
      %v436 = vmul.f32 %v300, %v410
      %v437 = vmul.f32 %v301, %v410
      %v438 = vmul.f32 %v302, %v410
      %v439 = vmul.f32 %v303, %v410
      %v440 = vmul.f32 %v304, %v410
      %v441 = vmul.f32 %v305, %v410
      %v442 = vmul.f32 %v306, %v410
      %v443 = vld [vmem:[%s1] sm:$0x1]
      %v445 = vlaneseq
      %v446 = vshrl.u32 %v445, 7
      %v447 = vsub.s32 0, %v446
      %v448 = vrot.slane %v443, %v447
      %v450 = vmul.f32 %v411, %v448
      %v451 = vmul.f32 %v412, %v448
      %v452 = vmul.f32 %v413, %v448
      %v453 = vmul.f32 %v414, %v448
      %v454 = vmul.f32 %v415, %v448
      %v455 = vmul.f32 %v416, %v448
      %v456 = vmul.f32 %v417, %v448
      %v457 = vmul.f32 %v418, %v448
      %v458 = vmul.f32 %v419, %v448
      %v459 = vmul.f32 %v420, %v448
      %v460 = vmul.f32 %v421, %v448
      %v461 = vmul.f32 %v422, %v448
      %v462 = vmul.f32 %v423, %v448
      %v463 = vmul.f32 %v424, %v448
      %v464 = vmul.f32 %v425, %v448
      %v465 = vmul.f32 %v426, %v448
      %v466 = vmul.f32 %v427, %v448
      %v467 = vmul.f32 %v428, %v448
      %v468 = vmul.f32 %v429, %v448
      %v469 = vmul.f32 %v430, %v448
      %v470 = vmul.f32 %v431, %v448
      %v471 = vmul.f32 %v432, %v448
      %v472 = vmul.f32 %v433, %v448
      %v473 = vmul.f32 %v434, %v448
      %v474 = vmul.f32 %v435, %v448
      %v475 = vmul.f32 %v436, %v448
      %v476 = vmul.f32 %v437, %v448
      %v477 = vmul.f32 %v438, %v448
      %v478 = vmul.f32 %v439, %v448
      %v479 = vmul.f32 %v440, %v448
      %v480 = vmul.f32 %v441, %v448
      %v481 = vmul.f32 %v442, %v448
      %v482 = vld [vmem:[%s2] sm:$0x1]
      %v484 = vlaneseq
      %v485 = vshrl.u32 %v484, 7
      %v486 = vsub.s32 0, %v485
      %v487 = vrot.slane %v482, %v486
      %v489 = vadd.f32 %v450, %v487
      %v490 = vadd.f32 %v451, %v487
      %v491 = vadd.f32 %v452, %v487
      %v492 = vadd.f32 %v453, %v487
      %v493 = vadd.f32 %v454, %v487
      %v494 = vadd.f32 %v455, %v487
      %v495 = vadd.f32 %v456, %v487
      %v496 = vadd.f32 %v457, %v487
      %v497 = vadd.f32 %v458, %v487
      %v498 = vadd.f32 %v459, %v487
      %v499 = vadd.f32 %v460, %v487
      %v500 = vadd.f32 %v461, %v487
      %v501 = vadd.f32 %v462, %v487
      %v502 = vadd.f32 %v463, %v487
      %v503 = vadd.f32 %v464, %v487
      %v504 = vadd.f32 %v465, %v487
      %v505 = vadd.f32 %v466, %v487
      %v506 = vadd.f32 %v467, %v487
      %v507 = vadd.f32 %v468, %v487
      %v508 = vadd.f32 %v469, %v487
      %v509 = vadd.f32 %v470, %v487
      %v510 = vadd.f32 %v471, %v487
      %v511 = vadd.f32 %v472, %v487
      %v512 = vadd.f32 %v473, %v487
      %v513 = vadd.f32 %v474, %v487
      %v514 = vadd.f32 %v475, %v487
      %v515 = vadd.f32 %v476, %v487
      %v516 = vadd.f32 %v477, %v487
      %v517 = vadd.f32 %v478, %v487
      %v518 = vadd.f32 %v479, %v487
      %v519 = vadd.f32 %v480, %v487
      %v520 = vadd.f32 %v481, %v487
      %v521 = vmax.f32 %v489, 0.0
      %v522 = vmax.f32 %v490, 0.0
      %v523 = vmax.f32 %v491, 0.0
      %v524 = vmax.f32 %v492, 0.0
      %v525 = vmax.f32 %v493, 0.0
      %v526 = vmax.f32 %v494, 0.0
      %v527 = vmax.f32 %v495, 0.0
      %v528 = vmax.f32 %v496, 0.0
      %v529 = vmax.f32 %v497, 0.0
      %v530 = vmax.f32 %v498, 0.0
      %v531 = vmax.f32 %v499, 0.0
      %v532 = vmax.f32 %v500, 0.0
      %v533 = vmax.f32 %v501, 0.0
      %v534 = vmax.f32 %v502, 0.0
      %v535 = vmax.f32 %v503, 0.0
      %v536 = vmax.f32 %v504, 0.0
      %v537 = vmax.f32 %v505, 0.0
      %v538 = vmax.f32 %v506, 0.0
      %v539 = vmax.f32 %v507, 0.0
      %v540 = vmax.f32 %v508, 0.0
      %v541 = vmax.f32 %v509, 0.0
      %v542 = vmax.f32 %v510, 0.0
      %v543 = vmax.f32 %v511, 0.0
      %v544 = vmax.f32 %v512, 0.0
      %v545 = vmax.f32 %v513, 0.0
      %v546 = vmax.f32 %v514, 0.0
      %v547 = vmax.f32 %v515, 0.0
      %v548 = vmax.f32 %v516, 0.0
      %v549 = vmax.f32 %v517, 0.0
      %v550 = vmax.f32 %v518, 0.0
      %v551 = vmax.f32 %v519, 0.0
      %v552 = vmax.f32 %v520, 0.0
      %553 = vst.msk [vmem:[%s170] sm:$0xff] %vm203, %v521
      %554 = vst.msk [vmem:[%s170 + $0x8] sm:$0xff] %vm203, %v522
      %555 = vst.msk [vmem:[%s170 + $0x10] sm:$0xff] %vm203, %v523
      %556 = vst.msk [vmem:[%s170 + $0x18] sm:$0xff] %vm203, %v524
      %557 = vst.msk [vmem:[%s170 + $0x20] sm:$0xff] %vm203, %v525
      %558 = vst.msk [vmem:[%s170 + $0x28] sm:$0xff] %vm203, %v526
      %559 = vst.msk [vmem:[%s170 + $0x30] sm:$0xff] %vm203, %v527
      %560 = vst.msk [vmem:[%s170 + $0x38] sm:$0xff] %vm203, %v528
      %561 = vst.msk [vmem:[%s170 + $0x40] sm:$0xff] %vm203, %v529
      %562 = vst.msk [vmem:[%s170 + $0x48] sm:$0xff] %vm203, %v530
      %563 = vst.msk [vmem:[%s170 + $0x50] sm:$0xff] %vm203, %v531
      %564 = vst.msk [vmem:[%s170 + $0x58] sm:$0xff] %vm203, %v532
      %565 = vst.msk [vmem:[%s170 + $0x60] sm:$0xff] %vm203, %v533
      %566 = vst.msk [vmem:[%s170 + $0x68] sm:$0xff] %vm203, %v534
      %567 = vst.msk [vmem:[%s170 + $0x70] sm:$0xff] %vm203, %v535
      %568 = vst.msk [vmem:[%s170 + $0x78] sm:$0xff] %vm203, %v536
      %569 = vst.msk [vmem:[%s170 + $0x80] sm:$0xff] %vm203, %v537
      %570 = vst.msk [vmem:[%s170 + $0x88] sm:$0xff] %vm203, %v538
      %571 = vst.msk [vmem:[%s170 + $0x90] sm:$0xff] %vm203, %v539
      %572 = vst.msk [vmem:[%s170 + $0x98] sm:$0xff] %vm203, %v540
      %573 = vst.msk [vmem:[%s170 + $0xa0] sm:$0xff] %vm203, %v541
      %574 = vst.msk [vmem:[%s170 + $0xa8] sm:$0xff] %vm203, %v542
      %575 = vst.msk [vmem:[%s170 + $0xb0] sm:$0xff] %vm203, %v543
      %576 = vst.msk [vmem:[%s170 + $0xb8] sm:$0xff] %vm203, %v544
      %577 = vst.msk [vmem:[%s170 + $0xc0] sm:$0xff] %vm203, %v545
      %578 = vst.msk [vmem:[%s170 + $0xc8] sm:$0xff] %vm203, %v546
      %579 = vst.msk [vmem:[%s170 + $0xd0] sm:$0xff] %vm203, %v547
      %580 = vst.msk [vmem:[%s170 + $0xd8] sm:$0xff] %vm203, %v548
      %581 = vst.msk [vmem:[%s170 + $0xe0] sm:$0xff] %vm203, %v549
      %582 = vst.msk [vmem:[%s170 + $0xe8] sm:$0xff] %vm203, %v550
      %583 = vst.msk [vmem:[%s170 + $0xf0] sm:$0xff] %vm203, %v551
      %584 = vst.msk [vmem:[%s170 + $0xf8] sm:$0xff] %vm203, %v552
      %p585 = scmp.lt.s32.totalorder %s14, 1
      %s586 = scalar_select %p585, %s14, 1
      %s587 = smul.addr %s586, 32
      %s588 = smul.addr %s587, 8
      %s589 = scalar_lea.vmem %s3, %s588
      // Predicated region
      $region33: #{generator_forward.38} parent=31 // pred_check
        %p590 = pneg %p100
      $region34: #{generator_forward.38} parent=31 // pred_check_branch
        %592 = sbr.rel (%p590) target = $region36
      $region35: #{generator_forward.38} parent=31 // pred_region
        _
      $region36: #{generator_forward.38} parent=31 // pred_fallthru
        _
    $region32: #{generator_forward.38} parent=5 // pred_fallthru
      _
    %p593 = scmp.le.s32.totalorder 2, %s9
    // Predicated region
    $region37: #{generator_forward.38} parent=5 // pred_check
      %p594 = pneg %p593
    $region38: #{generator_forward.38} parent=5 // pred_check_branch
      %596 = sbr.rel (%p594) target = $region40
    $region39: #{generator_forward.38} parent=5 // pred_region
      %s597 = ssub.s32 %s9, 2
      // Predicated region
      $region41: #{generator_forward.38} parent=39 // pred_check
        %p598 = pneg %p106
      $region42: #{generator_forward.38} parent=39 // pred_check_branch
        %600 = sbr.rel (%p598) target = $region44
      $region43: #{generator_forward.38} parent=39 // pred_region
        %p601 = scmp.lt.s32.totalorder %s15, 1
        %s602 = scalar_select %p601, %s15, 1
        %s603 = smul.addr %s602, 32
        %s604 = smul.addr %s603, 8
        %s605 = scalar_lea.vmem %s3, %s604
      $region44: #{generator_forward.38} parent=39 // pred_fallthru
        _
    $region40: #{generator_forward.38} parent=5 // pred_fallthru
      _
  $region6: #{generator_forward.38} parent=0 // loop_footer
    %s13 = sadd.s32 1, %s9
  $region7: #{generator_forward.38} parent=0 // loop_footer_branch
    %8 = sbr.rel target = $region3
  $region8: #{generator_forward.38} parent=0 // loop_exit
    _

// kernel: generator_forward.37
$region0: #{generator_forward.37}
  #allocation0 [shape = 'u32[]', space=smem, size = 0x4, offset = 0x4, fixed_abs, tag = 'smem constant byte address 0x4 - core index']
  #allocation1 [shape = 'u32[144,128]{1,0:T(1,128)}', space=vmem, size = 0x12000, scoped, tag = 'internal scratch']
  #allocation2 [shape = 'f32[512,128]{1,0:T(8,128)}', space=vmem, size = 0x40000, scoped, tag = 'scratch operand']
  %s0 = inlined_call_operand.vmem [shape: bf16[512,256], index: 0, kind: input, shape index: {}]
  %s1 = inlined_call_operand.vmem [shape: bf16[256,128], index: 1, kind: input, shape index: {}]
  %s2 = inlined_call_operand.vmem [shape: f32[1,128], index: 2, kind: input, shape index: {}]
  %s3 = inlined_call_operand.vmem [shape: f32[512,128], index: 3, kind: output, shape index: {}]
  %s4 = sld [smem:[#allocation0]]
  $region30: #{generator_forward.37} parent=0
    _
  %s6 = ssub.s32 1, %s4
  %s7 = scalar_select 0, %s6, %s4
  // Predicated region
  $region2: #{generator_forward.37} parent=0 // pred_check
    _
  $region3: #{generator_forward.37} parent=0 // pred_check_branch
    %9 = sbr.rel (0) target = $region5
  $region4: #{generator_forward.37} parent=0 // pred_region
    _
  $region5: #{generator_forward.37} parent=0 // pred_fallthru
    _
  // Predicated region
  $region6: #{generator_forward.37} parent=0 // pred_check
    _
  $region7: #{generator_forward.37} parent=0 // pred_check_branch
    %11 = sbr.rel (0) target = $region9
  $region8: #{generator_forward.37} parent=0 // pred_region
    _
  $region9: #{generator_forward.37} parent=0 // pred_fallthru
    _
  // Predicated region
  $region10: #{generator_forward.37} parent=0 // pred_check
    _
  $region11: #{generator_forward.37} parent=0 // pred_check_branch
    %13 = sbr.rel (0) target = $region13
  $region12: #{generator_forward.37} parent=0 // pred_region
    _
  $region13: #{generator_forward.37} parent=0 // pred_fallthru
    _
  %p15 = scmp.eq.s32.totalorder 0, 0
  // Predicated region
  $region14: #{generator_forward.37} parent=0 // pred_check
    %p16 = pneg %p15
  $region15: #{generator_forward.37} parent=0 // pred_check_branch
    %18 = sbr.rel (%p16) target = $region17
  $region16: #{generator_forward.37} parent=0 // pred_region
    %19 = vst [vmem:[#allocation2] sm:$0xff] 0.0
    %20 = vst [vmem:[#allocation2 + $0x8] sm:$0xff] 0.0
    %21 = vst [vmem:[#allocation2 + $0x10] sm:$0xff] 0.0
    %22 = vst [vmem:[#allocation2 + $0x18] sm:$0xff] 0.0
    %23 = vst [vmem:[#allocation2 + $0x20] sm:$0xff] 0.0
    %24 = vst [vmem:[#allocation2 + $0x28] sm:$0xff] 0.0
    %25 = vst [vmem:[#allocation2 + $0x30] sm:$0xff] 0.0
    %26 = vst [vmem:[#allocation2 + $0x38] sm:$0xff] 0.0
    %27 = vst [vmem:[#allocation2 + $0x40] sm:$0xff] 0.0
    %28 = vst [vmem:[#allocation2 + $0x48] sm:$0xff] 0.0
    %29 = vst [vmem:[#allocation2 + $0x50] sm:$0xff] 0.0
    %30 = vst [vmem:[#allocation2 + $0x58] sm:$0xff] 0.0
    %31 = vst [vmem:[#allocation2 + $0x60] sm:$0xff] 0.0
    %32 = vst [vmem:[#allocation2 + $0x68] sm:$0xff] 0.0
    %33 = vst [vmem:[#allocation2 + $0x70] sm:$0xff] 0.0
    %34 = vst [vmem:[#allocation2 + $0x78] sm:$0xff] 0.0
    %35 = vst [vmem:[#allocation2 + $0x80] sm:$0xff] 0.0
    %36 = vst [vmem:[#allocation2 + $0x88] sm:$0xff] 0.0
    %37 = vst [vmem:[#allocation2 + $0x90] sm:$0xff] 0.0
    %38 = vst [vmem:[#allocation2 + $0x98] sm:$0xff] 0.0
    %39 = vst [vmem:[#allocation2 + $0xa0] sm:$0xff] 0.0
    %40 = vst [vmem:[#allocation2 + $0xa8] sm:$0xff] 0.0
    %41 = vst [vmem:[#allocation2 + $0xb0] sm:$0xff] 0.0
    %42 = vst [vmem:[#allocation2 + $0xb8] sm:$0xff] 0.0
    %43 = vst [vmem:[#allocation2 + $0xc0] sm:$0xff] 0.0
    %44 = vst [vmem:[#allocation2 + $0xc8] sm:$0xff] 0.0
    %45 = vst [vmem:[#allocation2 + $0xd0] sm:$0xff] 0.0
    %46 = vst [vmem:[#allocation2 + $0xd8] sm:$0xff] 0.0
    %47 = vst [vmem:[#allocation2 + $0xe0] sm:$0xff] 0.0
    %48 = vst [vmem:[#allocation2 + $0xe8] sm:$0xff] 0.0
    %49 = vst [vmem:[#allocation2 + $0xf0] sm:$0xff] 0.0
    %50 = vst [vmem:[#allocation2 + $0xf8] sm:$0xff] 0.0
    %51 = vst [vmem:[#allocation2 + $0x100] sm:$0xff] 0.0
    %52 = vst [vmem:[#allocation2 + $0x108] sm:$0xff] 0.0
    %53 = vst [vmem:[#allocation2 + $0x110] sm:$0xff] 0.0
    %54 = vst [vmem:[#allocation2 + $0x118] sm:$0xff] 0.0
    %55 = vst [vmem:[#allocation2 + $0x120] sm:$0xff] 0.0
    %56 = vst [vmem:[#allocation2 + $0x128] sm:$0xff] 0.0
    %57 = vst [vmem:[#allocation2 + $0x130] sm:$0xff] 0.0
    %58 = vst [vmem:[#allocation2 + $0x138] sm:$0xff] 0.0
    %59 = vst [vmem:[#allocation2 + $0x140] sm:$0xff] 0.0
    %60 = vst [vmem:[#allocation2 + $0x148] sm:$0xff] 0.0
    %61 = vst [vmem:[#allocation2 + $0x150] sm:$0xff] 0.0
    %62 = vst [vmem:[#allocation2 + $0x158] sm:$0xff] 0.0
    %63 = vst [vmem:[#allocation2 + $0x160] sm:$0xff] 0.0
    %64 = vst [vmem:[#allocation2 + $0x168] sm:$0xff] 0.0
    %65 = vst [vmem:[#allocation2 + $0x170] sm:$0xff] 0.0
    %66 = vst [vmem:[#allocation2 + $0x178] sm:$0xff] 0.0
    %67 = vst [vmem:[#allocation2 + $0x180] sm:$0xff] 0.0
    %68 = vst [vmem:[#allocation2 + $0x188] sm:$0xff] 0.0
    %69 = vst [vmem:[#allocation2 + $0x190] sm:$0xff] 0.0
    %70 = vst [vmem:[#allocation2 + $0x198] sm:$0xff] 0.0
    %71 = vst [vmem:[#allocation2 + $0x1a0] sm:$0xff] 0.0
    %72 = vst [vmem:[#allocation2 + $0x1a8] sm:$0xff] 0.0
    %73 = vst [vmem:[#allocation2 + $0x1b0] sm:$0xff] 0.0
    %74 = vst [vmem:[#allocation2 + $0x1b8] sm:$0xff] 0.0
    %75 = vst [vmem:[#allocation2 + $0x1c0] sm:$0xff] 0.0
    %76 = vst [vmem:[#allocation2 + $0x1c8] sm:$0xff] 0.0
    %77 = vst [vmem:[#allocation2 + $0x1d0] sm:$0xff] 0.0
    %78 = vst [vmem:[#allocation2 + $0x1d8] sm:$0xff] 0.0
    %79 = vst [vmem:[#allocation2 + $0x1e0] sm:$0xff] 0.0
    %80 = vst [vmem:[#allocation2 + $0x1e8] sm:$0xff] 0.0
    %81 = vst [vmem:[#allocation2 + $0x1f0] sm:$0xff] 0.0
    %82 = vst [vmem:[#allocation2 + $0x1f8] sm:$0xff] 0.0
  $region17: #{generator_forward.37} parent=0 // pred_fallthru
    _
  %v83 = vld [vmem:[#allocation2] sm:$0xff]
  %v84 = vld [vmem:[#allocation2 + $0x8] sm:$0xff]
  %v85 = vld [vmem:[#allocation2 + $0x10] sm:$0xff]
  %v86 = vld [vmem:[#allocation2 + $0x18] sm:$0xff]
  %v87 = vld [vmem:[#allocation2 + $0x20] sm:$0xff]
  %v88 = vld [vmem:[#allocation2 + $0x28] sm:$0xff]
  %v89 = vld [vmem:[#allocation2 + $0x30] sm:$0xff]
  %v90 = vld [vmem:[#allocation2 + $0x38] sm:$0xff]
  %v91 = vld [vmem:[#allocation2 + $0x40] sm:$0xff]
  %v92 = vld [vmem:[#allocation2 + $0x48] sm:$0xff]
  %v93 = vld [vmem:[#allocation2 + $0x50] sm:$0xff]
  %v94 = vld [vmem:[#allocation2 + $0x58] sm:$0xff]
  %v95 = vld [vmem:[#allocation2 + $0x60] sm:$0xff]
  %v96 = vld [vmem:[#allocation2 + $0x68] sm:$0xff]
  %v97 = vld [vmem:[#allocation2 + $0x70] sm:$0xff]
  %v98 = vld [vmem:[#allocation2 + $0x78] sm:$0xff]
  %v99 = vld [vmem:[#allocation2 + $0x80] sm:$0xff]
  %v100 = vld [vmem:[#allocation2 + $0x88] sm:$0xff]
  %v101 = vld [vmem:[#allocation2 + $0x90] sm:$0xff]
  %v102 = vld [vmem:[#allocation2 + $0x98] sm:$0xff]
  %v103 = vld [vmem:[#allocation2 + $0xa0] sm:$0xff]
  %v104 = vld [vmem:[#allocation2 + $0xa8] sm:$0xff]
  %v105 = vld [vmem:[#allocation2 + $0xb0] sm:$0xff]
  %v106 = vld [vmem:[#allocation2 + $0xb8] sm:$0xff]
  %v107 = vld [vmem:[#allocation2 + $0xc0] sm:$0xff]
  %v108 = vld [vmem:[#allocation2 + $0xc8] sm:$0xff]
  %v109 = vld [vmem:[#allocation2 + $0xd0] sm:$0xff]
  %v110 = vld [vmem:[#allocation2 + $0xd8] sm:$0xff]
  %v111 = vld [vmem:[#allocation2 + $0xe0] sm:$0xff]
  %v112 = vld [vmem:[#allocation2 + $0xe8] sm:$0xff]
  %v113 = vld [vmem:[#allocation2 + $0xf0] sm:$0xff]
  %v114 = vld [vmem:[#allocation2 + $0xf8] sm:$0xff]
  %v115 = vld [vmem:[#allocation2 + $0x100] sm:$0xff]
  %v116 = vld [vmem:[#allocation2 + $0x108] sm:$0xff]
  %v117 = vld [vmem:[#allocation2 + $0x110] sm:$0xff]
  %v118 = vld [vmem:[#allocation2 + $0x118] sm:$0xff]
  %v119 = vld [vmem:[#allocation2 + $0x120] sm:$0xff]
  %v120 = vld [vmem:[#allocation2 + $0x128] sm:$0xff]
  %v121 = vld [vmem:[#allocation2 + $0x130] sm:$0xff]
  %v122 = vld [vmem:[#allocation2 + $0x138] sm:$0xff]
  %v123 = vld [vmem:[#allocation2 + $0x140] sm:$0xff]
  %v124 = vld [vmem:[#allocation2 + $0x148] sm:$0xff]
  %v125 = vld [vmem:[#allocation2 + $0x150] sm:$0xff]
  %v126 = vld [vmem:[#allocation2 + $0x158] sm:$0xff]
  %v127 = vld [vmem:[#allocation2 + $0x160] sm:$0xff]
  %v128 = vld [vmem:[#allocation2 + $0x168] sm:$0xff]
  %v129 = vld [vmem:[#allocation2 + $0x170] sm:$0xff]
  %v130 = vld [vmem:[#allocation2 + $0x178] sm:$0xff]
  %v131 = vld [vmem:[#allocation2 + $0x180] sm:$0xff]
  %v132 = vld [vmem:[#allocation2 + $0x188] sm:$0xff]
  %v133 = vld [vmem:[#allocation2 + $0x190] sm:$0xff]
  %v134 = vld [vmem:[#allocation2 + $0x198] sm:$0xff]
  %v135 = vld [vmem:[#allocation2 + $0x1a0] sm:$0xff]
  %v136 = vld [vmem:[#allocation2 + $0x1a8] sm:$0xff]
  %v137 = vld [vmem:[#allocation2 + $0x1b0] sm:$0xff]
  %v138 = vld [vmem:[#allocation2 + $0x1b8] sm:$0xff]
  %v139 = vld [vmem:[#allocation2 + $0x1c0] sm:$0xff]
  %v140 = vld [vmem:[#allocation2 + $0x1c8] sm:$0xff]
  %v141 = vld [vmem:[#allocation2 + $0x1d0] sm:$0xff]
  %v142 = vld [vmem:[#allocation2 + $0x1d8] sm:$0xff]
  %v143 = vld [vmem:[#allocation2 + $0x1e0] sm:$0xff]
  %v144 = vld [vmem:[#allocation2 + $0x1e8] sm:$0xff]
  %v145 = vld [vmem:[#allocation2 + $0x1f0] sm:$0xff]
  %v146 = vld [vmem:[#allocation2 + $0x1f8] sm:$0xff]
  %v147 = vld [vmem:[%s0] sm:$0xff]
  %v148 = vld [vmem:[%s0 + $0x8] sm:$0xff]
  %v149 = vld [vmem:[%s0 + $0x10] sm:$0xff]
  %v150 = vld [vmem:[%s0 + $0x18] sm:$0xff]
  %v151 = vld [vmem:[%s0 + $0x20] sm:$0xff]
  %v152 = vld [vmem:[%s0 + $0x28] sm:$0xff]
  %v153 = vld [vmem:[%s0 + $0x30] sm:$0xff]
  %v154 = vld [vmem:[%s0 + $0x38] sm:$0xff]
  %v155 = vld [vmem:[%s0 + $0x40] sm:$0xff]
  %v156 = vld [vmem:[%s0 + $0x48] sm:$0xff]
  %v157 = vld [vmem:[%s0 + $0x50] sm:$0xff]
  %v158 = vld [vmem:[%s0 + $0x58] sm:$0xff]
  %v159 = vld [vmem:[%s0 + $0x60] sm:$0xff]
  %v160 = vld [vmem:[%s0 + $0x68] sm:$0xff]
  %v161 = vld [vmem:[%s0 + $0x70] sm:$0xff]
  %v162 = vld [vmem:[%s0 + $0x78] sm:$0xff]
  %v163 = vld [vmem:[%s0 + $0x80] sm:$0xff]
  %v164 = vld [vmem:[%s0 + $0x88] sm:$0xff]
  %v165 = vld [vmem:[%s0 + $0x90] sm:$0xff]
  %v166 = vld [vmem:[%s0 + $0x98] sm:$0xff]
  %v167 = vld [vmem:[%s0 + $0xa0] sm:$0xff]
  %v168 = vld [vmem:[%s0 + $0xa8] sm:$0xff]
  %v169 = vld [vmem:[%s0 + $0xb0] sm:$0xff]
  %v170 = vld [vmem:[%s0 + $0xb8] sm:$0xff]
  %v171 = vld [vmem:[%s0 + $0xc0] sm:$0xff]
  %v172 = vld [vmem:[%s0 + $0xc8] sm:$0xff]
  %v173 = vld [vmem:[%s0 + $0xd0] sm:$0xff]
  %v174 = vld [vmem:[%s0 + $0xd8] sm:$0xff]
  %v175 = vld [vmem:[%s0 + $0xe0] sm:$0xff]
  %v176 = vld [vmem:[%s0 + $0xe8] sm:$0xff]
  %v177 = vld [vmem:[%s0 + $0xf0] sm:$0xff]
  %v178 = vld [vmem:[%s0 + $0xf8] sm:$0xff]
  %v179 = vld [vmem:[%s0 + $0x100] sm:$0xff]
  %v180 = vld [vmem:[%s0 + $0x108] sm:$0xff]
  %v181 = vld [vmem:[%s0 + $0x110] sm:$0xff]
  %v182 = vld [vmem:[%s0 + $0x118] sm:$0xff]
  %v183 = vld [vmem:[%s0 + $0x120] sm:$0xff]
  %v184 = vld [vmem:[%s0 + $0x128] sm:$0xff]
  %v185 = vld [vmem:[%s0 + $0x130] sm:$0xff]
  %v186 = vld [vmem:[%s0 + $0x138] sm:$0xff]
  %v187 = vld [vmem:[%s0 + $0x140] sm:$0xff]
  %v188 = vld [vmem:[%s0 + $0x148] sm:$0xff]
  %v189 = vld [vmem:[%s0 + $0x150] sm:$0xff]
  %v190 = vld [vmem:[%s0 + $0x158] sm:$0xff]
  %v191 = vld [vmem:[%s0 + $0x160] sm:$0xff]
  %v192 = vld [vmem:[%s0 + $0x168] sm:$0xff]
  %v193 = vld [vmem:[%s0 + $0x170] sm:$0xff]
  %v194 = vld [vmem:[%s0 + $0x178] sm:$0xff]
  %v195 = vld [vmem:[%s0 + $0x180] sm:$0xff]
  %v196 = vld [vmem:[%s0 + $0x188] sm:$0xff]
  %v197 = vld [vmem:[%s0 + $0x190] sm:$0xff]
  %v198 = vld [vmem:[%s0 + $0x198] sm:$0xff]
  %v199 = vld [vmem:[%s0 + $0x1a0] sm:$0xff]
  %v200 = vld [vmem:[%s0 + $0x1a8] sm:$0xff]
  %v201 = vld [vmem:[%s0 + $0x1b0] sm:$0xff]
  %v202 = vld [vmem:[%s0 + $0x1b8] sm:$0xff]
  %v203 = vld [vmem:[%s0 + $0x1c0] sm:$0xff]
  %v204 = vld [vmem:[%s0 + $0x1c8] sm:$0xff]
  %v205 = vld [vmem:[%s0 + $0x1d0] sm:$0xff]
  %v206 = vld [vmem:[%s0 + $0x1d8] sm:$0xff]
  %v207 = vld [vmem:[%s0 + $0x1e0] sm:$0xff]
  %v208 = vld [vmem:[%s0 + $0x1e8] sm:$0xff]
  %v209 = vld [vmem:[%s0 + $0x1f0] sm:$0xff]
  %v210 = vld [vmem:[%s0 + $0x1f8] sm:$0xff]
  %v211 = vld [vmem:[%s1] sm:$0xf]
  %v212 = vld [vmem:[%s1 + $0x4] sm:$0xf]
  %v213 = vld [vmem:[%s1 + $0x8] sm:$0xf]
  %v214 = vld [vmem:[%s1 + $0xc] sm:$0xf]
  %v215 = vld [vmem:[%s1 + $0x10] sm:$0xf]
  %v216 = vld [vmem:[%s1 + $0x14] sm:$0xf]
  %v217 = vld [vmem:[%s1 + $0x18] sm:$0xf]
  %v218 = vld [vmem:[%s1 + $0x1c] sm:$0xf]
  %v219 = vld [vmem:[%s1 + $0x20] sm:$0xf]
  %v220 = vld [vmem:[%s1 + $0x24] sm:$0xf]
  %v221 = vld [vmem:[%s1 + $0x28] sm:$0xf]
  %v222 = vld [vmem:[%s1 + $0x2c] sm:$0xf]
  %v223 = vld [vmem:[%s1 + $0x30] sm:$0xf]
  %v224 = vld [vmem:[%s1 + $0x34] sm:$0xf]
  %v225 = vld [vmem:[%s1 + $0x38] sm:$0xf]
  %v226 = vld [vmem:[%s1 + $0x3c] sm:$0xf]
  %v227 = vld [vmem:[%s1 + $0x40] sm:$0xf]
  %v228 = vld [vmem:[%s1 + $0x44] sm:$0xf]
  %v229 = vld [vmem:[%s1 + $0x48] sm:$0xf]
  %v230 = vld [vmem:[%s1 + $0x4c] sm:$0xf]
  %v231 = vld [vmem:[%s1 + $0x50] sm:$0xf]
  %v232 = vld [vmem:[%s1 + $0x54] sm:$0xf]
  %v233 = vld [vmem:[%s1 + $0x58] sm:$0xf]
  %v234 = vld [vmem:[%s1 + $0x5c] sm:$0xf]
  %v235 = vld [vmem:[%s1 + $0x60] sm:$0xf]
  %v236 = vld [vmem:[%s1 + $0x64] sm:$0xf]
  %v237 = vld [vmem:[%s1 + $0x68] sm:$0xf]
  %v238 = vld [vmem:[%s1 + $0x6c] sm:$0xf]
  %v239 = vld [vmem:[%s1 + $0x70] sm:$0xf]
  %v240 = vld [vmem:[%s1 + $0x74] sm:$0xf]
  %v241 = vld [vmem:[%s1 + $0x78] sm:$0xf]
  %v242 = vld [vmem:[%s1 + $0x7c] sm:$0xf]
  %v307 = vunpack.c.l.b16 %v147
  %v308 = vunpack.c.h.b16 %v147
  %v309 = vunpack.c.l.b16 %v148
  %v310 = vunpack.c.h.b16 %v148
  %v311 = vunpack.c.l.b16 %v149
  %v312 = vunpack.c.h.b16 %v149
  %v313 = vunpack.c.l.b16 %v150
  %v314 = vunpack.c.h.b16 %v150
  %v315 = vunpack.c.l.b16 %v151
  %v316 = vunpack.c.h.b16 %v151
  %v317 = vunpack.c.l.b16 %v152
  %v318 = vunpack.c.h.b16 %v152
  %v319 = vunpack.c.l.b16 %v153
  %v320 = vunpack.c.h.b16 %v153
  %v321 = vunpack.c.l.b16 %v154
  %v322 = vunpack.c.h.b16 %v154
  %v323 = vunpack.c.l.b16 %v155
  %v324 = vunpack.c.h.b16 %v155
  %v325 = vunpack.c.l.b16 %v156
  %v326 = vunpack.c.h.b16 %v156
  %v327 = vunpack.c.l.b16 %v157
  %v328 = vunpack.c.h.b16 %v157
  %v329 = vunpack.c.l.b16 %v158
  %v330 = vunpack.c.h.b16 %v158
  %v331 = vunpack.c.l.b16 %v159
  %v332 = vunpack.c.h.b16 %v159
  %v333 = vunpack.c.l.b16 %v160
  %v334 = vunpack.c.h.b16 %v160
  %v335 = vunpack.c.l.b16 %v161
  %v336 = vunpack.c.h.b16 %v161
  %v337 = vunpack.c.l.b16 %v162
  %v338 = vunpack.c.h.b16 %v162
  %v339 = vunpack.c.l.b16 %v163
  %v340 = vunpack.c.h.b16 %v163
  %v341 = vunpack.c.l.b16 %v164
  %v342 = vunpack.c.h.b16 %v164
  %v343 = vunpack.c.l.b16 %v165
  %v344 = vunpack.c.h.b16 %v165
  %v345 = vunpack.c.l.b16 %v166
  %v346 = vunpack.c.h.b16 %v166
  %v347 = vunpack.c.l.b16 %v167
  %v348 = vunpack.c.h.b16 %v167
  %v349 = vunpack.c.l.b16 %v168
  %v350 = vunpack.c.h.b16 %v168
  %v351 = vunpack.c.l.b16 %v169
  %v352 = vunpack.c.h.b16 %v169
  %v353 = vunpack.c.l.b16 %v170
  %v354 = vunpack.c.h.b16 %v170
  %v355 = vunpack.c.l.b16 %v171
  %v356 = vunpack.c.h.b16 %v171
  %v357 = vunpack.c.l.b16 %v172
  %v358 = vunpack.c.h.b16 %v172
  %v359 = vunpack.c.l.b16 %v173
  %v360 = vunpack.c.h.b16 %v173
  %v361 = vunpack.c.l.b16 %v174
  %v362 = vunpack.c.h.b16 %v174
  %v363 = vunpack.c.l.b16 %v175
  %v364 = vunpack.c.h.b16 %v175
  %v365 = vunpack.c.l.b16 %v176
  %v366 = vunpack.c.h.b16 %v176
  %v367 = vunpack.c.l.b16 %v177
  %v368 = vunpack.c.h.b16 %v177
  %v369 = vunpack.c.l.b16 %v178
  %v370 = vunpack.c.h.b16 %v178
  %v371 = vunpack.c.l.b16 %v179
  %v372 = vunpack.c.h.b16 %v179
  %v373 = vunpack.c.l.b16 %v180
  %v374 = vunpack.c.h.b16 %v180
  %v375 = vunpack.c.l.b16 %v181
  %v376 = vunpack.c.h.b16 %v181
  %v377 = vunpack.c.l.b16 %v182
  %v378 = vunpack.c.h.b16 %v182
  %v379 = vunpack.c.l.b16 %v183
  %v380 = vunpack.c.h.b16 %v183
  %v381 = vunpack.c.l.b16 %v184
  %v382 = vunpack.c.h.b16 %v184
  %v383 = vunpack.c.l.b16 %v185
  %v384 = vunpack.c.h.b16 %v185
  %v385 = vunpack.c.l.b16 %v186
  %v386 = vunpack.c.h.b16 %v186
  %v387 = vunpack.c.l.b16 %v187
  %v388 = vunpack.c.h.b16 %v187
  %v389 = vunpack.c.l.b16 %v188
  %v390 = vunpack.c.h.b16 %v188
  %v391 = vunpack.c.l.b16 %v189
  %v392 = vunpack.c.h.b16 %v189
  %v393 = vunpack.c.l.b16 %v190
  %v394 = vunpack.c.h.b16 %v190
  %v395 = vunpack.c.l.b16 %v191
  %v396 = vunpack.c.h.b16 %v191
  %v397 = vunpack.c.l.b16 %v192
  %v398 = vunpack.c.h.b16 %v192
  %v399 = vunpack.c.l.b16 %v193
  %v400 = vunpack.c.h.b16 %v193
  %v401 = vunpack.c.l.b16 %v194
  %v402 = vunpack.c.h.b16 %v194
  %v403 = vunpack.c.l.b16 %v195
  %v404 = vunpack.c.h.b16 %v195
  %v405 = vunpack.c.l.b16 %v196
  %v406 = vunpack.c.h.b16 %v196
  %v407 = vunpack.c.l.b16 %v197
  %v408 = vunpack.c.h.b16 %v197
  %v409 = vunpack.c.l.b16 %v198
  %v410 = vunpack.c.h.b16 %v198
  %v411 = vunpack.c.l.b16 %v199
  %v412 = vunpack.c.h.b16 %v199
  %v413 = vunpack.c.l.b16 %v200
  %v414 = vunpack.c.h.b16 %v200
  %v415 = vunpack.c.l.b16 %v201
  %v416 = vunpack.c.h.b16 %v201
  %v417 = vunpack.c.l.b16 %v202
  %v418 = vunpack.c.h.b16 %v202
  %v419 = vunpack.c.l.b16 %v203
  %v420 = vunpack.c.h.b16 %v203
  %v421 = vunpack.c.l.b16 %v204
  %v422 = vunpack.c.h.b16 %v204
  %v423 = vunpack.c.l.b16 %v205
  %v424 = vunpack.c.h.b16 %v205
  %v425 = vunpack.c.l.b16 %v206
  %v426 = vunpack.c.h.b16 %v206
  %v427 = vunpack.c.l.b16 %v207
  %v428 = vunpack.c.h.b16 %v207
  %v429 = vunpack.c.l.b16 %v208
  %v430 = vunpack.c.h.b16 %v208
  %v431 = vunpack.c.l.b16 %v209
  %v432 = vunpack.c.h.b16 %v209
  %v433 = vunpack.c.l.b16 %v210
  %v434 = vunpack.c.h.b16 %v210
  %v435 = vpack.c.b16 %v309, %v307
  %v436 = vpack.c.b16 %v310, %v308
  %v437 = vpack.c.b16 %v313, %v311
  %v438 = vpack.c.b16 %v314, %v312
  %v439 = vpack.c.b16 %v317, %v315
  %v440 = vpack.c.b16 %v318, %v316
  %v441 = vpack.c.b16 %v321, %v319
  %v442 = vpack.c.b16 %v322, %v320
  %v443 = vpack.c.b16 %v325, %v323
  %v444 = vpack.c.b16 %v326, %v324
  %v445 = vpack.c.b16 %v329, %v327
  %v446 = vpack.c.b16 %v330, %v328
  %v447 = vpack.c.b16 %v333, %v331
  %v448 = vpack.c.b16 %v334, %v332
  %v449 = vpack.c.b16 %v337, %v335
  %v450 = vpack.c.b16 %v338, %v336
  %v451 = vpack.c.b16 %v341, %v339
  %v452 = vpack.c.b16 %v342, %v340
  %v453 = vpack.c.b16 %v345, %v343
  %v454 = vpack.c.b16 %v346, %v344
  %v455 = vpack.c.b16 %v349, %v347
  %v456 = vpack.c.b16 %v350, %v348
  %v457 = vpack.c.b16 %v353, %v351
  %v458 = vpack.c.b16 %v354, %v352
  %v459 = vpack.c.b16 %v357, %v355
  %v460 = vpack.c.b16 %v358, %v356
  %v461 = vpack.c.b16 %v361, %v359
  %v462 = vpack.c.b16 %v362, %v360
  %v463 = vpack.c.b16 %v365, %v363
  %v464 = vpack.c.b16 %v366, %v364
  %v465 = vpack.c.b16 %v369, %v367
  %v466 = vpack.c.b16 %v370, %v368
  %v467 = vpack.c.b16 %v373, %v371
  %v468 = vpack.c.b16 %v374, %v372
  %v469 = vpack.c.b16 %v377, %v375
  %v470 = vpack.c.b16 %v378, %v376
  %v471 = vpack.c.b16 %v381, %v379
  %v472 = vpack.c.b16 %v382, %v380
  %v473 = vpack.c.b16 %v385, %v383
  %v474 = vpack.c.b16 %v386, %v384
  %v475 = vpack.c.b16 %v389, %v387
  %v476 = vpack.c.b16 %v390, %v388
  %v477 = vpack.c.b16 %v393, %v391
  %v478 = vpack.c.b16 %v394, %v392
  %v479 = vpack.c.b16 %v397, %v395
  %v480 = vpack.c.b16 %v398, %v396
  %v481 = vpack.c.b16 %v401, %v399
  %v482 = vpack.c.b16 %v402, %v400
  %v483 = vpack.c.b16 %v405, %v403
  %v484 = vpack.c.b16 %v406, %v404
  %v485 = vpack.c.b16 %v409, %v407
  %v486 = vpack.c.b16 %v410, %v408
  %v487 = vpack.c.b16 %v413, %v411
  %v488 = vpack.c.b16 %v414, %v412
  %v489 = vpack.c.b16 %v417, %v415
  %v490 = vpack.c.b16 %v418, %v416
  %v491 = vpack.c.b16 %v421, %v419
  %v492 = vpack.c.b16 %v422, %v420
  %v493 = vpack.c.b16 %v425, %v423
  %v494 = vpack.c.b16 %v426, %v424
  %v495 = vpack.c.b16 %v429, %v427
  %v496 = vpack.c.b16 %v430, %v428
  %v497 = vpack.c.b16 %v433, %v431
  %v498 = vpack.c.b16 %v434, %v432
  %v595 = vunpack.c.l.b16 %v211
  %v596 = vunpack.c.l.b16 %v212
  %v597 = vunpack.c.l.b16 %v213
  %v598 = vunpack.c.l.b16 %v214
  %v599 = vunpack.c.l.b16 %v215
  %v600 = vunpack.c.l.b16 %v216
  %v601 = vunpack.c.l.b16 %v217
  %v602 = vunpack.c.l.b16 %v218
  %v603 = vunpack.c.l.b16 %v219
  %v604 = vunpack.c.l.b16 %v220
  %v605 = vunpack.c.l.b16 %v221
  %v606 = vunpack.c.l.b16 %v222
  %v607 = vunpack.c.l.b16 %v223
  %v608 = vunpack.c.l.b16 %v224
  %v609 = vunpack.c.l.b16 %v225
  %v610 = vunpack.c.l.b16 %v226
  %v611 = vunpack.c.l.b16 %v227
  %v612 = vunpack.c.l.b16 %v228
  %v613 = vunpack.c.l.b16 %v229
  %v614 = vunpack.c.l.b16 %v230
  %v615 = vunpack.c.l.b16 %v231
  %v616 = vunpack.c.l.b16 %v232
  %v617 = vunpack.c.l.b16 %v233
  %v618 = vunpack.c.l.b16 %v234
  %v619 = vunpack.c.l.b16 %v235
  %v620 = vunpack.c.l.b16 %v236
  %v621 = vunpack.c.l.b16 %v237
  %v622 = vunpack.c.l.b16 %v238
  %v623 = vunpack.c.l.b16 %v239
  %v624 = vunpack.c.l.b16 %v240
  %v625 = vunpack.c.l.b16 %v241
  %v626 = vunpack.c.l.b16 %v242
  %v627 = vpack.c.b16 %v596, %v595
  %v628 = vpack.c.b16 %v598, %v597
  %v629 = vpack.c.b16 %v600, %v599
  %v630 = vpack.c.b16 %v602, %v601
  %v631 = vpack.c.b16 %v604, %v603
  %v632 = vpack.c.b16 %v606, %v605
  %v633 = vpack.c.b16 %v608, %v607
  %v634 = vpack.c.b16 %v610, %v609
  %v635 = vpack.c.b16 %v612, %v611
  %v636 = vpack.c.b16 %v614, %v613
  %v637 = vpack.c.b16 %v616, %v615
  %v638 = vpack.c.b16 %v618, %v617
  %v639 = vpack.c.b16 %v620, %v619
  %v640 = vpack.c.b16 %v622, %v621
  %v641 = vpack.c.b16 %v624, %v623
  %v642 = vpack.c.b16 %v626, %v625
  %659 = vmatprep.subr.bf16.mxu0 0
  %660 = vmatpush1.bf16.msra.mxu0 %v634
  %661 = vmatprep.subr.bf16.mxu0 0
  %662 = vmatpush1.bf16.msra.mxu0 %v633
  %663 = vmatprep.subr.bf16.mxu0 0
  %664 = vmatpush1.bf16.msra.mxu0 %v632
  %665 = vmatprep.subr.bf16.mxu0 0
  %666 = vmatpush1.bf16.msra.mxu0 %v631
  %667 = vmatprep.subr.bf16.mxu0 0
  %668 = vmatpush1.bf16.msra.mxu0 %v630
  %669 = vmatprep.subr.bf16.mxu0 0
  %670 = vmatpush1.bf16.msra.mxu0 %v629
  %671 = vmatprep.subr.bf16.mxu0 0
  %672 = vmatpush1.bf16.msra.mxu0 %v628
  %673 = vmatprep.subr.bf16.mxu0 0
  %674 = vmatpush1.bf16.msra.mxu0 %v627
  %675 = vmatprep.subr.bf16.mxu0 0
  %676 = vmatpush2.bf16.msra.mxu0 %v642
  %677 = vmatprep.subr.bf16.mxu0 0
  %678 = vmatpush2.bf16.msra.mxu0 %v641
  %679 = vmatprep.subr.bf16.mxu0 0
  %680 = vmatpush2.bf16.msra.mxu0 %v640
  %681 = vmatprep.subr.bf16.mxu0 0
  %682 = vmatpush2.bf16.msra.mxu0 %v639
  %683 = vmatprep.subr.bf16.mxu0 0
  %684 = vmatpush2.bf16.msra.mxu0 %v638
  %685 = vmatprep.subr.bf16.mxu0 0
  %686 = vmatpush2.bf16.msra.mxu0 %v637
  %687 = vmatprep.subr.bf16.mxu0 0
  %688 = vmatpush2.bf16.msra.mxu0 %v636
  %689 = vmatprep.subr.bf16.mxu0 0
  %690 = vmatpush2.bf16.msra.mxu0 %v635
  %691 = vmatprep.mubr.bf16.mxu0 %v436
  %692 = vmatmul.mubr.bf16.gmra.mxu0 %v435
  %v693 = vpop.f32.mrf.mxu0
  %v694 = vadd.f32 0.0, %v693
  %v695 = vpop.f32.mrf.mxu0
  %v696 = vpop.f32.mrf.mxu0
  %v697 = vadd.f32 0.0, %v696
  %v698 = vpop.f32.mrf.mxu0
  %699 = vmatprep.mubr.bf16.mxu0 %v438
  %700 = vmatmul.mubr.bf16.gmra.mxu0 %v437
  %v701 = vpop.f32.mrf.mxu0
  %v702 = vadd.f32 0.0, %v701
  %v703 = vpop.f32.mrf.mxu0
  %v704 = vpop.f32.mrf.mxu0
  %v705 = vadd.f32 0.0, %v704
  %v706 = vpop.f32.mrf.mxu0
  %707 = vmatprep.mubr.bf16.mxu0 %v440
  %708 = vmatmul.mubr.bf16.gmra.mxu0 %v439
  %v709 = vpop.f32.mrf.mxu0
  %v710 = vadd.f32 0.0, %v709
  %v711 = vpop.f32.mrf.mxu0
  %v712 = vpop.f32.mrf.mxu0
  %v713 = vadd.f32 0.0, %v712
  %v714 = vpop.f32.mrf.mxu0
  %715 = vmatprep.mubr.bf16.mxu0 %v442
  %716 = vmatmul.mubr.bf16.gmra.mxu0 %v441
  %v717 = vpop.f32.mrf.mxu0
  %v718 = vadd.f32 0.0, %v717
  %v719 = vpop.f32.mrf.mxu0
  %v720 = vpop.f32.mrf.mxu0
  %v721 = vadd.f32 0.0, %v720
  %v722 = vpop.f32.mrf.mxu0
  %723 = vmatprep.mubr.bf16.mxu0 %v444
  %724 = vmatmul.mubr.bf16.gmra.mxu0 %v443
  %v725 = vpop.f32.mrf.mxu0
  %v726 = vadd.f32 0.0, %v725
  %v727 = vpop.f32.mrf.mxu0
  %v728 = vpop.f32.mrf.mxu0
  %v729 = vadd.f32 0.0, %v728
  %v730 = vpop.f32.mrf.mxu0
  %731 = vmatprep.mubr.bf16.mxu0 %v446
  %732 = vmatmul.mubr.bf16.gmra.mxu0 %v445
  %v733 = vpop.f32.mrf.mxu0
  %v734 = vadd.f32 0.0, %v733
  %v735 = vpop.f32.mrf.mxu0
  %v736 = vpop.f32.mrf.mxu0
  %v737 = vadd.f32 0.0, %v736
  %v738 = vpop.f32.mrf.mxu0
  %739 = vmatprep.mubr.bf16.mxu0 %v448
  %740 = vmatmul.mubr.bf16.gmra.mxu0 %v447
  %v741 = vpop.f32.mrf.mxu0
  %v742 = vadd.f32 0.0, %v741
  %v743 = vpop.f32.mrf.mxu0
  %v744 = vpop.f32.mrf.mxu0
  %v745 = vadd.f32 0.0, %v744
  %v746 = vpop.f32.mrf.mxu0
  %747 = vmatprep.mubr.bf16.mxu0 %v450
  %748 = vmatmul.mubr.bf16.gmra.mxu0 %v449
  %v749 = vpop.f32.mrf.mxu0
  %v750 = vadd.f32 0.0, %v749
  %v751 = vpop.f32.mrf.mxu0
  %v752 = vpop.f32.mrf.mxu0
  %v753 = vadd.f32 0.0, %v752
  %v754 = vpop.f32.mrf.mxu0
  %755 = vmatprep.mubr.bf16.mxu0 %v452
  %756 = vmatmul.mubr.bf16.gmra.mxu0 %v451
  %v757 = vpop.f32.mrf.mxu0
  %v758 = vadd.f32 0.0, %v757
  %v759 = vpop.f32.mrf.mxu0
  %v760 = vpop.f32.mrf.mxu0
  %v761 = vadd.f32 0.0, %v760
  %v762 = vpop.f32.mrf.mxu0
  %763 = vmatprep.mubr.bf16.mxu0 %v454
  %764 = vmatmul.mubr.bf16.gmra.mxu0 %v453
  %v765 = vpop.f32.mrf.mxu0
  %v766 = vadd.f32 0.0, %v765
  %v767 = vpop.f32.mrf.mxu0
  %v768 = vpop.f32.mrf.mxu0
  %v769 = vadd.f32 0.0, %v768
  %v770 = vpop.f32.mrf.mxu0
  %771 = vmatprep.mubr.bf16.mxu0 %v456
  %772 = vmatmul.mubr.bf16.gmra.mxu0 %v455
  %v773 = vpop.f32.mrf.mxu0
  %v774 = vadd.f32 0.0, %v773
  %v775 = vpop.f32.mrf.mxu0
  %v776 = vpop.f32.mrf.mxu0
  %v777 = vadd.f32 0.0, %v776
  %v778 = vpop.f32.mrf.mxu0
  %779 = vmatprep.mubr.bf16.mxu0 %v458
  %780 = vmatmul.mubr.bf16.gmra.mxu0 %v457
  %v781 = vpop.f32.mrf.mxu0
  %v782 = vadd.f32 0.0, %v781
  %v783 = vpop.f32.mrf.mxu0
  %v784 = vpop.f32.mrf.mxu0
  %v785 = vadd.f32 0.0, %v784
  %v786 = vpop.f32.mrf.mxu0
  %787 = vmatprep.mubr.bf16.mxu0 %v460
  %788 = vmatmul.mubr.bf16.gmra.mxu0 %v459
  %v789 = vpop.f32.mrf.mxu0
  %v790 = vadd.f32 0.0, %v789
  %v791 = vpop.f32.mrf.mxu0
  %v792 = vpop.f32.mrf.mxu0
  %v793 = vadd.f32 0.0, %v792
  %v794 = vpop.f32.mrf.mxu0
  %795 = vmatprep.mubr.bf16.mxu0 %v462
  %796 = vmatmul.mubr.bf16.gmra.mxu0 %v461
  %v797 = vpop.f32.mrf.mxu0
  %v798 = vadd.f32 0.0, %v797
  %v799 = vpop.f32.mrf.mxu0
  %v800 = vpop.f32.mrf.mxu0
  %v801 = vadd.f32 0.0, %v800
  %v802 = vpop.f32.mrf.mxu0
  %803 = vmatprep.mubr.bf16.mxu0 %v464
  %804 = vmatmul.mubr.bf16.gmra.mxu0 %v463
  %v805 = vpop.f32.mrf.mxu0
  %v806 = vadd.f32 0.0, %v805
  %v807 = vpop.f32.mrf.mxu0
  %v808 = vpop.f32.mrf.mxu0
  %v809 = vadd.f32 0.0, %v808
  %v810 = vpop.f32.mrf.mxu0
  %811 = vmatprep.mubr.bf16.mxu0 %v466
  %812 = vmatmul.mubr.bf16.gmra.mxu0 %v465
  %v813 = vpop.f32.mrf.mxu0
  %v814 = vadd.f32 0.0, %v813
  %v815 = vpop.f32.mrf.mxu0
  %v816 = vpop.f32.mrf.mxu0
  %v817 = vadd.f32 0.0, %v816
  %v818 = vpop.f32.mrf.mxu0
  %819 = vmatprep.mubr.bf16.mxu0 %v468
  %820 = vmatmul.mubr.bf16.gmra.mxu0 %v467
  %v821 = vpop.f32.mrf.mxu0
  %v822 = vadd.f32 0.0, %v821
  %v823 = vpop.f32.mrf.mxu0
  %v824 = vpop.f32.mrf.mxu0
  %v825 = vadd.f32 0.0, %v824
  %v826 = vpop.f32.mrf.mxu0
  %827 = vmatprep.mubr.bf16.mxu0 %v470
  %828 = vmatmul.mubr.bf16.gmra.mxu0 %v469
  %v829 = vpop.f32.mrf.mxu0
  %v830 = vadd.f32 0.0, %v829
  %v831 = vpop.f32.mrf.mxu0
  %v832 = vpop.f32.mrf.mxu0
  %v833 = vadd.f32 0.0, %v832
  %v834 = vpop.f32.mrf.mxu0
  %835 = vmatprep.mubr.bf16.mxu0 %v472
  %836 = vmatmul.mubr.bf16.gmra.mxu0 %v471
  %v837 = vpop.f32.mrf.mxu0
  %v838 = vadd.f32 0.0, %v837
  %v839 = vpop.f32.mrf.mxu0
  %v840 = vpop.f32.mrf.mxu0
  %v841 = vadd.f32 0.0, %v840
  %v842 = vpop.f32.mrf.mxu0
  %843 = vmatprep.mubr.bf16.mxu0 %v474
  %844 = vmatmul.mubr.bf16.gmra.mxu0 %v473
  %v845 = vpop.f32.mrf.mxu0
  %v846 = vadd.f32 0.0, %v845
  %v847 = vpop.f32.mrf.mxu0
  %v848 = vpop.f32.mrf.mxu0
  %v849 = vadd.f32 0.0, %v848
  %v850 = vpop.f32.mrf.mxu0
  %851 = vmatprep.mubr.bf16.mxu0 %v476
  %852 = vmatmul.mubr.bf16.gmra.mxu0 %v475
  %v853 = vpop.f32.mrf.mxu0
  %v854 = vadd.f32 0.0, %v853
  %v855 = vpop.f32.mrf.mxu0
  %v856 = vpop.f32.mrf.mxu0
  %v857 = vadd.f32 0.0, %v856
  %v858 = vpop.f32.mrf.mxu0
  %859 = vmatprep.mubr.bf16.mxu0 %v478
  %860 = vmatmul.mubr.bf16.gmra.mxu0 %v477
  %v861 = vpop.f32.mrf.mxu0
  %v862 = vadd.f32 0.0, %v861
  %v863 = vpop.f32.mrf.mxu0
  %v864 = vpop.f32.mrf.mxu0
  %v865 = vadd.f32 0.0, %v864
  %v866 = vpop.f32.mrf.mxu0
  %867 = vmatprep.mubr.bf16.mxu0 %v480
  %868 = vmatmul.mubr.bf16.gmra.mxu0 %v479
  %v869 = vpop.f32.mrf.mxu0
  %v870 = vadd.f32 0.0, %v869
  %v871 = vpop.f32.mrf.mxu0
  %v872 = vpop.f32.mrf.mxu0
  %v873 = vadd.f32 0.0, %v872
  %v874 = vpop.f32.mrf.mxu0
  %875 = vmatprep.mubr.bf16.mxu0 %v482
  %876 = vmatmul.mubr.bf16.gmra.mxu0 %v481
  %v877 = vpop.f32.mrf.mxu0
  %v878 = vadd.f32 0.0, %v877
  %v879 = vpop.f32.mrf.mxu0
  %v880 = vpop.f32.mrf.mxu0
  %v881 = vadd.f32 0.0, %v880
  %v882 = vpop.f32.mrf.mxu0
  %883 = vmatprep.mubr.bf16.mxu0 %v484
  %884 = vmatmul.mubr.bf16.gmra.mxu0 %v483
  %v885 = vpop.f32.mrf.mxu0
  %v886 = vadd.f32 0.0, %v885
  %v887 = vpop.f32.mrf.mxu0
  %v888 = vpop.f32.mrf.mxu0
  %v889 = vadd.f32 0.0, %v888
  %v890 = vpop.f32.mrf.mxu0
  %891 = vmatprep.mubr.bf16.mxu0 %v486
  %892 = vmatmul.mubr.bf16.gmra.mxu0 %v485
  %v893 = vpop.f32.mrf.mxu0
  %v894 = vadd.f32 0.0, %v893
  %v895 = vpop.f32.mrf.mxu0
  %v896 = vpop.f32.mrf.mxu0
  %v897 = vadd.f32 0.0, %v896
  %v898 = vpop.f32.mrf.mxu0
  %899 = vmatprep.mubr.bf16.mxu0 %v488
  %900 = vmatmul.mubr.bf16.gmra.mxu0 %v487
  %v901 = vpop.f32.mrf.mxu0
  %v902 = vadd.f32 0.0, %v901
  %v903 = vpop.f32.mrf.mxu0
  %v904 = vpop.f32.mrf.mxu0
  %v905 = vadd.f32 0.0, %v904
  %v906 = vpop.f32.mrf.mxu0
  %907 = vmatprep.mubr.bf16.mxu0 %v490
  %908 = vmatmul.mubr.bf16.gmra.mxu0 %v489
  %v909 = vpop.f32.mrf.mxu0
  %v910 = vadd.f32 0.0, %v909
  %v911 = vpop.f32.mrf.mxu0
  %v912 = vpop.f32.mrf.mxu0
  %v913 = vadd.f32 0.0, %v912
  %v914 = vpop.f32.mrf.mxu0
  %915 = vmatprep.mubr.bf16.mxu0 %v492
  %916 = vmatmul.mubr.bf16.gmra.mxu0 %v491
  %v917 = vpop.f32.mrf.mxu0
  %v918 = vadd.f32 0.0, %v917
  %v919 = vpop.f32.mrf.mxu0
  %v920 = vpop.f32.mrf.mxu0
  %v921 = vadd.f32 0.0, %v920
  %v922 = vpop.f32.mrf.mxu0
  %923 = vmatprep.mubr.bf16.mxu0 %v494
  %924 = vmatmul.mubr.bf16.gmra.mxu0 %v493
  %v925 = vpop.f32.mrf.mxu0
  %v926 = vadd.f32 0.0, %v925
  %v927 = vpop.f32.mrf.mxu0
  %v928 = vpop.f32.mrf.mxu0
  %v929 = vadd.f32 0.0, %v928
  %v930 = vpop.f32.mrf.mxu0
  %931 = vmatprep.mubr.bf16.mxu0 %v496
  %932 = vmatmul.mubr.bf16.gmra.mxu0 %v495
  %v933 = vpop.f32.mrf.mxu0
  %v934 = vadd.f32 0.0, %v933
  %v935 = vpop.f32.mrf.mxu0
  %v936 = vpop.f32.mrf.mxu0
  %v937 = vadd.f32 0.0, %v936
  %v938 = vpop.f32.mrf.mxu0
  %939 = vmatprep.mubr.bf16.mxu0 %v498
  %940 = vmatmul.mubr.bf16.gmra.mxu0 %v497
  %v941 = vpop.f32.mrf.mxu0
  %v942 = vadd.f32 0.0, %v941
  %v943 = vpop.f32.mrf.mxu0
  %v944 = vpop.f32.mrf.mxu0
  %v945 = vadd.f32 0.0, %v944
  %v946 = vpop.f32.mrf.mxu0
  %947 = vdwg.mxu0
  %v948 = vadd.f32 %v83, %v694
  %v949 = vadd.f32 %v84, %v697
  %v950 = vadd.f32 %v85, %v702
  %v951 = vadd.f32 %v86, %v705
  %v952 = vadd.f32 %v87, %v710
  %v953 = vadd.f32 %v88, %v713
  %v954 = vadd.f32 %v89, %v718
  %v955 = vadd.f32 %v90, %v721
  %v956 = vadd.f32 %v91, %v726
  %v957 = vadd.f32 %v92, %v729
  %v958 = vadd.f32 %v93, %v734
  %v959 = vadd.f32 %v94, %v737
  %v960 = vadd.f32 %v95, %v742
  %v961 = vadd.f32 %v96, %v745
  %v962 = vadd.f32 %v97, %v750
  %v963 = vadd.f32 %v98, %v753
  %v964 = vadd.f32 %v99, %v758
  %v965 = vadd.f32 %v100, %v761
  %v966 = vadd.f32 %v101, %v766
  %v967 = vadd.f32 %v102, %v769
  %v968 = vadd.f32 %v103, %v774
  %v969 = vadd.f32 %v104, %v777
  %v970 = vadd.f32 %v105, %v782
  %v971 = vadd.f32 %v106, %v785
  %v972 = vadd.f32 %v107, %v790
  %v973 = vadd.f32 %v108, %v793
  %v974 = vadd.f32 %v109, %v798
  %v975 = vadd.f32 %v110, %v801
  %v976 = vadd.f32 %v111, %v806
  %v977 = vadd.f32 %v112, %v809
  %v978 = vadd.f32 %v113, %v814
  %v979 = vadd.f32 %v114, %v817
  %v980 = vadd.f32 %v115, %v822
  %v981 = vadd.f32 %v116, %v825
  %v982 = vadd.f32 %v117, %v830
  %v983 = vadd.f32 %v118, %v833
  %v984 = vadd.f32 %v119, %v838
  %v985 = vadd.f32 %v120, %v841
  %v986 = vadd.f32 %v121, %v846
  %v987 = vadd.f32 %v122, %v849
  %v988 = vadd.f32 %v123, %v854
  %v989 = vadd.f32 %v124, %v857
  %v990 = vadd.f32 %v125, %v862
  %v991 = vadd.f32 %v126, %v865
  %v992 = vadd.f32 %v127, %v870
  %v993 = vadd.f32 %v128, %v873
  %v994 = vadd.f32 %v129, %v878
  %v995 = vadd.f32 %v130, %v881
  %v996 = vadd.f32 %v131, %v886
  %v997 = vadd.f32 %v132, %v889
  %v998 = vadd.f32 %v133, %v894
  %v999 = vadd.f32 %v134, %v897
  %v1000 = vadd.f32 %v135, %v902
  %v1001 = vadd.f32 %v136, %v905
  %v1002 = vadd.f32 %v137, %v910
  %v1003 = vadd.f32 %v138, %v913
  %v1004 = vadd.f32 %v139, %v918
  %v1005 = vadd.f32 %v140, %v921
  %v1006 = vadd.f32 %v141, %v926
  %v1007 = vadd.f32 %v142, %v929
  %v1008 = vadd.f32 %v143, %v934
  %v1009 = vadd.f32 %v144, %v937
  %v1010 = vadd.f32 %v145, %v942
  %v1011 = vadd.f32 %v146, %v945
  %1012 = vst [vmem:[#allocation2] sm:$0xff] %v948
  %1013 = vst [vmem:[#allocation2 + $0x8] sm:$0xff] %v949
  %1014 = vst [vmem:[#allocation2 + $0x10] sm:$0xff] %v950
  %1015 = vst [vmem:[#allocation2 + $0x18] sm:$0xff] %v951
  %1016 = vst [vmem:[#allocation2 + $0x20] sm:$0xff] %v952
  %1017 = vst [vmem:[#allocation2 + $0x28] sm:$0xff] %v953
  %1018 = vst [vmem:[#allocation2 + $0x30] sm:$0xff] %v954
  %1019 = vst [vmem:[#allocation2 + $0x38] sm:$0xff] %v955
  %1020 = vst [vmem:[#allocation2 + $0x40] sm:$0xff] %v956
  %1021 = vst [vmem:[#allocation2 + $0x48] sm:$0xff] %v957
  %1022 = vst [vmem:[#allocation2 + $0x50] sm:$0xff] %v958
  %1023 = vst [vmem:[#allocation2 + $0x58] sm:$0xff] %v959
  %1024 = vst [vmem:[#allocation2 + $0x60] sm:$0xff] %v960
  %1025 = vst [vmem:[#allocation2 + $0x68] sm:$0xff] %v961
  %1026 = vst [vmem:[#allocation2 + $0x70] sm:$0xff] %v962
  %1027 = vst [vmem:[#allocation2 + $0x78] sm:$0xff] %v963
  %1028 = vst [vmem:[#allocation2 + $0x80] sm:$0xff] %v964
  %1029 = vst [vmem:[#allocation2 + $0x88] sm:$0xff] %v965
  %1030 = vst [vmem:[#allocation2 + $0x90] sm:$0xff] %v966
  %1031 = vst [vmem:[#allocation2 + $0x98] sm:$0xff] %v967
  %1032 = vst [vmem:[#allocation2 + $0xa0] sm:$0xff] %v968
  %1033 = vst [vmem:[#allocation2 + $0xa8] sm:$0xff] %v969
  %1034 = vst [vmem:[#allocation2 + $0xb0] sm:$0xff] %v970
  %1035 = vst [vmem:[#allocation2 + $0xb8] sm:$0xff] %v971
  %1036 = vst [vmem:[#allocation2 + $0xc0] sm:$0xff] %v972
  %1037 = vst [vmem:[#allocation2 + $0xc8] sm:$0xff] %v973
  %1038 = vst [vmem:[#allocation2 + $0xd0] sm:$0xff] %v974
  %1039 = vst [vmem:[#allocation2 + $0xd8] sm:$0xff] %v975
  %1040 = vst [vmem:[#allocation2 + $0xe0] sm:$0xff] %v976
  %1041 = vst [vmem:[#allocation2 + $0xe8] sm:$0xff] %v977
  %1042 = vst [vmem:[#allocation2 + $0xf0] sm:$0xff] %v978
  %1043 = vst [vmem:[#allocation2 + $0xf8] sm:$0xff] %v979
  %1044 = vst [vmem:[#allocation2 + $0x100] sm:$0xff] %v980
  %1045 = vst [vmem:[#allocation2 + $0x108] sm:$0xff] %v981
  %1046 = vst [vmem:[#allocation2 + $0x110] sm:$0xff] %v982
  %1047 = vst [vmem:[#allocation2 + $0x118] sm:$0xff] %v983
  %1048 = vst [vmem:[#allocation2 + $0x120] sm:$0xff] %v984
  %1049 = vst [vmem:[#allocation2 + $0x128] sm:$0xff] %v985
  %1050 = vst [vmem:[#allocation2 + $0x130] sm:$0xff] %v986
  %1051 = vst [vmem:[#allocation2 + $0x138] sm:$0xff] %v987
  %1052 = vst [vmem:[#allocation2 + $0x140] sm:$0xff] %v988
  %1053 = vst [vmem:[#allocation2 + $0x148] sm:$0xff] %v989
  %1054 = vst [vmem:[#allocation2 + $0x150] sm:$0xff] %v990
  %1055 = vst [vmem:[#allocation2 + $0x158] sm:$0xff] %v991
  %1056 = vst [vmem:[#allocation2 + $0x160] sm:$0xff] %v992
  %1057 = vst [vmem:[#allocation2 + $0x168] sm:$0xff] %v993
  %1058 = vst [vmem:[#allocation2 + $0x170] sm:$0xff] %v994
  %1059 = vst [vmem:[#allocation2 + $0x178] sm:$0xff] %v995
  %1060 = vst [vmem:[#allocation2 + $0x180] sm:$0xff] %v996
  %1061 = vst [vmem:[#allocation2 + $0x188] sm:$0xff] %v997
  %1062 = vst [vmem:[#allocation2 + $0x190] sm:$0xff] %v998
  %1063 = vst [vmem:[#allocation2 + $0x198] sm:$0xff] %v999
  %1064 = vst [vmem:[#allocation2 + $0x1a0] sm:$0xff] %v1000
  %1065 = vst [vmem:[#allocation2 + $0x1a8] sm:$0xff] %v1001
  %1066 = vst [vmem:[#allocation2 + $0x1b0] sm:$0xff] %v1002
  %1067 = vst [vmem:[#allocation2 + $0x1b8] sm:$0xff] %v1003
  %1068 = vst [vmem:[#allocation2 + $0x1c0] sm:$0xff] %v1004
  %1069 = vst [vmem:[#allocation2 + $0x1c8] sm:$0xff] %v1005
  %1070 = vst [vmem:[#allocation2 + $0x1d0] sm:$0xff] %v1006
  %1071 = vst [vmem:[#allocation2 + $0x1d8] sm:$0xff] %v1007
  %1072 = vst [vmem:[#allocation2 + $0x1e0] sm:$0xff] %v1008
  %1073 = vst [vmem:[#allocation2 + $0x1e8] sm:$0xff] %v1009
  %1074 = vst [vmem:[#allocation2 + $0x1f0] sm:$0xff] %v1010
  %1075 = vst [vmem:[#allocation2 + $0x1f8] sm:$0xff] %v1011
  // Predicated region
  $region18: #{generator_forward.37} parent=0 // pred_check
    %p1076 = pneg %p15
  $region19: #{generator_forward.37} parent=0 // pred_check_branch
    %1078 = sbr.rel (%p1076) target = $region21
  $region20: #{generator_forward.37} parent=0 // pred_region
    %v1079 = vld [vmem:[#allocation2] sm:$0xff]
    %v1080 = vld [vmem:[#allocation2 + $0x8] sm:$0xff]
    %v1081 = vld [vmem:[#allocation2 + $0x10] sm:$0xff]
    %v1082 = vld [vmem:[#allocation2 + $0x18] sm:$0xff]
    %v1083 = vld [vmem:[#allocation2 + $0x20] sm:$0xff]
    %v1084 = vld [vmem:[#allocation2 + $0x28] sm:$0xff]
    %v1085 = vld [vmem:[#allocation2 + $0x30] sm:$0xff]
    %v1086 = vld [vmem:[#allocation2 + $0x38] sm:$0xff]
    %v1087 = vld [vmem:[#allocation2 + $0x40] sm:$0xff]
    %v1088 = vld [vmem:[#allocation2 + $0x48] sm:$0xff]
    %v1089 = vld [vmem:[#allocation2 + $0x50] sm:$0xff]
    %v1090 = vld [vmem:[#allocation2 + $0x58] sm:$0xff]
    %v1091 = vld [vmem:[#allocation2 + $0x60] sm:$0xff]
    %v1092 = vld [vmem:[#allocation2 + $0x68] sm:$0xff]
    %v1093 = vld [vmem:[#allocation2 + $0x70] sm:$0xff]
    %v1094 = vld [vmem:[#allocation2 + $0x78] sm:$0xff]
    %v1095 = vld [vmem:[#allocation2 + $0x80] sm:$0xff]
    %v1096 = vld [vmem:[#allocation2 + $0x88] sm:$0xff]
    %v1097 = vld [vmem:[#allocation2 + $0x90] sm:$0xff]
    %v1098 = vld [vmem:[#allocation2 + $0x98] sm:$0xff]
    %v1099 = vld [vmem:[#allocation2 + $0xa0] sm:$0xff]
    %v1100 = vld [vmem:[#allocation2 + $0xa8] sm:$0xff]
    %v1101 = vld [vmem:[#allocation2 + $0xb0] sm:$0xff]
    %v1102 = vld [vmem:[#allocation2 + $0xb8] sm:$0xff]
    %v1103 = vld [vmem:[#allocation2 + $0xc0] sm:$0xff]
    %v1104 = vld [vmem:[#allocation2 + $0xc8] sm:$0xff]
    %v1105 = vld [vmem:[#allocation2 + $0xd0] sm:$0xff]
    %v1106 = vld [vmem:[#allocation2 + $0xd8] sm:$0xff]
    %v1107 = vld [vmem:[#allocation2 + $0xe0] sm:$0xff]
    %v1108 = vld [vmem:[#allocation2 + $0xe8] sm:$0xff]
    %v1109 = vld [vmem:[#allocation2 + $0xf0] sm:$0xff]
    %v1110 = vld [vmem:[#allocation2 + $0xf8] sm:$0xff]
    %v1111 = vld [vmem:[#allocation2 + $0x100] sm:$0xff]
    %v1112 = vld [vmem:[#allocation2 + $0x108] sm:$0xff]
    %v1113 = vld [vmem:[#allocation2 + $0x110] sm:$0xff]
    %v1114 = vld [vmem:[#allocation2 + $0x118] sm:$0xff]
    %v1115 = vld [vmem:[#allocation2 + $0x120] sm:$0xff]
    %v1116 = vld [vmem:[#allocation2 + $0x128] sm:$0xff]
    %v1117 = vld [vmem:[#allocation2 + $0x130] sm:$0xff]
    %v1118 = vld [vmem:[#allocation2 + $0x138] sm:$0xff]
    %v1119 = vld [vmem:[#allocation2 + $0x140] sm:$0xff]
    %v1120 = vld [vmem:[#allocation2 + $0x148] sm:$0xff]
    %v1121 = vld [vmem:[#allocation2 + $0x150] sm:$0xff]
    %v1122 = vld [vmem:[#allocation2 + $0x158] sm:$0xff]
    %v1123 = vld [vmem:[#allocation2 + $0x160] sm:$0xff]
    %v1124 = vld [vmem:[#allocation2 + $0x168] sm:$0xff]
    %v1125 = vld [vmem:[#allocation2 + $0x170] sm:$0xff]
    %v1126 = vld [vmem:[#allocation2 + $0x178] sm:$0xff]
    %v1127 = vld [vmem:[#allocation2 + $0x180] sm:$0xff]
    %v1128 = vld [vmem:[#allocation2 + $0x188] sm:$0xff]
    %v1129 = vld [vmem:[#allocation2 + $0x190] sm:$0xff]
    %v1130 = vld [vmem:[#allocation2 + $0x198] sm:$0xff]
    %v1131 = vld [vmem:[#allocation2 + $0x1a0] sm:$0xff]
    %v1132 = vld [vmem:[#allocation2 + $0x1a8] sm:$0xff]
    %v1133 = vld [vmem:[#allocation2 + $0x1b0] sm:$0xff]
    %v1134 = vld [vmem:[#allocation2 + $0x1b8] sm:$0xff]
    %v1135 = vld [vmem:[#allocation2 + $0x1c0] sm:$0xff]
    %v1136 = vld [vmem:[#allocation2 + $0x1c8] sm:$0xff]
    %v1137 = vld [vmem:[#allocation2 + $0x1d0] sm:$0xff]
    %v1138 = vld [vmem:[#allocation2 + $0x1d8] sm:$0xff]
    %v1139 = vld [vmem:[#allocation2 + $0x1e0] sm:$0xff]
    %v1140 = vld [vmem:[#allocation2 + $0x1e8] sm:$0xff]
    %v1141 = vld [vmem:[#allocation2 + $0x1f0] sm:$0xff]
    %v1142 = vld [vmem:[#allocation2 + $0x1f8] sm:$0xff]
    %v1143 = vld [vmem:[%s2] sm:$0x1]
    %v1145 = vlaneseq
    %v1146 = vshrl.u32 %v1145, 7
    %v1147 = vsub.s32 0, %v1146
    %v1148 = vrot.slane %v1143, %v1147
    %v1150 = vadd.f32 %v1079, %v1148
    %v1151 = vadd.f32 %v1080, %v1148
    %v1152 = vadd.f32 %v1081, %v1148
    %v1153 = vadd.f32 %v1082, %v1148
    %v1154 = vadd.f32 %v1083, %v1148
    %v1155 = vadd.f32 %v1084, %v1148
    %v1156 = vadd.f32 %v1085, %v1148
    %v1157 = vadd.f32 %v1086, %v1148
    %v1158 = vadd.f32 %v1087, %v1148
    %v1159 = vadd.f32 %v1088, %v1148
    %v1160 = vadd.f32 %v1089, %v1148
    %v1161 = vadd.f32 %v1090, %v1148
    %v1162 = vadd.f32 %v1091, %v1148
    %v1163 = vadd.f32 %v1092, %v1148
    %v1164 = vadd.f32 %v1093, %v1148
    %v1165 = vadd.f32 %v1094, %v1148
    %v1166 = vadd.f32 %v1095, %v1148
    %v1167 = vadd.f32 %v1096, %v1148
    %v1168 = vadd.f32 %v1097, %v1148
    %v1169 = vadd.f32 %v1098, %v1148
    %v1170 = vadd.f32 %v1099, %v1148
    %v1171 = vadd.f32 %v1100, %v1148
    %v1172 = vadd.f32 %v1101, %v1148
    %v1173 = vadd.f32 %v1102, %v1148
    %v1174 = vadd.f32 %v1103, %v1148
    %v1175 = vadd.f32 %v1104, %v1148
    %v1176 = vadd.f32 %v1105, %v1148
    %v1177 = vadd.f32 %v1106, %v1148
    %v1178 = vadd.f32 %v1107, %v1148
    %v1179 = vadd.f32 %v1108, %v1148
    %v1180 = vadd.f32 %v1109, %v1148
    %v1181 = vadd.f32 %v1110, %v1148
    %v1182 = vadd.f32 %v1111, %v1148
    %v1183 = vadd.f32 %v1112, %v1148
    %v1184 = vadd.f32 %v1113, %v1148
    %v1185 = vadd.f32 %v1114, %v1148
    %v1186 = vadd.f32 %v1115, %v1148
    %v1187 = vadd.f32 %v1116, %v1148
    %v1188 = vadd.f32 %v1117, %v1148
    %v1189 = vadd.f32 %v1118, %v1148
    %v1190 = vadd.f32 %v1119, %v1148
    %v1191 = vadd.f32 %v1120, %v1148
    %v1192 = vadd.f32 %v1121, %v1148
    %v1193 = vadd.f32 %v1122, %v1148
    %v1194 = vadd.f32 %v1123, %v1148
    %v1195 = vadd.f32 %v1124, %v1148
    %v1196 = vadd.f32 %v1125, %v1148
    %v1197 = vadd.f32 %v1126, %v1148
    %v1198 = vadd.f32 %v1127, %v1148
    %v1199 = vadd.f32 %v1128, %v1148
    %v1200 = vadd.f32 %v1129, %v1148
    %v1201 = vadd.f32 %v1130, %v1148
    %v1202 = vadd.f32 %v1131, %v1148
    %v1203 = vadd.f32 %v1132, %v1148
    %v1204 = vadd.f32 %v1133, %v1148
    %v1205 = vadd.f32 %v1134, %v1148
    %v1206 = vadd.f32 %v1135, %v1148
    %v1207 = vadd.f32 %v1136, %v1148
    %v1208 = vadd.f32 %v1137, %v1148
    %v1209 = vadd.f32 %v1138, %v1148
    %v1210 = vadd.f32 %v1139, %v1148
    %v1211 = vadd.f32 %v1140, %v1148
    %v1212 = vadd.f32 %v1141, %v1148
    %v1213 = vadd.f32 %v1142, %v1148
    %1214 = vst [vmem:[%s3] sm:$0xff] %v1150
    %1215 = vst [vmem:[%s3 + $0x8] sm:$0xff] %v1151
    %1216 = vst [vmem:[%s3 + $0x10] sm:$0xff] %v1152
    %1217 = vst [vmem:[%s3 + $0x18] sm:$0xff] %v1153
    %1218 = vst [vmem:[%s3 + $0x20] sm:$0xff] %v1154
    %1219 = vst [vmem:[%s3 + $0x28] sm:$0xff] %v1155
    %1220 = vst [vmem:[%s3 + $0x30] sm:$0xff] %v1156
    %1221 = vst [vmem:[%s3 + $0x38] sm:$0xff] %v1157
    %1222 = vst [vmem:[%s3 + $0x40] sm:$0xff] %v1158
    %1223 = vst [vmem:[%s3 + $0x48] sm:$0xff] %v1159
    %1224 = vst [vmem:[%s3 + $0x50] sm:$0xff] %v1160
    %1225 = vst [vmem:[%s3 + $0x58] sm:$0xff] %v1161
    %1226 = vst [vmem:[%s3 + $0x60] sm:$0xff] %v1162
    %1227 = vst [vmem:[%s3 + $0x68] sm:$0xff] %v1163
    %1228 = vst [vmem:[%s3 + $0x70] sm:$0xff] %v1164
    %1229 = vst [vmem:[%s3 + $0x78] sm:$0xff] %v1165
    %1230 = vst [vmem:[%s3 + $0x80] sm:$0xff] %v1166
    %1231 = vst [vmem:[%s3 + $0x88] sm:$0xff] %v1167
    %1232 = vst [vmem:[%s3 + $0x90] sm:$0xff] %v1168
    %1233 = vst [vmem:[%s3 + $0x98] sm:$0xff] %v1169
    %1234 = vst [vmem:[%s3 + $0xa0] sm:$0xff] %v1170
    %1235 = vst [vmem:[%s3 + $0xa8] sm:$0xff] %v1171
    %1236 = vst [vmem:[%s3 + $0xb0] sm:$0xff] %v1172
    %1237 = vst [vmem:[%s3 + $0xb8] sm:$0xff] %v1173
    %1238 = vst [vmem:[%s3 + $0xc0] sm:$0xff] %v1174
    %1239 = vst [vmem:[%s3 + $0xc8] sm:$0xff] %v1175
    %1240 = vst [vmem:[%s3 + $0xd0] sm:$0xff] %v1176
    %1241 = vst [vmem:[%s3 + $0xd8] sm:$0xff] %v1177
    %1242 = vst [vmem:[%s3 + $0xe0] sm:$0xff] %v1178
    %1243 = vst [vmem:[%s3 + $0xe8] sm:$0xff] %v1179
    %1244 = vst [vmem:[%s3 + $0xf0] sm:$0xff] %v1180
    %1245 = vst [vmem:[%s3 + $0xf8] sm:$0xff] %v1181
    %1246 = vst [vmem:[%s3 + $0x100] sm:$0xff] %v1182
    %1247 = vst [vmem:[%s3 + $0x108] sm:$0xff] %v1183
    %1248 = vst [vmem:[%s3 + $0x110] sm:$0xff] %v1184
    %1249 = vst [vmem:[%s3 + $0x118] sm:$0xff] %v1185
    %1250 = vst [vmem:[%s3 + $0x120] sm:$0xff] %v1186
    %1251 = vst [vmem:[%s3 + $0x128] sm:$0xff] %v1187
    %1252 = vst [vmem:[%s3 + $0x130] sm:$0xff] %v1188
    %1253 = vst [vmem:[%s3 + $0x138] sm:$0xff] %v1189
    %1254 = vst [vmem:[%s3 + $0x140] sm:$0xff] %v1190
    %1255 = vst [vmem:[%s3 + $0x148] sm:$0xff] %v1191
    %1256 = vst [vmem:[%s3 + $0x150] sm:$0xff] %v1192
    %1257 = vst [vmem:[%s3 + $0x158] sm:$0xff] %v1193
    %1258 = vst [vmem:[%s3 + $0x160] sm:$0xff] %v1194
    %1259 = vst [vmem:[%s3 + $0x168] sm:$0xff] %v1195
    %1260 = vst [vmem:[%s3 + $0x170] sm:$0xff] %v1196
    %1261 = vst [vmem:[%s3 + $0x178] sm:$0xff] %v1197
    %1262 = vst [vmem:[%s3 + $0x180] sm:$0xff] %v1198
    %1263 = vst [vmem:[%s3 + $0x188] sm:$0xff] %v1199
    %1264 = vst [vmem:[%s3 + $0x190] sm:$0xff] %v1200
    %1265 = vst [vmem:[%s3 + $0x198] sm:$0xff] %v1201
    %1266 = vst [vmem:[%s3 + $0x1a0] sm:$0xff] %v1202
    %1267 = vst [vmem:[%s3 + $0x1a8] sm:$0xff] %v1203
    %1268 = vst [vmem:[%s3 + $0x1b0] sm:$0xff] %v1204
    %1269 = vst [vmem:[%s3 + $0x1b8] sm:$0xff] %v1205
    %1270 = vst [vmem:[%s3 + $0x1c0] sm:$0xff] %v1206
    %1271 = vst [vmem:[%s3 + $0x1c8] sm:$0xff] %v1207
    %1272 = vst [vmem:[%s3 + $0x1d0] sm:$0xff] %v1208
    %1273 = vst [vmem:[%s3 + $0x1d8] sm:$0xff] %v1209
    %1274 = vst [vmem:[%s3 + $0x1e0] sm:$0xff] %v1210
    %1275 = vst [vmem:[%s3 + $0x1e8] sm:$0xff] %v1211
    %1276 = vst [vmem:[%s3 + $0x1f0] sm:$0xff] %v1212
    %1277 = vst [vmem:[%s3 + $0x1f8] sm:$0xff] %v1213
  $region21: #{generator_forward.37} parent=0 // pred_fallthru
    _
  // Predicated region
  $region22: #{generator_forward.37} parent=0 // pred_check
    _
  $region23: #{generator_forward.37} parent=0 // pred_check_branch
    %1279 = sbr.rel (0) target = $region25
  $region24: #{generator_forward.37} parent=0 // pred_region
    _
  $region25: #{generator_forward.37} parent=0 // pred_fallthru
    _
  // Predicated region
  $region26: #{generator_forward.37} parent=0 // pred_check
    _
  $region27: #{generator_forward.37} parent=0 // pred_check_branch
    %1281 = sbr.rel (0) target = $region29
  $region28: #{generator_forward.37} parent=0 // pred_region
    _
  $region29: #{generator_forward.37} parent=0 // pred_fallthru
    _

// kernel: generator_forward.39
$region0: #{generator_forward.39}
  #allocation0 [shape = 'u32[]', space=smem, size = 0x4, offset = 0x4, fixed_abs, tag = 'smem constant byte address 0x4 - core index']
  #allocation1 [shape = 'u32[144,128]{1,0:T(1,128)}', space=vmem, size = 0x12000, scoped, tag = 'internal scratch']
  #allocation2 [shape = 'f32[128,128]{1,0:T(8,128)}', space=vmem, size = 0x10000, scoped, tag = 'scratch operand']
  %s0 = inlined_call_operand.vmem [shape: bf16[128,128], index: 0, kind: input, shape index: {}]
  %s1 = inlined_call_operand.vmem [shape: bf16[128,128], index: 1, kind: input, shape index: {}]
  %s2 = inlined_call_operand.vmem [shape: f32[1,128], index: 2, kind: input, shape index: {}]
  %s3 = inlined_call_operand.vmem [shape: f32[128,128], index: 3, kind: output, shape index: {}]
  %s4 = sld [smem:[#allocation0]]
  $region30: #{generator_forward.39} parent=0
    _
  %s6 = ssub.s32 1, %s4
  %s7 = scalar_select 0, %s6, %s4
  // Predicated region
  $region2: #{generator_forward.39} parent=0 // pred_check
    _
  $region3: #{generator_forward.39} parent=0 // pred_check_branch
    %9 = sbr.rel (0) target = $region5
  $region4: #{generator_forward.39} parent=0 // pred_region
    _
  $region5: #{generator_forward.39} parent=0 // pred_fallthru
    _
  // Predicated region
  $region6: #{generator_forward.39} parent=0 // pred_check
    _
  $region7: #{generator_forward.39} parent=0 // pred_check_branch
    %11 = sbr.rel (0) target = $region9
  $region8: #{generator_forward.39} parent=0 // pred_region
    _
  $region9: #{generator_forward.39} parent=0 // pred_fallthru
    _
  // Predicated region
  $region10: #{generator_forward.39} parent=0 // pred_check
    _
  $region11: #{generator_forward.39} parent=0 // pred_check_branch
    %13 = sbr.rel (0) target = $region13
  $region12: #{generator_forward.39} parent=0 // pred_region
    _
  $region13: #{generator_forward.39} parent=0 // pred_fallthru
    _
  %p15 = scmp.eq.s32.totalorder 0, 0
  // Predicated region
  $region14: #{generator_forward.39} parent=0 // pred_check
    %p16 = pneg %p15
  $region15: #{generator_forward.39} parent=0 // pred_check_branch
    %18 = sbr.rel (%p16) target = $region17
  $region16: #{generator_forward.39} parent=0 // pred_region
    %19 = vst [vmem:[#allocation2] sm:$0xff] 0.0
    %20 = vst [vmem:[#allocation2 + $0x8] sm:$0xff] 0.0
    %21 = vst [vmem:[#allocation2 + $0x10] sm:$0xff] 0.0
    %22 = vst [vmem:[#allocation2 + $0x18] sm:$0xff] 0.0
    %23 = vst [vmem:[#allocation2 + $0x20] sm:$0xff] 0.0
    %24 = vst [vmem:[#allocation2 + $0x28] sm:$0xff] 0.0
    %25 = vst [vmem:[#allocation2 + $0x30] sm:$0xff] 0.0
    %26 = vst [vmem:[#allocation2 + $0x38] sm:$0xff] 0.0
    %27 = vst [vmem:[#allocation2 + $0x40] sm:$0xff] 0.0
    %28 = vst [vmem:[#allocation2 + $0x48] sm:$0xff] 0.0
    %29 = vst [vmem:[#allocation2 + $0x50] sm:$0xff] 0.0
    %30 = vst [vmem:[#allocation2 + $0x58] sm:$0xff] 0.0
    %31 = vst [vmem:[#allocation2 + $0x60] sm:$0xff] 0.0
    %32 = vst [vmem:[#allocation2 + $0x68] sm:$0xff] 0.0
    %33 = vst [vmem:[#allocation2 + $0x70] sm:$0xff] 0.0
    %34 = vst [vmem:[#allocation2 + $0x78] sm:$0xff] 0.0
  $region17: #{generator_forward.39} parent=0 // pred_fallthru
    _
  %v35 = vld [vmem:[#allocation2] sm:$0xff]
  %v36 = vld [vmem:[#allocation2 + $0x8] sm:$0xff]
  %v37 = vld [vmem:[#allocation2 + $0x10] sm:$0xff]
  %v38 = vld [vmem:[#allocation2 + $0x18] sm:$0xff]
  %v39 = vld [vmem:[#allocation2 + $0x20] sm:$0xff]
  %v40 = vld [vmem:[#allocation2 + $0x28] sm:$0xff]
  %v41 = vld [vmem:[#allocation2 + $0x30] sm:$0xff]
  %v42 = vld [vmem:[#allocation2 + $0x38] sm:$0xff]
  %v43 = vld [vmem:[#allocation2 + $0x40] sm:$0xff]
  %v44 = vld [vmem:[#allocation2 + $0x48] sm:$0xff]
  %v45 = vld [vmem:[#allocation2 + $0x50] sm:$0xff]
  %v46 = vld [vmem:[#allocation2 + $0x58] sm:$0xff]
  %v47 = vld [vmem:[#allocation2 + $0x60] sm:$0xff]
  %v48 = vld [vmem:[#allocation2 + $0x68] sm:$0xff]
  %v49 = vld [vmem:[#allocation2 + $0x70] sm:$0xff]
  %v50 = vld [vmem:[#allocation2 + $0x78] sm:$0xff]
  %v51 = vld [vmem:[%s0] sm:$0xf]
  %v52 = vld [vmem:[%s0 + $0x4] sm:$0xf]
  %v53 = vld [vmem:[%s0 + $0x8] sm:$0xf]
  %v54 = vld [vmem:[%s0 + $0xc] sm:$0xf]
  %v55 = vld [vmem:[%s0 + $0x10] sm:$0xf]
  %v56 = vld [vmem:[%s0 + $0x14] sm:$0xf]
  %v57 = vld [vmem:[%s0 + $0x18] sm:$0xf]
  %v58 = vld [vmem:[%s0 + $0x1c] sm:$0xf]
  %v59 = vld [vmem:[%s0 + $0x20] sm:$0xf]
  %v60 = vld [vmem:[%s0 + $0x24] sm:$0xf]
  %v61 = vld [vmem:[%s0 + $0x28] sm:$0xf]
  %v62 = vld [vmem:[%s0 + $0x2c] sm:$0xf]
  %v63 = vld [vmem:[%s0 + $0x30] sm:$0xf]
  %v64 = vld [vmem:[%s0 + $0x34] sm:$0xf]
  %v65 = vld [vmem:[%s0 + $0x38] sm:$0xf]
  %v66 = vld [vmem:[%s0 + $0x3c] sm:$0xf]
  %v67 = vld [vmem:[%s1] sm:$0xf]
  %v68 = vld [vmem:[%s1 + $0x4] sm:$0xf]
  %v69 = vld [vmem:[%s1 + $0x8] sm:$0xf]
  %v70 = vld [vmem:[%s1 + $0xc] sm:$0xf]
  %v71 = vld [vmem:[%s1 + $0x10] sm:$0xf]
  %v72 = vld [vmem:[%s1 + $0x14] sm:$0xf]
  %v73 = vld [vmem:[%s1 + $0x18] sm:$0xf]
  %v74 = vld [vmem:[%s1 + $0x1c] sm:$0xf]
  %v75 = vld [vmem:[%s1 + $0x20] sm:$0xf]
  %v76 = vld [vmem:[%s1 + $0x24] sm:$0xf]
  %v77 = vld [vmem:[%s1 + $0x28] sm:$0xf]
  %v78 = vld [vmem:[%s1 + $0x2c] sm:$0xf]
  %v79 = vld [vmem:[%s1 + $0x30] sm:$0xf]
  %v80 = vld [vmem:[%s1 + $0x34] sm:$0xf]
  %v81 = vld [vmem:[%s1 + $0x38] sm:$0xf]
  %v82 = vld [vmem:[%s1 + $0x3c] sm:$0xf]
  %v99 = vunpack.c.l.b16 %v51
  %v100 = vunpack.c.l.b16 %v52
  %v101 = vunpack.c.l.b16 %v53
  %v102 = vunpack.c.l.b16 %v54
  %v103 = vunpack.c.l.b16 %v55
  %v104 = vunpack.c.l.b16 %v56
  %v105 = vunpack.c.l.b16 %v57
  %v106 = vunpack.c.l.b16 %v58
  %v107 = vunpack.c.l.b16 %v59
  %v108 = vunpack.c.l.b16 %v60
  %v109 = vunpack.c.l.b16 %v61
  %v110 = vunpack.c.l.b16 %v62
  %v111 = vunpack.c.l.b16 %v63
  %v112 = vunpack.c.l.b16 %v64
  %v113 = vunpack.c.l.b16 %v65
  %v114 = vunpack.c.l.b16 %v66
  %v115 = vpack.c.b16 %v100, %v99
  %v116 = vpack.c.b16 %v102, %v101
  %v117 = vpack.c.b16 %v104, %v103
  %v118 = vpack.c.b16 %v106, %v105
  %v119 = vpack.c.b16 %v108, %v107
  %v120 = vpack.c.b16 %v110, %v109
  %v121 = vpack.c.b16 %v112, %v111
  %v122 = vpack.c.b16 %v114, %v113
  %v147 = vunpack.c.l.b16 %v67
  %v148 = vunpack.c.l.b16 %v68
  %v149 = vunpack.c.l.b16 %v69
  %v150 = vunpack.c.l.b16 %v70
  %v151 = vunpack.c.l.b16 %v71
  %v152 = vunpack.c.l.b16 %v72
  %v153 = vunpack.c.l.b16 %v73
  %v154 = vunpack.c.l.b16 %v74
  %v155 = vunpack.c.l.b16 %v75
  %v156 = vunpack.c.l.b16 %v76
  %v157 = vunpack.c.l.b16 %v77
  %v158 = vunpack.c.l.b16 %v78
  %v159 = vunpack.c.l.b16 %v79
  %v160 = vunpack.c.l.b16 %v80
  %v161 = vunpack.c.l.b16 %v81
  %v162 = vunpack.c.l.b16 %v82
  %v163 = vpack.c.b16 %v148, %v147
  %v164 = vpack.c.b16 %v150, %v149
  %v165 = vpack.c.b16 %v152, %v151
  %v166 = vpack.c.b16 %v154, %v153
  %v167 = vpack.c.b16 %v156, %v155
  %v168 = vpack.c.b16 %v158, %v157
  %v169 = vpack.c.b16 %v160, %v159
  %v170 = vpack.c.b16 %v162, %v161
  %179 = vmatprep.subr.bf16.mxu0 0
  %180 = vmatpush1.bf16.msra.mxu0 %v170
  %181 = vmatprep.subr.bf16.mxu0 0
  %182 = vmatpush1.bf16.msra.mxu0 %v169
  %183 = vmatprep.subr.bf16.mxu0 0
  %184 = vmatpush1.bf16.msra.mxu0 %v168
  %185 = vmatprep.subr.bf16.mxu0 0
  %186 = vmatpush1.bf16.msra.mxu0 %v167
  %187 = vmatprep.subr.bf16.mxu0 0
  %188 = vmatpush1.bf16.msra.mxu0 %v166
  %189 = vmatprep.subr.bf16.mxu0 0
  %190 = vmatpush1.bf16.msra.mxu0 %v165
  %191 = vmatprep.subr.bf16.mxu0 0
  %192 = vmatpush1.bf16.msra.mxu0 %v164
  %193 = vmatprep.subr.bf16.mxu0 0
  %194 = vmatpush1.bf16.msra.mxu0 %v163
  %195 = vmatprep.subr.bf16.mxu0 0
  %196 = vmatpush2.bf16.msra.mxu0 0
  %197 = vmatprep.subr.bf16.mxu0 0
  %198 = vmatpush2.bf16.msra.mxu0 0
  %199 = vmatprep.subr.bf16.mxu0 0
  %200 = vmatpush2.bf16.msra.mxu0 0
  %201 = vmatprep.subr.bf16.mxu0 0
  %202 = vmatpush2.bf16.msra.mxu0 0
  %203 = vmatprep.subr.bf16.mxu0 0
  %204 = vmatpush2.bf16.msra.mxu0 0
  %205 = vmatprep.subr.bf16.mxu0 0
  %206 = vmatpush2.bf16.msra.mxu0 0
  %207 = vmatprep.subr.bf16.mxu0 0
  %208 = vmatpush2.bf16.msra.mxu0 0
  %209 = vmatprep.subr.bf16.mxu0 0
  %210 = vmatpush2.bf16.msra.mxu0 0
  %211 = vmatprep.mubr.bf16.mxu0 0
  %212 = vmatmul.mubr.bf16.gmra.mxu0 %v115
  %v213 = vpop.f32.mrf.mxu0
  %v214 = vadd.f32 0.0, %v213
  %v215 = vpop.f32.mrf.mxu0
  %v216 = vpop.f32.mrf.mxu0
  %v217 = vadd.f32 0.0, %v216
  %v218 = vpop.f32.mrf.mxu0
  %219 = vmatprep.mubr.bf16.mxu0 0
  %220 = vmatmul.mubr.bf16.gmra.mxu0 %v116
  %v221 = vpop.f32.mrf.mxu0
  %v222 = vadd.f32 0.0, %v221
  %v223 = vpop.f32.mrf.mxu0
  %v224 = vpop.f32.mrf.mxu0
  %v225 = vadd.f32 0.0, %v224
  %v226 = vpop.f32.mrf.mxu0
  %227 = vmatprep.mubr.bf16.mxu0 0
  %228 = vmatmul.mubr.bf16.gmra.mxu0 %v117
  %v229 = vpop.f32.mrf.mxu0
  %v230 = vadd.f32 0.0, %v229
  %v231 = vpop.f32.mrf.mxu0
  %v232 = vpop.f32.mrf.mxu0
  %v233 = vadd.f32 0.0, %v232
  %v234 = vpop.f32.mrf.mxu0
  %235 = vmatprep.mubr.bf16.mxu0 0
  %236 = vmatmul.mubr.bf16.gmra.mxu0 %v118
  %v237 = vpop.f32.mrf.mxu0
  %v238 = vadd.f32 0.0, %v237
  %v239 = vpop.f32.mrf.mxu0
  %v240 = vpop.f32.mrf.mxu0
  %v241 = vadd.f32 0.0, %v240
  %v242 = vpop.f32.mrf.mxu0
  %243 = vmatprep.mubr.bf16.mxu0 0
  %244 = vmatmul.mubr.bf16.gmra.mxu0 %v119
  %v245 = vpop.f32.mrf.mxu0
  %v246 = vadd.f32 0.0, %v245
  %v247 = vpop.f32.mrf.mxu0
  %v248 = vpop.f32.mrf.mxu0
  %v249 = vadd.f32 0.0, %v248
  %v250 = vpop.f32.mrf.mxu0
  %251 = vmatprep.mubr.bf16.mxu0 0
  %252 = vmatmul.mubr.bf16.gmra.mxu0 %v120
  %v253 = vpop.f32.mrf.mxu0
  %v254 = vadd.f32 0.0, %v253
  %v255 = vpop.f32.mrf.mxu0
  %v256 = vpop.f32.mrf.mxu0
  %v257 = vadd.f32 0.0, %v256
  %v258 = vpop.f32.mrf.mxu0
  %259 = vmatprep.mubr.bf16.mxu0 0
  %260 = vmatmul.mubr.bf16.gmra.mxu0 %v121
  %v261 = vpop.f32.mrf.mxu0
  %v262 = vadd.f32 0.0, %v261
  %v263 = vpop.f32.mrf.mxu0
  %v264 = vpop.f32.mrf.mxu0
  %v265 = vadd.f32 0.0, %v264
  %v266 = vpop.f32.mrf.mxu0
  %267 = vmatprep.mubr.bf16.mxu0 0
  %268 = vmatmul.mubr.bf16.gmra.mxu0 %v122
  %v269 = vpop.f32.mrf.mxu0
  %v270 = vadd.f32 0.0, %v269
  %v271 = vpop.f32.mrf.mxu0
  %v272 = vpop.f32.mrf.mxu0
  %v273 = vadd.f32 0.0, %v272
  %v274 = vpop.f32.mrf.mxu0
  %275 = vdwg.mxu0
  %v276 = vadd.f32 %v35, %v214
  %v277 = vadd.f32 %v36, %v217
  %v278 = vadd.f32 %v37, %v222
  %v279 = vadd.f32 %v38, %v225
  %v280 = vadd.f32 %v39, %v230
  %v281 = vadd.f32 %v40, %v233
  %v282 = vadd.f32 %v41, %v238
  %v283 = vadd.f32 %v42, %v241
  %v284 = vadd.f32 %v43, %v246
  %v285 = vadd.f32 %v44, %v249
  %v286 = vadd.f32 %v45, %v254
  %v287 = vadd.f32 %v46, %v257
  %v288 = vadd.f32 %v47, %v262
  %v289 = vadd.f32 %v48, %v265
  %v290 = vadd.f32 %v49, %v270
  %v291 = vadd.f32 %v50, %v273
  %292 = vst [vmem:[#allocation2] sm:$0xff] %v276
  %293 = vst [vmem:[#allocation2 + $0x8] sm:$0xff] %v277
  %294 = vst [vmem:[#allocation2 + $0x10] sm:$0xff] %v278
  %295 = vst [vmem:[#allocation2 + $0x18] sm:$0xff] %v279
  %296 = vst [vmem:[#allocation2 + $0x20] sm:$0xff] %v280
  %297 = vst [vmem:[#allocation2 + $0x28] sm:$0xff] %v281
  %298 = vst [vmem:[#allocation2 + $0x30] sm:$0xff] %v282
  %299 = vst [vmem:[#allocation2 + $0x38] sm:$0xff] %v283
  %300 = vst [vmem:[#allocation2 + $0x40] sm:$0xff] %v284
  %301 = vst [vmem:[#allocation2 + $0x48] sm:$0xff] %v285
  %302 = vst [vmem:[#allocation2 + $0x50] sm:$0xff] %v286
  %303 = vst [vmem:[#allocation2 + $0x58] sm:$0xff] %v287
  %304 = vst [vmem:[#allocation2 + $0x60] sm:$0xff] %v288
  %305 = vst [vmem:[#allocation2 + $0x68] sm:$0xff] %v289
  %306 = vst [vmem:[#allocation2 + $0x70] sm:$0xff] %v290
  %307 = vst [vmem:[#allocation2 + $0x78] sm:$0xff] %v291
  // Predicated region
  $region18: #{generator_forward.39} parent=0 // pred_check
    %p308 = pneg %p15
  $region19: #{generator_forward.39} parent=0 // pred_check_branch
    %310 = sbr.rel (%p308) target = $region21
  $region20: #{generator_forward.39} parent=0 // pred_region
    %v311 = vld [vmem:[#allocation2] sm:$0xff]
    %v312 = vld [vmem:[#allocation2 + $0x8] sm:$0xff]
    %v313 = vld [vmem:[#allocation2 + $0x10] sm:$0xff]
    %v314 = vld [vmem:[#allocation2 + $0x18] sm:$0xff]
    %v315 = vld [vmem:[#allocation2 + $0x20] sm:$0xff]
    %v316 = vld [vmem:[#allocation2 + $0x28] sm:$0xff]
    %v317 = vld [vmem:[#allocation2 + $0x30] sm:$0xff]
    %v318 = vld [vmem:[#allocation2 + $0x38] sm:$0xff]
    %v319 = vld [vmem:[#allocation2 + $0x40] sm:$0xff]
    %v320 = vld [vmem:[#allocation2 + $0x48] sm:$0xff]
    %v321 = vld [vmem:[#allocation2 + $0x50] sm:$0xff]
    %v322 = vld [vmem:[#allocation2 + $0x58] sm:$0xff]
    %v323 = vld [vmem:[#allocation2 + $0x60] sm:$0xff]
    %v324 = vld [vmem:[#allocation2 + $0x68] sm:$0xff]
    %v325 = vld [vmem:[#allocation2 + $0x70] sm:$0xff]
    %v326 = vld [vmem:[#allocation2 + $0x78] sm:$0xff]
    %v327 = vld [vmem:[%s2] sm:$0x1]
    %v329 = vlaneseq
    %v330 = vshrl.u32 %v329, 7
    %v331 = vsub.s32 0, %v330
    %v332 = vrot.slane %v327, %v331
    %v334 = vadd.f32 %v311, %v332
    %v335 = vadd.f32 %v312, %v332
    %v336 = vadd.f32 %v313, %v332
    %v337 = vadd.f32 %v314, %v332
    %v338 = vadd.f32 %v315, %v332
    %v339 = vadd.f32 %v316, %v332
    %v340 = vadd.f32 %v317, %v332
    %v341 = vadd.f32 %v318, %v332
    %v342 = vadd.f32 %v319, %v332
    %v343 = vadd.f32 %v320, %v332
    %v344 = vadd.f32 %v321, %v332
    %v345 = vadd.f32 %v322, %v332
    %v346 = vadd.f32 %v323, %v332
    %v347 = vadd.f32 %v324, %v332
    %v348 = vadd.f32 %v325, %v332
    %v349 = vadd.f32 %v326, %v332
    %350 = vst [vmem:[%s3] sm:$0xff] %v334
    %351 = vst [vmem:[%s3 + $0x8] sm:$0xff] %v335
    %352 = vst [vmem:[%s3 + $0x10] sm:$0xff] %v336
    %353 = vst [vmem:[%s3 + $0x18] sm:$0xff] %v337
    %354 = vst [vmem:[%s3 + $0x20] sm:$0xff] %v338
    %355 = vst [vmem:[%s3 + $0x28] sm:$0xff] %v339
    %356 = vst [vmem:[%s3 + $0x30] sm:$0xff] %v340
    %357 = vst [vmem:[%s3 + $0x38] sm:$0xff] %v341
    %358 = vst [vmem:[%s3 + $0x40] sm:$0xff] %v342
    %359 = vst [vmem:[%s3 + $0x48] sm:$0xff] %v343
    %360 = vst [vmem:[%s3 + $0x50] sm:$0xff] %v344
    %361 = vst [vmem:[%s3 + $0x58] sm:$0xff] %v345
    %362 = vst [vmem:[%s3 + $0x60] sm:$0xff] %v346
    %363 = vst [vmem:[%s3 + $0x68] sm:$0xff] %v347
    %364 = vst [vmem:[%s3 + $0x70] sm:$0xff] %v348
    %365 = vst [vmem:[%s3 + $0x78] sm:$0xff] %v349
  $region21: #{generator_forward.39} parent=0 // pred_fallthru
    _
  // Predicated region
  $region22: #{generator_forward.39} parent=0 // pred_check
    _
  $region23: #{generator_forward.39} parent=0 // pred_check_branch
    %367 = sbr.rel (0) target = $region25
  $region24: #{generator_forward.39} parent=0 // pred_region
    _
  $region25: #{generator_forward.39} parent=0 // pred_fallthru
    _
  // Predicated region
  $region26: #{generator_forward.39} parent=0 // pred_check
    _
  $region27: #{generator_forward.39} parent=0 // pred_check_branch
    %369 = sbr.rel (0) target = $region29
  $region28: #{generator_forward.39} parent=0 // pred_region
    _
  $region29: #{generator_forward.39} parent=0 // pred_fallthru
    _

// kernel: generator_forward.40
$region0: #{generator_forward.40}
  #allocation0 [shape = 'u32[]', space=smem, size = 0x4, offset = 0x4, fixed_abs, tag = 'smem constant byte address 0x4 - core index']
  #allocation1 [shape = 'u32[144,128]{1,0:T(1,128)}', space=vmem, size = 0x12000, scoped, tag = 'internal scratch']
  %s0 = inlined_call_operand.vmem [shape: f32[2,8,8,16], index: 0, kind: input, shape index: {}]
  %s1 = inlined_call_operand.vmem [shape: f32[1,16], index: 1, kind: input, shape index: {}]
  %s2 = inlined_call_operand.vmem [shape: f32[1,16], index: 2, kind: input, shape index: {}]
  %s3 = inlined_call_operand.vmem [shape: f32[2,8,8,16], index: 3, kind: output, shape index: {}]
  %s4 = sld [smem:[#allocation0]]
  $region45: #{generator_forward.40} parent=0
    _
  %s6 = ssub.s32 1, %s4
  %s7 = scalar_select 0, %s6, %s4
  loop: start=0, step=1, limit=4
  $region2: #{generator_forward.40} parent=0 // loop_pre_header
    _
  $region3: #{generator_forward.40} parent=0 // loop_header
    %s9 = sphi 0, %s13
    %p10 = scmp.ge.s32.totalorder %s9, 4
    %s19 = sphi 0, %s21
    %s22 = sphi 0, %s19
    %s23 = sphi 0, %s22
    %s39 = sphi 0, %s23
    %s43 = sphi 0, %s43
    %s45 = sphi 0, %s43
    %s46 = sphi 0, %s45
    %s60 = sphi 0, %s46
    %s64 = sphi 0, %s64
    %s66 = sphi 0, %s64
    %s67 = sphi 0, %s66
    %s81 = sphi 0, %s67
    %s87 = sphi 0, %s89
    %s90 = sphi 0, %s87
    %s91 = sphi 0, %s90
    %s107 = sphi 0, %s91
  $region4: #{generator_forward.40} parent=0 // loop_header_branch
    %12 = sbr.rel (%p10) target = $region8
  $region5: #{generator_forward.40} parent=0 // loop_body
    %s14 = ssub.s32 %s9, 1
    %s15 = ssub.s32 %s9, 2
    %s16 = sadd.s32 %s9, 1
    %s17 = ssub.s32 %s9, %s16
    %p18 = scmp.eq.s32.totalorder %s17, 0
    %s20 = sadd.s32 %s19, 1
    %s21 = scalar_select %p18, %s19, %s20
    %p24 = pneg %p18
    %p25 = scmp.eq.s32.totalorder %s9, 1
    %p26 = por %p24, %p25
    %p27 = scmp.ne.s32.totalorder %s19, %s22
    %p28 = scmp.eq.s32.totalorder %s9, 0
    %p29 = por %p27, %p28
    %p30 = scmp.ne.s32.totalorder %s19, %s22
    %p31 = scmp.eq.s32.totalorder %s14, 1
    %p32 = por %p30, %p31
    %p33 = scmp.ne.s32.totalorder %s22, %s23
    %p34 = scmp.eq.s32.totalorder %s14, 0
    %p35 = por %p33, %p34
    %p36 = scmp.ne.s32.totalorder %s22, %s23
    %p37 = scmp.eq.s32.totalorder %s15, 1
    %p38 = por %p36, %p37
    %p40 = scmp.ne.s32.totalorder %s23, %s39
    %p41 = scmp.eq.s32.totalorder %s15, 0
    %p42 = por %p40, %p41
    %s44 = sadd.s32 %s43, 1
    %p47 = scmp.eq.s32.totalorder %s9, 1
    %p48 = scmp.ne.s32.totalorder %s43, %s45
    %p49 = scmp.eq.s32.totalorder %s9, 0
    %p50 = por %p48, %p49
    %p51 = scmp.ne.s32.totalorder %s43, %s45
    %p52 = scmp.eq.s32.totalorder %s14, 1
    %p53 = por %p51, %p52
    %p54 = scmp.ne.s32.totalorder %s45, %s46
    %p55 = scmp.eq.s32.totalorder %s14, 0
    %p56 = por %p54, %p55
    %p57 = scmp.ne.s32.totalorder %s45, %s46
    %p58 = scmp.eq.s32.totalorder %s15, 1
    %p59 = por %p57, %p58
    %p61 = scmp.ne.s32.totalorder %s46, %s60
    %p62 = scmp.eq.s32.totalorder %s15, 0
    %p63 = por %p61, %p62
    %s65 = sadd.s32 %s64, 1
    %p68 = scmp.eq.s32.totalorder %s9, 1
    %p69 = scmp.ne.s32.totalorder %s64, %s66
    %p70 = scmp.eq.s32.totalorder %s9, 0
    %p71 = por %p69, %p70
    %p72 = scmp.ne.s32.totalorder %s64, %s66
    %p73 = scmp.eq.s32.totalorder %s14, 1
    %p74 = por %p72, %p73
    %p75 = scmp.ne.s32.totalorder %s66, %s67
    %p76 = scmp.eq.s32.totalorder %s14, 0
    %p77 = por %p75, %p76
    %p78 = scmp.ne.s32.totalorder %s66, %s67
    %p79 = scmp.eq.s32.totalorder %s15, 1
    %p80 = por %p78, %p79
    %p82 = scmp.ne.s32.totalorder %s67, %s81
    %p83 = scmp.eq.s32.totalorder %s15, 0
    %p84 = por %p82, %p83
    %s85 = ssub.s32 %s9, %s16
    %p86 = scmp.eq.s32.totalorder %s85, 0
    %s88 = sadd.s32 %s87, 1
    %s89 = scalar_select %p86, %s87, %s88
    %p92 = pneg %p86
    %p93 = scmp.eq.s32.totalorder %s9, 1
    %p94 = por %p92, %p93
    %p95 = scmp.ne.s32.totalorder %s87, %s90
    %p96 = scmp.eq.s32.totalorder %s9, 0
    %p97 = por %p95, %p96
    %p98 = scmp.ne.s32.totalorder %s87, %s90
    %p99 = scmp.eq.s32.totalorder %s14, 1
    %p100 = por %p98, %p99
    %p101 = scmp.ne.s32.totalorder %s90, %s91
    %p102 = scmp.eq.s32.totalorder %s14, 0
    %p103 = por %p101, %p102
    %p104 = scmp.ne.s32.totalorder %s90, %s91
    %p105 = scmp.eq.s32.totalorder %s15, 1
    %p106 = por %p104, %p105
    %p108 = scmp.ne.s32.totalorder %s91, %s107
    %p109 = scmp.eq.s32.totalorder %s15, 0
    %p110 = por %p108, %p109
    %p111 = scmp.le.s32.totalorder 1, %s9
    %p112 = scmp.lt.s32.totalorder %s9, 3
    %p113 = pnand %p111, %p112
    %p114 = pneg %p113
    // Predicated region
    $region9: #{generator_forward.40} parent=5 // pred_check
      _
    $region10: #{generator_forward.40} parent=5 // pred_check_branch
      %116 = sbr.rel (%p113) target = $region12
    $region11: #{generator_forward.40} parent=5 // pred_region
      %s117 = ssub.s32 %s9, 1
      // Predicated region
      $region13: #{generator_forward.40} parent=11 // pred_check
        %p118 = pneg %p56
      $region14: #{generator_forward.40} parent=11 // pred_check_branch
        %120 = sbr.rel (%p118) target = $region16
      $region15: #{generator_forward.40} parent=11 // pred_region
        _
      $region16: #{generator_forward.40} parent=11 // pred_fallthru
        _
      // Predicated region
      $region17: #{generator_forward.40} parent=11 // pred_check
        %p121 = pneg %p77
      $region18: #{generator_forward.40} parent=11 // pred_check_branch
        %123 = sbr.rel (%p121) target = $region20
      $region19: #{generator_forward.40} parent=11 // pred_region
        _
      $region20: #{generator_forward.40} parent=11 // pred_fallthru
        _
    $region12: #{generator_forward.40} parent=5 // pred_fallthru
      _
    %p124 = scmp.lt.s32.totalorder %s9, 2
    // Predicated region
    $region21: #{generator_forward.40} parent=5 // pred_check
      %p125 = pneg %p124
    $region22: #{generator_forward.40} parent=5 // pred_check_branch
      %127 = sbr.rel (%p125) target = $region24
    $region23: #{generator_forward.40} parent=5 // pred_region
      // Predicated region
      $region25: #{generator_forward.40} parent=23 // pred_check
        %p128 = pneg %p29
      $region26: #{generator_forward.40} parent=23 // pred_check_branch
        %130 = sbr.rel (%p128) target = $region28
      $region27: #{generator_forward.40} parent=23 // pred_region
        %p131 = scmp.lt.s32.totalorder %s9, 1
        %s132 = scalar_select %p131, %s9, 1
        %s133 = smul.addr %s132, 8
        %s134 = smul.addr %s133, 8
        %s135 = scalar_lea.vmem %s0, %s134
      $region28: #{generator_forward.40} parent=23 // pred_fallthru
        _
    $region24: #{generator_forward.40} parent=5 // pred_fallthru
      _
    %p136 = scmp.le.s32.totalorder 1, %s9
    %p137 = scmp.lt.s32.totalorder %s9, 3
    %p138 = pnand %p136, %p137
    %p139 = pneg %p138
    // Predicated region
    $region29: #{generator_forward.40} parent=5 // pred_check
      _
    $region30: #{generator_forward.40} parent=5 // pred_check_branch
      %141 = sbr.rel (%p138) target = $region32
    $region31: #{generator_forward.40} parent=5 // pred_region
      %s142 = ssub.s32 %s9, 1
      %p143 = scmp.lt.s32.totalorder %s14, 1
      %s144 = scalar_select %p143, %s14, 1
      %s145 = smul.addr %s144, 8
      %s146 = smul.addr %s145, 8
      %s147 = scalar_lea.vmem %s0, %s146
      %p148 = pneg %p35
      %p149 = pneg %p32
      %p150 = pneg %p56
      %p151 = pneg %p53
      %p152 = pneg %p77
      %p153 = pneg %p74
      %p154 = pneg %p103
      %p155 = pneg %p100
      %p156 = scmp.lt.s32.totalorder %s14, 1
      %s157 = scalar_select %p156, %s14, 1
      %s158 = smul.addr %s157, 8
      %s159 = smul.addr %s158, 8
      %s160 = scalar_lea.vmem %s3, %s159
      %p161 = scmp.lt.s32.totalorder %s14, 1
      %s162 = scalar_select %p161, %s14, 1
      %s163 = smul.addr %s162, 8
      %s164 = smul.addr %s163, 8
      %s165 = scalar_lea.vmem %s0, %s164
      %p166 = scmp.lt.s32.totalorder %s14, 1
      %s167 = scalar_select %p166, %s14, 1
      %s168 = smul.addr %s167, 8
      %s169 = smul.addr %s168, 8
      %s170 = scalar_lea.vmem %s3, %s169
      %v171 = vld [vmem:[%s165] sm:$0xff]
      %v172 = vld [vmem:[%s165 + $0x8] sm:$0xff]
      %v173 = vld [vmem:[%s165 + $0x10] sm:$0xff]
      %v174 = vld [vmem:[%s165 + $0x18] sm:$0xff]
      %v175 = vld [vmem:[%s165 + $0x20] sm:$0xff]
      %v176 = vld [vmem:[%s165 + $0x28] sm:$0xff]
      %v177 = vld [vmem:[%s165 + $0x30] sm:$0xff]
      %v178 = vld [vmem:[%s165 + $0x38] sm:$0xff]
      %vm179 = vcmask 130048
      %v180 = vsel %vm179, %v171, 0.0
      %v181 = vsel %vm179, %v172, 0.0
      %v182 = vadd.f32 %v180, %v181
      %v183 = vsel %vm179, %v173, 0.0
      %v184 = vadd.f32 %v182, %v183
      %v185 = vsel %vm179, %v174, 0.0
      %v186 = vadd.f32 %v184, %v185
      %v187 = vsel %vm179, %v175, 0.0
      %v188 = vadd.f32 %v186, %v187
      %v189 = vsel %vm179, %v176, 0.0
      %v190 = vadd.f32 %v188, %v189
      %v191 = vsel %vm179, %v177, 0.0
      %v192 = vadd.f32 %v190, %v191
      %v193 = vsel %vm179, %v178, 0.0
      %v194 = vadd.f32 %v192, %v193
      %v195 = vrot.slane %v194, 4
      %v196 = vadd.f32 %v194, %v195
      %v197 = vrot.slane %v196, 2
      %v198 = vadd.f32 %v196, %v197
      %v199 = vrot.slane %v198, 1
      %v200 = vadd.f32 %v198, %v199
      %v201 = vrcp.pop 64.0
      %v202 = vmul.f32 %v200, %v201
      %v203 = vsub.f32 %v171, %v202
      %v204 = vsub.f32 %v172, %v202
      %v205 = vsub.f32 %v173, %v202
      %v206 = vsub.f32 %v174, %v202
      %v207 = vsub.f32 %v175, %v202
      %v208 = vsub.f32 %v176, %v202
      %v209 = vsub.f32 %v177, %v202
      %v210 = vsub.f32 %v178, %v202
      %v211 = vmul.f32 %v203, %v203
      %v212 = vmul.f32 %v204, %v204
      %v213 = vmul.f32 %v205, %v205
      %v214 = vmul.f32 %v206, %v206
      %v215 = vmul.f32 %v207, %v207
      %v216 = vmul.f32 %v208, %v208
      %v217 = vmul.f32 %v209, %v209
      %v218 = vmul.f32 %v210, %v210
      %v219 = vsel %vm179, %v211, 0.0
      %v220 = vsel %vm179, %v212, 0.0
      %v221 = vadd.f32 %v219, %v220
      %v222 = vsel %vm179, %v213, 0.0
      %v223 = vadd.f32 %v221, %v222
      %v224 = vsel %vm179, %v214, 0.0
      %v225 = vadd.f32 %v223, %v224
      %v226 = vsel %vm179, %v215, 0.0
      %v227 = vadd.f32 %v225, %v226
      %v228 = vsel %vm179, %v216, 0.0
      %v229 = vadd.f32 %v227, %v228
      %v230 = vsel %vm179, %v217, 0.0
      %v231 = vadd.f32 %v229, %v230
      %v232 = vsel %vm179, %v218, 0.0
      %v233 = vadd.f32 %v231, %v232
      %v234 = vrot.slane %v233, 4
      %v235 = vadd.f32 %v233, %v234
      %v236 = vrot.slane %v235, 2
      %v237 = vadd.f32 %v235, %v236
      %v238 = vrot.slane %v237, 1
      %v239 = vadd.f32 %v237, %v238
      %v240 = vmul.f32 %v239, %v201
      %v241 = vadd.f32 %v240, 1e-05
      %v242 = vrsqrt.pop %v241
      %v243 = vmul.f32 %v203, %v242
      %v244 = vmul.f32 %v204, %v242
      %v245 = vmul.f32 %v205, %v242
      %v246 = vmul.f32 %v206, %v242
      %v247 = vmul.f32 %v207, %v242
      %v248 = vmul.f32 %v208, %v242
      %v249 = vmul.f32 %v209, %v242
      %v250 = vmul.f32 %v210, %v242
      %v251 = vld [vmem:[%s1] sm:$0x1]
      %v253 = vlaneseq
      %v254 = vshrl.u32 %v253, 7
      %v255 = vsub.s32 0, %v254
      %v256 = vrot.slane %v251, %v255
      %v258 = vmul.f32 %v243, %v256
      %v259 = vmul.f32 %v244, %v256
      %v260 = vmul.f32 %v245, %v256
      %v261 = vmul.f32 %v246, %v256
      %v262 = vmul.f32 %v247, %v256
      %v263 = vmul.f32 %v248, %v256
      %v264 = vmul.f32 %v249, %v256
      %v265 = vmul.f32 %v250, %v256
      %v266 = vld [vmem:[%s2] sm:$0x1]
      %v268 = vlaneseq
      %v269 = vshrl.u32 %v268, 7
      %v270 = vsub.s32 0, %v269
      %v271 = vrot.slane %v266, %v270
      %v273 = vadd.f32 %v258, %v271
      %v274 = vadd.f32 %v259, %v271
      %v275 = vadd.f32 %v260, %v271
      %v276 = vadd.f32 %v261, %v271
      %v277 = vadd.f32 %v262, %v271
      %v278 = vadd.f32 %v263, %v271
      %v279 = vadd.f32 %v264, %v271
      %v280 = vadd.f32 %v265, %v271
      %v281 = vmax.f32 %v273, 0.0
      %v282 = vmax.f32 %v274, 0.0
      %v283 = vmax.f32 %v275, 0.0
      %v284 = vmax.f32 %v276, 0.0
      %v285 = vmax.f32 %v277, 0.0
      %v286 = vmax.f32 %v278, 0.0
      %v287 = vmax.f32 %v279, 0.0
      %v288 = vmax.f32 %v280, 0.0
      %289 = vst.msk [vmem:[%s170] sm:$0xff] %vm179, %v281
      %290 = vst.msk [vmem:[%s170 + $0x8] sm:$0xff] %vm179, %v282
      %291 = vst.msk [vmem:[%s170 + $0x10] sm:$0xff] %vm179, %v283
      %292 = vst.msk [vmem:[%s170 + $0x18] sm:$0xff] %vm179, %v284
      %293 = vst.msk [vmem:[%s170 + $0x20] sm:$0xff] %vm179, %v285
      %294 = vst.msk [vmem:[%s170 + $0x28] sm:$0xff] %vm179, %v286
      %295 = vst.msk [vmem:[%s170 + $0x30] sm:$0xff] %vm179, %v287
      %296 = vst.msk [vmem:[%s170 + $0x38] sm:$0xff] %vm179, %v288
      %p297 = scmp.lt.s32.totalorder %s14, 1
      %s298 = scalar_select %p297, %s14, 1
      %s299 = smul.addr %s298, 8
      %s300 = smul.addr %s299, 8
      %s301 = scalar_lea.vmem %s3, %s300
      // Predicated region
      $region33: #{generator_forward.40} parent=31 // pred_check
        %p302 = pneg %p100
      $region34: #{generator_forward.40} parent=31 // pred_check_branch
        %304 = sbr.rel (%p302) target = $region36
      $region35: #{generator_forward.40} parent=31 // pred_region
        _
      $region36: #{generator_forward.40} parent=31 // pred_fallthru
        _
    $region32: #{generator_forward.40} parent=5 // pred_fallthru
      _
    %p305 = scmp.le.s32.totalorder 2, %s9
    // Predicated region
    $region37: #{generator_forward.40} parent=5 // pred_check
      %p306 = pneg %p305
    $region38: #{generator_forward.40} parent=5 // pred_check_branch
      %308 = sbr.rel (%p306) target = $region40
    $region39: #{generator_forward.40} parent=5 // pred_region
      %s309 = ssub.s32 %s9, 2
      // Predicated region
      $region41: #{generator_forward.40} parent=39 // pred_check
        %p310 = pneg %p106
      $region42: #{generator_forward.40} parent=39 // pred_check_branch
        %312 = sbr.rel (%p310) target = $region44
      $region43: #{generator_forward.40} parent=39 // pred_region
        %p313 = scmp.lt.s32.totalorder %s15, 1
        %s314 = scalar_select %p313, %s15, 1
        %s315 = smul.addr %s314, 8
        %s316 = smul.addr %s315, 8
        %s317 = scalar_lea.vmem %s3, %s316
      $region44: #{generator_forward.40} parent=39 // pred_fallthru
        _
    $region40: #{generator_forward.40} parent=5 // pred_fallthru
      _
  $region6: #{generator_forward.40} parent=0 // loop_footer
    %s13 = sadd.s32 1, %s9
  $region7: #{generator_forward.40} parent=0 // loop_footer_branch
    %8 = sbr.rel target = $region3
  $region8: #{generator_forward.40} parent=0 // loop_exit
    _

// kernel: generator_forward.45
$region0: #{generator_forward.45}
  #allocation0 [shape = 'u32[]', space=smem, size = 0x4, offset = 0x4, fixed_abs, tag = 'smem constant byte address 0x4 - core index']
  #allocation1 [shape = 'u32[144,128]{1,0:T(1,128)}', space=vmem, size = 0x12000, scoped, tag = 'internal scratch']
  #allocation2 [shape = 'f32[32,128]{1,0:T(8,128)}', space=vmem, size = 0x4000, scoped, tag = 'scratch operand']
  %s0 = inlined_call_operand.vmem [shape: bf16[32,512], index: 0, kind: input, shape index: {}]
  %s1 = inlined_call_operand.vmem [shape: bf16[512,128], index: 1, kind: input, shape index: {}]
  %s2 = inlined_call_operand.vmem [shape: f32[1,128], index: 2, kind: input, shape index: {}]
  %s3 = inlined_call_operand.vmem [shape: f32[32,128], index: 3, kind: output, shape index: {}]
  %s4 = sld [smem:[#allocation0]]
  $region30: #{generator_forward.45} parent=0
    _
  %s6 = ssub.s32 1, %s4
  %s7 = scalar_select 0, %s6, %s4
  // Predicated region
  $region2: #{generator_forward.45} parent=0 // pred_check
    _
  $region3: #{generator_forward.45} parent=0 // pred_check_branch
    %9 = sbr.rel (0) target = $region5
  $region4: #{generator_forward.45} parent=0 // pred_region
    _
  $region5: #{generator_forward.45} parent=0 // pred_fallthru
    _
  // Predicated region
  $region6: #{generator_forward.45} parent=0 // pred_check
    _
  $region7: #{generator_forward.45} parent=0 // pred_check_branch
    %11 = sbr.rel (0) target = $region9
  $region8: #{generator_forward.45} parent=0 // pred_region
    _
  $region9: #{generator_forward.45} parent=0 // pred_fallthru
    _
  // Predicated region
  $region10: #{generator_forward.45} parent=0 // pred_check
    _
  $region11: #{generator_forward.45} parent=0 // pred_check_branch
    %13 = sbr.rel (0) target = $region13
  $region12: #{generator_forward.45} parent=0 // pred_region
    _
  $region13: #{generator_forward.45} parent=0 // pred_fallthru
    _
  %p15 = scmp.eq.s32.totalorder 0, 0
  // Predicated region
  $region14: #{generator_forward.45} parent=0 // pred_check
    %p16 = pneg %p15
  $region15: #{generator_forward.45} parent=0 // pred_check_branch
    %18 = sbr.rel (%p16) target = $region17
  $region16: #{generator_forward.45} parent=0 // pred_region
    %19 = vst [vmem:[#allocation2] sm:$0xff] 0.0
    %20 = vst [vmem:[#allocation2 + $0x8] sm:$0xff] 0.0
    %21 = vst [vmem:[#allocation2 + $0x10] sm:$0xff] 0.0
    %22 = vst [vmem:[#allocation2 + $0x18] sm:$0xff] 0.0
  $region17: #{generator_forward.45} parent=0 // pred_fallthru
    _
  %v23 = vld [vmem:[#allocation2] sm:$0xff]
  %v24 = vld [vmem:[#allocation2 + $0x8] sm:$0xff]
  %v25 = vld [vmem:[#allocation2 + $0x10] sm:$0xff]
  %v26 = vld [vmem:[#allocation2 + $0x18] sm:$0xff]
  %v27 = vld [vmem:[%s0] sm:$0xff]
  %v28 = vld [vmem:[%s0 + $0x8] sm:$0xff]
  %v29 = vld [vmem:[%s0 + $0x10] sm:$0xff]
  %v30 = vld [vmem:[%s0 + $0x18] sm:$0xff]
  %v31 = vld [vmem:[%s0 + $0x20] sm:$0xff]
  %v32 = vld [vmem:[%s0 + $0x28] sm:$0xff]
  %v33 = vld [vmem:[%s0 + $0x30] sm:$0xff]
  %v34 = vld [vmem:[%s0 + $0x38] sm:$0xff]
  %v35 = vld [vmem:[%s1] sm:$0xf]
  %v36 = vld [vmem:[%s1 + $0x4] sm:$0xf]
  %v37 = vld [vmem:[%s1 + $0x8] sm:$0xf]
  %v38 = vld [vmem:[%s1 + $0xc] sm:$0xf]
  %v39 = vld [vmem:[%s1 + $0x10] sm:$0xf]
  %v40 = vld [vmem:[%s1 + $0x14] sm:$0xf]
  %v41 = vld [vmem:[%s1 + $0x18] sm:$0xf]
  %v42 = vld [vmem:[%s1 + $0x1c] sm:$0xf]
  %v43 = vld [vmem:[%s1 + $0x20] sm:$0xf]
  %v44 = vld [vmem:[%s1 + $0x24] sm:$0xf]
  %v45 = vld [vmem:[%s1 + $0x28] sm:$0xf]
  %v46 = vld [vmem:[%s1 + $0x2c] sm:$0xf]
  %v47 = vld [vmem:[%s1 + $0x30] sm:$0xf]
  %v48 = vld [vmem:[%s1 + $0x34] sm:$0xf]
  %v49 = vld [vmem:[%s1 + $0x38] sm:$0xf]
  %v50 = vld [vmem:[%s1 + $0x3c] sm:$0xf]
  %v51 = vld [vmem:[%s1 + $0x40] sm:$0xf]
  %v52 = vld [vmem:[%s1 + $0x44] sm:$0xf]
  %v53 = vld [vmem:[%s1 + $0x48] sm:$0xf]
  %v54 = vld [vmem:[%s1 + $0x4c] sm:$0xf]
  %v55 = vld [vmem:[%s1 + $0x50] sm:$0xf]
  %v56 = vld [vmem:[%s1 + $0x54] sm:$0xf]
  %v57 = vld [vmem:[%s1 + $0x58] sm:$0xf]
  %v58 = vld [vmem:[%s1 + $0x5c] sm:$0xf]
  %v59 = vld [vmem:[%s1 + $0x60] sm:$0xf]
  %v60 = vld [vmem:[%s1 + $0x64] sm:$0xf]
  %v61 = vld [vmem:[%s1 + $0x68] sm:$0xf]
  %v62 = vld [vmem:[%s1 + $0x6c] sm:$0xf]
  %v63 = vld [vmem:[%s1 + $0x70] sm:$0xf]
  %v64 = vld [vmem:[%s1 + $0x74] sm:$0xf]
  %v65 = vld [vmem:[%s1 + $0x78] sm:$0xf]
  %v66 = vld [vmem:[%s1 + $0x7c] sm:$0xf]
  %v67 = vld [vmem:[%s1 + $0x80] sm:$0xf]
  %v68 = vld [vmem:[%s1 + $0x84] sm:$0xf]
  %v69 = vld [vmem:[%s1 + $0x88] sm:$0xf]
  %v70 = vld [vmem:[%s1 + $0x8c] sm:$0xf]
  %v71 = vld [vmem:[%s1 + $0x90] sm:$0xf]
  %v72 = vld [vmem:[%s1 + $0x94] sm:$0xf]
  %v73 = vld [vmem:[%s1 + $0x98] sm:$0xf]
  %v74 = vld [vmem:[%s1 + $0x9c] sm:$0xf]
  %v75 = vld [vmem:[%s1 + $0xa0] sm:$0xf]
  %v76 = vld [vmem:[%s1 + $0xa4] sm:$0xf]
  %v77 = vld [vmem:[%s1 + $0xa8] sm:$0xf]
  %v78 = vld [vmem:[%s1 + $0xac] sm:$0xf]
  %v79 = vld [vmem:[%s1 + $0xb0] sm:$0xf]
  %v80 = vld [vmem:[%s1 + $0xb4] sm:$0xf]
  %v81 = vld [vmem:[%s1 + $0xb8] sm:$0xf]
  %v82 = vld [vmem:[%s1 + $0xbc] sm:$0xf]
  %v83 = vld [vmem:[%s1 + $0xc0] sm:$0xf]
  %v84 = vld [vmem:[%s1 + $0xc4] sm:$0xf]
  %v85 = vld [vmem:[%s1 + $0xc8] sm:$0xf]
  %v86 = vld [vmem:[%s1 + $0xcc] sm:$0xf]
  %v87 = vld [vmem:[%s1 + $0xd0] sm:$0xf]
  %v88 = vld [vmem:[%s1 + $0xd4] sm:$0xf]
  %v89 = vld [vmem:[%s1 + $0xd8] sm:$0xf]
  %v90 = vld [vmem:[%s1 + $0xdc] sm:$0xf]
  %v91 = vld [vmem:[%s1 + $0xe0] sm:$0xf]
  %v92 = vld [vmem:[%s1 + $0xe4] sm:$0xf]
  %v93 = vld [vmem:[%s1 + $0xe8] sm:$0xf]
  %v94 = vld [vmem:[%s1 + $0xec] sm:$0xf]
  %v95 = vld [vmem:[%s1 + $0xf0] sm:$0xf]
  %v96 = vld [vmem:[%s1 + $0xf4] sm:$0xf]
  %v97 = vld [vmem:[%s1 + $0xf8] sm:$0xf]
  %v98 = vld [vmem:[%s1 + $0xfc] sm:$0xf]
  %v107 = vunpack.c.l.b16 %v27
  %v108 = vunpack.c.h.b16 %v27
  %v109 = vunpack.c.l.b16 %v28
  %v110 = vunpack.c.h.b16 %v28
  %v111 = vunpack.c.l.b16 %v29
  %v112 = vunpack.c.h.b16 %v29
  %v113 = vunpack.c.l.b16 %v30
  %v114 = vunpack.c.h.b16 %v30
  %v115 = vunpack.c.l.b16 %v31
  %v116 = vunpack.c.h.b16 %v31
  %v117 = vunpack.c.l.b16 %v32
  %v118 = vunpack.c.h.b16 %v32
  %v119 = vunpack.c.l.b16 %v33
  %v120 = vunpack.c.h.b16 %v33
  %v121 = vunpack.c.l.b16 %v34
  %v122 = vunpack.c.h.b16 %v34
  %v123 = vpack.c.b16 %v111, %v107
  %v124 = vpack.c.b16 %v112, %v108
  %v125 = vpack.c.b16 %v113, %v109
  %v126 = vpack.c.b16 %v114, %v110
  %v127 = vpack.c.b16 %v119, %v115
  %v128 = vpack.c.b16 %v120, %v116
  %v129 = vpack.c.b16 %v121, %v117
  %v130 = vpack.c.b16 %v122, %v118
  %v203 = vunpack.c.l.b16 %v35
  %v204 = vunpack.c.l.b16 %v36
  %v205 = vunpack.c.l.b16 %v37
  %v206 = vunpack.c.l.b16 %v38
  %v207 = vunpack.c.l.b16 %v39
  %v208 = vunpack.c.l.b16 %v40
  %v209 = vunpack.c.l.b16 %v41
  %v210 = vunpack.c.l.b16 %v42
  %v211 = vunpack.c.l.b16 %v43
  %v212 = vunpack.c.l.b16 %v44
  %v213 = vunpack.c.l.b16 %v45
  %v214 = vunpack.c.l.b16 %v46
  %v215 = vunpack.c.l.b16 %v47
  %v216 = vunpack.c.l.b16 %v48
  %v217 = vunpack.c.l.b16 %v49
  %v218 = vunpack.c.l.b16 %v50
  %v219 = vunpack.c.l.b16 %v51
  %v220 = vunpack.c.l.b16 %v52
  %v221 = vunpack.c.l.b16 %v53
  %v222 = vunpack.c.l.b16 %v54
  %v223 = vunpack.c.l.b16 %v55
  %v224 = vunpack.c.l.b16 %v56
  %v225 = vunpack.c.l.b16 %v57
  %v226 = vunpack.c.l.b16 %v58
  %v227 = vunpack.c.l.b16 %v59
  %v228 = vunpack.c.l.b16 %v60
  %v229 = vunpack.c.l.b16 %v61
  %v230 = vunpack.c.l.b16 %v62
  %v231 = vunpack.c.l.b16 %v63
  %v232 = vunpack.c.l.b16 %v64
  %v233 = vunpack.c.l.b16 %v65
  %v234 = vunpack.c.l.b16 %v66
  %v235 = vunpack.c.l.b16 %v67
  %v236 = vunpack.c.l.b16 %v68
  %v237 = vunpack.c.l.b16 %v69
  %v238 = vunpack.c.l.b16 %v70
  %v239 = vunpack.c.l.b16 %v71
  %v240 = vunpack.c.l.b16 %v72
  %v241 = vunpack.c.l.b16 %v73
  %v242 = vunpack.c.l.b16 %v74
  %v243 = vunpack.c.l.b16 %v75
  %v244 = vunpack.c.l.b16 %v76
  %v245 = vunpack.c.l.b16 %v77
  %v246 = vunpack.c.l.b16 %v78
  %v247 = vunpack.c.l.b16 %v79
  %v248 = vunpack.c.l.b16 %v80
  %v249 = vunpack.c.l.b16 %v81
  %v250 = vunpack.c.l.b16 %v82
  %v251 = vunpack.c.l.b16 %v83
  %v252 = vunpack.c.l.b16 %v84
  %v253 = vunpack.c.l.b16 %v85
  %v254 = vunpack.c.l.b16 %v86
  %v255 = vunpack.c.l.b16 %v87
  %v256 = vunpack.c.l.b16 %v88
  %v257 = vunpack.c.l.b16 %v89
  %v258 = vunpack.c.l.b16 %v90
  %v259 = vunpack.c.l.b16 %v91
  %v260 = vunpack.c.l.b16 %v92
  %v261 = vunpack.c.l.b16 %v93
  %v262 = vunpack.c.l.b16 %v94
  %v263 = vunpack.c.l.b16 %v95
  %v264 = vunpack.c.l.b16 %v96
  %v265 = vunpack.c.l.b16 %v97
  %v266 = vunpack.c.l.b16 %v98
  %v267 = vpack.c.b16 %v204, %v203
  %v268 = vpack.c.b16 %v206, %v205
  %v269 = vpack.c.b16 %v208, %v207
  %v270 = vpack.c.b16 %v210, %v209
  %v271 = vpack.c.b16 %v212, %v211
  %v272 = vpack.c.b16 %v214, %v213
  %v273 = vpack.c.b16 %v216, %v215
  %v274 = vpack.c.b16 %v218, %v217
  %v275 = vpack.c.b16 %v220, %v219
  %v276 = vpack.c.b16 %v222, %v221
  %v277 = vpack.c.b16 %v224, %v223
  %v278 = vpack.c.b16 %v226, %v225
  %v279 = vpack.c.b16 %v228, %v227
  %v280 = vpack.c.b16 %v230, %v229
  %v281 = vpack.c.b16 %v232, %v231
  %v282 = vpack.c.b16 %v234, %v233
  %v283 = vpack.c.b16 %v236, %v235
  %v284 = vpack.c.b16 %v238, %v237
  %v285 = vpack.c.b16 %v240, %v239
  %v286 = vpack.c.b16 %v242, %v241
  %v287 = vpack.c.b16 %v244, %v243
  %v288 = vpack.c.b16 %v246, %v245
  %v289 = vpack.c.b16 %v248, %v247
  %v290 = vpack.c.b16 %v250, %v249
  %v291 = vpack.c.b16 %v252, %v251
  %v292 = vpack.c.b16 %v254, %v253
  %v293 = vpack.c.b16 %v256, %v255
  %v294 = vpack.c.b16 %v258, %v257
  %v295 = vpack.c.b16 %v260, %v259
  %v296 = vpack.c.b16 %v262, %v261
  %v297 = vpack.c.b16 %v264, %v263
  %v298 = vpack.c.b16 %v266, %v265
  %331 = vmatprep.subr.bf16.mxu0 0
  %332 = vmatpush1.bf16.msra.mxu0 %v274
  %333 = vmatprep.subr.bf16.mxu0 0
  %334 = vmatpush1.bf16.msra.mxu0 %v273
  %335 = vmatprep.subr.bf16.mxu0 0
  %336 = vmatpush1.bf16.msra.mxu0 %v272
  %337 = vmatprep.subr.bf16.mxu0 0
  %338 = vmatpush1.bf16.msra.mxu0 %v271
  %339 = vmatprep.subr.bf16.mxu0 0
  %340 = vmatpush1.bf16.msra.mxu0 %v270
  %341 = vmatprep.subr.bf16.mxu0 0
  %342 = vmatpush1.bf16.msra.mxu0 %v269
  %343 = vmatprep.subr.bf16.mxu0 0
  %344 = vmatpush1.bf16.msra.mxu0 %v268
  %345 = vmatprep.subr.bf16.mxu0 0
  %346 = vmatpush1.bf16.msra.mxu0 %v267
  %347 = vmatprep.subr.bf16.mxu0 0
  %348 = vmatpush2.bf16.msra.mxu0 %v282
  %349 = vmatprep.subr.bf16.mxu0 0
  %350 = vmatpush2.bf16.msra.mxu0 %v281
  %351 = vmatprep.subr.bf16.mxu0 0
  %352 = vmatpush2.bf16.msra.mxu0 %v280
  %353 = vmatprep.subr.bf16.mxu0 0
  %354 = vmatpush2.bf16.msra.mxu0 %v279
  %355 = vmatprep.subr.bf16.mxu0 0
  %356 = vmatpush2.bf16.msra.mxu0 %v278
  %357 = vmatprep.subr.bf16.mxu0 0
  %358 = vmatpush2.bf16.msra.mxu0 %v277
  %359 = vmatprep.subr.bf16.mxu0 0
  %360 = vmatpush2.bf16.msra.mxu0 %v276
  %361 = vmatprep.subr.bf16.mxu0 0
  %362 = vmatpush2.bf16.msra.mxu0 %v275
  %363 = vmatprep.mubr.bf16.mxu0 %v124
  %364 = vmatmul.mubr.bf16.gmra.mxu0 %v123
  %v365 = vpop.f32.mrf.mxu0
  %v366 = vadd.f32 0.0, %v365
  %v367 = vpop.f32.mrf.mxu0
  %v368 = vpop.f32.mrf.mxu0
  %v369 = vadd.f32 0.0, %v368
  %v370 = vpop.f32.mrf.mxu0
  %371 = vmatprep.mubr.bf16.mxu0 %v128
  %372 = vmatmul.mubr.bf16.gmra.mxu0 %v127
  %v373 = vpop.f32.mrf.mxu0
  %v374 = vadd.f32 0.0, %v373
  %v375 = vpop.f32.mrf.mxu0
  %v376 = vpop.f32.mrf.mxu0
  %v377 = vadd.f32 0.0, %v376
  %v378 = vpop.f32.mrf.mxu0
  %379 = vdwg.mxu0
  %380 = vmatprep.subr.bf16.mxu0 0
  %381 = vmatpush1.bf16.msra.mxu0 %v290
  %382 = vmatprep.subr.bf16.mxu0 0
  %383 = vmatpush1.bf16.msra.mxu0 %v289
  %384 = vmatprep.subr.bf16.mxu0 0
  %385 = vmatpush1.bf16.msra.mxu0 %v288
  %386 = vmatprep.subr.bf16.mxu0 0
  %387 = vmatpush1.bf16.msra.mxu0 %v287
  %388 = vmatprep.subr.bf16.mxu0 0
  %389 = vmatpush1.bf16.msra.mxu0 %v286
  %390 = vmatprep.subr.bf16.mxu0 0
  %391 = vmatpush1.bf16.msra.mxu0 %v285
  %392 = vmatprep.subr.bf16.mxu0 0
  %393 = vmatpush1.bf16.msra.mxu0 %v284
  %394 = vmatprep.subr.bf16.mxu0 0
  %395 = vmatpush1.bf16.msra.mxu0 %v283
  %396 = vmatprep.subr.bf16.mxu0 0
  %397 = vmatpush2.bf16.msra.mxu0 %v298
  %398 = vmatprep.subr.bf16.mxu0 0
  %399 = vmatpush2.bf16.msra.mxu0 %v297
  %400 = vmatprep.subr.bf16.mxu0 0
  %401 = vmatpush2.bf16.msra.mxu0 %v296
  %402 = vmatprep.subr.bf16.mxu0 0
  %403 = vmatpush2.bf16.msra.mxu0 %v295
  %404 = vmatprep.subr.bf16.mxu0 0
  %405 = vmatpush2.bf16.msra.mxu0 %v294
  %406 = vmatprep.subr.bf16.mxu0 0
  %407 = vmatpush2.bf16.msra.mxu0 %v293
  %408 = vmatprep.subr.bf16.mxu0 0
  %409 = vmatpush2.bf16.msra.mxu0 %v292
  %410 = vmatprep.subr.bf16.mxu0 0
  %411 = vmatpush2.bf16.msra.mxu0 %v291
  %412 = vmatprep.mubr.bf16.mxu0 %v126
  %413 = vmatmul.mubr.bf16.gmra.mxu0 %v125
  %v414 = vpop.f32.mrf.mxu0
  %v415 = vadd.f32 %v366, %v414
  %v416 = vpop.f32.mrf.mxu0
  %v417 = vpop.f32.mrf.mxu0
  %v418 = vadd.f32 %v369, %v417
  %v419 = vpop.f32.mrf.mxu0
  %420 = vmatprep.mubr.bf16.mxu0 %v130
  %421 = vmatmul.mubr.bf16.gmra.mxu0 %v129
  %v422 = vpop.f32.mrf.mxu0
  %v423 = vadd.f32 %v374, %v422
  %v424 = vpop.f32.mrf.mxu0
  %v425 = vpop.f32.mrf.mxu0
  %v426 = vadd.f32 %v377, %v425
  %v427 = vpop.f32.mrf.mxu0
  %428 = vdwg.mxu0
  %v429 = vadd.f32 %v23, %v415
  %v430 = vadd.f32 %v24, %v418
  %v431 = vadd.f32 %v25, %v423
  %v432 = vadd.f32 %v26, %v426
  %433 = vst [vmem:[#allocation2] sm:$0xff] %v429
  %434 = vst [vmem:[#allocation2 + $0x8] sm:$0xff] %v430
  %435 = vst [vmem:[#allocation2 + $0x10] sm:$0xff] %v431
  %436 = vst [vmem:[#allocation2 + $0x18] sm:$0xff] %v432
  // Predicated region
  $region18: #{generator_forward.45} parent=0 // pred_check
    %p437 = pneg %p15
  $region19: #{generator_forward.45} parent=0 // pred_check_branch
    %439 = sbr.rel (%p437) target = $region21
  $region20: #{generator_forward.45} parent=0 // pred_region
    %v440 = vld [vmem:[#allocation2] sm:$0xff]
    %v441 = vld [vmem:[#allocation2 + $0x8] sm:$0xff]
    %v442 = vld [vmem:[#allocation2 + $0x10] sm:$0xff]
    %v443 = vld [vmem:[#allocation2 + $0x18] sm:$0xff]
    %v444 = vld [vmem:[%s2] sm:$0x1]
    %v446 = vlaneseq
    %v447 = vshrl.u32 %v446, 7
    %v448 = vsub.s32 0, %v447
    %v449 = vrot.slane %v444, %v448
    %v451 = vadd.f32 %v440, %v449
    %v452 = vadd.f32 %v441, %v449
    %v453 = vadd.f32 %v442, %v449
    %v454 = vadd.f32 %v443, %v449
    %455 = vst [vmem:[%s3] sm:$0xff] %v451
    %456 = vst [vmem:[%s3 + $0x8] sm:$0xff] %v452
    %457 = vst [vmem:[%s3 + $0x10] sm:$0xff] %v453
    %458 = vst [vmem:[%s3 + $0x18] sm:$0xff] %v454
  $region21: #{generator_forward.45} parent=0 // pred_fallthru
    _
  // Predicated region
  $region22: #{generator_forward.45} parent=0 // pred_check
    _
  $region23: #{generator_forward.45} parent=0 // pred_check_branch
    %460 = sbr.rel (0) target = $region25
  $region24: #{generator_forward.45} parent=0 // pred_region
    _
  $region25: #{generator_forward.45} parent=0 // pred_fallthru
    _
  // Predicated region
  $region26: #{generator_forward.45} parent=0 // pred_check
    _
  $region27: #{generator_forward.45} parent=0 // pred_check_branch
    %462 = sbr.rel (0) target = $region29
  $region28: #{generator_forward.45} parent=0 // pred_region
    _
  $region29: #{generator_forward.45} parent=0 // pred_fallthru
    _

// kernel: generator_forward.46
$region0: #{generator_forward.46}
  #allocation0 [shape = 'u32[]', space=smem, size = 0x4, offset = 0x4, fixed_abs, tag = 'smem constant byte address 0x4 - core index']
  #allocation1 [shape = 'u32[144,128]{1,0:T(1,128)}', space=vmem, size = 0x12000, scoped, tag = 'internal scratch']
  %s0 = inlined_call_operand.vmem [shape: f32[2,4,4,32], index: 0, kind: input, shape index: {}]
  %s1 = inlined_call_operand.vmem [shape: f32[1,32], index: 1, kind: input, shape index: {}]
  %s2 = inlined_call_operand.vmem [shape: f32[1,32], index: 2, kind: input, shape index: {}]
  %s3 = inlined_call_operand.vmem [shape: f32[2,4,4,32], index: 3, kind: output, shape index: {}]
  %s4 = sld [smem:[#allocation0]]
  $region45: #{generator_forward.46} parent=0
    _
  %s6 = ssub.s32 1, %s4
  %s7 = scalar_select 0, %s6, %s4
  loop: start=0, step=1, limit=4
  $region2: #{generator_forward.46} parent=0 // loop_pre_header
    _
  $region3: #{generator_forward.46} parent=0 // loop_header
    %s9 = sphi 0, %s13
    %p10 = scmp.ge.s32.totalorder %s9, 4
    %s19 = sphi 0, %s21
    %s22 = sphi 0, %s19
    %s23 = sphi 0, %s22
    %s39 = sphi 0, %s23
    %s43 = sphi 0, %s43
    %s45 = sphi 0, %s43
    %s46 = sphi 0, %s45
    %s60 = sphi 0, %s46
    %s64 = sphi 0, %s64
    %s66 = sphi 0, %s64
    %s67 = sphi 0, %s66
    %s81 = sphi 0, %s67
    %s87 = sphi 0, %s89
    %s90 = sphi 0, %s87
    %s91 = sphi 0, %s90
    %s107 = sphi 0, %s91
  $region4: #{generator_forward.46} parent=0 // loop_header_branch
    %12 = sbr.rel (%p10) target = $region8
  $region5: #{generator_forward.46} parent=0 // loop_body
    %s14 = ssub.s32 %s9, 1
    %s15 = ssub.s32 %s9, 2
    %s16 = sadd.s32 %s9, 1
    %s17 = ssub.s32 %s9, %s16
    %p18 = scmp.eq.s32.totalorder %s17, 0
    %s20 = sadd.s32 %s19, 1
    %s21 = scalar_select %p18, %s19, %s20
    %p24 = pneg %p18
    %p25 = scmp.eq.s32.totalorder %s9, 1
    %p26 = por %p24, %p25
    %p27 = scmp.ne.s32.totalorder %s19, %s22
    %p28 = scmp.eq.s32.totalorder %s9, 0
    %p29 = por %p27, %p28
    %p30 = scmp.ne.s32.totalorder %s19, %s22
    %p31 = scmp.eq.s32.totalorder %s14, 1
    %p32 = por %p30, %p31
    %p33 = scmp.ne.s32.totalorder %s22, %s23
    %p34 = scmp.eq.s32.totalorder %s14, 0
    %p35 = por %p33, %p34
    %p36 = scmp.ne.s32.totalorder %s22, %s23
    %p37 = scmp.eq.s32.totalorder %s15, 1
    %p38 = por %p36, %p37
    %p40 = scmp.ne.s32.totalorder %s23, %s39
    %p41 = scmp.eq.s32.totalorder %s15, 0
    %p42 = por %p40, %p41
    %s44 = sadd.s32 %s43, 1
    %p47 = scmp.eq.s32.totalorder %s9, 1
    %p48 = scmp.ne.s32.totalorder %s43, %s45
    %p49 = scmp.eq.s32.totalorder %s9, 0
    %p50 = por %p48, %p49
    %p51 = scmp.ne.s32.totalorder %s43, %s45
    %p52 = scmp.eq.s32.totalorder %s14, 1
    %p53 = por %p51, %p52
    %p54 = scmp.ne.s32.totalorder %s45, %s46
    %p55 = scmp.eq.s32.totalorder %s14, 0
    %p56 = por %p54, %p55
    %p57 = scmp.ne.s32.totalorder %s45, %s46
    %p58 = scmp.eq.s32.totalorder %s15, 1
    %p59 = por %p57, %p58
    %p61 = scmp.ne.s32.totalorder %s46, %s60
    %p62 = scmp.eq.s32.totalorder %s15, 0
    %p63 = por %p61, %p62
    %s65 = sadd.s32 %s64, 1
    %p68 = scmp.eq.s32.totalorder %s9, 1
    %p69 = scmp.ne.s32.totalorder %s64, %s66
    %p70 = scmp.eq.s32.totalorder %s9, 0
    %p71 = por %p69, %p70
    %p72 = scmp.ne.s32.totalorder %s64, %s66
    %p73 = scmp.eq.s32.totalorder %s14, 1
    %p74 = por %p72, %p73
    %p75 = scmp.ne.s32.totalorder %s66, %s67
    %p76 = scmp.eq.s32.totalorder %s14, 0
    %p77 = por %p75, %p76
    %p78 = scmp.ne.s32.totalorder %s66, %s67
    %p79 = scmp.eq.s32.totalorder %s15, 1
    %p80 = por %p78, %p79
    %p82 = scmp.ne.s32.totalorder %s67, %s81
    %p83 = scmp.eq.s32.totalorder %s15, 0
    %p84 = por %p82, %p83
    %s85 = ssub.s32 %s9, %s16
    %p86 = scmp.eq.s32.totalorder %s85, 0
    %s88 = sadd.s32 %s87, 1
    %s89 = scalar_select %p86, %s87, %s88
    %p92 = pneg %p86
    %p93 = scmp.eq.s32.totalorder %s9, 1
    %p94 = por %p92, %p93
    %p95 = scmp.ne.s32.totalorder %s87, %s90
    %p96 = scmp.eq.s32.totalorder %s9, 0
    %p97 = por %p95, %p96
    %p98 = scmp.ne.s32.totalorder %s87, %s90
    %p99 = scmp.eq.s32.totalorder %s14, 1
    %p100 = por %p98, %p99
    %p101 = scmp.ne.s32.totalorder %s90, %s91
    %p102 = scmp.eq.s32.totalorder %s14, 0
    %p103 = por %p101, %p102
    %p104 = scmp.ne.s32.totalorder %s90, %s91
    %p105 = scmp.eq.s32.totalorder %s15, 1
    %p106 = por %p104, %p105
    %p108 = scmp.ne.s32.totalorder %s91, %s107
    %p109 = scmp.eq.s32.totalorder %s15, 0
    %p110 = por %p108, %p109
    %p111 = scmp.le.s32.totalorder 1, %s9
    %p112 = scmp.lt.s32.totalorder %s9, 3
    %p113 = pnand %p111, %p112
    %p114 = pneg %p113
    // Predicated region
    $region9: #{generator_forward.46} parent=5 // pred_check
      _
    $region10: #{generator_forward.46} parent=5 // pred_check_branch
      %116 = sbr.rel (%p113) target = $region12
    $region11: #{generator_forward.46} parent=5 // pred_region
      %s117 = ssub.s32 %s9, 1
      // Predicated region
      $region13: #{generator_forward.46} parent=11 // pred_check
        %p118 = pneg %p56
      $region14: #{generator_forward.46} parent=11 // pred_check_branch
        %120 = sbr.rel (%p118) target = $region16
      $region15: #{generator_forward.46} parent=11 // pred_region
        _
      $region16: #{generator_forward.46} parent=11 // pred_fallthru
        _
      // Predicated region
      $region17: #{generator_forward.46} parent=11 // pred_check
        %p121 = pneg %p77
      $region18: #{generator_forward.46} parent=11 // pred_check_branch
        %123 = sbr.rel (%p121) target = $region20
      $region19: #{generator_forward.46} parent=11 // pred_region
        _
      $region20: #{generator_forward.46} parent=11 // pred_fallthru
        _
    $region12: #{generator_forward.46} parent=5 // pred_fallthru
      _
    %p124 = scmp.lt.s32.totalorder %s9, 2
    // Predicated region
    $region21: #{generator_forward.46} parent=5 // pred_check
      %p125 = pneg %p124
    $region22: #{generator_forward.46} parent=5 // pred_check_branch
      %127 = sbr.rel (%p125) target = $region24
    $region23: #{generator_forward.46} parent=5 // pred_region
      // Predicated region
      $region25: #{generator_forward.46} parent=23 // pred_check
        %p128 = pneg %p29
      $region26: #{generator_forward.46} parent=23 // pred_check_branch
        %130 = sbr.rel (%p128) target = $region28
      $region27: #{generator_forward.46} parent=23 // pred_region
        %p131 = scmp.lt.s32.totalorder %s9, 1
        %s132 = scalar_select %p131, %s9, 1
        %s133 = smul.addr %s132, 4
        %s134 = smul.addr %s133, 4
        %s135 = scalar_lea.vmem %s0, %s134
      $region28: #{generator_forward.46} parent=23 // pred_fallthru
        _
    $region24: #{generator_forward.46} parent=5 // pred_fallthru
      _
    %p136 = scmp.le.s32.totalorder 1, %s9
    %p137 = scmp.lt.s32.totalorder %s9, 3
    %p138 = pnand %p136, %p137
    %p139 = pneg %p138
    // Predicated region
    $region29: #{generator_forward.46} parent=5 // pred_check
      _
    $region30: #{generator_forward.46} parent=5 // pred_check_branch
      %141 = sbr.rel (%p138) target = $region32
    $region31: #{generator_forward.46} parent=5 // pred_region
      %s142 = ssub.s32 %s9, 1
      %p143 = scmp.lt.s32.totalorder %s14, 1
      %s144 = scalar_select %p143, %s14, 1
      %s145 = smul.addr %s144, 4
      %s146 = smul.addr %s145, 4
      %s147 = scalar_lea.vmem %s0, %s146
      %p148 = pneg %p35
      %p149 = pneg %p32
      %p150 = pneg %p56
      %p151 = pneg %p53
      %p152 = pneg %p77
      %p153 = pneg %p74
      %p154 = pneg %p103
      %p155 = pneg %p100
      %p156 = scmp.lt.s32.totalorder %s14, 1
      %s157 = scalar_select %p156, %s14, 1
      %s158 = smul.addr %s157, 4
      %s159 = smul.addr %s158, 4
      %s160 = scalar_lea.vmem %s3, %s159
      %p161 = scmp.lt.s32.totalorder %s14, 1
      %s162 = scalar_select %p161, %s14, 1
      %s163 = smul.addr %s162, 4
      %s164 = smul.addr %s163, 4
      %s165 = scalar_lea.vmem %s0, %s164
      %p166 = scmp.lt.s32.totalorder %s14, 1
      %s167 = scalar_select %p166, %s14, 1
      %s168 = smul.addr %s167, 4
      %s169 = smul.addr %s168, 4
      %s170 = scalar_lea.vmem %s3, %s169
      %v171 = vld [vmem:[%s165] sm:$0xf]
      %v172 = vld [vmem:[%s165 + $0x4] sm:$0xf]
      %v173 = vld [vmem:[%s165 + $0x8] sm:$0xf]
      %v174 = vld [vmem:[%s165 + $0xc] sm:$0xf]
      %vm175 = vcmask 257024
      %v176 = vsel %vm175, %v171, 0.0
      %v177 = vsel %vm175, %v172, 0.0
      %v178 = vadd.f32 %v176, %v177
      %v179 = vsel %vm175, %v173, 0.0
      %v180 = vadd.f32 %v178, %v179
      %v181 = vsel %vm175, %v174, 0.0
      %v182 = vadd.f32 %v180, %v181
      %v183 = vrot.slane %v182, 4
      %v184 = vadd.f32 %v182, %v183
      %v185 = vrot.slane %v184, 2
      %v186 = vadd.f32 %v184, %v185
      %v187 = vrot.slane %v186, 1
      %v188 = vadd.f32 %v186, %v187
      %v189 = vrcp.pop 16.0
      %v190 = vmul.f32 %v188, %v189
      %v191 = vsub.f32 %v171, %v190
      %v192 = vsub.f32 %v172, %v190
      %v193 = vsub.f32 %v173, %v190
      %v194 = vsub.f32 %v174, %v190
      %v195 = vmul.f32 %v191, %v191
      %v196 = vmul.f32 %v192, %v192
      %v197 = vmul.f32 %v193, %v193
      %v198 = vmul.f32 %v194, %v194
      %v199 = vsel %vm175, %v195, 0.0
      %v200 = vsel %vm175, %v196, 0.0
      %v201 = vadd.f32 %v199, %v200
      %v202 = vsel %vm175, %v197, 0.0
      %v203 = vadd.f32 %v201, %v202
      %v204 = vsel %vm175, %v198, 0.0
      %v205 = vadd.f32 %v203, %v204
      %v206 = vrot.slane %v205, 4
      %v207 = vadd.f32 %v205, %v206
      %v208 = vrot.slane %v207, 2
      %v209 = vadd.f32 %v207, %v208
      %v210 = vrot.slane %v209, 1
      %v211 = vadd.f32 %v209, %v210
      %v212 = vmul.f32 %v211, %v189
      %v213 = vadd.f32 %v212, 1e-05
      %v214 = vrsqrt.pop %v213
      %v215 = vmul.f32 %v191, %v214
      %v216 = vmul.f32 %v192, %v214
      %v217 = vmul.f32 %v193, %v214
      %v218 = vmul.f32 %v194, %v214
      %v219 = vld [vmem:[%s1] sm:$0x1]
      %v221 = vlaneseq
      %v222 = vshrl.u32 %v221, 7
      %v223 = vsub.s32 0, %v222
      %v224 = vrot.slane %v219, %v223
      %v226 = vmul.f32 %v215, %v224
      %v227 = vmul.f32 %v216, %v224
      %v228 = vmul.f32 %v217, %v224
      %v229 = vmul.f32 %v218, %v224
      %v230 = vld [vmem:[%s2] sm:$0x1]
      %v232 = vlaneseq
      %v233 = vshrl.u32 %v232, 7
      %v234 = vsub.s32 0, %v233
      %v235 = vrot.slane %v230, %v234
      %v237 = vadd.f32 %v226, %v235
      %v238 = vadd.f32 %v227, %v235
      %v239 = vadd.f32 %v228, %v235
      %v240 = vadd.f32 %v229, %v235
      %v241 = vmax.f32 %v237, 0.0
      %v242 = vmax.f32 %v238, 0.0
      %v243 = vmax.f32 %v239, 0.0
      %v244 = vmax.f32 %v240, 0.0
      %245 = vst.msk [vmem:[%s170] sm:$0xf] %vm175, %v241
      %246 = vst.msk [vmem:[%s170 + $0x4] sm:$0xf] %vm175, %v242
      %247 = vst.msk [vmem:[%s170 + $0x8] sm:$0xf] %vm175, %v243
      %248 = vst.msk [vmem:[%s170 + $0xc] sm:$0xf] %vm175, %v244
      %p249 = scmp.lt.s32.totalorder %s14, 1
      %s250 = scalar_select %p249, %s14, 1
      %s251 = smul.addr %s250, 4
      %s252 = smul.addr %s251, 4
      %s253 = scalar_lea.vmem %s3, %s252
      // Predicated region
      $region33: #{generator_forward.46} parent=31 // pred_check
        %p254 = pneg %p100
      $region34: #{generator_forward.46} parent=31 // pred_check_branch
        %256 = sbr.rel (%p254) target = $region36
      $region35: #{generator_forward.46} parent=31 // pred_region
        _
      $region36: #{generator_forward.46} parent=31 // pred_fallthru
        _
    $region32: #{generator_forward.46} parent=5 // pred_fallthru
      _
    %p257 = scmp.le.s32.totalorder 2, %s9
    // Predicated region
    $region37: #{generator_forward.46} parent=5 // pred_check
      %p258 = pneg %p257
    $region38: #{generator_forward.46} parent=5 // pred_check_branch
      %260 = sbr.rel (%p258) target = $region40
    $region39: #{generator_forward.46} parent=5 // pred_region
      %s261 = ssub.s32 %s9, 2
      // Predicated region
      $region41: #{generator_forward.46} parent=39 // pred_check
        %p262 = pneg %p106
      $region42: #{generator_forward.46} parent=39 // pred_check_branch
        %264 = sbr.rel (%p262) target = $region44
      $region43: #{generator_forward.46} parent=39 // pred_region
        %p265 = scmp.lt.s32.totalorder %s15, 1
        %s266 = scalar_select %p265, %s15, 1
        %s267 = smul.addr %s266, 4
        %s268 = smul.addr %s267, 4
        %s269 = scalar_lea.vmem %s3, %s268
      $region44: #{generator_forward.46} parent=39 // pred_fallthru
        _
    $region40: #{generator_forward.46} parent=5 // pred_fallthru
      _
  $region6: #{generator_forward.46} parent=0 // loop_footer
    %s13 = sadd.s32 1, %s9
  $region7: #{generator_forward.46} parent=0 // loop_footer_branch
    %8 = sbr.rel target = $region3
  $region8: #{generator_forward.46} parent=0 // loop_exit
    _

// kernel: generator_forward.48
$region0: #{generator_forward.48}
  #allocation0 [shape = 'u32[]', space=smem, size = 0x4, offset = 0x4, fixed_abs, tag = 'smem constant byte address 0x4 - core index']
  #allocation1 [shape = 'u32[144,128]{1,0:T(1,128)}', space=vmem, size = 0x12000, scoped, tag = 'internal scratch']
  #allocation2 [shape = 'f32[32,128]{1,0:T(8,128)}', space=vmem, size = 0x4000, scoped, tag = 'scratch operand']
  %s0 = inlined_call_operand.vmem [shape: bf16[32,128], index: 0, kind: input, shape index: {}]
  %s1 = inlined_call_operand.vmem [shape: bf16[128,128], index: 1, kind: input, shape index: {}]
  %s2 = inlined_call_operand.vmem [shape: f32[1,128], index: 2, kind: input, shape index: {}]
  %s3 = inlined_call_operand.vmem [shape: f32[32,128], index: 3, kind: output, shape index: {}]
  %s4 = sld [smem:[#allocation0]]
  $region30: #{generator_forward.48} parent=0
    _
  %s6 = ssub.s32 1, %s4
  %s7 = scalar_select 0, %s6, %s4
  // Predicated region
  $region2: #{generator_forward.48} parent=0 // pred_check
    _
  $region3: #{generator_forward.48} parent=0 // pred_check_branch
    %9 = sbr.rel (0) target = $region5
  $region4: #{generator_forward.48} parent=0 // pred_region
    _
  $region5: #{generator_forward.48} parent=0 // pred_fallthru
    _
  // Predicated region
  $region6: #{generator_forward.48} parent=0 // pred_check
    _
  $region7: #{generator_forward.48} parent=0 // pred_check_branch
    %11 = sbr.rel (0) target = $region9
  $region8: #{generator_forward.48} parent=0 // pred_region
    _
  $region9: #{generator_forward.48} parent=0 // pred_fallthru
    _
  // Predicated region
  $region10: #{generator_forward.48} parent=0 // pred_check
    _
  $region11: #{generator_forward.48} parent=0 // pred_check_branch
    %13 = sbr.rel (0) target = $region13
  $region12: #{generator_forward.48} parent=0 // pred_region
    _
  $region13: #{generator_forward.48} parent=0 // pred_fallthru
    _
  %p15 = scmp.eq.s32.totalorder 0, 0
  // Predicated region
  $region14: #{generator_forward.48} parent=0 // pred_check
    %p16 = pneg %p15
  $region15: #{generator_forward.48} parent=0 // pred_check_branch
    %18 = sbr.rel (%p16) target = $region17
  $region16: #{generator_forward.48} parent=0 // pred_region
    %19 = vst [vmem:[#allocation2] sm:$0xff] 0.0
    %20 = vst [vmem:[#allocation2 + $0x8] sm:$0xff] 0.0
    %21 = vst [vmem:[#allocation2 + $0x10] sm:$0xff] 0.0
    %22 = vst [vmem:[#allocation2 + $0x18] sm:$0xff] 0.0
  $region17: #{generator_forward.48} parent=0 // pred_fallthru
    _
  %v23 = vld [vmem:[#allocation2] sm:$0xff]
  %v24 = vld [vmem:[#allocation2 + $0x8] sm:$0xff]
  %v25 = vld [vmem:[#allocation2 + $0x10] sm:$0xff]
  %v26 = vld [vmem:[#allocation2 + $0x18] sm:$0xff]
  %v27 = vld [vmem:[%s0] sm:$0xf]
  %v28 = vld [vmem:[%s0 + $0x4] sm:$0xf]
  %v29 = vld [vmem:[%s0 + $0x8] sm:$0xf]
  %v30 = vld [vmem:[%s0 + $0xc] sm:$0xf]
  %v31 = vld [vmem:[%s1] sm:$0xf]
  %v32 = vld [vmem:[%s1 + $0x4] sm:$0xf]
  %v33 = vld [vmem:[%s1 + $0x8] sm:$0xf]
  %v34 = vld [vmem:[%s1 + $0xc] sm:$0xf]
  %v35 = vld [vmem:[%s1 + $0x10] sm:$0xf]
  %v36 = vld [vmem:[%s1 + $0x14] sm:$0xf]
  %v37 = vld [vmem:[%s1 + $0x18] sm:$0xf]
  %v38 = vld [vmem:[%s1 + $0x1c] sm:$0xf]
  %v39 = vld [vmem:[%s1 + $0x20] sm:$0xf]
  %v40 = vld [vmem:[%s1 + $0x24] sm:$0xf]
  %v41 = vld [vmem:[%s1 + $0x28] sm:$0xf]
  %v42 = vld [vmem:[%s1 + $0x2c] sm:$0xf]
  %v43 = vld [vmem:[%s1 + $0x30] sm:$0xf]
  %v44 = vld [vmem:[%s1 + $0x34] sm:$0xf]
  %v45 = vld [vmem:[%s1 + $0x38] sm:$0xf]
  %v46 = vld [vmem:[%s1 + $0x3c] sm:$0xf]
  %v51 = vunpack.c.l.b16 %v27
  %v52 = vunpack.c.l.b16 %v28
  %v53 = vunpack.c.l.b16 %v29
  %v54 = vunpack.c.l.b16 %v30
  %v55 = vpack.c.b16 %v52, %v51
  %v56 = vpack.c.b16 %v54, %v53
  %v75 = vunpack.c.l.b16 %v31
  %v76 = vunpack.c.l.b16 %v32
  %v77 = vunpack.c.l.b16 %v33
  %v78 = vunpack.c.l.b16 %v34
  %v79 = vunpack.c.l.b16 %v35
  %v80 = vunpack.c.l.b16 %v36
  %v81 = vunpack.c.l.b16 %v37
  %v82 = vunpack.c.l.b16 %v38
  %v83 = vunpack.c.l.b16 %v39
  %v84 = vunpack.c.l.b16 %v40
  %v85 = vunpack.c.l.b16 %v41
  %v86 = vunpack.c.l.b16 %v42
  %v87 = vunpack.c.l.b16 %v43
  %v88 = vunpack.c.l.b16 %v44
  %v89 = vunpack.c.l.b16 %v45
  %v90 = vunpack.c.l.b16 %v46
  %v91 = vpack.c.b16 %v76, %v75
  %v92 = vpack.c.b16 %v78, %v77
  %v93 = vpack.c.b16 %v80, %v79
  %v94 = vpack.c.b16 %v82, %v81
  %v95 = vpack.c.b16 %v84, %v83
  %v96 = vpack.c.b16 %v86, %v85
  %v97 = vpack.c.b16 %v88, %v87
  %v98 = vpack.c.b16 %v90, %v89
  %107 = vmatprep.subr.bf16.mxu0 0
  %108 = vmatpush1.bf16.msra.mxu0 %v98
  %109 = vmatprep.subr.bf16.mxu0 0
  %110 = vmatpush1.bf16.msra.mxu0 %v97
  %111 = vmatprep.subr.bf16.mxu0 0
  %112 = vmatpush1.bf16.msra.mxu0 %v96
  %113 = vmatprep.subr.bf16.mxu0 0
  %114 = vmatpush1.bf16.msra.mxu0 %v95
  %115 = vmatprep.subr.bf16.mxu0 0
  %116 = vmatpush1.bf16.msra.mxu0 %v94
  %117 = vmatprep.subr.bf16.mxu0 0
  %118 = vmatpush1.bf16.msra.mxu0 %v93
  %119 = vmatprep.subr.bf16.mxu0 0
  %120 = vmatpush1.bf16.msra.mxu0 %v92
  %121 = vmatprep.subr.bf16.mxu0 0
  %122 = vmatpush1.bf16.msra.mxu0 %v91
  %123 = vmatprep.subr.bf16.mxu0 0
  %124 = vmatpush2.bf16.msra.mxu0 0
  %125 = vmatprep.subr.bf16.mxu0 0
  %126 = vmatpush2.bf16.msra.mxu0 0
  %127 = vmatprep.subr.bf16.mxu0 0
  %128 = vmatpush2.bf16.msra.mxu0 0
  %129 = vmatprep.subr.bf16.mxu0 0
  %130 = vmatpush2.bf16.msra.mxu0 0
  %131 = vmatprep.subr.bf16.mxu0 0
  %132 = vmatpush2.bf16.msra.mxu0 0
  %133 = vmatprep.subr.bf16.mxu0 0
  %134 = vmatpush2.bf16.msra.mxu0 0
  %135 = vmatprep.subr.bf16.mxu0 0
  %136 = vmatpush2.bf16.msra.mxu0 0
  %137 = vmatprep.subr.bf16.mxu0 0
  %138 = vmatpush2.bf16.msra.mxu0 0
  %139 = vmatprep.mubr.bf16.mxu0 0
  %140 = vmatmul.mubr.bf16.gmra.mxu0 %v55
  %v141 = vpop.f32.mrf.mxu0
  %v142 = vadd.f32 0.0, %v141
  %v143 = vpop.f32.mrf.mxu0
  %v144 = vpop.f32.mrf.mxu0
  %v145 = vadd.f32 0.0, %v144
  %v146 = vpop.f32.mrf.mxu0
  %147 = vmatprep.mubr.bf16.mxu0 0
  %148 = vmatmul.mubr.bf16.gmra.mxu0 %v56
  %v149 = vpop.f32.mrf.mxu0
  %v150 = vadd.f32 0.0, %v149
  %v151 = vpop.f32.mrf.mxu0
  %v152 = vpop.f32.mrf.mxu0
  %v153 = vadd.f32 0.0, %v152
  %v154 = vpop.f32.mrf.mxu0
  %155 = vdwg.mxu0
  %v156 = vadd.f32 %v23, %v142
  %v157 = vadd.f32 %v24, %v145
  %v158 = vadd.f32 %v25, %v150
  %v159 = vadd.f32 %v26, %v153
  %160 = vst [vmem:[#allocation2] sm:$0xff] %v156
  %161 = vst [vmem:[#allocation2 + $0x8] sm:$0xff] %v157
  %162 = vst [vmem:[#allocation2 + $0x10] sm:$0xff] %v158
  %163 = vst [vmem:[#allocation2 + $0x18] sm:$0xff] %v159
  // Predicated region
  $region18: #{generator_forward.48} parent=0 // pred_check
    %p164 = pneg %p15
  $region19: #{generator_forward.48} parent=0 // pred_check_branch
    %166 = sbr.rel (%p164) target = $region21
  $region20: #{generator_forward.48} parent=0 // pred_region
    %v167 = vld [vmem:[#allocation2] sm:$0xff]
    %v168 = vld [vmem:[#allocation2 + $0x8] sm:$0xff]
    %v169 = vld [vmem:[#allocation2 + $0x10] sm:$0xff]
    %v170 = vld [vmem:[#allocation2 + $0x18] sm:$0xff]
    %v171 = vld [vmem:[%s2] sm:$0x1]
    %v173 = vlaneseq
    %v174 = vshrl.u32 %v173, 7
    %v175 = vsub.s32 0, %v174
    %v176 = vrot.slane %v171, %v175
    %v178 = vadd.f32 %v167, %v176
    %v179 = vadd.f32 %v168, %v176
    %v180 = vadd.f32 %v169, %v176
    %v181 = vadd.f32 %v170, %v176
    %182 = vst [vmem:[%s3] sm:$0xff] %v178
    %183 = vst [vmem:[%s3 + $0x8] sm:$0xff] %v179
    %184 = vst [vmem:[%s3 + $0x10] sm:$0xff] %v180
    %185 = vst [vmem:[%s3 + $0x18] sm:$0xff] %v181
  $region21: #{generator_forward.48} parent=0 // pred_fallthru
    _
  // Predicated region
  $region22: #{generator_forward.48} parent=0 // pred_check
    _
  $region23: #{generator_forward.48} parent=0 // pred_check_branch
    %187 = sbr.rel (0) target = $region25
  $region24: #{generator_forward.48} parent=0 // pred_region
    _
  $region25: #{generator_forward.48} parent=0 // pred_fallthru
    _
  // Predicated region
  $region26: #{generator_forward.48} parent=0 // pred_check
    _
  $region27: #{generator_forward.48} parent=0 // pred_check_branch
    %189 = sbr.rel (0) target = $region29
  $region28: #{generator_forward.48} parent=0 // pred_region
    _
  $region29: #{generator_forward.48} parent=0 // pred_fallthru
    _

// kernel: generator_forward.47
$region0: #{generator_forward.47}
  #allocation0 [shape = 'u32[]', space=smem, size = 0x4, offset = 0x4, fixed_abs, tag = 'smem constant byte address 0x4 - core index']
  #allocation1 [shape = 'u32[144,128]{1,0:T(1,128)}', space=vmem, size = 0x12000, scoped, tag = 'internal scratch']
  %s0 = inlined_call_operand.vmem [shape: f32[2,6,6,32], index: 0, kind: input, shape index: {}]
  %s1 = inlined_call_operand.vmem [shape: f32[3,3,32], index: 1, kind: input, shape index: {}]
  %s2 = inlined_call_operand.vmem [shape: f32[1,32], index: 2, kind: input, shape index: {}]
  %s3 = inlined_call_operand.vmem [shape: f32[2,4,4,32], index: 3, kind: output, shape index: {}]
  %s4 = sld [smem:[#allocation0]]
  $region45: #{generator_forward.47} parent=0
    _
  %s6 = ssub.s32 1, %s4
  %s7 = scalar_select 0, %s6, %s4
  loop: start=0, step=1, limit=4
  $region2: #{generator_forward.47} parent=0 // loop_pre_header
    _
  $region3: #{generator_forward.47} parent=0 // loop_header
    %s9 = sphi 0, %s13
    %p10 = scmp.ge.s32.totalorder %s9, 4
    %s19 = sphi 0, %s21
    %s22 = sphi 0, %s19
    %s23 = sphi 0, %s22
    %s39 = sphi 0, %s23
    %s43 = sphi 0, %s43
    %s45 = sphi 0, %s43
    %s46 = sphi 0, %s45
    %s60 = sphi 0, %s46
    %s64 = sphi 0, %s64
    %s66 = sphi 0, %s64
    %s67 = sphi 0, %s66
    %s81 = sphi 0, %s67
    %s87 = sphi 0, %s89
    %s90 = sphi 0, %s87
    %s91 = sphi 0, %s90
    %s107 = sphi 0, %s91
  $region4: #{generator_forward.47} parent=0 // loop_header_branch
    %12 = sbr.rel (%p10) target = $region8
  $region5: #{generator_forward.47} parent=0 // loop_body
    %s14 = ssub.s32 %s9, 1
    %s15 = ssub.s32 %s9, 2
    %s16 = sadd.s32 %s9, 1
    %s17 = ssub.s32 %s9, %s16
    %p18 = scmp.eq.s32.totalorder %s17, 0
    %s20 = sadd.s32 %s19, 1
    %s21 = scalar_select %p18, %s19, %s20
    %p24 = pneg %p18
    %p25 = scmp.eq.s32.totalorder %s9, 1
    %p26 = por %p24, %p25
    %p27 = scmp.ne.s32.totalorder %s19, %s22
    %p28 = scmp.eq.s32.totalorder %s9, 0
    %p29 = por %p27, %p28
    %p30 = scmp.ne.s32.totalorder %s19, %s22
    %p31 = scmp.eq.s32.totalorder %s14, 1
    %p32 = por %p30, %p31
    %p33 = scmp.ne.s32.totalorder %s22, %s23
    %p34 = scmp.eq.s32.totalorder %s14, 0
    %p35 = por %p33, %p34
    %p36 = scmp.ne.s32.totalorder %s22, %s23
    %p37 = scmp.eq.s32.totalorder %s15, 1
    %p38 = por %p36, %p37
    %p40 = scmp.ne.s32.totalorder %s23, %s39
    %p41 = scmp.eq.s32.totalorder %s15, 0
    %p42 = por %p40, %p41
    %s44 = sadd.s32 %s43, 1
    %p47 = scmp.eq.s32.totalorder %s9, 1
    %p48 = scmp.ne.s32.totalorder %s43, %s45
    %p49 = scmp.eq.s32.totalorder %s9, 0
    %p50 = por %p48, %p49
    %p51 = scmp.ne.s32.totalorder %s43, %s45
    %p52 = scmp.eq.s32.totalorder %s14, 1
    %p53 = por %p51, %p52
    %p54 = scmp.ne.s32.totalorder %s45, %s46
    %p55 = scmp.eq.s32.totalorder %s14, 0
    %p56 = por %p54, %p55
    %p57 = scmp.ne.s32.totalorder %s45, %s46
    %p58 = scmp.eq.s32.totalorder %s15, 1
    %p59 = por %p57, %p58
    %p61 = scmp.ne.s32.totalorder %s46, %s60
    %p62 = scmp.eq.s32.totalorder %s15, 0
    %p63 = por %p61, %p62
    %s65 = sadd.s32 %s64, 1
    %p68 = scmp.eq.s32.totalorder %s9, 1
    %p69 = scmp.ne.s32.totalorder %s64, %s66
    %p70 = scmp.eq.s32.totalorder %s9, 0
    %p71 = por %p69, %p70
    %p72 = scmp.ne.s32.totalorder %s64, %s66
    %p73 = scmp.eq.s32.totalorder %s14, 1
    %p74 = por %p72, %p73
    %p75 = scmp.ne.s32.totalorder %s66, %s67
    %p76 = scmp.eq.s32.totalorder %s14, 0
    %p77 = por %p75, %p76
    %p78 = scmp.ne.s32.totalorder %s66, %s67
    %p79 = scmp.eq.s32.totalorder %s15, 1
    %p80 = por %p78, %p79
    %p82 = scmp.ne.s32.totalorder %s67, %s81
    %p83 = scmp.eq.s32.totalorder %s15, 0
    %p84 = por %p82, %p83
    %s85 = ssub.s32 %s9, %s16
    %p86 = scmp.eq.s32.totalorder %s85, 0
    %s88 = sadd.s32 %s87, 1
    %s89 = scalar_select %p86, %s87, %s88
    %p92 = pneg %p86
    %p93 = scmp.eq.s32.totalorder %s9, 1
    %p94 = por %p92, %p93
    %p95 = scmp.ne.s32.totalorder %s87, %s90
    %p96 = scmp.eq.s32.totalorder %s9, 0
    %p97 = por %p95, %p96
    %p98 = scmp.ne.s32.totalorder %s87, %s90
    %p99 = scmp.eq.s32.totalorder %s14, 1
    %p100 = por %p98, %p99
    %p101 = scmp.ne.s32.totalorder %s90, %s91
    %p102 = scmp.eq.s32.totalorder %s14, 0
    %p103 = por %p101, %p102
    %p104 = scmp.ne.s32.totalorder %s90, %s91
    %p105 = scmp.eq.s32.totalorder %s15, 1
    %p106 = por %p104, %p105
    %p108 = scmp.ne.s32.totalorder %s91, %s107
    %p109 = scmp.eq.s32.totalorder %s15, 0
    %p110 = por %p108, %p109
    %p111 = scmp.le.s32.totalorder 1, %s9
    %p112 = scmp.lt.s32.totalorder %s9, 3
    %p113 = pnand %p111, %p112
    %p114 = pneg %p113
    // Predicated region
    $region9: #{generator_forward.47} parent=5 // pred_check
      _
    $region10: #{generator_forward.47} parent=5 // pred_check_branch
      %116 = sbr.rel (%p113) target = $region12
    $region11: #{generator_forward.47} parent=5 // pred_region
      %s117 = ssub.s32 %s9, 1
      // Predicated region
      $region13: #{generator_forward.47} parent=11 // pred_check
        %p118 = pneg %p56
      $region14: #{generator_forward.47} parent=11 // pred_check_branch
        %120 = sbr.rel (%p118) target = $region16
      $region15: #{generator_forward.47} parent=11 // pred_region
        _
      $region16: #{generator_forward.47} parent=11 // pred_fallthru
        _
      // Predicated region
      $region17: #{generator_forward.47} parent=11 // pred_check
        %p121 = pneg %p77
      $region18: #{generator_forward.47} parent=11 // pred_check_branch
        %123 = sbr.rel (%p121) target = $region20
      $region19: #{generator_forward.47} parent=11 // pred_region
        _
      $region20: #{generator_forward.47} parent=11 // pred_fallthru
        _
    $region12: #{generator_forward.47} parent=5 // pred_fallthru
      _
    %p124 = scmp.lt.s32.totalorder %s9, 2
    // Predicated region
    $region21: #{generator_forward.47} parent=5 // pred_check
      %p125 = pneg %p124
    $region22: #{generator_forward.47} parent=5 // pred_check_branch
      %127 = sbr.rel (%p125) target = $region24
    $region23: #{generator_forward.47} parent=5 // pred_region
      // Predicated region
      $region25: #{generator_forward.47} parent=23 // pred_check
        %p128 = pneg %p29
      $region26: #{generator_forward.47} parent=23 // pred_check_branch
        %130 = sbr.rel (%p128) target = $region28
      $region27: #{generator_forward.47} parent=23 // pred_region
        %p131 = scmp.lt.s32.totalorder %s9, 1
        %s132 = scalar_select %p131, %s9, 1
        %s133 = smul.addr %s132, 6
        %s134 = smul.addr %s133, 8
        %s135 = scalar_lea.vmem %s0, %s134
      $region28: #{generator_forward.47} parent=23 // pred_fallthru
        _
    $region24: #{generator_forward.47} parent=5 // pred_fallthru
      _
    %p136 = scmp.le.s32.totalorder 1, %s9
    %p137 = scmp.lt.s32.totalorder %s9, 3
    %p138 = pnand %p136, %p137
    %p139 = pneg %p138
    // Predicated region
    $region29: #{generator_forward.47} parent=5 // pred_check
      _
    $region30: #{generator_forward.47} parent=5 // pred_check_branch
      %141 = sbr.rel (%p138) target = $region32
    $region31: #{generator_forward.47} parent=5 // pred_region
      %s142 = ssub.s32 %s9, 1
      %p143 = scmp.lt.s32.totalorder %s14, 1
      %s144 = scalar_select %p143, %s14, 1
      %s145 = smul.addr %s144, 6
      %s146 = smul.addr %s145, 8
      %s147 = scalar_lea.vmem %s0, %s146
      %p148 = pneg %p35
      %p149 = pneg %p32
      %p150 = pneg %p56
      %p151 = pneg %p53
      %p152 = pneg %p77
      %p153 = pneg %p74
      %p154 = pneg %p103
      %p155 = pneg %p100
      %p156 = scmp.lt.s32.totalorder %s14, 1
      %s157 = scalar_select %p156, %s14, 1
      %s158 = smul.addr %s157, 4
      %s159 = smul.addr %s158, 4
      %s160 = scalar_lea.vmem %s3, %s159
      %p161 = scmp.lt.s32.totalorder %s14, 1
      %s162 = scalar_select %p161, %s14, 1
      %s163 = smul.addr %s162, 6
      %s164 = smul.addr %s163, 8
      %s165 = scalar_lea.vmem %s0, %s164
      %p166 = scmp.lt.s32.totalorder %s14, 1
      %s167 = scalar_select %p166, %s14, 1
      %s168 = smul.addr %s167, 4
      %s169 = smul.addr %s168, 4
      %s170 = scalar_lea.vmem %s3, %s169
      %v171 = vld [vmem:[%s165] sm:$0x3f]
      %v172 = vld [vmem:[%s165 + $0x8] sm:$0x3f]
      %v173 = vld [vmem:[%s165 + $0x10] sm:$0x3f]
      %v174 = vld [vmem:[%s165 + $0x18] sm:$0x3f]
      %v175 = vld [vmem:[%s165 + $0x20] sm:$0x3f]
      %v176 = vld [vmem:[%s165 + $0x28] sm:$0x3f]
      %v177 = vld [vmem:[%s1] sm:$0x1]
      %v178 = vlaneseq
      %v179 = vshrl.u32 %v178, 7
      %v180 = vsub.s32 0, %v179
      %v181 = vrot.slane %v177, %v180
      %v182 = vmul.f32 %v171, %v181
      %v183 = vmul.f32 %v172, %v181
      %v184 = vmul.f32 %v173, %v181
      %v185 = vmul.f32 %v174, %v181
      %v186 = vld [vmem:[%s1 + $0x1] sm:$0x1]
      %v187 = vlaneseq
      %v188 = vshrl.u32 %v187, 7
      %v189 = vsub.s32 0, %v188
      %v190 = vrot.slane %v186, %v189
      %v191 = vmul.f32 %v171, %v190
      %v192 = vmul.f32 %v172, %v190
      %v193 = vmul.f32 %v173, %v190
      %v194 = vmul.f32 %v174, %v190
      %v199 = vrot.slane %v191, 1
      %v200 = vrot.slane %v192, 1
      %v201 = vrot.slane %v193, 1
      %v202 = vrot.slane %v194, 1
      %v207 = vadd.f32 %v182, %v199
      %v208 = vadd.f32 %v183, %v200
      %v209 = vadd.f32 %v184, %v201
      %v210 = vadd.f32 %v185, %v202
      %v211 = vld [vmem:[%s1 + $0x2] sm:$0x1]
      %v212 = vlaneseq
      %v213 = vshrl.u32 %v212, 7
      %v214 = vsub.s32 0, %v213
      %v215 = vrot.slane %v211, %v214
      %v216 = vmul.f32 %v171, %v215
      %v217 = vmul.f32 %v172, %v215
      %v218 = vmul.f32 %v173, %v215
      %v219 = vmul.f32 %v174, %v215
      %v224 = vrot.slane %v216, 2
      %v225 = vrot.slane %v217, 2
      %v226 = vrot.slane %v218, 2
      %v227 = vrot.slane %v219, 2
      %v232 = vadd.f32 %v207, %v224
      %v233 = vadd.f32 %v208, %v225
      %v234 = vadd.f32 %v209, %v226
      %v235 = vadd.f32 %v210, %v227
      %s236 = scalar_lea.vmem %s1, 4
      %v237 = vld [vmem:[%s236] sm:$0x1]
      %v238 = vlaneseq
      %v239 = vshrl.u32 %v238, 7
      %v240 = vsub.s32 0, %v239
      %v241 = vrot.slane %v237, %v240
      %v242 = vmul.f32 %v172, %v241
      %v243 = vmul.f32 %v173, %v241
      %v244 = vmul.f32 %v174, %v241
      %v245 = vmul.f32 %v175, %v241
      %v246 = vadd.f32 %v232, %v242
      %v247 = vadd.f32 %v233, %v243
      %v248 = vadd.f32 %v234, %v244
      %v249 = vadd.f32 %v235, %v245
      %v250 = vld [vmem:[%s236 + $0x1] sm:$0x1]
      %v251 = vlaneseq
      %v252 = vshrl.u32 %v251, 7
      %v253 = vsub.s32 0, %v252
      %v254 = vrot.slane %v250, %v253
      %v255 = vmul.f32 %v172, %v254
      %v256 = vmul.f32 %v173, %v254
      %v257 = vmul.f32 %v174, %v254
      %v258 = vmul.f32 %v175, %v254
      %v263 = vrot.slane %v255, 1
      %v264 = vrot.slane %v256, 1
      %v265 = vrot.slane %v257, 1
      %v266 = vrot.slane %v258, 1
      %v271 = vadd.f32 %v246, %v263
      %v272 = vadd.f32 %v247, %v264
      %v273 = vadd.f32 %v248, %v265
      %v274 = vadd.f32 %v249, %v266
      %v275 = vld [vmem:[%s236 + $0x2] sm:$0x1]
      %v276 = vlaneseq
      %v277 = vshrl.u32 %v276, 7
      %v278 = vsub.s32 0, %v277
      %v279 = vrot.slane %v275, %v278
      %v280 = vmul.f32 %v172, %v279
      %v281 = vmul.f32 %v173, %v279
      %v282 = vmul.f32 %v174, %v279
      %v283 = vmul.f32 %v175, %v279
      %v288 = vrot.slane %v280, 2
      %v289 = vrot.slane %v281, 2
      %v290 = vrot.slane %v282, 2
      %v291 = vrot.slane %v283, 2
      %v296 = vadd.f32 %v271, %v288
      %v297 = vadd.f32 %v272, %v289
      %v298 = vadd.f32 %v273, %v290
      %v299 = vadd.f32 %v274, %v291
      %s300 = scalar_lea.vmem %s1, 8
      %v301 = vld [vmem:[%s300] sm:$0x1]
      %v302 = vlaneseq
      %v303 = vshrl.u32 %v302, 7
      %v304 = vsub.s32 0, %v303
      %v305 = vrot.slane %v301, %v304
      %v306 = vmul.f32 %v173, %v305
      %v307 = vmul.f32 %v174, %v305
      %v308 = vmul.f32 %v175, %v305
      %v309 = vmul.f32 %v176, %v305
      %v310 = vadd.f32 %v296, %v306
      %v311 = vadd.f32 %v297, %v307
      %v312 = vadd.f32 %v298, %v308
      %v313 = vadd.f32 %v299, %v309
      %v314 = vld [vmem:[%s300 + $0x1] sm:$0x1]
      %v315 = vlaneseq
      %v316 = vshrl.u32 %v315, 7
      %v317 = vsub.s32 0, %v316
      %v318 = vrot.slane %v314, %v317
      %v319 = vmul.f32 %v173, %v318
      %v320 = vmul.f32 %v174, %v318
      %v321 = vmul.f32 %v175, %v318
      %v322 = vmul.f32 %v176, %v318
      %v327 = vrot.slane %v319, 1
      %v328 = vrot.slane %v320, 1
      %v329 = vrot.slane %v321, 1
      %v330 = vrot.slane %v322, 1
      %v335 = vadd.f32 %v310, %v327
      %v336 = vadd.f32 %v311, %v328
      %v337 = vadd.f32 %v312, %v329
      %v338 = vadd.f32 %v313, %v330
      %v339 = vld [vmem:[%s300 + $0x2] sm:$0x1]
      %v340 = vlaneseq
      %v341 = vshrl.u32 %v340, 7
      %v342 = vsub.s32 0, %v341
      %v343 = vrot.slane %v339, %v342
      %v344 = vmul.f32 %v173, %v343
      %v345 = vmul.f32 %v174, %v343
      %v346 = vmul.f32 %v175, %v343
      %v347 = vmul.f32 %v176, %v343
      %v352 = vrot.slane %v344, 2
      %v353 = vrot.slane %v345, 2
      %v354 = vrot.slane %v346, 2
      %v355 = vrot.slane %v347, 2
      %v360 = vadd.f32 %v335, %v352
      %v361 = vadd.f32 %v336, %v353
      %v362 = vadd.f32 %v337, %v354
      %v363 = vadd.f32 %v338, %v355
      %v364 = vld [vmem:[%s2] sm:$0x1]
      %v366 = vlaneseq
      %v367 = vshrl.u32 %v366, 7
      %v368 = vsub.s32 0, %v367
      %v369 = vrot.slane %v364, %v368
      %v371 = vadd.f32 %v360, %v369
      %v372 = vadd.f32 %v361, %v369
      %v373 = vadd.f32 %v362, %v369
      %v374 = vadd.f32 %v363, %v369
      %vm375 = vcmask 257024
      %v376 = vsel %vm375, %v371, 0.0
      %v377 = vsel %vm375, %v372, 0.0
      %v378 = vadd.f32 %v376, %v377
      %v379 = vsel %vm375, %v373, 0.0
      %v380 = vadd.f32 %v378, %v379
      %v381 = vsel %vm375, %v374, 0.0
      %v382 = vadd.f32 %v380, %v381
      %v383 = vrot.slane %v382, 4
      %v384 = vadd.f32 %v382, %v383
      %v385 = vrot.slane %v384, 2
      %v386 = vadd.f32 %v384, %v385
      %v387 = vrot.slane %v386, 1
      %v388 = vadd.f32 %v386, %v387
      %v389 = vrcp.pop 16.0
      %v390 = vmul.f32 %v388, %v389
      %v391 = vsub.f32 %v371, %v390
      %v392 = vsub.f32 %v372, %v390
      %v393 = vsub.f32 %v373, %v390
      %v394 = vsub.f32 %v374, %v390
      %v395 = vmul.f32 %v391, %v391
      %v396 = vmul.f32 %v392, %v392
      %v397 = vmul.f32 %v393, %v393
      %v398 = vmul.f32 %v394, %v394
      %v399 = vsel %vm375, %v395, 0.0
      %v400 = vsel %vm375, %v396, 0.0
      %v401 = vadd.f32 %v399, %v400
      %v402 = vsel %vm375, %v397, 0.0
      %v403 = vadd.f32 %v401, %v402
      %v404 = vsel %vm375, %v398, 0.0
      %v405 = vadd.f32 %v403, %v404
      %v406 = vrot.slane %v405, 4
      %v407 = vadd.f32 %v405, %v406
      %v408 = vrot.slane %v407, 2
      %v409 = vadd.f32 %v407, %v408
      %v410 = vrot.slane %v409, 1
      %v411 = vadd.f32 %v409, %v410
      %v412 = vmul.f32 %v411, %v389
      %v413 = vadd.f32 %v412, 1e-05
      %v414 = vrsqrt.pop %v413
      %v415 = vmul.f32 %v391, %v414
      %v416 = vmul.f32 %v392, %v414
      %v417 = vmul.f32 %v393, %v414
      %v418 = vmul.f32 %v394, %v414
      %419 = vst.msk [vmem:[%s170] sm:$0xf] %vm375, %v415
      %420 = vst.msk [vmem:[%s170 + $0x4] sm:$0xf] %vm375, %v416
      %421 = vst.msk [vmem:[%s170 + $0x8] sm:$0xf] %vm375, %v417
      %422 = vst.msk [vmem:[%s170 + $0xc] sm:$0xf] %vm375, %v418
      %p423 = scmp.lt.s32.totalorder %s14, 1
      %s424 = scalar_select %p423, %s14, 1
      %s425 = smul.addr %s424, 4
      %s426 = smul.addr %s425, 4
      %s427 = scalar_lea.vmem %s3, %s426
      // Predicated region
      $region33: #{generator_forward.47} parent=31 // pred_check
        %p428 = pneg %p100
      $region34: #{generator_forward.47} parent=31 // pred_check_branch
        %430 = sbr.rel (%p428) target = $region36
      $region35: #{generator_forward.47} parent=31 // pred_region
        _
      $region36: #{generator_forward.47} parent=31 // pred_fallthru
        _
    $region32: #{generator_forward.47} parent=5 // pred_fallthru
      _
    %p431 = scmp.le.s32.totalorder 2, %s9
    // Predicated region
    $region37: #{generator_forward.47} parent=5 // pred_check
      %p432 = pneg %p431
    $region38: #{generator_forward.47} parent=5 // pred_check_branch
      %434 = sbr.rel (%p432) target = $region40
    $region39: #{generator_forward.47} parent=5 // pred_region
      %s435 = ssub.s32 %s9, 2
      // Predicated region
      $region41: #{generator_forward.47} parent=39 // pred_check
        %p436 = pneg %p106
      $region42: #{generator_forward.47} parent=39 // pred_check_branch
        %438 = sbr.rel (%p436) target = $region44
      $region43: #{generator_forward.47} parent=39 // pred_region
        %p439 = scmp.lt.s32.totalorder %s15, 1
        %s440 = scalar_select %p439, %s15, 1
        %s441 = smul.addr %s440, 4
        %s442 = smul.addr %s441, 4
        %s443 = scalar_lea.vmem %s3, %s442
      $region44: #{generator_forward.47} parent=39 // pred_fallthru
        _
    $region40: #{generator_forward.47} parent=5 // pred_fallthru
      _
  $region6: #{generator_forward.47} parent=0 // loop_footer
    %s13 = sadd.s32 1, %s9
  $region7: #{generator_forward.47} parent=0 // loop_footer_branch
    %8 = sbr.rel target = $region3
  $region8: #{generator_forward.47} parent=0 // loop_exit
    _

// kernel: generator_forward.52
$region0: #{generator_forward.52}
  #allocation0 [shape = 'u32[]', space=smem, size = 0x4, offset = 0x4, fixed_abs, tag = 'smem constant byte address 0x4 - core index']
  #allocation1 [shape = 'u32[144,128]{1,0:T(1,128)}', space=vmem, size = 0x12000, scoped, tag = 'internal scratch']
  %s0 = inlined_call_operand.vmem [shape: f32[2,4,4,32], index: 0, kind: input, shape index: {}]
  %s1 = inlined_call_operand.vmem [shape: f32[2,4,4,32], index: 1, kind: input, shape index: {}]
  %s2 = inlined_call_operand.vmem [shape: f32[1,32], index: 2, kind: input, shape index: {}]
  %s3 = inlined_call_operand.vmem [shape: f32[1,32], index: 3, kind: input, shape index: {}]
  %s4 = inlined_call_operand.vmem [shape: f32[2,4,4,32], index: 4, kind: output, shape index: {}]
  %s5 = sld [smem:[#allocation0]]
  $region49: #{generator_forward.52} parent=0
    _
  %s7 = ssub.s32 1, %s5
  %s8 = scalar_select 0, %s7, %s5
  loop: start=0, step=1, limit=4
  $region2: #{generator_forward.52} parent=0 // loop_pre_header
    _
  $region3: #{generator_forward.52} parent=0 // loop_header
    %s10 = sphi 0, %s14
    %p11 = scmp.ge.s32.totalorder %s10, 4
    %s20 = sphi 0, %s22
    %s23 = sphi 0, %s20
    %s24 = sphi 0, %s23
    %s40 = sphi 0, %s24
    %s46 = sphi 0, %s48
    %s49 = sphi 0, %s46
    %s50 = sphi 0, %s49
    %s66 = sphi 0, %s50
    %s70 = sphi 0, %s70
    %s72 = sphi 0, %s70
    %s73 = sphi 0, %s72
    %s87 = sphi 0, %s73
    %s91 = sphi 0, %s91
    %s93 = sphi 0, %s91
    %s94 = sphi 0, %s93
    %s108 = sphi 0, %s94
    %s114 = sphi 0, %s116
    %s117 = sphi 0, %s114
    %s118 = sphi 0, %s117
    %s134 = sphi 0, %s118
  $region4: #{generator_forward.52} parent=0 // loop_header_branch
    %13 = sbr.rel (%p11) target = $region8
  $region5: #{generator_forward.52} parent=0 // loop_body
    %s15 = ssub.s32 %s10, 1
    %s16 = ssub.s32 %s10, 2
    %s17 = sadd.s32 %s10, 1
    %s18 = ssub.s32 %s10, %s17
    %p19 = scmp.eq.s32.totalorder %s18, 0
    %s21 = sadd.s32 %s20, 1
    %s22 = scalar_select %p19, %s20, %s21
    %p25 = pneg %p19
    %p26 = scmp.eq.s32.totalorder %s10, 1
    %p27 = por %p25, %p26
    %p28 = scmp.ne.s32.totalorder %s20, %s23
    %p29 = scmp.eq.s32.totalorder %s10, 0
    %p30 = por %p28, %p29
    %p31 = scmp.ne.s32.totalorder %s20, %s23
    %p32 = scmp.eq.s32.totalorder %s15, 1
    %p33 = por %p31, %p32
    %p34 = scmp.ne.s32.totalorder %s23, %s24
    %p35 = scmp.eq.s32.totalorder %s15, 0
    %p36 = por %p34, %p35
    %p37 = scmp.ne.s32.totalorder %s23, %s24
    %p38 = scmp.eq.s32.totalorder %s16, 1
    %p39 = por %p37, %p38
    %p41 = scmp.ne.s32.totalorder %s24, %s40
    %p42 = scmp.eq.s32.totalorder %s16, 0
    %p43 = por %p41, %p42
    %s44 = ssub.s32 %s10, %s17
    %p45 = scmp.eq.s32.totalorder %s44, 0
    %s47 = sadd.s32 %s46, 1
    %s48 = scalar_select %p45, %s46, %s47
    %p51 = pneg %p45
    %p52 = scmp.eq.s32.totalorder %s10, 1
    %p53 = por %p51, %p52
    %p54 = scmp.ne.s32.totalorder %s46, %s49
    %p55 = scmp.eq.s32.totalorder %s10, 0
    %p56 = por %p54, %p55
    %p57 = scmp.ne.s32.totalorder %s46, %s49
    %p58 = scmp.eq.s32.totalorder %s15, 1
    %p59 = por %p57, %p58
    %p60 = scmp.ne.s32.totalorder %s49, %s50
    %p61 = scmp.eq.s32.totalorder %s15, 0
    %p62 = por %p60, %p61
    %p63 = scmp.ne.s32.totalorder %s49, %s50
    %p64 = scmp.eq.s32.totalorder %s16, 1
    %p65 = por %p63, %p64
    %p67 = scmp.ne.s32.totalorder %s50, %s66
    %p68 = scmp.eq.s32.totalorder %s16, 0
    %p69 = por %p67, %p68
    %s71 = sadd.s32 %s70, 1
    %p74 = scmp.eq.s32.totalorder %s10, 1
    %p75 = scmp.ne.s32.totalorder %s70, %s72
    %p76 = scmp.eq.s32.totalorder %s10, 0
    %p77 = por %p75, %p76
    %p78 = scmp.ne.s32.totalorder %s70, %s72
    %p79 = scmp.eq.s32.totalorder %s15, 1
    %p80 = por %p78, %p79
    %p81 = scmp.ne.s32.totalorder %s72, %s73
    %p82 = scmp.eq.s32.totalorder %s15, 0
    %p83 = por %p81, %p82
    %p84 = scmp.ne.s32.totalorder %s72, %s73
    %p85 = scmp.eq.s32.totalorder %s16, 1
    %p86 = por %p84, %p85
    %p88 = scmp.ne.s32.totalorder %s73, %s87
    %p89 = scmp.eq.s32.totalorder %s16, 0
    %p90 = por %p88, %p89
    %s92 = sadd.s32 %s91, 1
    %p95 = scmp.eq.s32.totalorder %s10, 1
    %p96 = scmp.ne.s32.totalorder %s91, %s93
    %p97 = scmp.eq.s32.totalorder %s10, 0
    %p98 = por %p96, %p97
    %p99 = scmp.ne.s32.totalorder %s91, %s93
    %p100 = scmp.eq.s32.totalorder %s15, 1
    %p101 = por %p99, %p100
    %p102 = scmp.ne.s32.totalorder %s93, %s94
    %p103 = scmp.eq.s32.totalorder %s15, 0
    %p104 = por %p102, %p103
    %p105 = scmp.ne.s32.totalorder %s93, %s94
    %p106 = scmp.eq.s32.totalorder %s16, 1
    %p107 = por %p105, %p106
    %p109 = scmp.ne.s32.totalorder %s94, %s108
    %p110 = scmp.eq.s32.totalorder %s16, 0
    %p111 = por %p109, %p110
    %s112 = ssub.s32 %s10, %s17
    %p113 = scmp.eq.s32.totalorder %s112, 0
    %s115 = sadd.s32 %s114, 1
    %s116 = scalar_select %p113, %s114, %s115
    %p119 = pneg %p113
    %p120 = scmp.eq.s32.totalorder %s10, 1
    %p121 = por %p119, %p120
    %p122 = scmp.ne.s32.totalorder %s114, %s117
    %p123 = scmp.eq.s32.totalorder %s10, 0
    %p124 = por %p122, %p123
    %p125 = scmp.ne.s32.totalorder %s114, %s117
    %p126 = scmp.eq.s32.totalorder %s15, 1
    %p127 = por %p125, %p126
    %p128 = scmp.ne.s32.totalorder %s117, %s118
    %p129 = scmp.eq.s32.totalorder %s15, 0
    %p130 = por %p128, %p129
    %p131 = scmp.ne.s32.totalorder %s117, %s118
    %p132 = scmp.eq.s32.totalorder %s16, 1
    %p133 = por %p131, %p132
    %p135 = scmp.ne.s32.totalorder %s118, %s134
    %p136 = scmp.eq.s32.totalorder %s16, 0
    %p137 = por %p135, %p136
    %p138 = scmp.le.s32.totalorder 1, %s10
    %p139 = scmp.lt.s32.totalorder %s10, 3
    %p140 = pnand %p138, %p139
    %p141 = pneg %p140
    // Predicated region
    $region9: #{generator_forward.52} parent=5 // pred_check
      _
    $region10: #{generator_forward.52} parent=5 // pred_check_branch
      %143 = sbr.rel (%p140) target = $region12
    $region11: #{generator_forward.52} parent=5 // pred_region
      %s144 = ssub.s32 %s10, 1
      // Predicated region
      $region13: #{generator_forward.52} parent=11 // pred_check
        %p145 = pneg %p83
      $region14: #{generator_forward.52} parent=11 // pred_check_branch
        %147 = sbr.rel (%p145) target = $region16
      $region15: #{generator_forward.52} parent=11 // pred_region
        _
      $region16: #{generator_forward.52} parent=11 // pred_fallthru
        _
      // Predicated region
      $region17: #{generator_forward.52} parent=11 // pred_check
        %p148 = pneg %p104
      $region18: #{generator_forward.52} parent=11 // pred_check_branch
        %150 = sbr.rel (%p148) target = $region20
      $region19: #{generator_forward.52} parent=11 // pred_region
        _
      $region20: #{generator_forward.52} parent=11 // pred_fallthru
        _
    $region12: #{generator_forward.52} parent=5 // pred_fallthru
      _
    %p151 = scmp.lt.s32.totalorder %s10, 2
    // Predicated region
    $region21: #{generator_forward.52} parent=5 // pred_check
      %p152 = pneg %p151
    $region22: #{generator_forward.52} parent=5 // pred_check_branch
      %154 = sbr.rel (%p152) target = $region24
    $region23: #{generator_forward.52} parent=5 // pred_region
      // Predicated region
      $region25: #{generator_forward.52} parent=23 // pred_check
        %p155 = pneg %p30
      $region26: #{generator_forward.52} parent=23 // pred_check_branch
        %157 = sbr.rel (%p155) target = $region28
      $region27: #{generator_forward.52} parent=23 // pred_region
        %p158 = scmp.lt.s32.totalorder %s10, 1
        %s159 = scalar_select %p158, %s10, 1
        %s160 = smul.addr %s159, 4
        %s161 = smul.addr %s160, 4
        %s162 = scalar_lea.vmem %s0, %s161
      $region28: #{generator_forward.52} parent=23 // pred_fallthru
        _
      // Predicated region
      $region29: #{generator_forward.52} parent=23 // pred_check
        %p163 = pneg %p56
      $region30: #{generator_forward.52} parent=23 // pred_check_branch
        %165 = sbr.rel (%p163) target = $region32
      $region31: #{generator_forward.52} parent=23 // pred_region
        %p166 = scmp.lt.s32.totalorder %s10, 1
        %s167 = scalar_select %p166, %s10, 1
        %s168 = smul.addr %s167, 4
        %s169 = smul.addr %s168, 4
        %s170 = scalar_lea.vmem %s1, %s169
      $region32: #{generator_forward.52} parent=23 // pred_fallthru
        _
    $region24: #{generator_forward.52} parent=5 // pred_fallthru
      _
    %p171 = scmp.le.s32.totalorder 1, %s10
    %p172 = scmp.lt.s32.totalorder %s10, 3
    %p173 = pnand %p171, %p172
    %p174 = pneg %p173
    // Predicated region
    $region33: #{generator_forward.52} parent=5 // pred_check
      _
    $region34: #{generator_forward.52} parent=5 // pred_check_branch
      %176 = sbr.rel (%p173) target = $region36
    $region35: #{generator_forward.52} parent=5 // pred_region
      %s177 = ssub.s32 %s10, 1
      %p178 = scmp.lt.s32.totalorder %s15, 1
      %s179 = scalar_select %p178, %s15, 1
      %s180 = smul.addr %s179, 4
      %s181 = smul.addr %s180, 4
      %s182 = scalar_lea.vmem %s0, %s181
      %p183 = pneg %p36
      %p184 = pneg %p33
      %p185 = scmp.lt.s32.totalorder %s15, 1
      %s186 = scalar_select %p185, %s15, 1
      %s187 = smul.addr %s186, 4
      %s188 = smul.addr %s187, 4
      %s189 = scalar_lea.vmem %s1, %s188
      %p190 = pneg %p62
      %p191 = pneg %p59
      %p192 = pneg %p83
      %p193 = pneg %p80
      %p194 = pneg %p104
      %p195 = pneg %p101
      %p196 = pneg %p130
      %p197 = pneg %p127
      %p198 = scmp.lt.s32.totalorder %s15, 1
      %s199 = scalar_select %p198, %s15, 1
      %s200 = smul.addr %s199, 4
      %s201 = smul.addr %s200, 4
      %s202 = scalar_lea.vmem %s4, %s201
      %p203 = scmp.lt.s32.totalorder %s15, 1
      %s204 = scalar_select %p203, %s15, 1
      %s205 = smul.addr %s204, 4
      %s206 = smul.addr %s205, 4
      %s207 = scalar_lea.vmem %s0, %s206
      %p208 = scmp.lt.s32.totalorder %s15, 1
      %s209 = scalar_select %p208, %s15, 1
      %s210 = smul.addr %s209, 4
      %s211 = smul.addr %s210, 4
      %s212 = scalar_lea.vmem %s1, %s211
      %p213 = scmp.lt.s32.totalorder %s15, 1
      %s214 = scalar_select %p213, %s15, 1
      %s215 = smul.addr %s214, 4
      %s216 = smul.addr %s215, 4
      %s217 = scalar_lea.vmem %s4, %s216
      %v218 = vld [vmem:[%s207] sm:$0xf]
      %v219 = vld [vmem:[%s207 + $0x4] sm:$0xf]
      %v220 = vld [vmem:[%s207 + $0x8] sm:$0xf]
      %v221 = vld [vmem:[%s207 + $0xc] sm:$0xf]
      %vm222 = vcmask 257024
      %v223 = vsel %vm222, %v218, 0.0
      %v224 = vsel %vm222, %v219, 0.0
      %v225 = vadd.f32 %v223, %v224
      %v226 = vsel %vm222, %v220, 0.0
      %v227 = vadd.f32 %v225, %v226
      %v228 = vsel %vm222, %v221, 0.0
      %v229 = vadd.f32 %v227, %v228
      %v230 = vrot.slane %v229, 4
      %v231 = vadd.f32 %v229, %v230
      %v232 = vrot.slane %v231, 2
      %v233 = vadd.f32 %v231, %v232
      %v234 = vrot.slane %v233, 1
      %v235 = vadd.f32 %v233, %v234
      %v236 = vrcp.pop 16.0
      %v237 = vmul.f32 %v235, %v236
      %v238 = vsub.f32 %v218, %v237
      %v239 = vsub.f32 %v219, %v237
      %v240 = vsub.f32 %v220, %v237
      %v241 = vsub.f32 %v221, %v237
      %v242 = vmul.f32 %v238, %v238
      %v243 = vmul.f32 %v239, %v239
      %v244 = vmul.f32 %v240, %v240
      %v245 = vmul.f32 %v241, %v241
      %v246 = vsel %vm222, %v242, 0.0
      %v247 = vsel %vm222, %v243, 0.0
      %v248 = vadd.f32 %v246, %v247
      %v249 = vsel %vm222, %v244, 0.0
      %v250 = vadd.f32 %v248, %v249
      %v251 = vsel %vm222, %v245, 0.0
      %v252 = vadd.f32 %v250, %v251
      %v253 = vrot.slane %v252, 4
      %v254 = vadd.f32 %v252, %v253
      %v255 = vrot.slane %v254, 2
      %v256 = vadd.f32 %v254, %v255
      %v257 = vrot.slane %v256, 1
      %v258 = vadd.f32 %v256, %v257
      %v259 = vmul.f32 %v258, %v236
      %v260 = vadd.f32 %v259, 1e-05
      %v261 = vrsqrt.pop %v260
      %v262 = vmul.f32 %v238, %v261
      %v263 = vmul.f32 %v239, %v261
      %v264 = vmul.f32 %v240, %v261
      %v265 = vmul.f32 %v241, %v261
      %v266 = vld [vmem:[%s2] sm:$0x1]
      %v268 = vlaneseq
      %v269 = vshrl.u32 %v268, 7
      %v270 = vsub.s32 0, %v269
      %v271 = vrot.slane %v266, %v270
      %v273 = vmul.f32 %v262, %v271
      %v274 = vmul.f32 %v263, %v271
      %v275 = vmul.f32 %v264, %v271
      %v276 = vmul.f32 %v265, %v271
      %v277 = vld [vmem:[%s3] sm:$0x1]
      %v279 = vlaneseq
      %v280 = vshrl.u32 %v279, 7
      %v281 = vsub.s32 0, %v280
      %v282 = vrot.slane %v277, %v281
      %v284 = vadd.f32 %v273, %v282
      %v285 = vadd.f32 %v274, %v282
      %v286 = vadd.f32 %v275, %v282
      %v287 = vadd.f32 %v276, %v282
      %v288 = vld [vmem:[%s212] sm:$0xf]
      %v289 = vld [vmem:[%s212 + $0x4] sm:$0xf]
      %v290 = vld [vmem:[%s212 + $0x8] sm:$0xf]
      %v291 = vld [vmem:[%s212 + $0xc] sm:$0xf]
      %v292 = vadd.f32 %v288, %v284
      %v293 = vadd.f32 %v289, %v285
      %v294 = vadd.f32 %v290, %v286
      %v295 = vadd.f32 %v291, %v287
      %296 = vst.msk [vmem:[%s217] sm:$0xf] %vm222, %v292
      %297 = vst.msk [vmem:[%s217 + $0x4] sm:$0xf] %vm222, %v293
      %298 = vst.msk [vmem:[%s217 + $0x8] sm:$0xf] %vm222, %v294
      %299 = vst.msk [vmem:[%s217 + $0xc] sm:$0xf] %vm222, %v295
      %p300 = scmp.lt.s32.totalorder %s15, 1
      %s301 = scalar_select %p300, %s15, 1
      %s302 = smul.addr %s301, 4
      %s303 = smul.addr %s302, 4
      %s304 = scalar_lea.vmem %s4, %s303
      // Predicated region
      $region37: #{generator_forward.52} parent=35 // pred_check
        %p305 = pneg %p127
      $region38: #{generator_forward.52} parent=35 // pred_check_branch
        %307 = sbr.rel (%p305) target = $region40
      $region39: #{generator_forward.52} parent=35 // pred_region
        _
      $region40: #{generator_forward.52} parent=35 // pred_fallthru
        _
    $region36: #{generator_forward.52} parent=5 // pred_fallthru
      _
    %p308 = scmp.le.s32.totalorder 2, %s10
    // Predicated region
    $region41: #{generator_forward.52} parent=5 // pred_check
      %p309 = pneg %p308
    $region42: #{generator_forward.52} parent=5 // pred_check_branch
      %311 = sbr.rel (%p309) target = $region44
    $region43: #{generator_forward.52} parent=5 // pred_region
      %s312 = ssub.s32 %s10, 2
      // Predicated region
      $region45: #{generator_forward.52} parent=43 // pred_check
        %p313 = pneg %p133
      $region46: #{generator_forward.52} parent=43 // pred_check_branch
        %315 = sbr.rel (%p313) target = $region48
      $region47: #{generator_forward.52} parent=43 // pred_region
        %p316 = scmp.lt.s32.totalorder %s16, 1
        %s317 = scalar_select %p316, %s16, 1
        %s318 = smul.addr %s317, 4
        %s319 = smul.addr %s318, 4
        %s320 = scalar_lea.vmem %s4, %s319
      $region48: #{generator_forward.52} parent=43 // pred_fallthru
        _
    $region44: #{generator_forward.52} parent=5 // pred_fallthru
      _
  $region6: #{generator_forward.52} parent=0 // loop_footer
    %s14 = sadd.s32 1, %s10
  $region7: #{generator_forward.52} parent=0 // loop_footer_branch
    %9 = sbr.rel target = $region3
  $region8: #{generator_forward.52} parent=0 // loop_exit
    _

// kernel: generator_forward.69
$region0: #{generator_forward.69}
  #allocation0 [shape = 'u32[]', space=smem, size = 0x4, offset = 0x4, fixed_abs, tag = 'smem constant byte address 0x4 - core index']
  #allocation1 [shape = 'u32[144,128]{1,0:T(1,128)}', space=vmem, size = 0x12000, scoped, tag = 'internal scratch']
  #allocation2 [shape = 'f32[512,128]{1,0:T(8,128)}', space=vmem, size = 0x40000, scoped, tag = 'scratch operand']
  %s0 = inlined_call_operand.vmem [shape: bf16[512,128], index: 0, kind: input, shape index: {}]
  %s1 = inlined_call_operand.vmem [shape: bf16[128,128], index: 1, kind: input, shape index: {}]
  %s2 = inlined_call_operand.vmem [shape: f32[1,128], index: 2, kind: input, shape index: {}]
  %s3 = inlined_call_operand.vmem [shape: f32[512,128], index: 3, kind: output, shape index: {}]
  %s4 = sld [smem:[#allocation0]]
  $region30: #{generator_forward.69} parent=0
    _
  %s6 = ssub.s32 1, %s4
  %s7 = scalar_select 0, %s6, %s4
  // Predicated region
  $region2: #{generator_forward.69} parent=0 // pred_check
    _
  $region3: #{generator_forward.69} parent=0 // pred_check_branch
    %9 = sbr.rel (0) target = $region5
  $region4: #{generator_forward.69} parent=0 // pred_region
    _
  $region5: #{generator_forward.69} parent=0 // pred_fallthru
    _
  // Predicated region
  $region6: #{generator_forward.69} parent=0 // pred_check
    _
  $region7: #{generator_forward.69} parent=0 // pred_check_branch
    %11 = sbr.rel (0) target = $region9
  $region8: #{generator_forward.69} parent=0 // pred_region
    _
  $region9: #{generator_forward.69} parent=0 // pred_fallthru
    _
  // Predicated region
  $region10: #{generator_forward.69} parent=0 // pred_check
    _
  $region11: #{generator_forward.69} parent=0 // pred_check_branch
    %13 = sbr.rel (0) target = $region13
  $region12: #{generator_forward.69} parent=0 // pred_region
    _
  $region13: #{generator_forward.69} parent=0 // pred_fallthru
    _
  %p15 = scmp.eq.s32.totalorder 0, 0
  // Predicated region
  $region14: #{generator_forward.69} parent=0 // pred_check
    %p16 = pneg %p15
  $region15: #{generator_forward.69} parent=0 // pred_check_branch
    %18 = sbr.rel (%p16) target = $region17
  $region16: #{generator_forward.69} parent=0 // pred_region
    %19 = vst [vmem:[#allocation2] sm:$0xff] 0.0
    %20 = vst [vmem:[#allocation2 + $0x8] sm:$0xff] 0.0
    %21 = vst [vmem:[#allocation2 + $0x10] sm:$0xff] 0.0
    %22 = vst [vmem:[#allocation2 + $0x18] sm:$0xff] 0.0
    %23 = vst [vmem:[#allocation2 + $0x20] sm:$0xff] 0.0
    %24 = vst [vmem:[#allocation2 + $0x28] sm:$0xff] 0.0
    %25 = vst [vmem:[#allocation2 + $0x30] sm:$0xff] 0.0
    %26 = vst [vmem:[#allocation2 + $0x38] sm:$0xff] 0.0
    %27 = vst [vmem:[#allocation2 + $0x40] sm:$0xff] 0.0
    %28 = vst [vmem:[#allocation2 + $0x48] sm:$0xff] 0.0
    %29 = vst [vmem:[#allocation2 + $0x50] sm:$0xff] 0.0
    %30 = vst [vmem:[#allocation2 + $0x58] sm:$0xff] 0.0
    %31 = vst [vmem:[#allocation2 + $0x60] sm:$0xff] 0.0
    %32 = vst [vmem:[#allocation2 + $0x68] sm:$0xff] 0.0
    %33 = vst [vmem:[#allocation2 + $0x70] sm:$0xff] 0.0
    %34 = vst [vmem:[#allocation2 + $0x78] sm:$0xff] 0.0
    %35 = vst [vmem:[#allocation2 + $0x80] sm:$0xff] 0.0
    %36 = vst [vmem:[#allocation2 + $0x88] sm:$0xff] 0.0
    %37 = vst [vmem:[#allocation2 + $0x90] sm:$0xff] 0.0
    %38 = vst [vmem:[#allocation2 + $0x98] sm:$0xff] 0.0
    %39 = vst [vmem:[#allocation2 + $0xa0] sm:$0xff] 0.0
    %40 = vst [vmem:[#allocation2 + $0xa8] sm:$0xff] 0.0
    %41 = vst [vmem:[#allocation2 + $0xb0] sm:$0xff] 0.0
    %42 = vst [vmem:[#allocation2 + $0xb8] sm:$0xff] 0.0
    %43 = vst [vmem:[#allocation2 + $0xc0] sm:$0xff] 0.0
    %44 = vst [vmem:[#allocation2 + $0xc8] sm:$0xff] 0.0
    %45 = vst [vmem:[#allocation2 + $0xd0] sm:$0xff] 0.0
    %46 = vst [vmem:[#allocation2 + $0xd8] sm:$0xff] 0.0
    %47 = vst [vmem:[#allocation2 + $0xe0] sm:$0xff] 0.0
    %48 = vst [vmem:[#allocation2 + $0xe8] sm:$0xff] 0.0
    %49 = vst [vmem:[#allocation2 + $0xf0] sm:$0xff] 0.0
    %50 = vst [vmem:[#allocation2 + $0xf8] sm:$0xff] 0.0
    %51 = vst [vmem:[#allocation2 + $0x100] sm:$0xff] 0.0
    %52 = vst [vmem:[#allocation2 + $0x108] sm:$0xff] 0.0
    %53 = vst [vmem:[#allocation2 + $0x110] sm:$0xff] 0.0
    %54 = vst [vmem:[#allocation2 + $0x118] sm:$0xff] 0.0
    %55 = vst [vmem:[#allocation2 + $0x120] sm:$0xff] 0.0
    %56 = vst [vmem:[#allocation2 + $0x128] sm:$0xff] 0.0
    %57 = vst [vmem:[#allocation2 + $0x130] sm:$0xff] 0.0
    %58 = vst [vmem:[#allocation2 + $0x138] sm:$0xff] 0.0
    %59 = vst [vmem:[#allocation2 + $0x140] sm:$0xff] 0.0
    %60 = vst [vmem:[#allocation2 + $0x148] sm:$0xff] 0.0
    %61 = vst [vmem:[#allocation2 + $0x150] sm:$0xff] 0.0
    %62 = vst [vmem:[#allocation2 + $0x158] sm:$0xff] 0.0
    %63 = vst [vmem:[#allocation2 + $0x160] sm:$0xff] 0.0
    %64 = vst [vmem:[#allocation2 + $0x168] sm:$0xff] 0.0
    %65 = vst [vmem:[#allocation2 + $0x170] sm:$0xff] 0.0
    %66 = vst [vmem:[#allocation2 + $0x178] sm:$0xff] 0.0
    %67 = vst [vmem:[#allocation2 + $0x180] sm:$0xff] 0.0
    %68 = vst [vmem:[#allocation2 + $0x188] sm:$0xff] 0.0
    %69 = vst [vmem:[#allocation2 + $0x190] sm:$0xff] 0.0
    %70 = vst [vmem:[#allocation2 + $0x198] sm:$0xff] 0.0
    %71 = vst [vmem:[#allocation2 + $0x1a0] sm:$0xff] 0.0
    %72 = vst [vmem:[#allocation2 + $0x1a8] sm:$0xff] 0.0
    %73 = vst [vmem:[#allocation2 + $0x1b0] sm:$0xff] 0.0
    %74 = vst [vmem:[#allocation2 + $0x1b8] sm:$0xff] 0.0
    %75 = vst [vmem:[#allocation2 + $0x1c0] sm:$0xff] 0.0
    %76 = vst [vmem:[#allocation2 + $0x1c8] sm:$0xff] 0.0
    %77 = vst [vmem:[#allocation2 + $0x1d0] sm:$0xff] 0.0
    %78 = vst [vmem:[#allocation2 + $0x1d8] sm:$0xff] 0.0
    %79 = vst [vmem:[#allocation2 + $0x1e0] sm:$0xff] 0.0
    %80 = vst [vmem:[#allocation2 + $0x1e8] sm:$0xff] 0.0
    %81 = vst [vmem:[#allocation2 + $0x1f0] sm:$0xff] 0.0
    %82 = vst [vmem:[#allocation2 + $0x1f8] sm:$0xff] 0.0
  $region17: #{generator_forward.69} parent=0 // pred_fallthru
    _
  %v83 = vld [vmem:[#allocation2] sm:$0xff]
  %v84 = vld [vmem:[#allocation2 + $0x8] sm:$0xff]
  %v85 = vld [vmem:[#allocation2 + $0x10] sm:$0xff]
  %v86 = vld [vmem:[#allocation2 + $0x18] sm:$0xff]
  %v87 = vld [vmem:[#allocation2 + $0x20] sm:$0xff]
  %v88 = vld [vmem:[#allocation2 + $0x28] sm:$0xff]
  %v89 = vld [vmem:[#allocation2 + $0x30] sm:$0xff]
  %v90 = vld [vmem:[#allocation2 + $0x38] sm:$0xff]
  %v91 = vld [vmem:[#allocation2 + $0x40] sm:$0xff]
  %v92 = vld [vmem:[#allocation2 + $0x48] sm:$0xff]
  %v93 = vld [vmem:[#allocation2 + $0x50] sm:$0xff]
  %v94 = vld [vmem:[#allocation2 + $0x58] sm:$0xff]
  %v95 = vld [vmem:[#allocation2 + $0x60] sm:$0xff]
  %v96 = vld [vmem:[#allocation2 + $0x68] sm:$0xff]
  %v97 = vld [vmem:[#allocation2 + $0x70] sm:$0xff]
  %v98 = vld [vmem:[#allocation2 + $0x78] sm:$0xff]
  %v99 = vld [vmem:[#allocation2 + $0x80] sm:$0xff]
  %v100 = vld [vmem:[#allocation2 + $0x88] sm:$0xff]
  %v101 = vld [vmem:[#allocation2 + $0x90] sm:$0xff]
  %v102 = vld [vmem:[#allocation2 + $0x98] sm:$0xff]
  %v103 = vld [vmem:[#allocation2 + $0xa0] sm:$0xff]
  %v104 = vld [vmem:[#allocation2 + $0xa8] sm:$0xff]
  %v105 = vld [vmem:[#allocation2 + $0xb0] sm:$0xff]
  %v106 = vld [vmem:[#allocation2 + $0xb8] sm:$0xff]
  %v107 = vld [vmem:[#allocation2 + $0xc0] sm:$0xff]
  %v108 = vld [vmem:[#allocation2 + $0xc8] sm:$0xff]
  %v109 = vld [vmem:[#allocation2 + $0xd0] sm:$0xff]
  %v110 = vld [vmem:[#allocation2 + $0xd8] sm:$0xff]
  %v111 = vld [vmem:[#allocation2 + $0xe0] sm:$0xff]
  %v112 = vld [vmem:[#allocation2 + $0xe8] sm:$0xff]
  %v113 = vld [vmem:[#allocation2 + $0xf0] sm:$0xff]
  %v114 = vld [vmem:[#allocation2 + $0xf8] sm:$0xff]
  %v115 = vld [vmem:[#allocation2 + $0x100] sm:$0xff]
  %v116 = vld [vmem:[#allocation2 + $0x108] sm:$0xff]
  %v117 = vld [vmem:[#allocation2 + $0x110] sm:$0xff]
  %v118 = vld [vmem:[#allocation2 + $0x118] sm:$0xff]
  %v119 = vld [vmem:[#allocation2 + $0x120] sm:$0xff]
  %v120 = vld [vmem:[#allocation2 + $0x128] sm:$0xff]
  %v121 = vld [vmem:[#allocation2 + $0x130] sm:$0xff]
  %v122 = vld [vmem:[#allocation2 + $0x138] sm:$0xff]
  %v123 = vld [vmem:[#allocation2 + $0x140] sm:$0xff]
  %v124 = vld [vmem:[#allocation2 + $0x148] sm:$0xff]
  %v125 = vld [vmem:[#allocation2 + $0x150] sm:$0xff]
  %v126 = vld [vmem:[#allocation2 + $0x158] sm:$0xff]
  %v127 = vld [vmem:[#allocation2 + $0x160] sm:$0xff]
  %v128 = vld [vmem:[#allocation2 + $0x168] sm:$0xff]
  %v129 = vld [vmem:[#allocation2 + $0x170] sm:$0xff]
  %v130 = vld [vmem:[#allocation2 + $0x178] sm:$0xff]
  %v131 = vld [vmem:[#allocation2 + $0x180] sm:$0xff]
  %v132 = vld [vmem:[#allocation2 + $0x188] sm:$0xff]
  %v133 = vld [vmem:[#allocation2 + $0x190] sm:$0xff]
  %v134 = vld [vmem:[#allocation2 + $0x198] sm:$0xff]
  %v135 = vld [vmem:[#allocation2 + $0x1a0] sm:$0xff]
  %v136 = vld [vmem:[#allocation2 + $0x1a8] sm:$0xff]
  %v137 = vld [vmem:[#allocation2 + $0x1b0] sm:$0xff]
  %v138 = vld [vmem:[#allocation2 + $0x1b8] sm:$0xff]
  %v139 = vld [vmem:[#allocation2 + $0x1c0] sm:$0xff]
  %v140 = vld [vmem:[#allocation2 + $0x1c8] sm:$0xff]
  %v141 = vld [vmem:[#allocation2 + $0x1d0] sm:$0xff]
  %v142 = vld [vmem:[#allocation2 + $0x1d8] sm:$0xff]
  %v143 = vld [vmem:[#allocation2 + $0x1e0] sm:$0xff]
  %v144 = vld [vmem:[#allocation2 + $0x1e8] sm:$0xff]
  %v145 = vld [vmem:[#allocation2 + $0x1f0] sm:$0xff]
  %v146 = vld [vmem:[#allocation2 + $0x1f8] sm:$0xff]
  %v147 = vld [vmem:[%s0] sm:$0xf]
  %v148 = vld [vmem:[%s0 + $0x4] sm:$0xf]
  %v149 = vld [vmem:[%s0 + $0x8] sm:$0xf]
  %v150 = vld [vmem:[%s0 + $0xc] sm:$0xf]
  %v151 = vld [vmem:[%s0 + $0x10] sm:$0xf]
  %v152 = vld [vmem:[%s0 + $0x14] sm:$0xf]
  %v153 = vld [vmem:[%s0 + $0x18] sm:$0xf]
  %v154 = vld [vmem:[%s0 + $0x1c] sm:$0xf]
  %v155 = vld [vmem:[%s0 + $0x20] sm:$0xf]
  %v156 = vld [vmem:[%s0 + $0x24] sm:$0xf]
  %v157 = vld [vmem:[%s0 + $0x28] sm:$0xf]
  %v158 = vld [vmem:[%s0 + $0x2c] sm:$0xf]
  %v159 = vld [vmem:[%s0 + $0x30] sm:$0xf]
  %v160 = vld [vmem:[%s0 + $0x34] sm:$0xf]
  %v161 = vld [vmem:[%s0 + $0x38] sm:$0xf]
  %v162 = vld [vmem:[%s0 + $0x3c] sm:$0xf]
  %v163 = vld [vmem:[%s0 + $0x40] sm:$0xf]
  %v164 = vld [vmem:[%s0 + $0x44] sm:$0xf]
  %v165 = vld [vmem:[%s0 + $0x48] sm:$0xf]
  %v166 = vld [vmem:[%s0 + $0x4c] sm:$0xf]
  %v167 = vld [vmem:[%s0 + $0x50] sm:$0xf]
  %v168 = vld [vmem:[%s0 + $0x54] sm:$0xf]
  %v169 = vld [vmem:[%s0 + $0x58] sm:$0xf]
  %v170 = vld [vmem:[%s0 + $0x5c] sm:$0xf]
  %v171 = vld [vmem:[%s0 + $0x60] sm:$0xf]
  %v172 = vld [vmem:[%s0 + $0x64] sm:$0xf]
  %v173 = vld [vmem:[%s0 + $0x68] sm:$0xf]
  %v174 = vld [vmem:[%s0 + $0x6c] sm:$0xf]
  %v175 = vld [vmem:[%s0 + $0x70] sm:$0xf]
  %v176 = vld [vmem:[%s0 + $0x74] sm:$0xf]
  %v177 = vld [vmem:[%s0 + $0x78] sm:$0xf]
  %v178 = vld [vmem:[%s0 + $0x7c] sm:$0xf]
  %v179 = vld [vmem:[%s0 + $0x80] sm:$0xf]
  %v180 = vld [vmem:[%s0 + $0x84] sm:$0xf]
  %v181 = vld [vmem:[%s0 + $0x88] sm:$0xf]
  %v182 = vld [vmem:[%s0 + $0x8c] sm:$0xf]
  %v183 = vld [vmem:[%s0 + $0x90] sm:$0xf]
  %v184 = vld [vmem:[%s0 + $0x94] sm:$0xf]
  %v185 = vld [vmem:[%s0 + $0x98] sm:$0xf]
  %v186 = vld [vmem:[%s0 + $0x9c] sm:$0xf]
  %v187 = vld [vmem:[%s0 + $0xa0] sm:$0xf]
  %v188 = vld [vmem:[%s0 + $0xa4] sm:$0xf]
  %v189 = vld [vmem:[%s0 + $0xa8] sm:$0xf]
  %v190 = vld [vmem:[%s0 + $0xac] sm:$0xf]
  %v191 = vld [vmem:[%s0 + $0xb0] sm:$0xf]
  %v192 = vld [vmem:[%s0 + $0xb4] sm:$0xf]
  %v193 = vld [vmem:[%s0 + $0xb8] sm:$0xf]
  %v194 = vld [vmem:[%s0 + $0xbc] sm:$0xf]
  %v195 = vld [vmem:[%s0 + $0xc0] sm:$0xf]
  %v196 = vld [vmem:[%s0 + $0xc4] sm:$0xf]
  %v197 = vld [vmem:[%s0 + $0xc8] sm:$0xf]
  %v198 = vld [vmem:[%s0 + $0xcc] sm:$0xf]
  %v199 = vld [vmem:[%s0 + $0xd0] sm:$0xf]
  %v200 = vld [vmem:[%s0 + $0xd4] sm:$0xf]
  %v201 = vld [vmem:[%s0 + $0xd8] sm:$0xf]
  %v202 = vld [vmem:[%s0 + $0xdc] sm:$0xf]
  %v203 = vld [vmem:[%s0 + $0xe0] sm:$0xf]
  %v204 = vld [vmem:[%s0 + $0xe4] sm:$0xf]
  %v205 = vld [vmem:[%s0 + $0xe8] sm:$0xf]
  %v206 = vld [vmem:[%s0 + $0xec] sm:$0xf]
  %v207 = vld [vmem:[%s0 + $0xf0] sm:$0xf]
  %v208 = vld [vmem:[%s0 + $0xf4] sm:$0xf]
  %v209 = vld [vmem:[%s0 + $0xf8] sm:$0xf]
  %v210 = vld [vmem:[%s0 + $0xfc] sm:$0xf]
  %v211 = vld [vmem:[%s1] sm:$0xf]
  %v212 = vld [vmem:[%s1 + $0x4] sm:$0xf]
  %v213 = vld [vmem:[%s1 + $0x8] sm:$0xf]
  %v214 = vld [vmem:[%s1 + $0xc] sm:$0xf]
  %v215 = vld [vmem:[%s1 + $0x10] sm:$0xf]
  %v216 = vld [vmem:[%s1 + $0x14] sm:$0xf]
  %v217 = vld [vmem:[%s1 + $0x18] sm:$0xf]
  %v218 = vld [vmem:[%s1 + $0x1c] sm:$0xf]
  %v219 = vld [vmem:[%s1 + $0x20] sm:$0xf]
  %v220 = vld [vmem:[%s1 + $0x24] sm:$0xf]
  %v221 = vld [vmem:[%s1 + $0x28] sm:$0xf]
  %v222 = vld [vmem:[%s1 + $0x2c] sm:$0xf]
  %v223 = vld [vmem:[%s1 + $0x30] sm:$0xf]
  %v224 = vld [vmem:[%s1 + $0x34] sm:$0xf]
  %v225 = vld [vmem:[%s1 + $0x38] sm:$0xf]
  %v226 = vld [vmem:[%s1 + $0x3c] sm:$0xf]
  %v291 = vunpack.c.l.b16 %v147
  %v292 = vunpack.c.l.b16 %v148
  %v293 = vunpack.c.l.b16 %v149
  %v294 = vunpack.c.l.b16 %v150
  %v295 = vunpack.c.l.b16 %v151
  %v296 = vunpack.c.l.b16 %v152
  %v297 = vunpack.c.l.b16 %v153
  %v298 = vunpack.c.l.b16 %v154
  %v299 = vunpack.c.l.b16 %v155
  %v300 = vunpack.c.l.b16 %v156
  %v301 = vunpack.c.l.b16 %v157
  %v302 = vunpack.c.l.b16 %v158
  %v303 = vunpack.c.l.b16 %v159
  %v304 = vunpack.c.l.b16 %v160
  %v305 = vunpack.c.l.b16 %v161
  %v306 = vunpack.c.l.b16 %v162
  %v307 = vunpack.c.l.b16 %v163
  %v308 = vunpack.c.l.b16 %v164
  %v309 = vunpack.c.l.b16 %v165
  %v310 = vunpack.c.l.b16 %v166
  %v311 = vunpack.c.l.b16 %v167
  %v312 = vunpack.c.l.b16 %v168
  %v313 = vunpack.c.l.b16 %v169
  %v314 = vunpack.c.l.b16 %v170
  %v315 = vunpack.c.l.b16 %v171
  %v316 = vunpack.c.l.b16 %v172
  %v317 = vunpack.c.l.b16 %v173
  %v318 = vunpack.c.l.b16 %v174
  %v319 = vunpack.c.l.b16 %v175
  %v320 = vunpack.c.l.b16 %v176
  %v321 = vunpack.c.l.b16 %v177
  %v322 = vunpack.c.l.b16 %v178
  %v323 = vunpack.c.l.b16 %v179
  %v324 = vunpack.c.l.b16 %v180
  %v325 = vunpack.c.l.b16 %v181
  %v326 = vunpack.c.l.b16 %v182
  %v327 = vunpack.c.l.b16 %v183
  %v328 = vunpack.c.l.b16 %v184
  %v329 = vunpack.c.l.b16 %v185
  %v330 = vunpack.c.l.b16 %v186
  %v331 = vunpack.c.l.b16 %v187
  %v332 = vunpack.c.l.b16 %v188
  %v333 = vunpack.c.l.b16 %v189
  %v334 = vunpack.c.l.b16 %v190
  %v335 = vunpack.c.l.b16 %v191
  %v336 = vunpack.c.l.b16 %v192
  %v337 = vunpack.c.l.b16 %v193
  %v338 = vunpack.c.l.b16 %v194
  %v339 = vunpack.c.l.b16 %v195
  %v340 = vunpack.c.l.b16 %v196
  %v341 = vunpack.c.l.b16 %v197
  %v342 = vunpack.c.l.b16 %v198
  %v343 = vunpack.c.l.b16 %v199
  %v344 = vunpack.c.l.b16 %v200
  %v345 = vunpack.c.l.b16 %v201
  %v346 = vunpack.c.l.b16 %v202
  %v347 = vunpack.c.l.b16 %v203
  %v348 = vunpack.c.l.b16 %v204
  %v349 = vunpack.c.l.b16 %v205
  %v350 = vunpack.c.l.b16 %v206
  %v351 = vunpack.c.l.b16 %v207
  %v352 = vunpack.c.l.b16 %v208
  %v353 = vunpack.c.l.b16 %v209
  %v354 = vunpack.c.l.b16 %v210
  %v355 = vpack.c.b16 %v292, %v291
  %v356 = vpack.c.b16 %v294, %v293
  %v357 = vpack.c.b16 %v296, %v295
  %v358 = vpack.c.b16 %v298, %v297
  %v359 = vpack.c.b16 %v300, %v299
  %v360 = vpack.c.b16 %v302, %v301
  %v361 = vpack.c.b16 %v304, %v303
  %v362 = vpack.c.b16 %v306, %v305
  %v363 = vpack.c.b16 %v308, %v307
  %v364 = vpack.c.b16 %v310, %v309
  %v365 = vpack.c.b16 %v312, %v311
  %v366 = vpack.c.b16 %v314, %v313
  %v367 = vpack.c.b16 %v316, %v315
  %v368 = vpack.c.b16 %v318, %v317
  %v369 = vpack.c.b16 %v320, %v319
  %v370 = vpack.c.b16 %v322, %v321
  %v371 = vpack.c.b16 %v324, %v323
  %v372 = vpack.c.b16 %v326, %v325
  %v373 = vpack.c.b16 %v328, %v327
  %v374 = vpack.c.b16 %v330, %v329
  %v375 = vpack.c.b16 %v332, %v331
  %v376 = vpack.c.b16 %v334, %v333
  %v377 = vpack.c.b16 %v336, %v335
  %v378 = vpack.c.b16 %v338, %v337
  %v379 = vpack.c.b16 %v340, %v339
  %v380 = vpack.c.b16 %v342, %v341
  %v381 = vpack.c.b16 %v344, %v343
  %v382 = vpack.c.b16 %v346, %v345
  %v383 = vpack.c.b16 %v348, %v347
  %v384 = vpack.c.b16 %v350, %v349
  %v385 = vpack.c.b16 %v352, %v351
  %v386 = vpack.c.b16 %v354, %v353
  %v435 = vunpack.c.l.b16 %v211
  %v436 = vunpack.c.l.b16 %v212
  %v437 = vunpack.c.l.b16 %v213
  %v438 = vunpack.c.l.b16 %v214
  %v439 = vunpack.c.l.b16 %v215
  %v440 = vunpack.c.l.b16 %v216
  %v441 = vunpack.c.l.b16 %v217
  %v442 = vunpack.c.l.b16 %v218
  %v443 = vunpack.c.l.b16 %v219
  %v444 = vunpack.c.l.b16 %v220
  %v445 = vunpack.c.l.b16 %v221
  %v446 = vunpack.c.l.b16 %v222
  %v447 = vunpack.c.l.b16 %v223
  %v448 = vunpack.c.l.b16 %v224
  %v449 = vunpack.c.l.b16 %v225
  %v450 = vunpack.c.l.b16 %v226
  %v451 = vpack.c.b16 %v436, %v435
  %v452 = vpack.c.b16 %v438, %v437
  %v453 = vpack.c.b16 %v440, %v439
  %v454 = vpack.c.b16 %v442, %v441
  %v455 = vpack.c.b16 %v444, %v443
  %v456 = vpack.c.b16 %v446, %v445
  %v457 = vpack.c.b16 %v448, %v447
  %v458 = vpack.c.b16 %v450, %v449
  %467 = vmatprep.subr.bf16.mxu0 0
  %468 = vmatpush1.bf16.msra.mxu0 %v458
  %469 = vmatprep.subr.bf16.mxu0 0
  %470 = vmatpush1.bf16.msra.mxu0 %v457
  %471 = vmatprep.subr.bf16.mxu0 0
  %472 = vmatpush1.bf16.msra.mxu0 %v456
  %473 = vmatprep.subr.bf16.mxu0 0
  %474 = vmatpush1.bf16.msra.mxu0 %v455
  %475 = vmatprep.subr.bf16.mxu0 0
  %476 = vmatpush1.bf16.msra.mxu0 %v454
  %477 = vmatprep.subr.bf16.mxu0 0
  %478 = vmatpush1.bf16.msra.mxu0 %v453
  %479 = vmatprep.subr.bf16.mxu0 0
  %480 = vmatpush1.bf16.msra.mxu0 %v452
  %481 = vmatprep.subr.bf16.mxu0 0
  %482 = vmatpush1.bf16.msra.mxu0 %v451
  %483 = vmatprep.subr.bf16.mxu0 0
  %484 = vmatpush2.bf16.msra.mxu0 0
  %485 = vmatprep.subr.bf16.mxu0 0
  %486 = vmatpush2.bf16.msra.mxu0 0
  %487 = vmatprep.subr.bf16.mxu0 0
  %488 = vmatpush2.bf16.msra.mxu0 0
  %489 = vmatprep.subr.bf16.mxu0 0
  %490 = vmatpush2.bf16.msra.mxu0 0
  %491 = vmatprep.subr.bf16.mxu0 0
  %492 = vmatpush2.bf16.msra.mxu0 0
  %493 = vmatprep.subr.bf16.mxu0 0
  %494 = vmatpush2.bf16.msra.mxu0 0
  %495 = vmatprep.subr.bf16.mxu0 0
  %496 = vmatpush2.bf16.msra.mxu0 0
  %497 = vmatprep.subr.bf16.mxu0 0
  %498 = vmatpush2.bf16.msra.mxu0 0
  %499 = vmatprep.mubr.bf16.mxu0 0
  %500 = vmatmul.mubr.bf16.gmra.mxu0 %v355
  %v501 = vpop.f32.mrf.mxu0
  %v502 = vadd.f32 0.0, %v501
  %v503 = vpop.f32.mrf.mxu0
  %v504 = vpop.f32.mrf.mxu0
  %v505 = vadd.f32 0.0, %v504
  %v506 = vpop.f32.mrf.mxu0
  %507 = vmatprep.mubr.bf16.mxu0 0
  %508 = vmatmul.mubr.bf16.gmra.mxu0 %v356
  %v509 = vpop.f32.mrf.mxu0
  %v510 = vadd.f32 0.0, %v509
  %v511 = vpop.f32.mrf.mxu0
  %v512 = vpop.f32.mrf.mxu0
  %v513 = vadd.f32 0.0, %v512
  %v514 = vpop.f32.mrf.mxu0
  %515 = vmatprep.mubr.bf16.mxu0 0
  %516 = vmatmul.mubr.bf16.gmra.mxu0 %v357
  %v517 = vpop.f32.mrf.mxu0
  %v518 = vadd.f32 0.0, %v517
  %v519 = vpop.f32.mrf.mxu0
  %v520 = vpop.f32.mrf.mxu0
  %v521 = vadd.f32 0.0, %v520
  %v522 = vpop.f32.mrf.mxu0
  %523 = vmatprep.mubr.bf16.mxu0 0
  %524 = vmatmul.mubr.bf16.gmra.mxu0 %v358
  %v525 = vpop.f32.mrf.mxu0
  %v526 = vadd.f32 0.0, %v525
  %v527 = vpop.f32.mrf.mxu0
  %v528 = vpop.f32.mrf.mxu0
  %v529 = vadd.f32 0.0, %v528
  %v530 = vpop.f32.mrf.mxu0
  %531 = vmatprep.mubr.bf16.mxu0 0
  %532 = vmatmul.mubr.bf16.gmra.mxu0 %v359
  %v533 = vpop.f32.mrf.mxu0
  %v534 = vadd.f32 0.0, %v533
  %v535 = vpop.f32.mrf.mxu0
  %v536 = vpop.f32.mrf.mxu0
  %v537 = vadd.f32 0.0, %v536
  %v538 = vpop.f32.mrf.mxu0
  %539 = vmatprep.mubr.bf16.mxu0 0
  %540 = vmatmul.mubr.bf16.gmra.mxu0 %v360
  %v541 = vpop.f32.mrf.mxu0
  %v542 = vadd.f32 0.0, %v541
  %v543 = vpop.f32.mrf.mxu0
  %v544 = vpop.f32.mrf.mxu0
  %v545 = vadd.f32 0.0, %v544
  %v546 = vpop.f32.mrf.mxu0
  %547 = vmatprep.mubr.bf16.mxu0 0
  %548 = vmatmul.mubr.bf16.gmra.mxu0 %v361
  %v549 = vpop.f32.mrf.mxu0
  %v550 = vadd.f32 0.0, %v549
  %v551 = vpop.f32.mrf.mxu0
  %v552 = vpop.f32.mrf.mxu0
  %v553 = vadd.f32 0.0, %v552
  %v554 = vpop.f32.mrf.mxu0
  %555 = vmatprep.mubr.bf16.mxu0 0
  %556 = vmatmul.mubr.bf16.gmra.mxu0 %v362
  %v557 = vpop.f32.mrf.mxu0
  %v558 = vadd.f32 0.0, %v557
  %v559 = vpop.f32.mrf.mxu0
  %v560 = vpop.f32.mrf.mxu0
  %v561 = vadd.f32 0.0, %v560
  %v562 = vpop.f32.mrf.mxu0
  %563 = vmatprep.mubr.bf16.mxu0 0
  %564 = vmatmul.mubr.bf16.gmra.mxu0 %v363
  %v565 = vpop.f32.mrf.mxu0
  %v566 = vadd.f32 0.0, %v565
  %v567 = vpop.f32.mrf.mxu0
  %v568 = vpop.f32.mrf.mxu0
  %v569 = vadd.f32 0.0, %v568
  %v570 = vpop.f32.mrf.mxu0
  %571 = vmatprep.mubr.bf16.mxu0 0
  %572 = vmatmul.mubr.bf16.gmra.mxu0 %v364
  %v573 = vpop.f32.mrf.mxu0
  %v574 = vadd.f32 0.0, %v573
  %v575 = vpop.f32.mrf.mxu0
  %v576 = vpop.f32.mrf.mxu0
  %v577 = vadd.f32 0.0, %v576
  %v578 = vpop.f32.mrf.mxu0
  %579 = vmatprep.mubr.bf16.mxu0 0
  %580 = vmatmul.mubr.bf16.gmra.mxu0 %v365
  %v581 = vpop.f32.mrf.mxu0
  %v582 = vadd.f32 0.0, %v581
  %v583 = vpop.f32.mrf.mxu0
  %v584 = vpop.f32.mrf.mxu0
  %v585 = vadd.f32 0.0, %v584
  %v586 = vpop.f32.mrf.mxu0
  %587 = vmatprep.mubr.bf16.mxu0 0
  %588 = vmatmul.mubr.bf16.gmra.mxu0 %v366
  %v589 = vpop.f32.mrf.mxu0
  %v590 = vadd.f32 0.0, %v589
  %v591 = vpop.f32.mrf.mxu0
  %v592 = vpop.f32.mrf.mxu0
  %v593 = vadd.f32 0.0, %v592
  %v594 = vpop.f32.mrf.mxu0
  %595 = vmatprep.mubr.bf16.mxu0 0
  %596 = vmatmul.mubr.bf16.gmra.mxu0 %v367
  %v597 = vpop.f32.mrf.mxu0
  %v598 = vadd.f32 0.0, %v597
  %v599 = vpop.f32.mrf.mxu0
  %v600 = vpop.f32.mrf.mxu0
  %v601 = vadd.f32 0.0, %v600
  %v602 = vpop.f32.mrf.mxu0
  %603 = vmatprep.mubr.bf16.mxu0 0
  %604 = vmatmul.mubr.bf16.gmra.mxu0 %v368
  %v605 = vpop.f32.mrf.mxu0
  %v606 = vadd.f32 0.0, %v605
  %v607 = vpop.f32.mrf.mxu0
  %v608 = vpop.f32.mrf.mxu0
  %v609 = vadd.f32 0.0, %v608
  %v610 = vpop.f32.mrf.mxu0
  %611 = vmatprep.mubr.bf16.mxu0 0
  %612 = vmatmul.mubr.bf16.gmra.mxu0 %v369
  %v613 = vpop.f32.mrf.mxu0
  %v614 = vadd.f32 0.0, %v613
  %v615 = vpop.f32.mrf.mxu0
  %v616 = vpop.f32.mrf.mxu0
  %v617 = vadd.f32 0.0, %v616
  %v618 = vpop.f32.mrf.mxu0
  %619 = vmatprep.mubr.bf16.mxu0 0
  %620 = vmatmul.mubr.bf16.gmra.mxu0 %v370
  %v621 = vpop.f32.mrf.mxu0
  %v622 = vadd.f32 0.0, %v621
  %v623 = vpop.f32.mrf.mxu0
  %v624 = vpop.f32.mrf.mxu0
  %v625 = vadd.f32 0.0, %v624
  %v626 = vpop.f32.mrf.mxu0
  %627 = vmatprep.mubr.bf16.mxu0 0
  %628 = vmatmul.mubr.bf16.gmra.mxu0 %v371
  %v629 = vpop.f32.mrf.mxu0
  %v630 = vadd.f32 0.0, %v629
  %v631 = vpop.f32.mrf.mxu0
  %v632 = vpop.f32.mrf.mxu0
  %v633 = vadd.f32 0.0, %v632
  %v634 = vpop.f32.mrf.mxu0
  %635 = vmatprep.mubr.bf16.mxu0 0
  %636 = vmatmul.mubr.bf16.gmra.mxu0 %v372
  %v637 = vpop.f32.mrf.mxu0
  %v638 = vadd.f32 0.0, %v637
  %v639 = vpop.f32.mrf.mxu0
  %v640 = vpop.f32.mrf.mxu0
  %v641 = vadd.f32 0.0, %v640
  %v642 = vpop.f32.mrf.mxu0
  %643 = vmatprep.mubr.bf16.mxu0 0
  %644 = vmatmul.mubr.bf16.gmra.mxu0 %v373
  %v645 = vpop.f32.mrf.mxu0
  %v646 = vadd.f32 0.0, %v645
  %v647 = vpop.f32.mrf.mxu0
  %v648 = vpop.f32.mrf.mxu0
  %v649 = vadd.f32 0.0, %v648
  %v650 = vpop.f32.mrf.mxu0
  %651 = vmatprep.mubr.bf16.mxu0 0
  %652 = vmatmul.mubr.bf16.gmra.mxu0 %v374
  %v653 = vpop.f32.mrf.mxu0
  %v654 = vadd.f32 0.0, %v653
  %v655 = vpop.f32.mrf.mxu0
  %v656 = vpop.f32.mrf.mxu0
  %v657 = vadd.f32 0.0, %v656
  %v658 = vpop.f32.mrf.mxu0
  %659 = vmatprep.mubr.bf16.mxu0 0
  %660 = vmatmul.mubr.bf16.gmra.mxu0 %v375
  %v661 = vpop.f32.mrf.mxu0
  %v662 = vadd.f32 0.0, %v661
  %v663 = vpop.f32.mrf.mxu0
  %v664 = vpop.f32.mrf.mxu0
  %v665 = vadd.f32 0.0, %v664
  %v666 = vpop.f32.mrf.mxu0
  %667 = vmatprep.mubr.bf16.mxu0 0
  %668 = vmatmul.mubr.bf16.gmra.mxu0 %v376
  %v669 = vpop.f32.mrf.mxu0
  %v670 = vadd.f32 0.0, %v669
  %v671 = vpop.f32.mrf.mxu0
  %v672 = vpop.f32.mrf.mxu0
  %v673 = vadd.f32 0.0, %v672
  %v674 = vpop.f32.mrf.mxu0
  %675 = vmatprep.mubr.bf16.mxu0 0
  %676 = vmatmul.mubr.bf16.gmra.mxu0 %v377
  %v677 = vpop.f32.mrf.mxu0
  %v678 = vadd.f32 0.0, %v677
  %v679 = vpop.f32.mrf.mxu0
  %v680 = vpop.f32.mrf.mxu0
  %v681 = vadd.f32 0.0, %v680
  %v682 = vpop.f32.mrf.mxu0
  %683 = vmatprep.mubr.bf16.mxu0 0
  %684 = vmatmul.mubr.bf16.gmra.mxu0 %v378
  %v685 = vpop.f32.mrf.mxu0
  %v686 = vadd.f32 0.0, %v685
  %v687 = vpop.f32.mrf.mxu0
  %v688 = vpop.f32.mrf.mxu0
  %v689 = vadd.f32 0.0, %v688
  %v690 = vpop.f32.mrf.mxu0
  %691 = vmatprep.mubr.bf16.mxu0 0
  %692 = vmatmul.mubr.bf16.gmra.mxu0 %v379
  %v693 = vpop.f32.mrf.mxu0
  %v694 = vadd.f32 0.0, %v693
  %v695 = vpop.f32.mrf.mxu0
  %v696 = vpop.f32.mrf.mxu0
  %v697 = vadd.f32 0.0, %v696
  %v698 = vpop.f32.mrf.mxu0
  %699 = vmatprep.mubr.bf16.mxu0 0
  %700 = vmatmul.mubr.bf16.gmra.mxu0 %v380
  %v701 = vpop.f32.mrf.mxu0
  %v702 = vadd.f32 0.0, %v701
  %v703 = vpop.f32.mrf.mxu0
  %v704 = vpop.f32.mrf.mxu0
  %v705 = vadd.f32 0.0, %v704
  %v706 = vpop.f32.mrf.mxu0
  %707 = vmatprep.mubr.bf16.mxu0 0
  %708 = vmatmul.mubr.bf16.gmra.mxu0 %v381
  %v709 = vpop.f32.mrf.mxu0
  %v710 = vadd.f32 0.0, %v709
  %v711 = vpop.f32.mrf.mxu0
  %v712 = vpop.f32.mrf.mxu0
  %v713 = vadd.f32 0.0, %v712
  %v714 = vpop.f32.mrf.mxu0
  %715 = vmatprep.mubr.bf16.mxu0 0
  %716 = vmatmul.mubr.bf16.gmra.mxu0 %v382
  %v717 = vpop.f32.mrf.mxu0
  %v718 = vadd.f32 0.0, %v717
  %v719 = vpop.f32.mrf.mxu0
  %v720 = vpop.f32.mrf.mxu0
  %v721 = vadd.f32 0.0, %v720
  %v722 = vpop.f32.mrf.mxu0
  %723 = vmatprep.mubr.bf16.mxu0 0
  %724 = vmatmul.mubr.bf16.gmra.mxu0 %v383
  %v725 = vpop.f32.mrf.mxu0
  %v726 = vadd.f32 0.0, %v725
  %v727 = vpop.f32.mrf.mxu0
  %v728 = vpop.f32.mrf.mxu0
  %v729 = vadd.f32 0.0, %v728
  %v730 = vpop.f32.mrf.mxu0
  %731 = vmatprep.mubr.bf16.mxu0 0
  %732 = vmatmul.mubr.bf16.gmra.mxu0 %v384
  %v733 = vpop.f32.mrf.mxu0
  %v734 = vadd.f32 0.0, %v733
  %v735 = vpop.f32.mrf.mxu0
  %v736 = vpop.f32.mrf.mxu0
  %v737 = vadd.f32 0.0, %v736
  %v738 = vpop.f32.mrf.mxu0
  %739 = vmatprep.mubr.bf16.mxu0 0
  %740 = vmatmul.mubr.bf16.gmra.mxu0 %v385
  %v741 = vpop.f32.mrf.mxu0
  %v742 = vadd.f32 0.0, %v741
  %v743 = vpop.f32.mrf.mxu0
  %v744 = vpop.f32.mrf.mxu0
  %v745 = vadd.f32 0.0, %v744
  %v746 = vpop.f32.mrf.mxu0
  %747 = vmatprep.mubr.bf16.mxu0 0
  %748 = vmatmul.mubr.bf16.gmra.mxu0 %v386
  %v749 = vpop.f32.mrf.mxu0
  %v750 = vadd.f32 0.0, %v749
  %v751 = vpop.f32.mrf.mxu0
  %v752 = vpop.f32.mrf.mxu0
  %v753 = vadd.f32 0.0, %v752
  %v754 = vpop.f32.mrf.mxu0
  %755 = vdwg.mxu0
  %v756 = vadd.f32 %v83, %v502
  %v757 = vadd.f32 %v84, %v505
  %v758 = vadd.f32 %v85, %v510
  %v759 = vadd.f32 %v86, %v513
  %v760 = vadd.f32 %v87, %v518
  %v761 = vadd.f32 %v88, %v521
  %v762 = vadd.f32 %v89, %v526
  %v763 = vadd.f32 %v90, %v529
  %v764 = vadd.f32 %v91, %v534
  %v765 = vadd.f32 %v92, %v537
  %v766 = vadd.f32 %v93, %v542
  %v767 = vadd.f32 %v94, %v545
  %v768 = vadd.f32 %v95, %v550
  %v769 = vadd.f32 %v96, %v553
  %v770 = vadd.f32 %v97, %v558
  %v771 = vadd.f32 %v98, %v561
  %v772 = vadd.f32 %v99, %v566
  %v773 = vadd.f32 %v100, %v569
  %v774 = vadd.f32 %v101, %v574
  %v775 = vadd.f32 %v102, %v577
  %v776 = vadd.f32 %v103, %v582
  %v777 = vadd.f32 %v104, %v585
  %v778 = vadd.f32 %v105, %v590
  %v779 = vadd.f32 %v106, %v593
  %v780 = vadd.f32 %v107, %v598
  %v781 = vadd.f32 %v108, %v601
  %v782 = vadd.f32 %v109, %v606
  %v783 = vadd.f32 %v110, %v609
  %v784 = vadd.f32 %v111, %v614
  %v785 = vadd.f32 %v112, %v617
  %v786 = vadd.f32 %v113, %v622
  %v787 = vadd.f32 %v114, %v625
  %v788 = vadd.f32 %v115, %v630
  %v789 = vadd.f32 %v116, %v633
  %v790 = vadd.f32 %v117, %v638
  %v791 = vadd.f32 %v118, %v641
  %v792 = vadd.f32 %v119, %v646
  %v793 = vadd.f32 %v120, %v649
  %v794 = vadd.f32 %v121, %v654
  %v795 = vadd.f32 %v122, %v657
  %v796 = vadd.f32 %v123, %v662
  %v797 = vadd.f32 %v124, %v665
  %v798 = vadd.f32 %v125, %v670
  %v799 = vadd.f32 %v126, %v673
  %v800 = vadd.f32 %v127, %v678
  %v801 = vadd.f32 %v128, %v681
  %v802 = vadd.f32 %v129, %v686
  %v803 = vadd.f32 %v130, %v689
  %v804 = vadd.f32 %v131, %v694
  %v805 = vadd.f32 %v132, %v697
  %v806 = vadd.f32 %v133, %v702
  %v807 = vadd.f32 %v134, %v705
  %v808 = vadd.f32 %v135, %v710
  %v809 = vadd.f32 %v136, %v713
  %v810 = vadd.f32 %v137, %v718
  %v811 = vadd.f32 %v138, %v721
  %v812 = vadd.f32 %v139, %v726
  %v813 = vadd.f32 %v140, %v729
  %v814 = vadd.f32 %v141, %v734
  %v815 = vadd.f32 %v142, %v737
  %v816 = vadd.f32 %v143, %v742
  %v817 = vadd.f32 %v144, %v745
  %v818 = vadd.f32 %v145, %v750
  %v819 = vadd.f32 %v146, %v753
  %820 = vst [vmem:[#allocation2] sm:$0xff] %v756
  %821 = vst [vmem:[#allocation2 + $0x8] sm:$0xff] %v757
  %822 = vst [vmem:[#allocation2 + $0x10] sm:$0xff] %v758
  %823 = vst [vmem:[#allocation2 + $0x18] sm:$0xff] %v759
  %824 = vst [vmem:[#allocation2 + $0x20] sm:$0xff] %v760
  %825 = vst [vmem:[#allocation2 + $0x28] sm:$0xff] %v761
  %826 = vst [vmem:[#allocation2 + $0x30] sm:$0xff] %v762
  %827 = vst [vmem:[#allocation2 + $0x38] sm:$0xff] %v763
  %828 = vst [vmem:[#allocation2 + $0x40] sm:$0xff] %v764
  %829 = vst [vmem:[#allocation2 + $0x48] sm:$0xff] %v765
  %830 = vst [vmem:[#allocation2 + $0x50] sm:$0xff] %v766
  %831 = vst [vmem:[#allocation2 + $0x58] sm:$0xff] %v767
  %832 = vst [vmem:[#allocation2 + $0x60] sm:$0xff] %v768
  %833 = vst [vmem:[#allocation2 + $0x68] sm:$0xff] %v769
  %834 = vst [vmem:[#allocation2 + $0x70] sm:$0xff] %v770
  %835 = vst [vmem:[#allocation2 + $0x78] sm:$0xff] %v771
  %836 = vst [vmem:[#allocation2 + $0x80] sm:$0xff] %v772
  %837 = vst [vmem:[#allocation2 + $0x88] sm:$0xff] %v773
  %838 = vst [vmem:[#allocation2 + $0x90] sm:$0xff] %v774
  %839 = vst [vmem:[#allocation2 + $0x98] sm:$0xff] %v775
  %840 = vst [vmem:[#allocation2 + $0xa0] sm:$0xff] %v776
  %841 = vst [vmem:[#allocation2 + $0xa8] sm:$0xff] %v777
  %842 = vst [vmem:[#allocation2 + $0xb0] sm:$0xff] %v778
  %843 = vst [vmem:[#allocation2 + $0xb8] sm:$0xff] %v779
  %844 = vst [vmem:[#allocation2 + $0xc0] sm:$0xff] %v780
  %845 = vst [vmem:[#allocation2 + $0xc8] sm:$0xff] %v781
  %846 = vst [vmem:[#allocation2 + $0xd0] sm:$0xff] %v782
  %847 = vst [vmem:[#allocation2 + $0xd8] sm:$0xff] %v783
  %848 = vst [vmem:[#allocation2 + $0xe0] sm:$0xff] %v784
  %849 = vst [vmem:[#allocation2 + $0xe8] sm:$0xff] %v785
  %850 = vst [vmem:[#allocation2 + $0xf0] sm:$0xff] %v786
  %851 = vst [vmem:[#allocation2 + $0xf8] sm:$0xff] %v787
  %852 = vst [vmem:[#allocation2 + $0x100] sm:$0xff] %v788
  %853 = vst [vmem:[#allocation2 + $0x108] sm:$0xff] %v789
  %854 = vst [vmem:[#allocation2 + $0x110] sm:$0xff] %v790
  %855 = vst [vmem:[#allocation2 + $0x118] sm:$0xff] %v791
  %856 = vst [vmem:[#allocation2 + $0x120] sm:$0xff] %v792
  %857 = vst [vmem:[#allocation2 + $0x128] sm:$0xff] %v793
  %858 = vst [vmem:[#allocation2 + $0x130] sm:$0xff] %v794
  %859 = vst [vmem:[#allocation2 + $0x138] sm:$0xff] %v795
  %860 = vst [vmem:[#allocation2 + $0x140] sm:$0xff] %v796
  %861 = vst [vmem:[#allocation2 + $0x148] sm:$0xff] %v797
  %862 = vst [vmem:[#allocation2 + $0x150] sm:$0xff] %v798
  %863 = vst [vmem:[#allocation2 + $0x158] sm:$0xff] %v799
  %864 = vst [vmem:[#allocation2 + $0x160] sm:$0xff] %v800
  %865 = vst [vmem:[#allocation2 + $0x168] sm:$0xff] %v801
  %866 = vst [vmem:[#allocation2 + $0x170] sm:$0xff] %v802
  %867 = vst [vmem:[#allocation2 + $0x178] sm:$0xff] %v803
  %868 = vst [vmem:[#allocation2 + $0x180] sm:$0xff] %v804
  %869 = vst [vmem:[#allocation2 + $0x188] sm:$0xff] %v805
  %870 = vst [vmem:[#allocation2 + $0x190] sm:$0xff] %v806
  %871 = vst [vmem:[#allocation2 + $0x198] sm:$0xff] %v807
  %872 = vst [vmem:[#allocation2 + $0x1a0] sm:$0xff] %v808
  %873 = vst [vmem:[#allocation2 + $0x1a8] sm:$0xff] %v809
  %874 = vst [vmem:[#allocation2 + $0x1b0] sm:$0xff] %v810
  %875 = vst [vmem:[#allocation2 + $0x1b8] sm:$0xff] %v811
  %876 = vst [vmem:[#allocation2 + $0x1c0] sm:$0xff] %v812
  %877 = vst [vmem:[#allocation2 + $0x1c8] sm:$0xff] %v813
  %878 = vst [vmem:[#allocation2 + $0x1d0] sm:$0xff] %v814
  %879 = vst [vmem:[#allocation2 + $0x1d8] sm:$0xff] %v815
  %880 = vst [vmem:[#allocation2 + $0x1e0] sm:$0xff] %v816
  %881 = vst [vmem:[#allocation2 + $0x1e8] sm:$0xff] %v817
  %882 = vst [vmem:[#allocation2 + $0x1f0] sm:$0xff] %v818
  %883 = vst [vmem:[#allocation2 + $0x1f8] sm:$0xff] %v819
  // Predicated region
  $region18: #{generator_forward.69} parent=0 // pred_check
    %p884 = pneg %p15
  $region19: #{generator_forward.69} parent=0 // pred_check_branch
    %886 = sbr.rel (%p884) target = $region21
  $region20: #{generator_forward.69} parent=0 // pred_region
    %v887 = vld [vmem:[#allocation2] sm:$0xff]
    %v888 = vld [vmem:[#allocation2 + $0x8] sm:$0xff]
    %v889 = vld [vmem:[#allocation2 + $0x10] sm:$0xff]
    %v890 = vld [vmem:[#allocation2 + $0x18] sm:$0xff]
    %v891 = vld [vmem:[#allocation2 + $0x20] sm:$0xff]
    %v892 = vld [vmem:[#allocation2 + $0x28] sm:$0xff]
    %v893 = vld [vmem:[#allocation2 + $0x30] sm:$0xff]
    %v894 = vld [vmem:[#allocation2 + $0x38] sm:$0xff]
    %v895 = vld [vmem:[#allocation2 + $0x40] sm:$0xff]
    %v896 = vld [vmem:[#allocation2 + $0x48] sm:$0xff]
    %v897 = vld [vmem:[#allocation2 + $0x50] sm:$0xff]
    %v898 = vld [vmem:[#allocation2 + $0x58] sm:$0xff]
    %v899 = vld [vmem:[#allocation2 + $0x60] sm:$0xff]
    %v900 = vld [vmem:[#allocation2 + $0x68] sm:$0xff]
    %v901 = vld [vmem:[#allocation2 + $0x70] sm:$0xff]
    %v902 = vld [vmem:[#allocation2 + $0x78] sm:$0xff]
    %v903 = vld [vmem:[#allocation2 + $0x80] sm:$0xff]
    %v904 = vld [vmem:[#allocation2 + $0x88] sm:$0xff]
    %v905 = vld [vmem:[#allocation2 + $0x90] sm:$0xff]
    %v906 = vld [vmem:[#allocation2 + $0x98] sm:$0xff]
    %v907 = vld [vmem:[#allocation2 + $0xa0] sm:$0xff]
    %v908 = vld [vmem:[#allocation2 + $0xa8] sm:$0xff]
    %v909 = vld [vmem:[#allocation2 + $0xb0] sm:$0xff]
    %v910 = vld [vmem:[#allocation2 + $0xb8] sm:$0xff]
    %v911 = vld [vmem:[#allocation2 + $0xc0] sm:$0xff]
    %v912 = vld [vmem:[#allocation2 + $0xc8] sm:$0xff]
    %v913 = vld [vmem:[#allocation2 + $0xd0] sm:$0xff]
    %v914 = vld [vmem:[#allocation2 + $0xd8] sm:$0xff]
    %v915 = vld [vmem:[#allocation2 + $0xe0] sm:$0xff]
    %v916 = vld [vmem:[#allocation2 + $0xe8] sm:$0xff]
    %v917 = vld [vmem:[#allocation2 + $0xf0] sm:$0xff]
    %v918 = vld [vmem:[#allocation2 + $0xf8] sm:$0xff]
    %v919 = vld [vmem:[#allocation2 + $0x100] sm:$0xff]
    %v920 = vld [vmem:[#allocation2 + $0x108] sm:$0xff]
    %v921 = vld [vmem:[#allocation2 + $0x110] sm:$0xff]
    %v922 = vld [vmem:[#allocation2 + $0x118] sm:$0xff]
    %v923 = vld [vmem:[#allocation2 + $0x120] sm:$0xff]
    %v924 = vld [vmem:[#allocation2 + $0x128] sm:$0xff]
    %v925 = vld [vmem:[#allocation2 + $0x130] sm:$0xff]
    %v926 = vld [vmem:[#allocation2 + $0x138] sm:$0xff]
    %v927 = vld [vmem:[#allocation2 + $0x140] sm:$0xff]
    %v928 = vld [vmem:[#allocation2 + $0x148] sm:$0xff]
    %v929 = vld [vmem:[#allocation2 + $0x150] sm:$0xff]
    %v930 = vld [vmem:[#allocation2 + $0x158] sm:$0xff]
    %v931 = vld [vmem:[#allocation2 + $0x160] sm:$0xff]
    %v932 = vld [vmem:[#allocation2 + $0x168] sm:$0xff]
    %v933 = vld [vmem:[#allocation2 + $0x170] sm:$0xff]
    %v934 = vld [vmem:[#allocation2 + $0x178] sm:$0xff]
    %v935 = vld [vmem:[#allocation2 + $0x180] sm:$0xff]
    %v936 = vld [vmem:[#allocation2 + $0x188] sm:$0xff]
    %v937 = vld [vmem:[#allocation2 + $0x190] sm:$0xff]
    %v938 = vld [vmem:[#allocation2 + $0x198] sm:$0xff]
    %v939 = vld [vmem:[#allocation2 + $0x1a0] sm:$0xff]
    %v940 = vld [vmem:[#allocation2 + $0x1a8] sm:$0xff]
    %v941 = vld [vmem:[#allocation2 + $0x1b0] sm:$0xff]
    %v942 = vld [vmem:[#allocation2 + $0x1b8] sm:$0xff]
    %v943 = vld [vmem:[#allocation2 + $0x1c0] sm:$0xff]
    %v944 = vld [vmem:[#allocation2 + $0x1c8] sm:$0xff]
    %v945 = vld [vmem:[#allocation2 + $0x1d0] sm:$0xff]
    %v946 = vld [vmem:[#allocation2 + $0x1d8] sm:$0xff]
    %v947 = vld [vmem:[#allocation2 + $0x1e0] sm:$0xff]
    %v948 = vld [vmem:[#allocation2 + $0x1e8] sm:$0xff]
    %v949 = vld [vmem:[#allocation2 + $0x1f0] sm:$0xff]
    %v950 = vld [vmem:[#allocation2 + $0x1f8] sm:$0xff]
    %v951 = vld [vmem:[%s2] sm:$0x1]
    %v953 = vlaneseq
    %v954 = vshrl.u32 %v953, 7
    %v955 = vsub.s32 0, %v954
    %v956 = vrot.slane %v951, %v955
    %v958 = vadd.f32 %v887, %v956
    %v959 = vadd.f32 %v888, %v956
    %v960 = vadd.f32 %v889, %v956
    %v961 = vadd.f32 %v890, %v956
    %v962 = vadd.f32 %v891, %v956
    %v963 = vadd.f32 %v892, %v956
    %v964 = vadd.f32 %v893, %v956
    %v965 = vadd.f32 %v894, %v956
    %v966 = vadd.f32 %v895, %v956
    %v967 = vadd.f32 %v896, %v956
    %v968 = vadd.f32 %v897, %v956
    %v969 = vadd.f32 %v898, %v956
    %v970 = vadd.f32 %v899, %v956
    %v971 = vadd.f32 %v900, %v956
    %v972 = vadd.f32 %v901, %v956
    %v973 = vadd.f32 %v902, %v956
    %v974 = vadd.f32 %v903, %v956
    %v975 = vadd.f32 %v904, %v956
    %v976 = vadd.f32 %v905, %v956
    %v977 = vadd.f32 %v906, %v956
    %v978 = vadd.f32 %v907, %v956
    %v979 = vadd.f32 %v908, %v956
    %v980 = vadd.f32 %v909, %v956
    %v981 = vadd.f32 %v910, %v956
    %v982 = vadd.f32 %v911, %v956
    %v983 = vadd.f32 %v912, %v956
    %v984 = vadd.f32 %v913, %v956
    %v985 = vadd.f32 %v914, %v956
    %v986 = vadd.f32 %v915, %v956
    %v987 = vadd.f32 %v916, %v956
    %v988 = vadd.f32 %v917, %v956
    %v989 = vadd.f32 %v918, %v956
    %v990 = vadd.f32 %v919, %v956
    %v991 = vadd.f32 %v920, %v956
    %v992 = vadd.f32 %v921, %v956
    %v993 = vadd.f32 %v922, %v956
    %v994 = vadd.f32 %v923, %v956
    %v995 = vadd.f32 %v924, %v956
    %v996 = vadd.f32 %v925, %v956
    %v997 = vadd.f32 %v926, %v956
    %v998 = vadd.f32 %v927, %v956
    %v999 = vadd.f32 %v928, %v956
    %v1000 = vadd.f32 %v929, %v956
    %v1001 = vadd.f32 %v930, %v956
    %v1002 = vadd.f32 %v931, %v956
    %v1003 = vadd.f32 %v932, %v956
    %v1004 = vadd.f32 %v933, %v956
    %v1005 = vadd.f32 %v934, %v956
    %v1006 = vadd.f32 %v935, %v956
    %v1007 = vadd.f32 %v936, %v956
    %v1008 = vadd.f32 %v937, %v956
    %v1009 = vadd.f32 %v938, %v956
    %v1010 = vadd.f32 %v939, %v956
    %v1011 = vadd.f32 %v940, %v956
    %v1012 = vadd.f32 %v941, %v956
    %v1013 = vadd.f32 %v942, %v956
    %v1014 = vadd.f32 %v943, %v956
    %v1015 = vadd.f32 %v944, %v956
    %v1016 = vadd.f32 %v945, %v956
    %v1017 = vadd.f32 %v946, %v956
    %v1018 = vadd.f32 %v947, %v956
    %v1019 = vadd.f32 %v948, %v956
    %v1020 = vadd.f32 %v949, %v956
    %v1021 = vadd.f32 %v950, %v956
    %1022 = vst [vmem:[%s3] sm:$0xff] %v958
    %1023 = vst [vmem:[%s3 + $0x8] sm:$0xff] %v959
    %1024 = vst [vmem:[%s3 + $0x10] sm:$0xff] %v960
    %1025 = vst [vmem:[%s3 + $0x18] sm:$0xff] %v961
    %1026 = vst [vmem:[%s3 + $0x20] sm:$0xff] %v962
    %1027 = vst [vmem:[%s3 + $0x28] sm:$0xff] %v963
    %1028 = vst [vmem:[%s3 + $0x30] sm:$0xff] %v964
    %1029 = vst [vmem:[%s3 + $0x38] sm:$0xff] %v965
    %1030 = vst [vmem:[%s3 + $0x40] sm:$0xff] %v966
    %1031 = vst [vmem:[%s3 + $0x48] sm:$0xff] %v967
    %1032 = vst [vmem:[%s3 + $0x50] sm:$0xff] %v968
    %1033 = vst [vmem:[%s3 + $0x58] sm:$0xff] %v969
    %1034 = vst [vmem:[%s3 + $0x60] sm:$0xff] %v970
    %1035 = vst [vmem:[%s3 + $0x68] sm:$0xff] %v971
    %1036 = vst [vmem:[%s3 + $0x70] sm:$0xff] %v972
    %1037 = vst [vmem:[%s3 + $0x78] sm:$0xff] %v973
    %1038 = vst [vmem:[%s3 + $0x80] sm:$0xff] %v974
    %1039 = vst [vmem:[%s3 + $0x88] sm:$0xff] %v975
    %1040 = vst [vmem:[%s3 + $0x90] sm:$0xff] %v976
    %1041 = vst [vmem:[%s3 + $0x98] sm:$0xff] %v977
    %1042 = vst [vmem:[%s3 + $0xa0] sm:$0xff] %v978
    %1043 = vst [vmem:[%s3 + $0xa8] sm:$0xff] %v979
    %1044 = vst [vmem:[%s3 + $0xb0] sm:$0xff] %v980
    %1045 = vst [vmem:[%s3 + $0xb8] sm:$0xff] %v981
    %1046 = vst [vmem:[%s3 + $0xc0] sm:$0xff] %v982
    %1047 = vst [vmem:[%s3 + $0xc8] sm:$0xff] %v983
    %1048 = vst [vmem:[%s3 + $0xd0] sm:$0xff] %v984
    %1049 = vst [vmem:[%s3 + $0xd8] sm:$0xff] %v985
    %1050 = vst [vmem:[%s3 + $0xe0] sm:$0xff] %v986
    %1051 = vst [vmem:[%s3 + $0xe8] sm:$0xff] %v987
    %1052 = vst [vmem:[%s3 + $0xf0] sm:$0xff] %v988
    %1053 = vst [vmem:[%s3 + $0xf8] sm:$0xff] %v989
    %1054 = vst [vmem:[%s3 + $0x100] sm:$0xff] %v990
    %1055 = vst [vmem:[%s3 + $0x108] sm:$0xff] %v991
    %1056 = vst [vmem:[%s3 + $0x110] sm:$0xff] %v992
    %1057 = vst [vmem:[%s3 + $0x118] sm:$0xff] %v993
    %1058 = vst [vmem:[%s3 + $0x120] sm:$0xff] %v994
    %1059 = vst [vmem:[%s3 + $0x128] sm:$0xff] %v995
    %1060 = vst [vmem:[%s3 + $0x130] sm:$0xff] %v996
    %1061 = vst [vmem:[%s3 + $0x138] sm:$0xff] %v997
    %1062 = vst [vmem:[%s3 + $0x140] sm:$0xff] %v998
    %1063 = vst [vmem:[%s3 + $0x148] sm:$0xff] %v999
    %1064 = vst [vmem:[%s3 + $0x150] sm:$0xff] %v1000
    %1065 = vst [vmem:[%s3 + $0x158] sm:$0xff] %v1001
    %1066 = vst [vmem:[%s3 + $0x160] sm:$0xff] %v1002
    %1067 = vst [vmem:[%s3 + $0x168] sm:$0xff] %v1003
    %1068 = vst [vmem:[%s3 + $0x170] sm:$0xff] %v1004
    %1069 = vst [vmem:[%s3 + $0x178] sm:$0xff] %v1005
    %1070 = vst [vmem:[%s3 + $0x180] sm:$0xff] %v1006
    %1071 = vst [vmem:[%s3 + $0x188] sm:$0xff] %v1007
    %1072 = vst [vmem:[%s3 + $0x190] sm:$0xff] %v1008
    %1073 = vst [vmem:[%s3 + $0x198] sm:$0xff] %v1009
    %1074 = vst [vmem:[%s3 + $0x1a0] sm:$0xff] %v1010
    %1075 = vst [vmem:[%s3 + $0x1a8] sm:$0xff] %v1011
    %1076 = vst [vmem:[%s3 + $0x1b0] sm:$0xff] %v1012
    %1077 = vst [vmem:[%s3 + $0x1b8] sm:$0xff] %v1013
    %1078 = vst [vmem:[%s3 + $0x1c0] sm:$0xff] %v1014
    %1079 = vst [vmem:[%s3 + $0x1c8] sm:$0xff] %v1015
    %1080 = vst [vmem:[%s3 + $0x1d0] sm:$0xff] %v1016
    %1081 = vst [vmem:[%s3 + $0x1d8] sm:$0xff] %v1017
    %1082 = vst [vmem:[%s3 + $0x1e0] sm:$0xff] %v1018
    %1083 = vst [vmem:[%s3 + $0x1e8] sm:$0xff] %v1019
    %1084 = vst [vmem:[%s3 + $0x1f0] sm:$0xff] %v1020
    %1085 = vst [vmem:[%s3 + $0x1f8] sm:$0xff] %v1021
  $region21: #{generator_forward.69} parent=0 // pred_fallthru
    _
  // Predicated region
  $region22: #{generator_forward.69} parent=0 // pred_check
    _
  $region23: #{generator_forward.69} parent=0 // pred_check_branch
    %1087 = sbr.rel (0) target = $region25
  $region24: #{generator_forward.69} parent=0 // pred_region
    _
  $region25: #{generator_forward.69} parent=0 // pred_fallthru
    _
  // Predicated region
  $region26: #{generator_forward.69} parent=0 // pred_check
    _
  $region27: #{generator_forward.69} parent=0 // pred_check_branch
    %1089 = sbr.rel (0) target = $region29
  $region28: #{generator_forward.69} parent=0 // pred_region
    _
  $region29: #{generator_forward.69} parent=0 // pred_fallthru
    _

// kernel: generator_forward.70
$region0: #{generator_forward.70}
  #allocation0 [shape = 'u32[]', space=smem, size = 0x4, offset = 0x4, fixed_abs, tag = 'smem constant byte address 0x4 - core index']
  #allocation1 [shape = 'u32[144,128]{1,0:T(1,128)}', space=vmem, size = 0x12000, scoped, tag = 'internal scratch']
  %s0 = inlined_call_operand.vmem [shape: f32[2,16,16,16], index: 0, kind: input, shape index: {}]
  %s1 = inlined_call_operand.vmem [shape: f32[1,16], index: 1, kind: input, shape index: {}]
  %s2 = inlined_call_operand.vmem [shape: f32[1,16], index: 2, kind: input, shape index: {}]
  %s3 = inlined_call_operand.vmem [shape: f32[2,16,16,16], index: 3, kind: output, shape index: {}]
  %s4 = sld [smem:[#allocation0]]
  $region45: #{generator_forward.70} parent=0
    _
  %s6 = ssub.s32 1, %s4
  %s7 = scalar_select 0, %s6, %s4
  loop: start=0, step=1, limit=4
  $region2: #{generator_forward.70} parent=0 // loop_pre_header
    _
  $region3: #{generator_forward.70} parent=0 // loop_header
    %s9 = sphi 0, %s13
    %p10 = scmp.ge.s32.totalorder %s9, 4
    %s19 = sphi 0, %s21
    %s22 = sphi 0, %s19
    %s23 = sphi 0, %s22
    %s39 = sphi 0, %s23
    %s43 = sphi 0, %s43
    %s45 = sphi 0, %s43
    %s46 = sphi 0, %s45
    %s60 = sphi 0, %s46
    %s64 = sphi 0, %s64
    %s66 = sphi 0, %s64
    %s67 = sphi 0, %s66
    %s81 = sphi 0, %s67
    %s87 = sphi 0, %s89
    %s90 = sphi 0, %s87
    %s91 = sphi 0, %s90
    %s107 = sphi 0, %s91
  $region4: #{generator_forward.70} parent=0 // loop_header_branch
    %12 = sbr.rel (%p10) target = $region8
  $region5: #{generator_forward.70} parent=0 // loop_body
    %s14 = ssub.s32 %s9, 1
    %s15 = ssub.s32 %s9, 2
    %s16 = sadd.s32 %s9, 1
    %s17 = ssub.s32 %s9, %s16
    %p18 = scmp.eq.s32.totalorder %s17, 0
    %s20 = sadd.s32 %s19, 1
    %s21 = scalar_select %p18, %s19, %s20
    %p24 = pneg %p18
    %p25 = scmp.eq.s32.totalorder %s9, 1
    %p26 = por %p24, %p25
    %p27 = scmp.ne.s32.totalorder %s19, %s22
    %p28 = scmp.eq.s32.totalorder %s9, 0
    %p29 = por %p27, %p28
    %p30 = scmp.ne.s32.totalorder %s19, %s22
    %p31 = scmp.eq.s32.totalorder %s14, 1
    %p32 = por %p30, %p31
    %p33 = scmp.ne.s32.totalorder %s22, %s23
    %p34 = scmp.eq.s32.totalorder %s14, 0
    %p35 = por %p33, %p34
    %p36 = scmp.ne.s32.totalorder %s22, %s23
    %p37 = scmp.eq.s32.totalorder %s15, 1
    %p38 = por %p36, %p37
    %p40 = scmp.ne.s32.totalorder %s23, %s39
    %p41 = scmp.eq.s32.totalorder %s15, 0
    %p42 = por %p40, %p41
    %s44 = sadd.s32 %s43, 1
    %p47 = scmp.eq.s32.totalorder %s9, 1
    %p48 = scmp.ne.s32.totalorder %s43, %s45
    %p49 = scmp.eq.s32.totalorder %s9, 0
    %p50 = por %p48, %p49
    %p51 = scmp.ne.s32.totalorder %s43, %s45
    %p52 = scmp.eq.s32.totalorder %s14, 1
    %p53 = por %p51, %p52
    %p54 = scmp.ne.s32.totalorder %s45, %s46
    %p55 = scmp.eq.s32.totalorder %s14, 0
    %p56 = por %p54, %p55
    %p57 = scmp.ne.s32.totalorder %s45, %s46
    %p58 = scmp.eq.s32.totalorder %s15, 1
    %p59 = por %p57, %p58
    %p61 = scmp.ne.s32.totalorder %s46, %s60
    %p62 = scmp.eq.s32.totalorder %s15, 0
    %p63 = por %p61, %p62
    %s65 = sadd.s32 %s64, 1
    %p68 = scmp.eq.s32.totalorder %s9, 1
    %p69 = scmp.ne.s32.totalorder %s64, %s66
    %p70 = scmp.eq.s32.totalorder %s9, 0
    %p71 = por %p69, %p70
    %p72 = scmp.ne.s32.totalorder %s64, %s66
    %p73 = scmp.eq.s32.totalorder %s14, 1
    %p74 = por %p72, %p73
    %p75 = scmp.ne.s32.totalorder %s66, %s67
    %p76 = scmp.eq.s32.totalorder %s14, 0
    %p77 = por %p75, %p76
    %p78 = scmp.ne.s32.totalorder %s66, %s67
    %p79 = scmp.eq.s32.totalorder %s15, 1
    %p80 = por %p78, %p79
    %p82 = scmp.ne.s32.totalorder %s67, %s81
    %p83 = scmp.eq.s32.totalorder %s15, 0
    %p84 = por %p82, %p83
    %s85 = ssub.s32 %s9, %s16
    %p86 = scmp.eq.s32.totalorder %s85, 0
    %s88 = sadd.s32 %s87, 1
    %s89 = scalar_select %p86, %s87, %s88
    %p92 = pneg %p86
    %p93 = scmp.eq.s32.totalorder %s9, 1
    %p94 = por %p92, %p93
    %p95 = scmp.ne.s32.totalorder %s87, %s90
    %p96 = scmp.eq.s32.totalorder %s9, 0
    %p97 = por %p95, %p96
    %p98 = scmp.ne.s32.totalorder %s87, %s90
    %p99 = scmp.eq.s32.totalorder %s14, 1
    %p100 = por %p98, %p99
    %p101 = scmp.ne.s32.totalorder %s90, %s91
    %p102 = scmp.eq.s32.totalorder %s14, 0
    %p103 = por %p101, %p102
    %p104 = scmp.ne.s32.totalorder %s90, %s91
    %p105 = scmp.eq.s32.totalorder %s15, 1
    %p106 = por %p104, %p105
    %p108 = scmp.ne.s32.totalorder %s91, %s107
    %p109 = scmp.eq.s32.totalorder %s15, 0
    %p110 = por %p108, %p109
    %p111 = scmp.le.s32.totalorder 1, %s9
    %p112 = scmp.lt.s32.totalorder %s9, 3
    %p113 = pnand %p111, %p112
    %p114 = pneg %p113
    // Predicated region
    $region9: #{generator_forward.70} parent=5 // pred_check
      _
    $region10: #{generator_forward.70} parent=5 // pred_check_branch
      %116 = sbr.rel (%p113) target = $region12
    $region11: #{generator_forward.70} parent=5 // pred_region
      %s117 = ssub.s32 %s9, 1
      // Predicated region
      $region13: #{generator_forward.70} parent=11 // pred_check
        %p118 = pneg %p56
      $region14: #{generator_forward.70} parent=11 // pred_check_branch
        %120 = sbr.rel (%p118) target = $region16
      $region15: #{generator_forward.70} parent=11 // pred_region
        _
      $region16: #{generator_forward.70} parent=11 // pred_fallthru
        _
      // Predicated region
      $region17: #{generator_forward.70} parent=11 // pred_check
        %p121 = pneg %p77
      $region18: #{generator_forward.70} parent=11 // pred_check_branch
        %123 = sbr.rel (%p121) target = $region20
      $region19: #{generator_forward.70} parent=11 // pred_region
        _
      $region20: #{generator_forward.70} parent=11 // pred_fallthru
        _
    $region12: #{generator_forward.70} parent=5 // pred_fallthru
      _
    %p124 = scmp.lt.s32.totalorder %s9, 2
    // Predicated region
    $region21: #{generator_forward.70} parent=5 // pred_check
      %p125 = pneg %p124
    $region22: #{generator_forward.70} parent=5 // pred_check_branch
      %127 = sbr.rel (%p125) target = $region24
    $region23: #{generator_forward.70} parent=5 // pred_region
      // Predicated region
      $region25: #{generator_forward.70} parent=23 // pred_check
        %p128 = pneg %p29
      $region26: #{generator_forward.70} parent=23 // pred_check_branch
        %130 = sbr.rel (%p128) target = $region28
      $region27: #{generator_forward.70} parent=23 // pred_region
        %p131 = scmp.lt.s32.totalorder %s9, 1
        %s132 = scalar_select %p131, %s9, 1
        %s133 = smul.addr %s132, 32
        %s134 = smul.addr %s133, 8
        %s135 = scalar_lea.vmem %s0, %s134
      $region28: #{generator_forward.70} parent=23 // pred_fallthru
        _
    $region24: #{generator_forward.70} parent=5 // pred_fallthru
      _
    %p136 = scmp.le.s32.totalorder 1, %s9
    %p137 = scmp.lt.s32.totalorder %s9, 3
    %p138 = pnand %p136, %p137
    %p139 = pneg %p138
    // Predicated region
    $region29: #{generator_forward.70} parent=5 // pred_check
      _
    $region30: #{generator_forward.70} parent=5 // pred_check_branch
      %141 = sbr.rel (%p138) target = $region32
    $region31: #{generator_forward.70} parent=5 // pred_region
      %s142 = ssub.s32 %s9, 1
      %p143 = scmp.lt.s32.totalorder %s14, 1
      %s144 = scalar_select %p143, %s14, 1
      %s145 = smul.addr %s144, 32
      %s146 = smul.addr %s145, 8
      %s147 = scalar_lea.vmem %s0, %s146
      %p148 = pneg %p35
      %p149 = pneg %p32
      %p150 = pneg %p56
      %p151 = pneg %p53
      %p152 = pneg %p77
      %p153 = pneg %p74
      %p154 = pneg %p103
      %p155 = pneg %p100
      %p156 = scmp.lt.s32.totalorder %s14, 1
      %s157 = scalar_select %p156, %s14, 1
      %s158 = smul.addr %s157, 32
      %s159 = smul.addr %s158, 8
      %s160 = scalar_lea.vmem %s3, %s159
      %p161 = scmp.lt.s32.totalorder %s14, 1
      %s162 = scalar_select %p161, %s14, 1
      %s163 = smul.addr %s162, 32
      %s164 = smul.addr %s163, 8
      %s165 = scalar_lea.vmem %s0, %s164
      %p166 = scmp.lt.s32.totalorder %s14, 1
      %s167 = scalar_select %p166, %s14, 1
      %s168 = smul.addr %s167, 32
      %s169 = smul.addr %s168, 8
      %s170 = scalar_lea.vmem %s3, %s169
      %v171 = vld [vmem:[%s165] sm:$0xff]
      %v172 = vld [vmem:[%s165 + $0x8] sm:$0xff]
      %v173 = vld [vmem:[%s165 + $0x10] sm:$0xff]
      %v174 = vld [vmem:[%s165 + $0x18] sm:$0xff]
      %v175 = vld [vmem:[%s165 + $0x20] sm:$0xff]
      %v176 = vld [vmem:[%s165 + $0x28] sm:$0xff]
      %v177 = vld [vmem:[%s165 + $0x30] sm:$0xff]
      %v178 = vld [vmem:[%s165 + $0x38] sm:$0xff]
      %v179 = vld [vmem:[%s165 + $0x40] sm:$0xff]
      %v180 = vld [vmem:[%s165 + $0x48] sm:$0xff]
      %v181 = vld [vmem:[%s165 + $0x50] sm:$0xff]
      %v182 = vld [vmem:[%s165 + $0x58] sm:$0xff]
      %v183 = vld [vmem:[%s165 + $0x60] sm:$0xff]
      %v184 = vld [vmem:[%s165 + $0x68] sm:$0xff]
      %v185 = vld [vmem:[%s165 + $0x70] sm:$0xff]
      %v186 = vld [vmem:[%s165 + $0x78] sm:$0xff]
      %v187 = vld [vmem:[%s165 + $0x80] sm:$0xff]
      %v188 = vld [vmem:[%s165 + $0x88] sm:$0xff]
      %v189 = vld [vmem:[%s165 + $0x90] sm:$0xff]
      %v190 = vld [vmem:[%s165 + $0x98] sm:$0xff]
      %v191 = vld [vmem:[%s165 + $0xa0] sm:$0xff]
      %v192 = vld [vmem:[%s165 + $0xa8] sm:$0xff]
      %v193 = vld [vmem:[%s165 + $0xb0] sm:$0xff]
      %v194 = vld [vmem:[%s165 + $0xb8] sm:$0xff]
      %v195 = vld [vmem:[%s165 + $0xc0] sm:$0xff]
      %v196 = vld [vmem:[%s165 + $0xc8] sm:$0xff]
      %v197 = vld [vmem:[%s165 + $0xd0] sm:$0xff]
      %v198 = vld [vmem:[%s165 + $0xd8] sm:$0xff]
      %v199 = vld [vmem:[%s165 + $0xe0] sm:$0xff]
      %v200 = vld [vmem:[%s165 + $0xe8] sm:$0xff]
      %v201 = vld [vmem:[%s165 + $0xf0] sm:$0xff]
      %v202 = vld [vmem:[%s165 + $0xf8] sm:$0xff]
      %vm203 = vcmask 130048
      %v204 = vsel %vm203, %v171, 0.0
      %v205 = vsel %vm203, %v172, 0.0
      %v206 = vadd.f32 %v204, %v205
      %v207 = vsel %vm203, %v173, 0.0
      %v208 = vadd.f32 %v206, %v207
      %v209 = vsel %vm203, %v174, 0.0
      %v210 = vadd.f32 %v208, %v209
      %v211 = vsel %vm203, %v175, 0.0
      %v212 = vadd.f32 %v210, %v211
      %v213 = vsel %vm203, %v176, 0.0
      %v214 = vadd.f32 %v212, %v213
      %v215 = vsel %vm203, %v177, 0.0
      %v216 = vadd.f32 %v214, %v215
      %v217 = vsel %vm203, %v178, 0.0
      %v218 = vadd.f32 %v216, %v217
      %v219 = vsel %vm203, %v179, 0.0
      %v220 = vadd.f32 %v218, %v219
      %v221 = vsel %vm203, %v180, 0.0
      %v222 = vadd.f32 %v220, %v221
      %v223 = vsel %vm203, %v181, 0.0
      %v224 = vadd.f32 %v222, %v223
      %v225 = vsel %vm203, %v182, 0.0
      %v226 = vadd.f32 %v224, %v225
      %v227 = vsel %vm203, %v183, 0.0
      %v228 = vadd.f32 %v226, %v227
      %v229 = vsel %vm203, %v184, 0.0
      %v230 = vadd.f32 %v228, %v229
      %v231 = vsel %vm203, %v185, 0.0
      %v232 = vadd.f32 %v230, %v231
      %v233 = vsel %vm203, %v186, 0.0
      %v234 = vadd.f32 %v232, %v233
      %v235 = vsel %vm203, %v187, 0.0
      %v236 = vadd.f32 %v234, %v235
      %v237 = vsel %vm203, %v188, 0.0
      %v238 = vadd.f32 %v236, %v237
      %v239 = vsel %vm203, %v189, 0.0
      %v240 = vadd.f32 %v238, %v239
      %v241 = vsel %vm203, %v190, 0.0
      %v242 = vadd.f32 %v240, %v241
      %v243 = vsel %vm203, %v191, 0.0
      %v244 = vadd.f32 %v242, %v243
      %v245 = vsel %vm203, %v192, 0.0
      %v246 = vadd.f32 %v244, %v245
      %v247 = vsel %vm203, %v193, 0.0
      %v248 = vadd.f32 %v246, %v247
      %v249 = vsel %vm203, %v194, 0.0
      %v250 = vadd.f32 %v248, %v249
      %v251 = vsel %vm203, %v195, 0.0
      %v252 = vadd.f32 %v250, %v251
      %v253 = vsel %vm203, %v196, 0.0
      %v254 = vadd.f32 %v252, %v253
      %v255 = vsel %vm203, %v197, 0.0
      %v256 = vadd.f32 %v254, %v255
      %v257 = vsel %vm203, %v198, 0.0
      %v258 = vadd.f32 %v256, %v257
      %v259 = vsel %vm203, %v199, 0.0
      %v260 = vadd.f32 %v258, %v259
      %v261 = vsel %vm203, %v200, 0.0
      %v262 = vadd.f32 %v260, %v261
      %v263 = vsel %vm203, %v201, 0.0
      %v264 = vadd.f32 %v262, %v263
      %v265 = vsel %vm203, %v202, 0.0
      %v266 = vadd.f32 %v264, %v265
      %v267 = vrot.slane %v266, 4
      %v268 = vadd.f32 %v266, %v267
      %v269 = vrot.slane %v268, 2
      %v270 = vadd.f32 %v268, %v269
      %v271 = vrot.slane %v270, 1
      %v272 = vadd.f32 %v270, %v271
      %v273 = vrcp.pop 256.0
      %v274 = vmul.f32 %v272, %v273
      %v275 = vsub.f32 %v171, %v274
      %v276 = vsub.f32 %v172, %v274
      %v277 = vsub.f32 %v173, %v274
      %v278 = vsub.f32 %v174, %v274
      %v279 = vsub.f32 %v175, %v274
      %v280 = vsub.f32 %v176, %v274
      %v281 = vsub.f32 %v177, %v274
      %v282 = vsub.f32 %v178, %v274
      %v283 = vsub.f32 %v179, %v274
      %v284 = vsub.f32 %v180, %v274
      %v285 = vsub.f32 %v181, %v274
      %v286 = vsub.f32 %v182, %v274
      %v287 = vsub.f32 %v183, %v274
      %v288 = vsub.f32 %v184, %v274
      %v289 = vsub.f32 %v185, %v274
      %v290 = vsub.f32 %v186, %v274
      %v291 = vsub.f32 %v187, %v274
      %v292 = vsub.f32 %v188, %v274
      %v293 = vsub.f32 %v189, %v274
      %v294 = vsub.f32 %v190, %v274
      %v295 = vsub.f32 %v191, %v274
      %v296 = vsub.f32 %v192, %v274
      %v297 = vsub.f32 %v193, %v274
      %v298 = vsub.f32 %v194, %v274
      %v299 = vsub.f32 %v195, %v274
      %v300 = vsub.f32 %v196, %v274
      %v301 = vsub.f32 %v197, %v274
      %v302 = vsub.f32 %v198, %v274
      %v303 = vsub.f32 %v199, %v274
      %v304 = vsub.f32 %v200, %v274
      %v305 = vsub.f32 %v201, %v274
      %v306 = vsub.f32 %v202, %v274
      %v307 = vmul.f32 %v275, %v275
      %v308 = vmul.f32 %v276, %v276
      %v309 = vmul.f32 %v277, %v277
      %v310 = vmul.f32 %v278, %v278
      %v311 = vmul.f32 %v279, %v279
      %v312 = vmul.f32 %v280, %v280
      %v313 = vmul.f32 %v281, %v281
      %v314 = vmul.f32 %v282, %v282
      %v315 = vmul.f32 %v283, %v283
      %v316 = vmul.f32 %v284, %v284
      %v317 = vmul.f32 %v285, %v285
      %v318 = vmul.f32 %v286, %v286
      %v319 = vmul.f32 %v287, %v287
      %v320 = vmul.f32 %v288, %v288
      %v321 = vmul.f32 %v289, %v289
      %v322 = vmul.f32 %v290, %v290
      %v323 = vmul.f32 %v291, %v291
      %v324 = vmul.f32 %v292, %v292
      %v325 = vmul.f32 %v293, %v293
      %v326 = vmul.f32 %v294, %v294
      %v327 = vmul.f32 %v295, %v295
      %v328 = vmul.f32 %v296, %v296
      %v329 = vmul.f32 %v297, %v297
      %v330 = vmul.f32 %v298, %v298
      %v331 = vmul.f32 %v299, %v299
      %v332 = vmul.f32 %v300, %v300
      %v333 = vmul.f32 %v301, %v301
      %v334 = vmul.f32 %v302, %v302
      %v335 = vmul.f32 %v303, %v303
      %v336 = vmul.f32 %v304, %v304
      %v337 = vmul.f32 %v305, %v305
      %v338 = vmul.f32 %v306, %v306
      %v339 = vsel %vm203, %v307, 0.0
      %v340 = vsel %vm203, %v308, 0.0
      %v341 = vadd.f32 %v339, %v340
      %v342 = vsel %vm203, %v309, 0.0
      %v343 = vadd.f32 %v341, %v342
      %v344 = vsel %vm203, %v310, 0.0
      %v345 = vadd.f32 %v343, %v344
      %v346 = vsel %vm203, %v311, 0.0
      %v347 = vadd.f32 %v345, %v346
      %v348 = vsel %vm203, %v312, 0.0
      %v349 = vadd.f32 %v347, %v348
      %v350 = vsel %vm203, %v313, 0.0
      %v351 = vadd.f32 %v349, %v350
      %v352 = vsel %vm203, %v314, 0.0
      %v353 = vadd.f32 %v351, %v352
      %v354 = vsel %vm203, %v315, 0.0
      %v355 = vadd.f32 %v353, %v354
      %v356 = vsel %vm203, %v316, 0.0
      %v357 = vadd.f32 %v355, %v356
      %v358 = vsel %vm203, %v317, 0.0
      %v359 = vadd.f32 %v357, %v358
      %v360 = vsel %vm203, %v318, 0.0
      %v361 = vadd.f32 %v359, %v360
      %v362 = vsel %vm203, %v319, 0.0
      %v363 = vadd.f32 %v361, %v362
      %v364 = vsel %vm203, %v320, 0.0
      %v365 = vadd.f32 %v363, %v364
      %v366 = vsel %vm203, %v321, 0.0
      %v367 = vadd.f32 %v365, %v366
      %v368 = vsel %vm203, %v322, 0.0
      %v369 = vadd.f32 %v367, %v368
      %v370 = vsel %vm203, %v323, 0.0
      %v371 = vadd.f32 %v369, %v370
      %v372 = vsel %vm203, %v324, 0.0
      %v373 = vadd.f32 %v371, %v372
      %v374 = vsel %vm203, %v325, 0.0
      %v375 = vadd.f32 %v373, %v374
      %v376 = vsel %vm203, %v326, 0.0
      %v377 = vadd.f32 %v375, %v376
      %v378 = vsel %vm203, %v327, 0.0
      %v379 = vadd.f32 %v377, %v378
      %v380 = vsel %vm203, %v328, 0.0
      %v381 = vadd.f32 %v379, %v380
      %v382 = vsel %vm203, %v329, 0.0
      %v383 = vadd.f32 %v381, %v382
      %v384 = vsel %vm203, %v330, 0.0
      %v385 = vadd.f32 %v383, %v384
      %v386 = vsel %vm203, %v331, 0.0
      %v387 = vadd.f32 %v385, %v386
      %v388 = vsel %vm203, %v332, 0.0
      %v389 = vadd.f32 %v387, %v388
      %v390 = vsel %vm203, %v333, 0.0
      %v391 = vadd.f32 %v389, %v390
      %v392 = vsel %vm203, %v334, 0.0
      %v393 = vadd.f32 %v391, %v392
      %v394 = vsel %vm203, %v335, 0.0
      %v395 = vadd.f32 %v393, %v394
      %v396 = vsel %vm203, %v336, 0.0
      %v397 = vadd.f32 %v395, %v396
      %v398 = vsel %vm203, %v337, 0.0
      %v399 = vadd.f32 %v397, %v398
      %v400 = vsel %vm203, %v338, 0.0
      %v401 = vadd.f32 %v399, %v400
      %v402 = vrot.slane %v401, 4
      %v403 = vadd.f32 %v401, %v402
      %v404 = vrot.slane %v403, 2
      %v405 = vadd.f32 %v403, %v404
      %v406 = vrot.slane %v405, 1
      %v407 = vadd.f32 %v405, %v406
      %v408 = vmul.f32 %v407, %v273
      %v409 = vadd.f32 %v408, 1e-05
      %v410 = vrsqrt.pop %v409
      %v411 = vmul.f32 %v275, %v410
      %v412 = vmul.f32 %v276, %v410
      %v413 = vmul.f32 %v277, %v410
      %v414 = vmul.f32 %v278, %v410
      %v415 = vmul.f32 %v279, %v410
      %v416 = vmul.f32 %v280, %v410
      %v417 = vmul.f32 %v281, %v410
      %v418 = vmul.f32 %v282, %v410
      %v419 = vmul.f32 %v283, %v410
      %v420 = vmul.f32 %v284, %v410
      %v421 = vmul.f32 %v285, %v410
      %v422 = vmul.f32 %v286, %v410
      %v423 = vmul.f32 %v287, %v410
      %v424 = vmul.f32 %v288, %v410
      %v425 = vmul.f32 %v289, %v410
      %v426 = vmul.f32 %v290, %v410
      %v427 = vmul.f32 %v291, %v410
      %v428 = vmul.f32 %v292, %v410
      %v429 = vmul.f32 %v293, %v410
      %v430 = vmul.f32 %v294, %v410
      %v431 = vmul.f32 %v295, %v410
      %v432 = vmul.f32 %v296, %v410
      %v433 = vmul.f32 %v297, %v410
      %v434 = vmul.f32 %v298, %v410
      %v435 = vmul.f32 %v299, %v410
      %v436 = vmul.f32 %v300, %v410
      %v437 = vmul.f32 %v301, %v410
      %v438 = vmul.f32 %v302, %v410
      %v439 = vmul.f32 %v303, %v410
      %v440 = vmul.f32 %v304, %v410
      %v441 = vmul.f32 %v305, %v410
      %v442 = vmul.f32 %v306, %v410
      %v443 = vld [vmem:[%s1] sm:$0x1]
      %v445 = vlaneseq
      %v446 = vshrl.u32 %v445, 7
      %v447 = vsub.s32 0, %v446
      %v448 = vrot.slane %v443, %v447
      %v450 = vmul.f32 %v411, %v448
      %v451 = vmul.f32 %v412, %v448
      %v452 = vmul.f32 %v413, %v448
      %v453 = vmul.f32 %v414, %v448
      %v454 = vmul.f32 %v415, %v448
      %v455 = vmul.f32 %v416, %v448
      %v456 = vmul.f32 %v417, %v448
      %v457 = vmul.f32 %v418, %v448
      %v458 = vmul.f32 %v419, %v448
      %v459 = vmul.f32 %v420, %v448
      %v460 = vmul.f32 %v421, %v448
      %v461 = vmul.f32 %v422, %v448
      %v462 = vmul.f32 %v423, %v448
      %v463 = vmul.f32 %v424, %v448
      %v464 = vmul.f32 %v425, %v448
      %v465 = vmul.f32 %v426, %v448
      %v466 = vmul.f32 %v427, %v448
      %v467 = vmul.f32 %v428, %v448
      %v468 = vmul.f32 %v429, %v448
      %v469 = vmul.f32 %v430, %v448
      %v470 = vmul.f32 %v431, %v448
      %v471 = vmul.f32 %v432, %v448
      %v472 = vmul.f32 %v433, %v448
      %v473 = vmul.f32 %v434, %v448
      %v474 = vmul.f32 %v435, %v448
      %v475 = vmul.f32 %v436, %v448
      %v476 = vmul.f32 %v437, %v448
      %v477 = vmul.f32 %v438, %v448
      %v478 = vmul.f32 %v439, %v448
      %v479 = vmul.f32 %v440, %v448
      %v480 = vmul.f32 %v441, %v448
      %v481 = vmul.f32 %v442, %v448
      %v482 = vld [vmem:[%s2] sm:$0x1]
      %v484 = vlaneseq
      %v485 = vshrl.u32 %v484, 7
      %v486 = vsub.s32 0, %v485
      %v487 = vrot.slane %v482, %v486
      %v489 = vadd.f32 %v450, %v487
      %v490 = vadd.f32 %v451, %v487
      %v491 = vadd.f32 %v452, %v487
      %v492 = vadd.f32 %v453, %v487
      %v493 = vadd.f32 %v454, %v487
      %v494 = vadd.f32 %v455, %v487
      %v495 = vadd.f32 %v456, %v487
      %v496 = vadd.f32 %v457, %v487
      %v497 = vadd.f32 %v458, %v487
      %v498 = vadd.f32 %v459, %v487
      %v499 = vadd.f32 %v460, %v487
      %v500 = vadd.f32 %v461, %v487
      %v501 = vadd.f32 %v462, %v487
      %v502 = vadd.f32 %v463, %v487
      %v503 = vadd.f32 %v464, %v487
      %v504 = vadd.f32 %v465, %v487
      %v505 = vadd.f32 %v466, %v487
      %v506 = vadd.f32 %v467, %v487
      %v507 = vadd.f32 %v468, %v487
      %v508 = vadd.f32 %v469, %v487
      %v509 = vadd.f32 %v470, %v487
      %v510 = vadd.f32 %v471, %v487
      %v511 = vadd.f32 %v472, %v487
      %v512 = vadd.f32 %v473, %v487
      %v513 = vadd.f32 %v474, %v487
      %v514 = vadd.f32 %v475, %v487
      %v515 = vadd.f32 %v476, %v487
      %v516 = vadd.f32 %v477, %v487
      %v517 = vadd.f32 %v478, %v487
      %v518 = vadd.f32 %v479, %v487
      %v519 = vadd.f32 %v480, %v487
      %v520 = vadd.f32 %v481, %v487
      %v521 = vmax.f32 %v489, 0.0
      %v522 = vmax.f32 %v490, 0.0
      %v523 = vmax.f32 %v491, 0.0
      %v524 = vmax.f32 %v492, 0.0
      %v525 = vmax.f32 %v493, 0.0
      %v526 = vmax.f32 %v494, 0.0
      %v527 = vmax.f32 %v495, 0.0
      %v528 = vmax.f32 %v496, 0.0
      %v529 = vmax.f32 %v497, 0.0
      %v530 = vmax.f32 %v498, 0.0
      %v531 = vmax.f32 %v499, 0.0
      %v532 = vmax.f32 %v500, 0.0
      %v533 = vmax.f32 %v501, 0.0
      %v534 = vmax.f32 %v502, 0.0
      %v535 = vmax.f32 %v503, 0.0
      %v536 = vmax.f32 %v504, 0.0
      %v537 = vmax.f32 %v505, 0.0
      %v538 = vmax.f32 %v506, 0.0
      %v539 = vmax.f32 %v507, 0.0
      %v540 = vmax.f32 %v508, 0.0
      %v541 = vmax.f32 %v509, 0.0
      %v542 = vmax.f32 %v510, 0.0
      %v543 = vmax.f32 %v511, 0.0
      %v544 = vmax.f32 %v512, 0.0
      %v545 = vmax.f32 %v513, 0.0
      %v546 = vmax.f32 %v514, 0.0
      %v547 = vmax.f32 %v515, 0.0
      %v548 = vmax.f32 %v516, 0.0
      %v549 = vmax.f32 %v517, 0.0
      %v550 = vmax.f32 %v518, 0.0
      %v551 = vmax.f32 %v519, 0.0
      %v552 = vmax.f32 %v520, 0.0
      %553 = vst.msk [vmem:[%s170] sm:$0xff] %vm203, %v521
      %554 = vst.msk [vmem:[%s170 + $0x8] sm:$0xff] %vm203, %v522
      %555 = vst.msk [vmem:[%s170 + $0x10] sm:$0xff] %vm203, %v523
      %556 = vst.msk [vmem:[%s170 + $0x18] sm:$0xff] %vm203, %v524
      %557 = vst.msk [vmem:[%s170 + $0x20] sm:$0xff] %vm203, %v525
      %558 = vst.msk [vmem:[%s170 + $0x28] sm:$0xff] %vm203, %v526
      %559 = vst.msk [vmem:[%s170 + $0x30] sm:$0xff] %vm203, %v527
      %560 = vst.msk [vmem:[%s170 + $0x38] sm:$0xff] %vm203, %v528
      %561 = vst.msk [vmem:[%s170 + $0x40] sm:$0xff] %vm203, %v529
      %562 = vst.msk [vmem:[%s170 + $0x48] sm:$0xff] %vm203, %v530
      %563 = vst.msk [vmem:[%s170 + $0x50] sm:$0xff] %vm203, %v531
      %564 = vst.msk [vmem:[%s170 + $0x58] sm:$0xff] %vm203, %v532
      %565 = vst.msk [vmem:[%s170 + $0x60] sm:$0xff] %vm203, %v533
      %566 = vst.msk [vmem:[%s170 + $0x68] sm:$0xff] %vm203, %v534
      %567 = vst.msk [vmem:[%s170 + $0x70] sm:$0xff] %vm203, %v535
      %568 = vst.msk [vmem:[%s170 + $0x78] sm:$0xff] %vm203, %v536
      %569 = vst.msk [vmem:[%s170 + $0x80] sm:$0xff] %vm203, %v537
      %570 = vst.msk [vmem:[%s170 + $0x88] sm:$0xff] %vm203, %v538
      %571 = vst.msk [vmem:[%s170 + $0x90] sm:$0xff] %vm203, %v539
      %572 = vst.msk [vmem:[%s170 + $0x98] sm:$0xff] %vm203, %v540
      %573 = vst.msk [vmem:[%s170 + $0xa0] sm:$0xff] %vm203, %v541
      %574 = vst.msk [vmem:[%s170 + $0xa8] sm:$0xff] %vm203, %v542
      %575 = vst.msk [vmem:[%s170 + $0xb0] sm:$0xff] %vm203, %v543
      %576 = vst.msk [vmem:[%s170 + $0xb8] sm:$0xff] %vm203, %v544
      %577 = vst.msk [vmem:[%s170 + $0xc0] sm:$0xff] %vm203, %v545
      %578 = vst.msk [vmem:[%s170 + $0xc8] sm:$0xff] %vm203, %v546
      %579 = vst.msk [vmem:[%s170 + $0xd0] sm:$0xff] %vm203, %v547
      %580 = vst.msk [vmem:[%s170 + $0xd8] sm:$0xff] %vm203, %v548
      %581 = vst.msk [vmem:[%s170 + $0xe0] sm:$0xff] %vm203, %v549
      %582 = vst.msk [vmem:[%s170 + $0xe8] sm:$0xff] %vm203, %v550
      %583 = vst.msk [vmem:[%s170 + $0xf0] sm:$0xff] %vm203, %v551
      %584 = vst.msk [vmem:[%s170 + $0xf8] sm:$0xff] %vm203, %v552
      %p585 = scmp.lt.s32.totalorder %s14, 1
      %s586 = scalar_select %p585, %s14, 1
      %s587 = smul.addr %s586, 32
      %s588 = smul.addr %s587, 8
      %s589 = scalar_lea.vmem %s3, %s588
      // Predicated region
      $region33: #{generator_forward.70} parent=31 // pred_check
        %p590 = pneg %p100
      $region34: #{generator_forward.70} parent=31 // pred_check_branch
        %592 = sbr.rel (%p590) target = $region36
      $region35: #{generator_forward.70} parent=31 // pred_region
        _
      $region36: #{generator_forward.70} parent=31 // pred_fallthru
        _
    $region32: #{generator_forward.70} parent=5 // pred_fallthru
      _
    %p593 = scmp.le.s32.totalorder 2, %s9
    // Predicated region
    $region37: #{generator_forward.70} parent=5 // pred_check
      %p594 = pneg %p593
    $region38: #{generator_forward.70} parent=5 // pred_check_branch
      %596 = sbr.rel (%p594) target = $region40
    $region39: #{generator_forward.70} parent=5 // pred_region
      %s597 = ssub.s32 %s9, 2
      // Predicated region
      $region41: #{generator_forward.70} parent=39 // pred_check
        %p598 = pneg %p106
      $region42: #{generator_forward.70} parent=39 // pred_check_branch
        %600 = sbr.rel (%p598) target = $region44
      $region43: #{generator_forward.70} parent=39 // pred_region
        %p601 = scmp.lt.s32.totalorder %s15, 1
        %s602 = scalar_select %p601, %s15, 1
        %s603 = smul.addr %s602, 32
        %s604 = smul.addr %s603, 8
        %s605 = scalar_lea.vmem %s3, %s604
      $region44: #{generator_forward.70} parent=39 // pred_fallthru
        _
    $region40: #{generator_forward.70} parent=5 // pred_fallthru
      _
  $region6: #{generator_forward.70} parent=0 // loop_footer
    %s13 = sadd.s32 1, %s9
  $region7: #{generator_forward.70} parent=0 // loop_footer_branch
    %8 = sbr.rel target = $region3
  $region8: #{generator_forward.70} parent=0 // loop_exit
    _

// kernel: generator_forward.73
$region0: #{generator_forward.73}
  #allocation0 [shape = 'u32[]', space=smem, size = 0x4, offset = 0x4, fixed_abs, tag = 'smem constant byte address 0x4 - core index']
  #allocation1 [shape = 'u32[144,128]{1,0:T(1,128)}', space=vmem, size = 0x12000, scoped, tag = 'internal scratch']
  #allocation2 [shape = 'f32[512,128]{1,0:T(8,128)}', space=vmem, size = 0x40000, scoped, tag = 'scratch operand']
  %s0 = inlined_call_operand.vmem [shape: bf16[512,896], index: 0, kind: input, shape index: {}]
  %s1 = inlined_call_operand.vmem [shape: bf16[896,128], index: 1, kind: input, shape index: {}]
  %s2 = inlined_call_operand.vmem [shape: f32[1,128], index: 2, kind: input, shape index: {}]
  %s3 = inlined_call_operand.vmem [shape: f32[512,128], index: 3, kind: output, shape index: {}]
  %s4 = sld [smem:[#allocation0]]
  $region30: #{generator_forward.73} parent=0
    _
  %s6 = ssub.s32 1, %s4
  %s7 = scalar_select 0, %s6, %s4
  // Predicated region
  $region2: #{generator_forward.73} parent=0 // pred_check
    _
  $region3: #{generator_forward.73} parent=0 // pred_check_branch
    %9 = sbr.rel (0) target = $region5
  $region4: #{generator_forward.73} parent=0 // pred_region
    _
  $region5: #{generator_forward.73} parent=0 // pred_fallthru
    _
  // Predicated region
  $region6: #{generator_forward.73} parent=0 // pred_check
    _
  $region7: #{generator_forward.73} parent=0 // pred_check_branch
    %11 = sbr.rel (0) target = $region9
  $region8: #{generator_forward.73} parent=0 // pred_region
    _
  $region9: #{generator_forward.73} parent=0 // pred_fallthru
    _
  // Predicated region
  $region10: #{generator_forward.73} parent=0 // pred_check
    _
  $region11: #{generator_forward.73} parent=0 // pred_check_branch
    %13 = sbr.rel (0) target = $region13
  $region12: #{generator_forward.73} parent=0 // pred_region
    _
  $region13: #{generator_forward.73} parent=0 // pred_fallthru
    _
  %p15 = scmp.eq.s32.totalorder 0, 0
  // Predicated region
  $region14: #{generator_forward.73} parent=0 // pred_check
    %p16 = pneg %p15
  $region15: #{generator_forward.73} parent=0 // pred_check_branch
    %18 = sbr.rel (%p16) target = $region17
  $region16: #{generator_forward.73} parent=0 // pred_region
    %19 = vst [vmem:[#allocation2] sm:$0xff] 0.0
    %20 = vst [vmem:[#allocation2 + $0x8] sm:$0xff] 0.0
    %21 = vst [vmem:[#allocation2 + $0x10] sm:$0xff] 0.0
    %22 = vst [vmem:[#allocation2 + $0x18] sm:$0xff] 0.0
    %23 = vst [vmem:[#allocation2 + $0x20] sm:$0xff] 0.0
    %24 = vst [vmem:[#allocation2 + $0x28] sm:$0xff] 0.0
    %25 = vst [vmem:[#allocation2 + $0x30] sm:$0xff] 0.0
    %26 = vst [vmem:[#allocation2 + $0x38] sm:$0xff] 0.0
    %27 = vst [vmem:[#allocation2 + $0x40] sm:$0xff] 0.0
    %28 = vst [vmem:[#allocation2 + $0x48] sm:$0xff] 0.0
    %29 = vst [vmem:[#allocation2 + $0x50] sm:$0xff] 0.0
    %30 = vst [vmem:[#allocation2 + $0x58] sm:$0xff] 0.0
    %31 = vst [vmem:[#allocation2 + $0x60] sm:$0xff] 0.0
    %32 = vst [vmem:[#allocation2 + $0x68] sm:$0xff] 0.0
    %33 = vst [vmem:[#allocation2 + $0x70] sm:$0xff] 0.0
    %34 = vst [vmem:[#allocation2 + $0x78] sm:$0xff] 0.0
    %35 = vst [vmem:[#allocation2 + $0x80] sm:$0xff] 0.0
    %36 = vst [vmem:[#allocation2 + $0x88] sm:$0xff] 0.0
    %37 = vst [vmem:[#allocation2 + $0x90] sm:$0xff] 0.0
    %38 = vst [vmem:[#allocation2 + $0x98] sm:$0xff] 0.0
    %39 = vst [vmem:[#allocation2 + $0xa0] sm:$0xff] 0.0
    %40 = vst [vmem:[#allocation2 + $0xa8] sm:$0xff] 0.0
    %41 = vst [vmem:[#allocation2 + $0xb0] sm:$0xff] 0.0
    %42 = vst [vmem:[#allocation2 + $0xb8] sm:$0xff] 0.0
    %43 = vst [vmem:[#allocation2 + $0xc0] sm:$0xff] 0.0
    %44 = vst [vmem:[#allocation2 + $0xc8] sm:$0xff] 0.0
    %45 = vst [vmem:[#allocation2 + $0xd0] sm:$0xff] 0.0
    %46 = vst [vmem:[#allocation2 + $0xd8] sm:$0xff] 0.0
    %47 = vst [vmem:[#allocation2 + $0xe0] sm:$0xff] 0.0
    %48 = vst [vmem:[#allocation2 + $0xe8] sm:$0xff] 0.0
    %49 = vst [vmem:[#allocation2 + $0xf0] sm:$0xff] 0.0
    %50 = vst [vmem:[#allocation2 + $0xf8] sm:$0xff] 0.0
    %51 = vst [vmem:[#allocation2 + $0x100] sm:$0xff] 0.0
    %52 = vst [vmem:[#allocation2 + $0x108] sm:$0xff] 0.0
    %53 = vst [vmem:[#allocation2 + $0x110] sm:$0xff] 0.0
    %54 = vst [vmem:[#allocation2 + $0x118] sm:$0xff] 0.0
    %55 = vst [vmem:[#allocation2 + $0x120] sm:$0xff] 0.0
    %56 = vst [vmem:[#allocation2 + $0x128] sm:$0xff] 0.0
    %57 = vst [vmem:[#allocation2 + $0x130] sm:$0xff] 0.0
    %58 = vst [vmem:[#allocation2 + $0x138] sm:$0xff] 0.0
    %59 = vst [vmem:[#allocation2 + $0x140] sm:$0xff] 0.0
    %60 = vst [vmem:[#allocation2 + $0x148] sm:$0xff] 0.0
    %61 = vst [vmem:[#allocation2 + $0x150] sm:$0xff] 0.0
    %62 = vst [vmem:[#allocation2 + $0x158] sm:$0xff] 0.0
    %63 = vst [vmem:[#allocation2 + $0x160] sm:$0xff] 0.0
    %64 = vst [vmem:[#allocation2 + $0x168] sm:$0xff] 0.0
    %65 = vst [vmem:[#allocation2 + $0x170] sm:$0xff] 0.0
    %66 = vst [vmem:[#allocation2 + $0x178] sm:$0xff] 0.0
    %67 = vst [vmem:[#allocation2 + $0x180] sm:$0xff] 0.0
    %68 = vst [vmem:[#allocation2 + $0x188] sm:$0xff] 0.0
    %69 = vst [vmem:[#allocation2 + $0x190] sm:$0xff] 0.0
    %70 = vst [vmem:[#allocation2 + $0x198] sm:$0xff] 0.0
    %71 = vst [vmem:[#allocation2 + $0x1a0] sm:$0xff] 0.0
    %72 = vst [vmem:[#allocation2 + $0x1a8] sm:$0xff] 0.0
    %73 = vst [vmem:[#allocation2 + $0x1b0] sm:$0xff] 0.0
    %74 = vst [vmem:[#allocation2 + $0x1b8] sm:$0xff] 0.0
    %75 = vst [vmem:[#allocation2 + $0x1c0] sm:$0xff] 0.0
    %76 = vst [vmem:[#allocation2 + $0x1c8] sm:$0xff] 0.0
    %77 = vst [vmem:[#allocation2 + $0x1d0] sm:$0xff] 0.0
    %78 = vst [vmem:[#allocation2 + $0x1d8] sm:$0xff] 0.0
    %79 = vst [vmem:[#allocation2 + $0x1e0] sm:$0xff] 0.0
    %80 = vst [vmem:[#allocation2 + $0x1e8] sm:$0xff] 0.0
    %81 = vst [vmem:[#allocation2 + $0x1f0] sm:$0xff] 0.0
    %82 = vst [vmem:[#allocation2 + $0x1f8] sm:$0xff] 0.0
  $region17: #{generator_forward.73} parent=0 // pred_fallthru
    _
  %v83 = vld [vmem:[#allocation2] sm:$0xff]
  %v84 = vld [vmem:[#allocation2 + $0x8] sm:$0xff]
  %v85 = vld [vmem:[#allocation2 + $0x10] sm:$0xff]
  %v86 = vld [vmem:[#allocation2 + $0x18] sm:$0xff]
  %v87 = vld [vmem:[#allocation2 + $0x20] sm:$0xff]
  %v88 = vld [vmem:[#allocation2 + $0x28] sm:$0xff]
  %v89 = vld [vmem:[#allocation2 + $0x30] sm:$0xff]
  %v90 = vld [vmem:[#allocation2 + $0x38] sm:$0xff]
  %v91 = vld [vmem:[#allocation2 + $0x40] sm:$0xff]
  %v92 = vld [vmem:[#allocation2 + $0x48] sm:$0xff]
  %v93 = vld [vmem:[#allocation2 + $0x50] sm:$0xff]
  %v94 = vld [vmem:[#allocation2 + $0x58] sm:$0xff]
  %v95 = vld [vmem:[#allocation2 + $0x60] sm:$0xff]
  %v96 = vld [vmem:[#allocation2 + $0x68] sm:$0xff]
  %v97 = vld [vmem:[#allocation2 + $0x70] sm:$0xff]
  %v98 = vld [vmem:[#allocation2 + $0x78] sm:$0xff]
  %v99 = vld [vmem:[#allocation2 + $0x80] sm:$0xff]
  %v100 = vld [vmem:[#allocation2 + $0x88] sm:$0xff]
  %v101 = vld [vmem:[#allocation2 + $0x90] sm:$0xff]
  %v102 = vld [vmem:[#allocation2 + $0x98] sm:$0xff]
  %v103 = vld [vmem:[#allocation2 + $0xa0] sm:$0xff]
  %v104 = vld [vmem:[#allocation2 + $0xa8] sm:$0xff]
  %v105 = vld [vmem:[#allocation2 + $0xb0] sm:$0xff]
  %v106 = vld [vmem:[#allocation2 + $0xb8] sm:$0xff]
  %v107 = vld [vmem:[#allocation2 + $0xc0] sm:$0xff]
  %v108 = vld [vmem:[#allocation2 + $0xc8] sm:$0xff]
  %v109 = vld [vmem:[#allocation2 + $0xd0] sm:$0xff]
  %v110 = vld [vmem:[#allocation2 + $0xd8] sm:$0xff]
  %v111 = vld [vmem:[#allocation2 + $0xe0] sm:$0xff]
  %v112 = vld [vmem:[#allocation2 + $0xe8] sm:$0xff]
  %v113 = vld [vmem:[#allocation2 + $0xf0] sm:$0xff]
  %v114 = vld [vmem:[#allocation2 + $0xf8] sm:$0xff]
  %v115 = vld [vmem:[#allocation2 + $0x100] sm:$0xff]
  %v116 = vld [vmem:[#allocation2 + $0x108] sm:$0xff]
  %v117 = vld [vmem:[#allocation2 + $0x110] sm:$0xff]
  %v118 = vld [vmem:[#allocation2 + $0x118] sm:$0xff]
  %v119 = vld [vmem:[#allocation2 + $0x120] sm:$0xff]
  %v120 = vld [vmem:[#allocation2 + $0x128] sm:$0xff]
  %v121 = vld [vmem:[#allocation2 + $0x130] sm:$0xff]
  %v122 = vld [vmem:[#allocation2 + $0x138] sm:$0xff]
  %v123 = vld [vmem:[#allocation2 + $0x140] sm:$0xff]
  %v124 = vld [vmem:[#allocation2 + $0x148] sm:$0xff]
  %v125 = vld [vmem:[#allocation2 + $0x150] sm:$0xff]
  %v126 = vld [vmem:[#allocation2 + $0x158] sm:$0xff]
  %v127 = vld [vmem:[#allocation2 + $0x160] sm:$0xff]
  %v128 = vld [vmem:[#allocation2 + $0x168] sm:$0xff]
  %v129 = vld [vmem:[#allocation2 + $0x170] sm:$0xff]
  %v130 = vld [vmem:[#allocation2 + $0x178] sm:$0xff]
  %v131 = vld [vmem:[#allocation2 + $0x180] sm:$0xff]
  %v132 = vld [vmem:[#allocation2 + $0x188] sm:$0xff]
  %v133 = vld [vmem:[#allocation2 + $0x190] sm:$0xff]
  %v134 = vld [vmem:[#allocation2 + $0x198] sm:$0xff]
  %v135 = vld [vmem:[#allocation2 + $0x1a0] sm:$0xff]
  %v136 = vld [vmem:[#allocation2 + $0x1a8] sm:$0xff]
  %v137 = vld [vmem:[#allocation2 + $0x1b0] sm:$0xff]
  %v138 = vld [vmem:[#allocation2 + $0x1b8] sm:$0xff]
  %v139 = vld [vmem:[#allocation2 + $0x1c0] sm:$0xff]
  %v140 = vld [vmem:[#allocation2 + $0x1c8] sm:$0xff]
  %v141 = vld [vmem:[#allocation2 + $0x1d0] sm:$0xff]
  %v142 = vld [vmem:[#allocation2 + $0x1d8] sm:$0xff]
  %v143 = vld [vmem:[#allocation2 + $0x1e0] sm:$0xff]
  %v144 = vld [vmem:[#allocation2 + $0x1e8] sm:$0xff]
  %v145 = vld [vmem:[#allocation2 + $0x1f0] sm:$0xff]
  %v146 = vld [vmem:[#allocation2 + $0x1f8] sm:$0xff]
  %v147 = vld [vmem:[%s0] sm:$0xff]
  %v148 = vld [vmem:[%s0 + $0x8] sm:$0xff]
  %v149 = vld [vmem:[%s0 + $0x10] sm:$0xff]
  %v150 = vld [vmem:[%s0 + $0x18] sm:$0xf]
  %v151 = vld [vmem:[%s0 + $0x1c] sm:$0xff]
  %v152 = vld [vmem:[%s0 + $0x24] sm:$0xff]
  %v153 = vld [vmem:[%s0 + $0x2c] sm:$0xff]
  %v154 = vld [vmem:[%s0 + $0x34] sm:$0xf]
  %v155 = vld [vmem:[%s0 + $0x38] sm:$0xff]
  %v156 = vld [vmem:[%s0 + $0x40] sm:$0xff]
  %v157 = vld [vmem:[%s0 + $0x48] sm:$0xff]
  %v158 = vld [vmem:[%s0 + $0x50] sm:$0xf]
  %v159 = vld [vmem:[%s0 + $0x54] sm:$0xff]
  %v160 = vld [vmem:[%s0 + $0x5c] sm:$0xff]
  %v161 = vld [vmem:[%s0 + $0x64] sm:$0xff]
  %v162 = vld [vmem:[%s0 + $0x6c] sm:$0xf]
  %v163 = vld [vmem:[%s0 + $0x70] sm:$0xff]
  %v164 = vld [vmem:[%s0 + $0x78] sm:$0xff]
  %v165 = vld [vmem:[%s0 + $0x80] sm:$0xff]
  %v166 = vld [vmem:[%s0 + $0x88] sm:$0xf]
  %v167 = vld [vmem:[%s0 + $0x8c] sm:$0xff]
  %v168 = vld [vmem:[%s0 + $0x94] sm:$0xff]
  %v169 = vld [vmem:[%s0 + $0x9c] sm:$0xff]
  %v170 = vld [vmem:[%s0 + $0xa4] sm:$0xf]
  %v171 = vld [vmem:[%s0 + $0xa8] sm:$0xff]
  %v172 = vld [vmem:[%s0 + $0xb0] sm:$0xff]
  %v173 = vld [vmem:[%s0 + $0xb8] sm:$0xff]
  %v174 = vld [vmem:[%s0 + $0xc0] sm:$0xf]
  %v175 = vld [vmem:[%s0 + $0xc4] sm:$0xff]
  %v176 = vld [vmem:[%s0 + $0xcc] sm:$0xff]
  %v177 = vld [vmem:[%s0 + $0xd4] sm:$0xff]
  %v178 = vld [vmem:[%s0 + $0xdc] sm:$0xf]
  %v179 = vld [vmem:[%s0 + $0xe0] sm:$0xff]
  %v180 = vld [vmem:[%s0 + $0xe8] sm:$0xff]
  %v181 = vld [vmem:[%s0 + $0xf0] sm:$0xff]
  %v182 = vld [vmem:[%s0 + $0xf8] sm:$0xf]
  %v183 = vld [vmem:[%s0 + $0xfc] sm:$0xff]
  %v184 = vld [vmem:[%s0 + $0x104] sm:$0xff]
  %v185 = vld [vmem:[%s0 + $0x10c] sm:$0xff]
  %v186 = vld [vmem:[%s0 + $0x114] sm:$0xf]
  %v187 = vld [vmem:[%s0 + $0x118] sm:$0xff]
  %v188 = vld [vmem:[%s0 + $0x120] sm:$0xff]
  %v189 = vld [vmem:[%s0 + $0x128] sm:$0xff]
  %v190 = vld [vmem:[%s0 + $0x130] sm:$0xf]
  %v191 = vld [vmem:[%s0 + $0x134] sm:$0xff]
  %v192 = vld [vmem:[%s0 + $0x13c] sm:$0xff]
  %v193 = vld [vmem:[%s0 + $0x144] sm:$0xff]
  %v194 = vld [vmem:[%s0 + $0x14c] sm:$0xf]
  %v195 = vld [vmem:[%s0 + $0x150] sm:$0xff]
  %v196 = vld [vmem:[%s0 + $0x158] sm:$0xff]
  %v197 = vld [vmem:[%s0 + $0x160] sm:$0xff]
  %v198 = vld [vmem:[%s0 + $0x168] sm:$0xf]
  %v199 = vld [vmem:[%s0 + $0x16c] sm:$0xff]
  %v200 = vld [vmem:[%s0 + $0x174] sm:$0xff]
  %v201 = vld [vmem:[%s0 + $0x17c] sm:$0xff]
  %v202 = vld [vmem:[%s0 + $0x184] sm:$0xf]
  %v203 = vld [vmem:[%s0 + $0x188] sm:$0xff]
  %v204 = vld [vmem:[%s0 + $0x190] sm:$0xff]
  %v205 = vld [vmem:[%s0 + $0x198] sm:$0xff]
  %v206 = vld [vmem:[%s0 + $0x1a0] sm:$0xf]
  %v207 = vld [vmem:[%s0 + $0x1a4] sm:$0xff]
  %v208 = vld [vmem:[%s0 + $0x1ac] sm:$0xff]
  %v209 = vld [vmem:[%s0 + $0x1b4] sm:$0xff]
  %v210 = vld [vmem:[%s0 + $0x1bc] sm:$0xf]
  %v211 = vld [vmem:[%s0 + $0x1c0] sm:$0xff]
  %v212 = vld [vmem:[%s0 + $0x1c8] sm:$0xff]
  %v213 = vld [vmem:[%s0 + $0x1d0] sm:$0xff]
  %v214 = vld [vmem:[%s0 + $0x1d8] sm:$0xf]
  %v215 = vld [vmem:[%s0 + $0x1dc] sm:$0xff]
  %v216 = vld [vmem:[%s0 + $0x1e4] sm:$0xff]
  %v217 = vld [vmem:[%s0 + $0x1ec] sm:$0xff]
  %v218 = vld [vmem:[%s0 + $0x1f4] sm:$0xf]
  %v219 = vld [vmem:[%s0 + $0x1f8] sm:$0xff]
  %v220 = vld [vmem:[%s0 + $0x200] sm:$0xff]
  %v221 = vld [vmem:[%s0 + $0x208] sm:$0xff]
  %v222 = vld [vmem:[%s0 + $0x210] sm:$0xf]
  %v223 = vld [vmem:[%s0 + $0x214] sm:$0xff]
  %v224 = vld [vmem:[%s0 + $0x21c] sm:$0xff]
  %v225 = vld [vmem:[%s0 + $0x224] sm:$0xff]
  %v226 = vld [vmem:[%s0 + $0x22c] sm:$0xf]
  %v227 = vld [vmem:[%s0 + $0x230] sm:$0xff]
  %v228 = vld [vmem:[%s0 + $0x238] sm:$0xff]
  %v229 = vld [vmem:[%s0 + $0x240] sm:$0xff]
  %v230 = vld [vmem:[%s0 + $0x248] sm:$0xf]
  %v231 = vld [vmem:[%s0 + $0x24c] sm:$0xff]
  %v232 = vld [vmem:[%s0 + $0x254] sm:$0xff]
  %v233 = vld [vmem:[%s0 + $0x25c] sm:$0xff]
  %v234 = vld [vmem:[%s0 + $0x264] sm:$0xf]
  %v235 = vld [vmem:[%s0 + $0x268] sm:$0xff]
  %v236 = vld [vmem:[%s0 + $0x270] sm:$0xff]
  %v237 = vld [vmem:[%s0 + $0x278] sm:$0xff]
  %v238 = vld [vmem:[%s0 + $0x280] sm:$0xf]
  %v239 = vld [vmem:[%s0 + $0x284] sm:$0xff]
  %v240 = vld [vmem:[%s0 + $0x28c] sm:$0xff]
  %v241 = vld [vmem:[%s0 + $0x294] sm:$0xff]
  %v242 = vld [vmem:[%s0 + $0x29c] sm:$0xf]
  %v243 = vld [vmem:[%s0 + $0x2a0] sm:$0xff]
  %v244 = vld [vmem:[%s0 + $0x2a8] sm:$0xff]
  %v245 = vld [vmem:[%s0 + $0x2b0] sm:$0xff]
  %v246 = vld [vmem:[%s0 + $0x2b8] sm:$0xf]
  %v247 = vld [vmem:[%s0 + $0x2bc] sm:$0xff]
  %v248 = vld [vmem:[%s0 + $0x2c4] sm:$0xff]
  %v249 = vld [vmem:[%s0 + $0x2cc] sm:$0xff]
  %v250 = vld [vmem:[%s0 + $0x2d4] sm:$0xf]
  %v251 = vld [vmem:[%s0 + $0x2d8] sm:$0xff]
  %v252 = vld [vmem:[%s0 + $0x2e0] sm:$0xff]
  %v253 = vld [vmem:[%s0 + $0x2e8] sm:$0xff]
  %v254 = vld [vmem:[%s0 + $0x2f0] sm:$0xf]
  %v255 = vld [vmem:[%s0 + $0x2f4] sm:$0xff]
  %v256 = vld [vmem:[%s0 + $0x2fc] sm:$0xff]
  %v257 = vld [vmem:[%s0 + $0x304] sm:$0xff]
  %v258 = vld [vmem:[%s0 + $0x30c] sm:$0xf]
  %v259 = vld [vmem:[%s0 + $0x310] sm:$0xff]
  %v260 = vld [vmem:[%s0 + $0x318] sm:$0xff]
  %v261 = vld [vmem:[%s0 + $0x320] sm:$0xff]
  %v262 = vld [vmem:[%s0 + $0x328] sm:$0xf]
  %v263 = vld [vmem:[%s0 + $0x32c] sm:$0xff]
  %v264 = vld [vmem:[%s0 + $0x334] sm:$0xff]
  %v265 = vld [vmem:[%s0 + $0x33c] sm:$0xff]
  %v266 = vld [vmem:[%s0 + $0x344] sm:$0xf]
  %v267 = vld [vmem:[%s0 + $0x348] sm:$0xff]
  %v268 = vld [vmem:[%s0 + $0x350] sm:$0xff]
  %v269 = vld [vmem:[%s0 + $0x358] sm:$0xff]
  %v270 = vld [vmem:[%s0 + $0x360] sm:$0xf]
  %v271 = vld [vmem:[%s0 + $0x364] sm:$0xff]
  %v272 = vld [vmem:[%s0 + $0x36c] sm:$0xff]
  %v273 = vld [vmem:[%s0 + $0x374] sm:$0xff]
  %v274 = vld [vmem:[%s0 + $0x37c] sm:$0xf]
  %v275 = vld [vmem:[%s0 + $0x380] sm:$0xff]
  %v276 = vld [vmem:[%s0 + $0x388] sm:$0xff]
  %v277 = vld [vmem:[%s0 + $0x390] sm:$0xff]
  %v278 = vld [vmem:[%s0 + $0x398] sm:$0xf]
  %v279 = vld [vmem:[%s0 + $0x39c] sm:$0xff]
  %v280 = vld [vmem:[%s0 + $0x3a4] sm:$0xff]
  %v281 = vld [vmem:[%s0 + $0x3ac] sm:$0xff]
  %v282 = vld [vmem:[%s0 + $0x3b4] sm:$0xf]
  %v283 = vld [vmem:[%s0 + $0x3b8] sm:$0xff]
  %v284 = vld [vmem:[%s0 + $0x3c0] sm:$0xff]
  %v285 = vld [vmem:[%s0 + $0x3c8] sm:$0xff]
  %v286 = vld [vmem:[%s0 + $0x3d0] sm:$0xf]
  %v287 = vld [vmem:[%s0 + $0x3d4] sm:$0xff]
  %v288 = vld [vmem:[%s0 + $0x3dc] sm:$0xff]
  %v289 = vld [vmem:[%s0 + $0x3e4] sm:$0xff]
  %v290 = vld [vmem:[%s0 + $0x3ec] sm:$0xf]
  %v291 = vld [vmem:[%s0 + $0x3f0] sm:$0xff]
  %v292 = vld [vmem:[%s0 + $0x3f8] sm:$0xff]
  %v293 = vld [vmem:[%s0 + $0x400] sm:$0xff]
  %v294 = vld [vmem:[%s0 + $0x408] sm:$0xf]
  %v295 = vld [vmem:[%s0 + $0x40c] sm:$0xff]
  %v296 = vld [vmem:[%s0 + $0x414] sm:$0xff]
  %v297 = vld [vmem:[%s0 + $0x41c] sm:$0xff]
  %v298 = vld [vmem:[%s0 + $0x424] sm:$0xf]
  %v299 = vld [vmem:[%s0 + $0x428] sm:$0xff]
  %v300 = vld [vmem:[%s0 + $0x430] sm:$0xff]
  %v301 = vld [vmem:[%s0 + $0x438] sm:$0xff]
  %v302 = vld [vmem:[%s0 + $0x440] sm:$0xf]
  %v303 = vld [vmem:[%s0 + $0x444] sm:$0xff]
  %v304 = vld [vmem:[%s0 + $0x44c] sm:$0xff]
  %v305 = vld [vmem:[%s0 + $0x454] sm:$0xff]
  %v306 = vld [vmem:[%s0 + $0x45c] sm:$0xf]
  %v307 = vld [vmem:[%s0 + $0x460] sm:$0xff]
  %v308 = vld [vmem:[%s0 + $0x468] sm:$0xff]
  %v309 = vld [vmem:[%s0 + $0x470] sm:$0xff]
  %v310 = vld [vmem:[%s0 + $0x478] sm:$0xf]
  %v311 = vld [vmem:[%s0 + $0x47c] sm:$0xff]
  %v312 = vld [vmem:[%s0 + $0x484] sm:$0xff]
  %v313 = vld [vmem:[%s0 + $0x48c] sm:$0xff]
  %v314 = vld [vmem:[%s0 + $0x494] sm:$0xf]
  %v315 = vld [vmem:[%s0 + $0x498] sm:$0xff]
  %v316 = vld [vmem:[%s0 + $0x4a0] sm:$0xff]
  %v317 = vld [vmem:[%s0 + $0x4a8] sm:$0xff]
  %v318 = vld [vmem:[%s0 + $0x4b0] sm:$0xf]
  %v319 = vld [vmem:[%s0 + $0x4b4] sm:$0xff]
  %v320 = vld [vmem:[%s0 + $0x4bc] sm:$0xff]
  %v321 = vld [vmem:[%s0 + $0x4c4] sm:$0xff]
  %v322 = vld [vmem:[%s0 + $0x4cc] sm:$0xf]
  %v323 = vld [vmem:[%s0 + $0x4d0] sm:$0xff]
  %v324 = vld [vmem:[%s0 + $0x4d8] sm:$0xff]
  %v325 = vld [vmem:[%s0 + $0x4e0] sm:$0xff]
  %v326 = vld [vmem:[%s0 + $0x4e8] sm:$0xf]
  %v327 = vld [vmem:[%s0 + $0x4ec] sm:$0xff]
  %v328 = vld [vmem:[%s0 + $0x4f4] sm:$0xff]
  %v329 = vld [vmem:[%s0 + $0x4fc] sm:$0xff]
  %v330 = vld [vmem:[%s0 + $0x504] sm:$0xf]
  %v331 = vld [vmem:[%s0 + $0x508] sm:$0xff]
  %v332 = vld [vmem:[%s0 + $0x510] sm:$0xff]
  %v333 = vld [vmem:[%s0 + $0x518] sm:$0xff]
  %v334 = vld [vmem:[%s0 + $0x520] sm:$0xf]
  %v335 = vld [vmem:[%s0 + $0x524] sm:$0xff]
  %v336 = vld [vmem:[%s0 + $0x52c] sm:$0xff]
  %v337 = vld [vmem:[%s0 + $0x534] sm:$0xff]
  %v338 = vld [vmem:[%s0 + $0x53c] sm:$0xf]
  %v339 = vld [vmem:[%s0 + $0x540] sm:$0xff]
  %v340 = vld [vmem:[%s0 + $0x548] sm:$0xff]
  %v341 = vld [vmem:[%s0 + $0x550] sm:$0xff]
  %v342 = vld [vmem:[%s0 + $0x558] sm:$0xf]
  %v343 = vld [vmem:[%s0 + $0x55c] sm:$0xff]
  %v344 = vld [vmem:[%s0 + $0x564] sm:$0xff]
  %v345 = vld [vmem:[%s0 + $0x56c] sm:$0xff]
  %v346 = vld [vmem:[%s0 + $0x574] sm:$0xf]
  %v347 = vld [vmem:[%s0 + $0x578] sm:$0xff]
  %v348 = vld [vmem:[%s0 + $0x580] sm:$0xff]
  %v349 = vld [vmem:[%s0 + $0x588] sm:$0xff]
  %v350 = vld [vmem:[%s0 + $0x590] sm:$0xf]
  %v351 = vld [vmem:[%s0 + $0x594] sm:$0xff]
  %v352 = vld [vmem:[%s0 + $0x59c] sm:$0xff]
  %v353 = vld [vmem:[%s0 + $0x5a4] sm:$0xff]
  %v354 = vld [vmem:[%s0 + $0x5ac] sm:$0xf]
  %v355 = vld [vmem:[%s0 + $0x5b0] sm:$0xff]
  %v356 = vld [vmem:[%s0 + $0x5b8] sm:$0xff]
  %v357 = vld [vmem:[%s0 + $0x5c0] sm:$0xff]
  %v358 = vld [vmem:[%s0 + $0x5c8] sm:$0xf]
  %v359 = vld [vmem:[%s0 + $0x5cc] sm:$0xff]
  %v360 = vld [vmem:[%s0 + $0x5d4] sm:$0xff]
  %v361 = vld [vmem:[%s0 + $0x5dc] sm:$0xff]
  %v362 = vld [vmem:[%s0 + $0x5e4] sm:$0xf]
  %v363 = vld [vmem:[%s0 + $0x5e8] sm:$0xff]
  %v364 = vld [vmem:[%s0 + $0x5f0] sm:$0xff]
  %v365 = vld [vmem:[%s0 + $0x5f8] sm:$0xff]
  %v366 = vld [vmem:[%s0 + $0x600] sm:$0xf]
  %v367 = vld [vmem:[%s0 + $0x604] sm:$0xff]
  %v368 = vld [vmem:[%s0 + $0x60c] sm:$0xff]
  %v369 = vld [vmem:[%s0 + $0x614] sm:$0xff]
  %v370 = vld [vmem:[%s0 + $0x61c] sm:$0xf]
  %v371 = vld [vmem:[%s0 + $0x620] sm:$0xff]
  %v372 = vld [vmem:[%s0 + $0x628] sm:$0xff]
  %v373 = vld [vmem:[%s0 + $0x630] sm:$0xff]
  %v374 = vld [vmem:[%s0 + $0x638] sm:$0xf]
  %v375 = vld [vmem:[%s0 + $0x63c] sm:$0xff]
  %v376 = vld [vmem:[%s0 + $0x644] sm:$0xff]
  %v377 = vld [vmem:[%s0 + $0x64c] sm:$0xff]
  %v378 = vld [vmem:[%s0 + $0x654] sm:$0xf]
  %v379 = vld [vmem:[%s0 + $0x658] sm:$0xff]
  %v380 = vld [vmem:[%s0 + $0x660] sm:$0xff]
  %v381 = vld [vmem:[%s0 + $0x668] sm:$0xff]
  %v382 = vld [vmem:[%s0 + $0x670] sm:$0xf]
  %v383 = vld [vmem:[%s0 + $0x674] sm:$0xff]
  %v384 = vld [vmem:[%s0 + $0x67c] sm:$0xff]
  %v385 = vld [vmem:[%s0 + $0x684] sm:$0xff]
  %v386 = vld [vmem:[%s0 + $0x68c] sm:$0xf]
  %v387 = vld [vmem:[%s0 + $0x690] sm:$0xff]
  %v388 = vld [vmem:[%s0 + $0x698] sm:$0xff]
  %v389 = vld [vmem:[%s0 + $0x6a0] sm:$0xff]
  %v390 = vld [vmem:[%s0 + $0x6a8] sm:$0xf]
  %v391 = vld [vmem:[%s0 + $0x6ac] sm:$0xff]
  %v392 = vld [vmem:[%s0 + $0x6b4] sm:$0xff]
  %v393 = vld [vmem:[%s0 + $0x6bc] sm:$0xff]
  %v394 = vld [vmem:[%s0 + $0x6c4] sm:$0xf]
  %v395 = vld [vmem:[%s0 + $0x6c8] sm:$0xff]
  %v396 = vld [vmem:[%s0 + $0x6d0] sm:$0xff]
  %v397 = vld [vmem:[%s0 + $0x6d8] sm:$0xff]
  %v398 = vld [vmem:[%s0 + $0x6e0] sm:$0xf]
  %v399 = vld [vmem:[%s0 + $0x6e4] sm:$0xff]
  %v400 = vld [vmem:[%s0 + $0x6ec] sm:$0xff]
  %v401 = vld [vmem:[%s0 + $0x6f4] sm:$0xff]
  %v402 = vld [vmem:[%s0 + $0x6fc] sm:$0xf]
  %v403 = vld [vmem:[%s1] sm:$0xf]
  %v404 = vld [vmem:[%s1 + $0x4] sm:$0xf]
  %v405 = vld [vmem:[%s1 + $0x8] sm:$0xf]
  %v406 = vld [vmem:[%s1 + $0xc] sm:$0xf]
  %v407 = vld [vmem:[%s1 + $0x10] sm:$0xf]
  %v408 = vld [vmem:[%s1 + $0x14] sm:$0xf]
  %v409 = vld [vmem:[%s1 + $0x18] sm:$0xf]
  %v410 = vld [vmem:[%s1 + $0x1c] sm:$0xf]
  %v411 = vld [vmem:[%s1 + $0x20] sm:$0xf]
  %v412 = vld [vmem:[%s1 + $0x24] sm:$0xf]
  %v413 = vld [vmem:[%s1 + $0x28] sm:$0xf]
  %v414 = vld [vmem:[%s1 + $0x2c] sm:$0xf]
  %v415 = vld [vmem:[%s1 + $0x30] sm:$0xf]
  %v416 = vld [vmem:[%s1 + $0x34] sm:$0xf]
  %v417 = vld [vmem:[%s1 + $0x38] sm:$0xf]
  %v418 = vld [vmem:[%s1 + $0x3c] sm:$0xf]
  %v419 = vld [vmem:[%s1 + $0x40] sm:$0xf]
  %v420 = vld [vmem:[%s1 + $0x44] sm:$0xf]
  %v421 = vld [vmem:[%s1 + $0x48] sm:$0xf]
  %v422 = vld [vmem:[%s1 + $0x4c] sm:$0xf]
  %v423 = vld [vmem:[%s1 + $0x50] sm:$0xf]
  %v424 = vld [vmem:[%s1 + $0x54] sm:$0xf]
  %v425 = vld [vmem:[%s1 + $0x58] sm:$0xf]
  %v426 = vld [vmem:[%s1 + $0x5c] sm:$0xf]
  %v427 = vld [vmem:[%s1 + $0x60] sm:$0xf]
  %v428 = vld [vmem:[%s1 + $0x64] sm:$0xf]
  %v429 = vld [vmem:[%s1 + $0x68] sm:$0xf]
  %v430 = vld [vmem:[%s1 + $0x6c] sm:$0xf]
  %v431 = vld [vmem:[%s1 + $0x70] sm:$0xf]
  %v432 = vld [vmem:[%s1 + $0x74] sm:$0xf]
  %v433 = vld [vmem:[%s1 + $0x78] sm:$0xf]
  %v434 = vld [vmem:[%s1 + $0x7c] sm:$0xf]
  %v435 = vld [vmem:[%s1 + $0x80] sm:$0xf]
  %v436 = vld [vmem:[%s1 + $0x84] sm:$0xf]
  %v437 = vld [vmem:[%s1 + $0x88] sm:$0xf]
  %v438 = vld [vmem:[%s1 + $0x8c] sm:$0xf]
  %v439 = vld [vmem:[%s1 + $0x90] sm:$0xf]
  %v440 = vld [vmem:[%s1 + $0x94] sm:$0xf]
  %v441 = vld [vmem:[%s1 + $0x98] sm:$0xf]
  %v442 = vld [vmem:[%s1 + $0x9c] sm:$0xf]
  %v443 = vld [vmem:[%s1 + $0xa0] sm:$0xf]
  %v444 = vld [vmem:[%s1 + $0xa4] sm:$0xf]
  %v445 = vld [vmem:[%s1 + $0xa8] sm:$0xf]
  %v446 = vld [vmem:[%s1 + $0xac] sm:$0xf]
  %v447 = vld [vmem:[%s1 + $0xb0] sm:$0xf]
  %v448 = vld [vmem:[%s1 + $0xb4] sm:$0xf]
  %v449 = vld [vmem:[%s1 + $0xb8] sm:$0xf]
  %v450 = vld [vmem:[%s1 + $0xbc] sm:$0xf]
  %v451 = vld [vmem:[%s1 + $0xc0] sm:$0xf]
  %v452 = vld [vmem:[%s1 + $0xc4] sm:$0xf]
  %v453 = vld [vmem:[%s1 + $0xc8] sm:$0xf]
  %v454 = vld [vmem:[%s1 + $0xcc] sm:$0xf]
  %v455 = vld [vmem:[%s1 + $0xd0] sm:$0xf]
  %v456 = vld [vmem:[%s1 + $0xd4] sm:$0xf]
  %v457 = vld [vmem:[%s1 + $0xd8] sm:$0xf]
  %v458 = vld [vmem:[%s1 + $0xdc] sm:$0xf]
  %v459 = vld [vmem:[%s1 + $0xe0] sm:$0xf]
  %v460 = vld [vmem:[%s1 + $0xe4] sm:$0xf]
  %v461 = vld [vmem:[%s1 + $0xe8] sm:$0xf]
  %v462 = vld [vmem:[%s1 + $0xec] sm:$0xf]
  %v463 = vld [vmem:[%s1 + $0xf0] sm:$0xf]
  %v464 = vld [vmem:[%s1 + $0xf4] sm:$0xf]
  %v465 = vld [vmem:[%s1 + $0xf8] sm:$0xf]
  %v466 = vld [vmem:[%s1 + $0xfc] sm:$0xf]
  %v467 = vld [vmem:[%s1 + $0x100] sm:$0xf]
  %v468 = vld [vmem:[%s1 + $0x104] sm:$0xf]
  %v469 = vld [vmem:[%s1 + $0x108] sm:$0xf]
  %v470 = vld [vmem:[%s1 + $0x10c] sm:$0xf]
  %v471 = vld [vmem:[%s1 + $0x110] sm:$0xf]
  %v472 = vld [vmem:[%s1 + $0x114] sm:$0xf]
  %v473 = vld [vmem:[%s1 + $0x118] sm:$0xf]
  %v474 = vld [vmem:[%s1 + $0x11c] sm:$0xf]
  %v475 = vld [vmem:[%s1 + $0x120] sm:$0xf]
  %v476 = vld [vmem:[%s1 + $0x124] sm:$0xf]
  %v477 = vld [vmem:[%s1 + $0x128] sm:$0xf]
  %v478 = vld [vmem:[%s1 + $0x12c] sm:$0xf]
  %v479 = vld [vmem:[%s1 + $0x130] sm:$0xf]
  %v480 = vld [vmem:[%s1 + $0x134] sm:$0xf]
  %v481 = vld [vmem:[%s1 + $0x138] sm:$0xf]
  %v482 = vld [vmem:[%s1 + $0x13c] sm:$0xf]
  %v483 = vld [vmem:[%s1 + $0x140] sm:$0xf]
  %v484 = vld [vmem:[%s1 + $0x144] sm:$0xf]
  %v485 = vld [vmem:[%s1 + $0x148] sm:$0xf]
  %v486 = vld [vmem:[%s1 + $0x14c] sm:$0xf]
  %v487 = vld [vmem:[%s1 + $0x150] sm:$0xf]
  %v488 = vld [vmem:[%s1 + $0x154] sm:$0xf]
  %v489 = vld [vmem:[%s1 + $0x158] sm:$0xf]
  %v490 = vld [vmem:[%s1 + $0x15c] sm:$0xf]
  %v491 = vld [vmem:[%s1 + $0x160] sm:$0xf]
  %v492 = vld [vmem:[%s1 + $0x164] sm:$0xf]
  %v493 = vld [vmem:[%s1 + $0x168] sm:$0xf]
  %v494 = vld [vmem:[%s1 + $0x16c] sm:$0xf]
  %v495 = vld [vmem:[%s1 + $0x170] sm:$0xf]
  %v496 = vld [vmem:[%s1 + $0x174] sm:$0xf]
  %v497 = vld [vmem:[%s1 + $0x178] sm:$0xf]
  %v498 = vld [vmem:[%s1 + $0x17c] sm:$0xf]
  %v499 = vld [vmem:[%s1 + $0x180] sm:$0xf]
  %v500 = vld [vmem:[%s1 + $0x184] sm:$0xf]
  %v501 = vld [vmem:[%s1 + $0x188] sm:$0xf]
  %v502 = vld [vmem:[%s1 + $0x18c] sm:$0xf]
  %v503 = vld [vmem:[%s1 + $0x190] sm:$0xf]
  %v504 = vld [vmem:[%s1 + $0x194] sm:$0xf]
  %v505 = vld [vmem:[%s1 + $0x198] sm:$0xf]
  %v506 = vld [vmem:[%s1 + $0x19c] sm:$0xf]
  %v507 = vld [vmem:[%s1 + $0x1a0] sm:$0xf]
  %v508 = vld [vmem:[%s1 + $0x1a4] sm:$0xf]
  %v509 = vld [vmem:[%s1 + $0x1a8] sm:$0xf]
  %v510 = vld [vmem:[%s1 + $0x1ac] sm:$0xf]
  %v511 = vld [vmem:[%s1 + $0x1b0] sm:$0xf]
  %v512 = vld [vmem:[%s1 + $0x1b4] sm:$0xf]
  %v513 = vld [vmem:[%s1 + $0x1b8] sm:$0xf]
  %v514 = vld [vmem:[%s1 + $0x1bc] sm:$0xf]
  %v771 = vunpack.c.l.b16 %v147
  %v772 = vunpack.c.h.b16 %v147
  %v773 = vunpack.c.l.b16 %v148
  %v774 = vunpack.c.h.b16 %v148
  %v775 = vunpack.c.l.b16 %v149
  %v776 = vunpack.c.h.b16 %v149
  %v777 = vunpack.c.l.b16 %v150
  %v778 = vunpack.c.l.b16 %v151
  %v779 = vunpack.c.h.b16 %v151
  %v780 = vunpack.c.l.b16 %v152
  %v781 = vunpack.c.h.b16 %v152
  %v782 = vunpack.c.l.b16 %v153
  %v783 = vunpack.c.h.b16 %v153
  %v784 = vunpack.c.l.b16 %v154
  %v785 = vunpack.c.l.b16 %v155
  %v786 = vunpack.c.h.b16 %v155
  %v787 = vunpack.c.l.b16 %v156
  %v788 = vunpack.c.h.b16 %v156
  %v789 = vunpack.c.l.b16 %v157
  %v790 = vunpack.c.h.b16 %v157
  %v791 = vunpack.c.l.b16 %v158
  %v792 = vunpack.c.l.b16 %v159
  %v793 = vunpack.c.h.b16 %v159
  %v794 = vunpack.c.l.b16 %v160
  %v795 = vunpack.c.h.b16 %v160
  %v796 = vunpack.c.l.b16 %v161
  %v797 = vunpack.c.h.b16 %v161
  %v798 = vunpack.c.l.b16 %v162
  %v799 = vunpack.c.l.b16 %v163
  %v800 = vunpack.c.h.b16 %v163
  %v801 = vunpack.c.l.b16 %v164
  %v802 = vunpack.c.h.b16 %v164
  %v803 = vunpack.c.l.b16 %v165
  %v804 = vunpack.c.h.b16 %v165
  %v805 = vunpack.c.l.b16 %v166
  %v806 = vunpack.c.l.b16 %v167
  %v807 = vunpack.c.h.b16 %v167
  %v808 = vunpack.c.l.b16 %v168
  %v809 = vunpack.c.h.b16 %v168
  %v810 = vunpack.c.l.b16 %v169
  %v811 = vunpack.c.h.b16 %v169
  %v812 = vunpack.c.l.b16 %v170
  %v813 = vunpack.c.l.b16 %v171
  %v814 = vunpack.c.h.b16 %v171
  %v815 = vunpack.c.l.b16 %v172
  %v816 = vunpack.c.h.b16 %v172
  %v817 = vunpack.c.l.b16 %v173
  %v818 = vunpack.c.h.b16 %v173
  %v819 = vunpack.c.l.b16 %v174
  %v820 = vunpack.c.l.b16 %v175
  %v821 = vunpack.c.h.b16 %v175
  %v822 = vunpack.c.l.b16 %v176
  %v823 = vunpack.c.h.b16 %v176
  %v824 = vunpack.c.l.b16 %v177
  %v825 = vunpack.c.h.b16 %v177
  %v826 = vunpack.c.l.b16 %v178
  %v827 = vunpack.c.l.b16 %v179
  %v828 = vunpack.c.h.b16 %v179
  %v829 = vunpack.c.l.b16 %v180
  %v830 = vunpack.c.h.b16 %v180
  %v831 = vunpack.c.l.b16 %v181
  %v832 = vunpack.c.h.b16 %v181
  %v833 = vunpack.c.l.b16 %v182
  %v834 = vunpack.c.l.b16 %v183
  %v835 = vunpack.c.h.b16 %v183
  %v836 = vunpack.c.l.b16 %v184
  %v837 = vunpack.c.h.b16 %v184
  %v838 = vunpack.c.l.b16 %v185
  %v839 = vunpack.c.h.b16 %v185
  %v840 = vunpack.c.l.b16 %v186
  %v841 = vunpack.c.l.b16 %v187
  %v842 = vunpack.c.h.b16 %v187
  %v843 = vunpack.c.l.b16 %v188
  %v844 = vunpack.c.h.b16 %v188
  %v845 = vunpack.c.l.b16 %v189
  %v846 = vunpack.c.h.b16 %v189
  %v847 = vunpack.c.l.b16 %v190
  %v848 = vunpack.c.l.b16 %v191
  %v849 = vunpack.c.h.b16 %v191
  %v850 = vunpack.c.l.b16 %v192
  %v851 = vunpack.c.h.b16 %v192
  %v852 = vunpack.c.l.b16 %v193
  %v853 = vunpack.c.h.b16 %v193
  %v854 = vunpack.c.l.b16 %v194
  %v855 = vunpack.c.l.b16 %v195
  %v856 = vunpack.c.h.b16 %v195
  %v857 = vunpack.c.l.b16 %v196
  %v858 = vunpack.c.h.b16 %v196
  %v859 = vunpack.c.l.b16 %v197
  %v860 = vunpack.c.h.b16 %v197
  %v861 = vunpack.c.l.b16 %v198
  %v862 = vunpack.c.l.b16 %v199
  %v863 = vunpack.c.h.b16 %v199
  %v864 = vunpack.c.l.b16 %v200
  %v865 = vunpack.c.h.b16 %v200
  %v866 = vunpack.c.l.b16 %v201
  %v867 = vunpack.c.h.b16 %v201
  %v868 = vunpack.c.l.b16 %v202
  %v869 = vunpack.c.l.b16 %v203
  %v870 = vunpack.c.h.b16 %v203
  %v871 = vunpack.c.l.b16 %v204
  %v872 = vunpack.c.h.b16 %v204
  %v873 = vunpack.c.l.b16 %v205
  %v874 = vunpack.c.h.b16 %v205
  %v875 = vunpack.c.l.b16 %v206
  %v876 = vunpack.c.l.b16 %v207
  %v877 = vunpack.c.h.b16 %v207
  %v878 = vunpack.c.l.b16 %v208
  %v879 = vunpack.c.h.b16 %v208
  %v880 = vunpack.c.l.b16 %v209
  %v881 = vunpack.c.h.b16 %v209
  %v882 = vunpack.c.l.b16 %v210
  %v883 = vunpack.c.l.b16 %v211
  %v884 = vunpack.c.h.b16 %v211
  %v885 = vunpack.c.l.b16 %v212
  %v886 = vunpack.c.h.b16 %v212
  %v887 = vunpack.c.l.b16 %v213
  %v888 = vunpack.c.h.b16 %v213
  %v889 = vunpack.c.l.b16 %v214
  %v890 = vunpack.c.l.b16 %v215
  %v891 = vunpack.c.h.b16 %v215
  %v892 = vunpack.c.l.b16 %v216
  %v893 = vunpack.c.h.b16 %v216
  %v894 = vunpack.c.l.b16 %v217
  %v895 = vunpack.c.h.b16 %v217
  %v896 = vunpack.c.l.b16 %v218
  %v897 = vunpack.c.l.b16 %v219
  %v898 = vunpack.c.h.b16 %v219
  %v899 = vunpack.c.l.b16 %v220
  %v900 = vunpack.c.h.b16 %v220
  %v901 = vunpack.c.l.b16 %v221
  %v902 = vunpack.c.h.b16 %v221
  %v903 = vunpack.c.l.b16 %v222
  %v904 = vunpack.c.l.b16 %v223
  %v905 = vunpack.c.h.b16 %v223
  %v906 = vunpack.c.l.b16 %v224
  %v907 = vunpack.c.h.b16 %v224
  %v908 = vunpack.c.l.b16 %v225
  %v909 = vunpack.c.h.b16 %v225
  %v910 = vunpack.c.l.b16 %v226
  %v911 = vunpack.c.l.b16 %v227
  %v912 = vunpack.c.h.b16 %v227
  %v913 = vunpack.c.l.b16 %v228
  %v914 = vunpack.c.h.b16 %v228
  %v915 = vunpack.c.l.b16 %v229
  %v916 = vunpack.c.h.b16 %v229
  %v917 = vunpack.c.l.b16 %v230
  %v918 = vunpack.c.l.b16 %v231
  %v919 = vunpack.c.h.b16 %v231
  %v920 = vunpack.c.l.b16 %v232
  %v921 = vunpack.c.h.b16 %v232
  %v922 = vunpack.c.l.b16 %v233
  %v923 = vunpack.c.h.b16 %v233
  %v924 = vunpack.c.l.b16 %v234
  %v925 = vunpack.c.l.b16 %v235
  %v926 = vunpack.c.h.b16 %v235
  %v927 = vunpack.c.l.b16 %v236
  %v928 = vunpack.c.h.b16 %v236
  %v929 = vunpack.c.l.b16 %v237
  %v930 = vunpack.c.h.b16 %v237
  %v931 = vunpack.c.l.b16 %v238
  %v932 = vunpack.c.l.b16 %v239
  %v933 = vunpack.c.h.b16 %v239
  %v934 = vunpack.c.l.b16 %v240
  %v935 = vunpack.c.h.b16 %v240
  %v936 = vunpack.c.l.b16 %v241
  %v937 = vunpack.c.h.b16 %v241
  %v938 = vunpack.c.l.b16 %v242
  %v939 = vunpack.c.l.b16 %v243
  %v940 = vunpack.c.h.b16 %v243
  %v941 = vunpack.c.l.b16 %v244
  %v942 = vunpack.c.h.b16 %v244
  %v943 = vunpack.c.l.b16 %v245
  %v944 = vunpack.c.h.b16 %v245
  %v945 = vunpack.c.l.b16 %v246
  %v946 = vunpack.c.l.b16 %v247
  %v947 = vunpack.c.h.b16 %v247
  %v948 = vunpack.c.l.b16 %v248
  %v949 = vunpack.c.h.b16 %v248
  %v950 = vunpack.c.l.b16 %v249
  %v951 = vunpack.c.h.b16 %v249
  %v952 = vunpack.c.l.b16 %v250
  %v953 = vunpack.c.l.b16 %v251
  %v954 = vunpack.c.h.b16 %v251
  %v955 = vunpack.c.l.b16 %v252
  %v956 = vunpack.c.h.b16 %v252
  %v957 = vunpack.c.l.b16 %v253
  %v958 = vunpack.c.h.b16 %v253
  %v959 = vunpack.c.l.b16 %v254
  %v960 = vunpack.c.l.b16 %v255
  %v961 = vunpack.c.h.b16 %v255
  %v962 = vunpack.c.l.b16 %v256
  %v963 = vunpack.c.h.b16 %v256
  %v964 = vunpack.c.l.b16 %v257
  %v965 = vunpack.c.h.b16 %v257
  %v966 = vunpack.c.l.b16 %v258
  %v967 = vunpack.c.l.b16 %v259
  %v968 = vunpack.c.h.b16 %v259
  %v969 = vunpack.c.l.b16 %v260
  %v970 = vunpack.c.h.b16 %v260
  %v971 = vunpack.c.l.b16 %v261
  %v972 = vunpack.c.h.b16 %v261
  %v973 = vunpack.c.l.b16 %v262
  %v974 = vunpack.c.l.b16 %v263
  %v975 = vunpack.c.h.b16 %v263
  %v976 = vunpack.c.l.b16 %v264
  %v977 = vunpack.c.h.b16 %v264
  %v978 = vunpack.c.l.b16 %v265
  %v979 = vunpack.c.h.b16 %v265
  %v980 = vunpack.c.l.b16 %v266
  %v981 = vunpack.c.l.b16 %v267
  %v982 = vunpack.c.h.b16 %v267
  %v983 = vunpack.c.l.b16 %v268
  %v984 = vunpack.c.h.b16 %v268
  %v985 = vunpack.c.l.b16 %v269
  %v986 = vunpack.c.h.b16 %v269
  %v987 = vunpack.c.l.b16 %v270
  %v988 = vunpack.c.l.b16 %v271
  %v989 = vunpack.c.h.b16 %v271
  %v990 = vunpack.c.l.b16 %v272
  %v991 = vunpack.c.h.b16 %v272
  %v992 = vunpack.c.l.b16 %v273
  %v993 = vunpack.c.h.b16 %v273
  %v994 = vunpack.c.l.b16 %v274
  %v995 = vunpack.c.l.b16 %v275
  %v996 = vunpack.c.h.b16 %v275
  %v997 = vunpack.c.l.b16 %v276
  %v998 = vunpack.c.h.b16 %v276
  %v999 = vunpack.c.l.b16 %v277
  %v1000 = vunpack.c.h.b16 %v277
  %v1001 = vunpack.c.l.b16 %v278
  %v1002 = vunpack.c.l.b16 %v279
  %v1003 = vunpack.c.h.b16 %v279
  %v1004 = vunpack.c.l.b16 %v280
  %v1005 = vunpack.c.h.b16 %v280
  %v1006 = vunpack.c.l.b16 %v281
  %v1007 = vunpack.c.h.b16 %v281
  %v1008 = vunpack.c.l.b16 %v282
  %v1009 = vunpack.c.l.b16 %v283
  %v1010 = vunpack.c.h.b16 %v283
  %v1011 = vunpack.c.l.b16 %v284
  %v1012 = vunpack.c.h.b16 %v284
  %v1013 = vunpack.c.l.b16 %v285
  %v1014 = vunpack.c.h.b16 %v285
  %v1015 = vunpack.c.l.b16 %v286
  %v1016 = vunpack.c.l.b16 %v287
  %v1017 = vunpack.c.h.b16 %v287
  %v1018 = vunpack.c.l.b16 %v288
  %v1019 = vunpack.c.h.b16 %v288
  %v1020 = vunpack.c.l.b16 %v289
  %v1021 = vunpack.c.h.b16 %v289
  %v1022 = vunpack.c.l.b16 %v290
  %v1023 = vunpack.c.l.b16 %v291
  %v1024 = vunpack.c.h.b16 %v291
  %v1025 = vunpack.c.l.b16 %v292
  %v1026 = vunpack.c.h.b16 %v292
  %v1027 = vunpack.c.l.b16 %v293
  %v1028 = vunpack.c.h.b16 %v293
  %v1029 = vunpack.c.l.b16 %v294
  %v1030 = vunpack.c.l.b16 %v295
  %v1031 = vunpack.c.h.b16 %v295
  %v1032 = vunpack.c.l.b16 %v296
  %v1033 = vunpack.c.h.b16 %v296
  %v1034 = vunpack.c.l.b16 %v297
  %v1035 = vunpack.c.h.b16 %v297
  %v1036 = vunpack.c.l.b16 %v298
  %v1037 = vunpack.c.l.b16 %v299
  %v1038 = vunpack.c.h.b16 %v299
  %v1039 = vunpack.c.l.b16 %v300
  %v1040 = vunpack.c.h.b16 %v300
  %v1041 = vunpack.c.l.b16 %v301
  %v1042 = vunpack.c.h.b16 %v301
  %v1043 = vunpack.c.l.b16 %v302
  %v1044 = vunpack.c.l.b16 %v303
  %v1045 = vunpack.c.h.b16 %v303
  %v1046 = vunpack.c.l.b16 %v304
  %v1047 = vunpack.c.h.b16 %v304
  %v1048 = vunpack.c.l.b16 %v305
  %v1049 = vunpack.c.h.b16 %v305
  %v1050 = vunpack.c.l.b16 %v306
  %v1051 = vunpack.c.l.b16 %v307
  %v1052 = vunpack.c.h.b16 %v307
  %v1053 = vunpack.c.l.b16 %v308
  %v1054 = vunpack.c.h.b16 %v308
  %v1055 = vunpack.c.l.b16 %v309
  %v1056 = vunpack.c.h.b16 %v309
  %v1057 = vunpack.c.l.b16 %v310
  %v1058 = vunpack.c.l.b16 %v311
  %v1059 = vunpack.c.h.b16 %v311
  %v1060 = vunpack.c.l.b16 %v312
  %v1061 = vunpack.c.h.b16 %v312
  %v1062 = vunpack.c.l.b16 %v313
  %v1063 = vunpack.c.h.b16 %v313
  %v1064 = vunpack.c.l.b16 %v314
  %v1065 = vunpack.c.l.b16 %v315
  %v1066 = vunpack.c.h.b16 %v315
  %v1067 = vunpack.c.l.b16 %v316
  %v1068 = vunpack.c.h.b16 %v316
  %v1069 = vunpack.c.l.b16 %v317
  %v1070 = vunpack.c.h.b16 %v317
  %v1071 = vunpack.c.l.b16 %v318
  %v1072 = vunpack.c.l.b16 %v319
  %v1073 = vunpack.c.h.b16 %v319
  %v1074 = vunpack.c.l.b16 %v320
  %v1075 = vunpack.c.h.b16 %v320
  %v1076 = vunpack.c.l.b16 %v321
  %v1077 = vunpack.c.h.b16 %v321
  %v1078 = vunpack.c.l.b16 %v322
  %v1079 = vunpack.c.l.b16 %v323
  %v1080 = vunpack.c.h.b16 %v323
  %v1081 = vunpack.c.l.b16 %v324
  %v1082 = vunpack.c.h.b16 %v324
  %v1083 = vunpack.c.l.b16 %v325
  %v1084 = vunpack.c.h.b16 %v325
  %v1085 = vunpack.c.l.b16 %v326
  %v1086 = vunpack.c.l.b16 %v327
  %v1087 = vunpack.c.h.b16 %v327
  %v1088 = vunpack.c.l.b16 %v328
  %v1089 = vunpack.c.h.b16 %v328
  %v1090 = vunpack.c.l.b16 %v329
  %v1091 = vunpack.c.h.b16 %v329
  %v1092 = vunpack.c.l.b16 %v330
  %v1093 = vunpack.c.l.b16 %v331
  %v1094 = vunpack.c.h.b16 %v331
  %v1095 = vunpack.c.l.b16 %v332
  %v1096 = vunpack.c.h.b16 %v332
  %v1097 = vunpack.c.l.b16 %v333
  %v1098 = vunpack.c.h.b16 %v333
  %v1099 = vunpack.c.l.b16 %v334
  %v1100 = vunpack.c.l.b16 %v335
  %v1101 = vunpack.c.h.b16 %v335
  %v1102 = vunpack.c.l.b16 %v336
  %v1103 = vunpack.c.h.b16 %v336
  %v1104 = vunpack.c.l.b16 %v337
  %v1105 = vunpack.c.h.b16 %v337
  %v1106 = vunpack.c.l.b16 %v338
  %v1107 = vunpack.c.l.b16 %v339
  %v1108 = vunpack.c.h.b16 %v339
  %v1109 = vunpack.c.l.b16 %v340
  %v1110 = vunpack.c.h.b16 %v340
  %v1111 = vunpack.c.l.b16 %v341
  %v1112 = vunpack.c.h.b16 %v341
  %v1113 = vunpack.c.l.b16 %v342
  %v1114 = vunpack.c.l.b16 %v343
  %v1115 = vunpack.c.h.b16 %v343
  %v1116 = vunpack.c.l.b16 %v344
  %v1117 = vunpack.c.h.b16 %v344
  %v1118 = vunpack.c.l.b16 %v345
  %v1119 = vunpack.c.h.b16 %v345
  %v1120 = vunpack.c.l.b16 %v346
  %v1121 = vunpack.c.l.b16 %v347
  %v1122 = vunpack.c.h.b16 %v347
  %v1123 = vunpack.c.l.b16 %v348
  %v1124 = vunpack.c.h.b16 %v348
  %v1125 = vunpack.c.l.b16 %v349
  %v1126 = vunpack.c.h.b16 %v349
  %v1127 = vunpack.c.l.b16 %v350
  %v1128 = vunpack.c.l.b16 %v351
  %v1129 = vunpack.c.h.b16 %v351
  %v1130 = vunpack.c.l.b16 %v352
  %v1131 = vunpack.c.h.b16 %v352
  %v1132 = vunpack.c.l.b16 %v353
  %v1133 = vunpack.c.h.b16 %v353
  %v1134 = vunpack.c.l.b16 %v354
  %v1135 = vunpack.c.l.b16 %v355
  %v1136 = vunpack.c.h.b16 %v355
  %v1137 = vunpack.c.l.b16 %v356
  %v1138 = vunpack.c.h.b16 %v356
  %v1139 = vunpack.c.l.b16 %v357
  %v1140 = vunpack.c.h.b16 %v357
  %v1141 = vunpack.c.l.b16 %v358
  %v1142 = vunpack.c.l.b16 %v359
  %v1143 = vunpack.c.h.b16 %v359
  %v1144 = vunpack.c.l.b16 %v360
  %v1145 = vunpack.c.h.b16 %v360
  %v1146 = vunpack.c.l.b16 %v361
  %v1147 = vunpack.c.h.b16 %v361
  %v1148 = vunpack.c.l.b16 %v362
  %v1149 = vunpack.c.l.b16 %v363
  %v1150 = vunpack.c.h.b16 %v363
  %v1151 = vunpack.c.l.b16 %v364
  %v1152 = vunpack.c.h.b16 %v364
  %v1153 = vunpack.c.l.b16 %v365
  %v1154 = vunpack.c.h.b16 %v365
  %v1155 = vunpack.c.l.b16 %v366
  %v1156 = vunpack.c.l.b16 %v367
  %v1157 = vunpack.c.h.b16 %v367
  %v1158 = vunpack.c.l.b16 %v368
  %v1159 = vunpack.c.h.b16 %v368
  %v1160 = vunpack.c.l.b16 %v369
  %v1161 = vunpack.c.h.b16 %v369
  %v1162 = vunpack.c.l.b16 %v370
  %v1163 = vunpack.c.l.b16 %v371
  %v1164 = vunpack.c.h.b16 %v371
  %v1165 = vunpack.c.l.b16 %v372
  %v1166 = vunpack.c.h.b16 %v372
  %v1167 = vunpack.c.l.b16 %v373
  %v1168 = vunpack.c.h.b16 %v373
  %v1169 = vunpack.c.l.b16 %v374
  %v1170 = vunpack.c.l.b16 %v375
  %v1171 = vunpack.c.h.b16 %v375
  %v1172 = vunpack.c.l.b16 %v376
  %v1173 = vunpack.c.h.b16 %v376
  %v1174 = vunpack.c.l.b16 %v377
  %v1175 = vunpack.c.h.b16 %v377
  %v1176 = vunpack.c.l.b16 %v378
  %v1177 = vunpack.c.l.b16 %v379
  %v1178 = vunpack.c.h.b16 %v379
  %v1179 = vunpack.c.l.b16 %v380
  %v1180 = vunpack.c.h.b16 %v380
  %v1181 = vunpack.c.l.b16 %v381
  %v1182 = vunpack.c.h.b16 %v381
  %v1183 = vunpack.c.l.b16 %v382
  %v1184 = vunpack.c.l.b16 %v383
  %v1185 = vunpack.c.h.b16 %v383
  %v1186 = vunpack.c.l.b16 %v384
  %v1187 = vunpack.c.h.b16 %v384
  %v1188 = vunpack.c.l.b16 %v385
  %v1189 = vunpack.c.h.b16 %v385
  %v1190 = vunpack.c.l.b16 %v386
  %v1191 = vunpack.c.l.b16 %v387
  %v1192 = vunpack.c.h.b16 %v387
  %v1193 = vunpack.c.l.b16 %v388
  %v1194 = vunpack.c.h.b16 %v388
  %v1195 = vunpack.c.l.b16 %v389
  %v1196 = vunpack.c.h.b16 %v389
  %v1197 = vunpack.c.l.b16 %v390
  %v1198 = vunpack.c.l.b16 %v391
  %v1199 = vunpack.c.h.b16 %v391
  %v1200 = vunpack.c.l.b16 %v392
  %v1201 = vunpack.c.h.b16 %v392
  %v1202 = vunpack.c.l.b16 %v393
  %v1203 = vunpack.c.h.b16 %v393
  %v1204 = vunpack.c.l.b16 %v394
  %v1205 = vunpack.c.l.b16 %v395
  %v1206 = vunpack.c.h.b16 %v395
  %v1207 = vunpack.c.l.b16 %v396
  %v1208 = vunpack.c.h.b16 %v396
  %v1209 = vunpack.c.l.b16 %v397
  %v1210 = vunpack.c.h.b16 %v397
  %v1211 = vunpack.c.l.b16 %v398
  %v1212 = vunpack.c.l.b16 %v399
  %v1213 = vunpack.c.h.b16 %v399
  %v1214 = vunpack.c.l.b16 %v400
  %v1215 = vunpack.c.h.b16 %v400
  %v1216 = vunpack.c.l.b16 %v401
  %v1217 = vunpack.c.h.b16 %v401
  %v1218 = vunpack.c.l.b16 %v402
  %v1219 = vpack.c.b16 %v778, %v771
  %v1220 = vpack.c.b16 %v779, %v772
  %v1221 = vpack.c.b16 %v780, %v773
  %v1222 = vpack.c.b16 %v781, %v774
  %v1223 = vpack.c.b16 %v782, %v775
  %v1224 = vpack.c.b16 %v783, %v776
  %v1225 = vpack.c.b16 %v784, %v777
  %v1226 = vpack.c.b16 %v792, %v785
  %v1227 = vpack.c.b16 %v793, %v786
  %v1228 = vpack.c.b16 %v794, %v787
  %v1229 = vpack.c.b16 %v795, %v788
  %v1230 = vpack.c.b16 %v796, %v789
  %v1231 = vpack.c.b16 %v797, %v790
  %v1232 = vpack.c.b16 %v798, %v791
  %v1233 = vpack.c.b16 %v806, %v799
  %v1234 = vpack.c.b16 %v807, %v800
  %v1235 = vpack.c.b16 %v808, %v801
  %v1236 = vpack.c.b16 %v809, %v802
  %v1237 = vpack.c.b16 %v810, %v803
  %v1238 = vpack.c.b16 %v811, %v804
  %v1239 = vpack.c.b16 %v812, %v805
  %v1240 = vpack.c.b16 %v820, %v813
  %v1241 = vpack.c.b16 %v821, %v814
  %v1242 = vpack.c.b16 %v822, %v815
  %v1243 = vpack.c.b16 %v823, %v816
  %v1244 = vpack.c.b16 %v824, %v817
  %v1245 = vpack.c.b16 %v825, %v818
  %v1246 = vpack.c.b16 %v826, %v819
  %v1247 = vpack.c.b16 %v834, %v827
  %v1248 = vpack.c.b16 %v835, %v828
  %v1249 = vpack.c.b16 %v836, %v829
  %v1250 = vpack.c.b16 %v837, %v830
  %v1251 = vpack.c.b16 %v838, %v831
  %v1252 = vpack.c.b16 %v839, %v832
  %v1253 = vpack.c.b16 %v840, %v833
  %v1254 = vpack.c.b16 %v848, %v841
  %v1255 = vpack.c.b16 %v849, %v842
  %v1256 = vpack.c.b16 %v850, %v843
  %v1257 = vpack.c.b16 %v851, %v844
  %v1258 = vpack.c.b16 %v852, %v845
  %v1259 = vpack.c.b16 %v853, %v846
  %v1260 = vpack.c.b16 %v854, %v847
  %v1261 = vpack.c.b16 %v862, %v855
  %v1262 = vpack.c.b16 %v863, %v856
  %v1263 = vpack.c.b16 %v864, %v857
  %v1264 = vpack.c.b16 %v865, %v858
  %v1265 = vpack.c.b16 %v866, %v859
  %v1266 = vpack.c.b16 %v867, %v860
  %v1267 = vpack.c.b16 %v868, %v861
  %v1268 = vpack.c.b16 %v876, %v869
  %v1269 = vpack.c.b16 %v877, %v870
  %v1270 = vpack.c.b16 %v878, %v871
  %v1271 = vpack.c.b16 %v879, %v872
  %v1272 = vpack.c.b16 %v880, %v873
  %v1273 = vpack.c.b16 %v881, %v874
  %v1274 = vpack.c.b16 %v882, %v875
  %v1275 = vpack.c.b16 %v890, %v883
  %v1276 = vpack.c.b16 %v891, %v884
  %v1277 = vpack.c.b16 %v892, %v885
  %v1278 = vpack.c.b16 %v893, %v886
  %v1279 = vpack.c.b16 %v894, %v887
  %v1280 = vpack.c.b16 %v895, %v888
  %v1281 = vpack.c.b16 %v896, %v889
  %v1282 = vpack.c.b16 %v904, %v897
  %v1283 = vpack.c.b16 %v905, %v898
  %v1284 = vpack.c.b16 %v906, %v899
  %v1285 = vpack.c.b16 %v907, %v900
  %v1286 = vpack.c.b16 %v908, %v901
  %v1287 = vpack.c.b16 %v909, %v902
  %v1288 = vpack.c.b16 %v910, %v903
  %v1289 = vpack.c.b16 %v918, %v911
  %v1290 = vpack.c.b16 %v919, %v912
  %v1291 = vpack.c.b16 %v920, %v913
  %v1292 = vpack.c.b16 %v921, %v914
  %v1293 = vpack.c.b16 %v922, %v915
  %v1294 = vpack.c.b16 %v923, %v916
  %v1295 = vpack.c.b16 %v924, %v917
  %v1296 = vpack.c.b16 %v932, %v925
  %v1297 = vpack.c.b16 %v933, %v926
  %v1298 = vpack.c.b16 %v934, %v927
  %v1299 = vpack.c.b16 %v935, %v928
  %v1300 = vpack.c.b16 %v936, %v929
  %v1301 = vpack.c.b16 %v937, %v930
  %v1302 = vpack.c.b16 %v938, %v931
  %v1303 = vpack.c.b16 %v946, %v939
  %v1304 = vpack.c.b16 %v947, %v940
  %v1305 = vpack.c.b16 %v948, %v941
  %v1306 = vpack.c.b16 %v949, %v942
  %v1307 = vpack.c.b16 %v950, %v943
  %v1308 = vpack.c.b16 %v951, %v944
  %v1309 = vpack.c.b16 %v952, %v945
  %v1310 = vpack.c.b16 %v960, %v953
  %v1311 = vpack.c.b16 %v961, %v954
  %v1312 = vpack.c.b16 %v962, %v955
  %v1313 = vpack.c.b16 %v963, %v956
  %v1314 = vpack.c.b16 %v964, %v957
  %v1315 = vpack.c.b16 %v965, %v958
  %v1316 = vpack.c.b16 %v966, %v959
  %v1317 = vpack.c.b16 %v974, %v967
  %v1318 = vpack.c.b16 %v975, %v968
  %v1319 = vpack.c.b16 %v976, %v969
  %v1320 = vpack.c.b16 %v977, %v970
  %v1321 = vpack.c.b16 %v978, %v971
  %v1322 = vpack.c.b16 %v979, %v972
  %v1323 = vpack.c.b16 %v980, %v973
  %v1324 = vpack.c.b16 %v988, %v981
  %v1325 = vpack.c.b16 %v989, %v982
  %v1326 = vpack.c.b16 %v990, %v983
  %v1327 = vpack.c.b16 %v991, %v984
  %v1328 = vpack.c.b16 %v992, %v985
  %v1329 = vpack.c.b16 %v993, %v986
  %v1330 = vpack.c.b16 %v994, %v987
  %v1331 = vpack.c.b16 %v1002, %v995
  %v1332 = vpack.c.b16 %v1003, %v996
  %v1333 = vpack.c.b16 %v1004, %v997
  %v1334 = vpack.c.b16 %v1005, %v998
  %v1335 = vpack.c.b16 %v1006, %v999
  %v1336 = vpack.c.b16 %v1007, %v1000
  %v1337 = vpack.c.b16 %v1008, %v1001
  %v1338 = vpack.c.b16 %v1016, %v1009
  %v1339 = vpack.c.b16 %v1017, %v1010
  %v1340 = vpack.c.b16 %v1018, %v1011
  %v1341 = vpack.c.b16 %v1019, %v1012
  %v1342 = vpack.c.b16 %v1020, %v1013
  %v1343 = vpack.c.b16 %v1021, %v1014
  %v1344 = vpack.c.b16 %v1022, %v1015
  %v1345 = vpack.c.b16 %v1030, %v1023
  %v1346 = vpack.c.b16 %v1031, %v1024
  %v1347 = vpack.c.b16 %v1032, %v1025
  %v1348 = vpack.c.b16 %v1033, %v1026
  %v1349 = vpack.c.b16 %v1034, %v1027
  %v1350 = vpack.c.b16 %v1035, %v1028
  %v1351 = vpack.c.b16 %v1036, %v1029
  %v1352 = vpack.c.b16 %v1044, %v1037
  %v1353 = vpack.c.b16 %v1045, %v1038
  %v1354 = vpack.c.b16 %v1046, %v1039
  %v1355 = vpack.c.b16 %v1047, %v1040
  %v1356 = vpack.c.b16 %v1048, %v1041
  %v1357 = vpack.c.b16 %v1049, %v1042
  %v1358 = vpack.c.b16 %v1050, %v1043
  %v1359 = vpack.c.b16 %v1058, %v1051
  %v1360 = vpack.c.b16 %v1059, %v1052
  %v1361 = vpack.c.b16 %v1060, %v1053
  %v1362 = vpack.c.b16 %v1061, %v1054
  %v1363 = vpack.c.b16 %v1062, %v1055
  %v1364 = vpack.c.b16 %v1063, %v1056
  %v1365 = vpack.c.b16 %v1064, %v1057
  %v1366 = vpack.c.b16 %v1072, %v1065
  %v1367 = vpack.c.b16 %v1073, %v1066
  %v1368 = vpack.c.b16 %v1074, %v1067
  %v1369 = vpack.c.b16 %v1075, %v1068
  %v1370 = vpack.c.b16 %v1076, %v1069
  %v1371 = vpack.c.b16 %v1077, %v1070
  %v1372 = vpack.c.b16 %v1078, %v1071
  %v1373 = vpack.c.b16 %v1086, %v1079
  %v1374 = vpack.c.b16 %v1087, %v1080
  %v1375 = vpack.c.b16 %v1088, %v1081
  %v1376 = vpack.c.b16 %v1089, %v1082
  %v1377 = vpack.c.b16 %v1090, %v1083
  %v1378 = vpack.c.b16 %v1091, %v1084
  %v1379 = vpack.c.b16 %v1092, %v1085
  %v1380 = vpack.c.b16 %v1100, %v1093
  %v1381 = vpack.c.b16 %v1101, %v1094
  %v1382 = vpack.c.b16 %v1102, %v1095
  %v1383 = vpack.c.b16 %v1103, %v1096
  %v1384 = vpack.c.b16 %v1104, %v1097
  %v1385 = vpack.c.b16 %v1105, %v1098
  %v1386 = vpack.c.b16 %v1106, %v1099
  %v1387 = vpack.c.b16 %v1114, %v1107
  %v1388 = vpack.c.b16 %v1115, %v1108
  %v1389 = vpack.c.b16 %v1116, %v1109
  %v1390 = vpack.c.b16 %v1117, %v1110
  %v1391 = vpack.c.b16 %v1118, %v1111
  %v1392 = vpack.c.b16 %v1119, %v1112
  %v1393 = vpack.c.b16 %v1120, %v1113
  %v1394 = vpack.c.b16 %v1128, %v1121
  %v1395 = vpack.c.b16 %v1129, %v1122
  %v1396 = vpack.c.b16 %v1130, %v1123
  %v1397 = vpack.c.b16 %v1131, %v1124
  %v1398 = vpack.c.b16 %v1132, %v1125
  %v1399 = vpack.c.b16 %v1133, %v1126
  %v1400 = vpack.c.b16 %v1134, %v1127
  %v1401 = vpack.c.b16 %v1142, %v1135
  %v1402 = vpack.c.b16 %v1143, %v1136
  %v1403 = vpack.c.b16 %v1144, %v1137
  %v1404 = vpack.c.b16 %v1145, %v1138
  %v1405 = vpack.c.b16 %v1146, %v1139
  %v1406 = vpack.c.b16 %v1147, %v1140
  %v1407 = vpack.c.b16 %v1148, %v1141
  %v1408 = vpack.c.b16 %v1156, %v1149
  %v1409 = vpack.c.b16 %v1157, %v1150
  %v1410 = vpack.c.b16 %v1158, %v1151
  %v1411 = vpack.c.b16 %v1159, %v1152
  %v1412 = vpack.c.b16 %v1160, %v1153
  %v1413 = vpack.c.b16 %v1161, %v1154
  %v1414 = vpack.c.b16 %v1162, %v1155
  %v1415 = vpack.c.b16 %v1170, %v1163
  %v1416 = vpack.c.b16 %v1171, %v1164
  %v1417 = vpack.c.b16 %v1172, %v1165
  %v1418 = vpack.c.b16 %v1173, %v1166
  %v1419 = vpack.c.b16 %v1174, %v1167
  %v1420 = vpack.c.b16 %v1175, %v1168
  %v1421 = vpack.c.b16 %v1176, %v1169
  %v1422 = vpack.c.b16 %v1184, %v1177
  %v1423 = vpack.c.b16 %v1185, %v1178
  %v1424 = vpack.c.b16 %v1186, %v1179
  %v1425 = vpack.c.b16 %v1187, %v1180
  %v1426 = vpack.c.b16 %v1188, %v1181
  %v1427 = vpack.c.b16 %v1189, %v1182
  %v1428 = vpack.c.b16 %v1190, %v1183
  %v1429 = vpack.c.b16 %v1198, %v1191
  %v1430 = vpack.c.b16 %v1199, %v1192
  %v1431 = vpack.c.b16 %v1200, %v1193
  %v1432 = vpack.c.b16 %v1201, %v1194
  %v1433 = vpack.c.b16 %v1202, %v1195
  %v1434 = vpack.c.b16 %v1203, %v1196
  %v1435 = vpack.c.b16 %v1204, %v1197
  %v1436 = vpack.c.b16 %v1212, %v1205
  %v1437 = vpack.c.b16 %v1213, %v1206
  %v1438 = vpack.c.b16 %v1214, %v1207
  %v1439 = vpack.c.b16 %v1215, %v1208
  %v1440 = vpack.c.b16 %v1216, %v1209
  %v1441 = vpack.c.b16 %v1217, %v1210
  %v1442 = vpack.c.b16 %v1218, %v1211
  %v1779 = vunpack.c.l.b16 %v403
  %v1780 = vunpack.c.l.b16 %v404
  %v1781 = vunpack.c.l.b16 %v405
  %v1782 = vunpack.c.l.b16 %v406
  %v1783 = vunpack.c.l.b16 %v407
  %v1784 = vunpack.c.l.b16 %v408
  %v1785 = vunpack.c.l.b16 %v409
  %v1786 = vunpack.c.l.b16 %v410
  %v1787 = vunpack.c.l.b16 %v411
  %v1788 = vunpack.c.l.b16 %v412
  %v1789 = vunpack.c.l.b16 %v413
  %v1790 = vunpack.c.l.b16 %v414
  %v1791 = vunpack.c.l.b16 %v415
  %v1792 = vunpack.c.l.b16 %v416
  %v1793 = vunpack.c.l.b16 %v417
  %v1794 = vunpack.c.l.b16 %v418
  %v1795 = vunpack.c.l.b16 %v419
  %v1796 = vunpack.c.l.b16 %v420
  %v1797 = vunpack.c.l.b16 %v421
  %v1798 = vunpack.c.l.b16 %v422
  %v1799 = vunpack.c.l.b16 %v423
  %v1800 = vunpack.c.l.b16 %v424
  %v1801 = vunpack.c.l.b16 %v425
  %v1802 = vunpack.c.l.b16 %v426
  %v1803 = vunpack.c.l.b16 %v427
  %v1804 = vunpack.c.l.b16 %v428
  %v1805 = vunpack.c.l.b16 %v429
  %v1806 = vunpack.c.l.b16 %v430
  %v1807 = vunpack.c.l.b16 %v431
  %v1808 = vunpack.c.l.b16 %v432
  %v1809 = vunpack.c.l.b16 %v433
  %v1810 = vunpack.c.l.b16 %v434
  %v1811 = vunpack.c.l.b16 %v435
  %v1812 = vunpack.c.l.b16 %v436
  %v1813 = vunpack.c.l.b16 %v437
  %v1814 = vunpack.c.l.b16 %v438
  %v1815 = vunpack.c.l.b16 %v439
  %v1816 = vunpack.c.l.b16 %v440
  %v1817 = vunpack.c.l.b16 %v441
  %v1818 = vunpack.c.l.b16 %v442
  %v1819 = vunpack.c.l.b16 %v443
  %v1820 = vunpack.c.l.b16 %v444
  %v1821 = vunpack.c.l.b16 %v445
  %v1822 = vunpack.c.l.b16 %v446
  %v1823 = vunpack.c.l.b16 %v447
  %v1824 = vunpack.c.l.b16 %v448
  %v1825 = vunpack.c.l.b16 %v449
  %v1826 = vunpack.c.l.b16 %v450
  %v1827 = vunpack.c.l.b16 %v451
  %v1828 = vunpack.c.l.b16 %v452
  %v1829 = vunpack.c.l.b16 %v453
  %v1830 = vunpack.c.l.b16 %v454
  %v1831 = vunpack.c.l.b16 %v455
  %v1832 = vunpack.c.l.b16 %v456
  %v1833 = vunpack.c.l.b16 %v457
  %v1834 = vunpack.c.l.b16 %v458
  %v1835 = vunpack.c.l.b16 %v459
  %v1836 = vunpack.c.l.b16 %v460
  %v1837 = vunpack.c.l.b16 %v461
  %v1838 = vunpack.c.l.b16 %v462
  %v1839 = vunpack.c.l.b16 %v463
  %v1840 = vunpack.c.l.b16 %v464
  %v1841 = vunpack.c.l.b16 %v465
  %v1842 = vunpack.c.l.b16 %v466
  %v1843 = vunpack.c.l.b16 %v467
  %v1844 = vunpack.c.l.b16 %v468
  %v1845 = vunpack.c.l.b16 %v469
  %v1846 = vunpack.c.l.b16 %v470
  %v1847 = vunpack.c.l.b16 %v471
  %v1848 = vunpack.c.l.b16 %v472
  %v1849 = vunpack.c.l.b16 %v473
  %v1850 = vunpack.c.l.b16 %v474
  %v1851 = vunpack.c.l.b16 %v475
  %v1852 = vunpack.c.l.b16 %v476
  %v1853 = vunpack.c.l.b16 %v477
  %v1854 = vunpack.c.l.b16 %v478
  %v1855 = vunpack.c.l.b16 %v479
  %v1856 = vunpack.c.l.b16 %v480
  %v1857 = vunpack.c.l.b16 %v481
  %v1858 = vunpack.c.l.b16 %v482
  %v1859 = vunpack.c.l.b16 %v483
  %v1860 = vunpack.c.l.b16 %v484
  %v1861 = vunpack.c.l.b16 %v485
  %v1862 = vunpack.c.l.b16 %v486
  %v1863 = vunpack.c.l.b16 %v487
  %v1864 = vunpack.c.l.b16 %v488
  %v1865 = vunpack.c.l.b16 %v489
  %v1866 = vunpack.c.l.b16 %v490
  %v1867 = vunpack.c.l.b16 %v491
  %v1868 = vunpack.c.l.b16 %v492
  %v1869 = vunpack.c.l.b16 %v493
  %v1870 = vunpack.c.l.b16 %v494
  %v1871 = vunpack.c.l.b16 %v495
  %v1872 = vunpack.c.l.b16 %v496
  %v1873 = vunpack.c.l.b16 %v497
  %v1874 = vunpack.c.l.b16 %v498
  %v1875 = vunpack.c.l.b16 %v499
  %v1876 = vunpack.c.l.b16 %v500
  %v1877 = vunpack.c.l.b16 %v501
  %v1878 = vunpack.c.l.b16 %v502
  %v1879 = vunpack.c.l.b16 %v503
  %v1880 = vunpack.c.l.b16 %v504
  %v1881 = vunpack.c.l.b16 %v505
  %v1882 = vunpack.c.l.b16 %v506
  %v1883 = vunpack.c.l.b16 %v507
  %v1884 = vunpack.c.l.b16 %v508
  %v1885 = vunpack.c.l.b16 %v509
  %v1886 = vunpack.c.l.b16 %v510
  %v1887 = vunpack.c.l.b16 %v511
  %v1888 = vunpack.c.l.b16 %v512
  %v1889 = vunpack.c.l.b16 %v513
  %v1890 = vunpack.c.l.b16 %v514
  %v1891 = vpack.c.b16 %v1780, %v1779
  %v1892 = vpack.c.b16 %v1782, %v1781
  %v1893 = vpack.c.b16 %v1784, %v1783
  %v1894 = vpack.c.b16 %v1786, %v1785
  %v1895 = vpack.c.b16 %v1788, %v1787
  %v1896 = vpack.c.b16 %v1790, %v1789
  %v1897 = vpack.c.b16 %v1792, %v1791
  %v1898 = vpack.c.b16 %v1794, %v1793
  %v1899 = vpack.c.b16 %v1796, %v1795
  %v1900 = vpack.c.b16 %v1798, %v1797
  %v1901 = vpack.c.b16 %v1800, %v1799
  %v1902 = vpack.c.b16 %v1802, %v1801
  %v1903 = vpack.c.b16 %v1804, %v1803
  %v1904 = vpack.c.b16 %v1806, %v1805
  %v1905 = vpack.c.b16 %v1808, %v1807
  %v1906 = vpack.c.b16 %v1810, %v1809
  %v1907 = vpack.c.b16 %v1812, %v1811
  %v1908 = vpack.c.b16 %v1814, %v1813
  %v1909 = vpack.c.b16 %v1816, %v1815
  %v1910 = vpack.c.b16 %v1818, %v1817
  %v1911 = vpack.c.b16 %v1820, %v1819
  %v1912 = vpack.c.b16 %v1822, %v1821
  %v1913 = vpack.c.b16 %v1824, %v1823
  %v1914 = vpack.c.b16 %v1826, %v1825
  %v1915 = vpack.c.b16 %v1828, %v1827
  %v1916 = vpack.c.b16 %v1830, %v1829
  %v1917 = vpack.c.b16 %v1832, %v1831
  %v1918 = vpack.c.b16 %v1834, %v1833
  %v1919 = vpack.c.b16 %v1836, %v1835
  %v1920 = vpack.c.b16 %v1838, %v1837
  %v1921 = vpack.c.b16 %v1840, %v1839
  %v1922 = vpack.c.b16 %v1842, %v1841
  %v1923 = vpack.c.b16 %v1844, %v1843
  %v1924 = vpack.c.b16 %v1846, %v1845
  %v1925 = vpack.c.b16 %v1848, %v1847
  %v1926 = vpack.c.b16 %v1850, %v1849
  %v1927 = vpack.c.b16 %v1852, %v1851
  %v1928 = vpack.c.b16 %v1854, %v1853
  %v1929 = vpack.c.b16 %v1856, %v1855
  %v1930 = vpack.c.b16 %v1858, %v1857
  %v1931 = vpack.c.b16 %v1860, %v1859
  %v1932 = vpack.c.b16 %v1862, %v1861
  %v1933 = vpack.c.b16 %v1864, %v1863
  %v1934 = vpack.c.b16 %v1866, %v1865
  %v1935 = vpack.c.b16 %v1868, %v1867
  %v1936 = vpack.c.b16 %v1870, %v1869
  %v1937 = vpack.c.b16 %v1872, %v1871
  %v1938 = vpack.c.b16 %v1874, %v1873
  %v1939 = vpack.c.b16 %v1876, %v1875
  %v1940 = vpack.c.b16 %v1878, %v1877
  %v1941 = vpack.c.b16 %v1880, %v1879
  %v1942 = vpack.c.b16 %v1882, %v1881
  %v1943 = vpack.c.b16 %v1884, %v1883
  %v1944 = vpack.c.b16 %v1886, %v1885
  %v1945 = vpack.c.b16 %v1888, %v1887
  %v1946 = vpack.c.b16 %v1890, %v1889
  %2003 = vmatprep.subr.bf16.mxu0 0
  %2004 = vmatpush1.bf16.msra.mxu0 %v1898
  %2005 = vmatprep.subr.bf16.mxu0 0
  %2006 = vmatpush1.bf16.msra.mxu0 %v1897
  %2007 = vmatprep.subr.bf16.mxu0 0
  %2008 = vmatpush1.bf16.msra.mxu0 %v1896
  %2009 = vmatprep.subr.bf16.mxu0 0
  %2010 = vmatpush1.bf16.msra.mxu0 %v1895
  %2011 = vmatprep.subr.bf16.mxu0 0
  %2012 = vmatpush1.bf16.msra.mxu0 %v1894
  %2013 = vmatprep.subr.bf16.mxu0 0
  %2014 = vmatpush1.bf16.msra.mxu0 %v1893
  %2015 = vmatprep.subr.bf16.mxu0 0
  %2016 = vmatpush1.bf16.msra.mxu0 %v1892
  %2017 = vmatprep.subr.bf16.mxu0 0
  %2018 = vmatpush1.bf16.msra.mxu0 %v1891
  %2019 = vmatprep.subr.bf16.mxu0 0
  %2020 = vmatpush2.bf16.msra.mxu0 %v1906
  %2021 = vmatprep.subr.bf16.mxu0 0
  %2022 = vmatpush2.bf16.msra.mxu0 %v1905
  %2023 = vmatprep.subr.bf16.mxu0 0
  %2024 = vmatpush2.bf16.msra.mxu0 %v1904
  %2025 = vmatprep.subr.bf16.mxu0 0
  %2026 = vmatpush2.bf16.msra.mxu0 %v1903
  %2027 = vmatprep.subr.bf16.mxu0 0
  %2028 = vmatpush2.bf16.msra.mxu0 %v1902
  %2029 = vmatprep.subr.bf16.mxu0 0
  %2030 = vmatpush2.bf16.msra.mxu0 %v1901
  %2031 = vmatprep.subr.bf16.mxu0 0
  %2032 = vmatpush2.bf16.msra.mxu0 %v1900
  %2033 = vmatprep.subr.bf16.mxu0 0
  %2034 = vmatpush2.bf16.msra.mxu0 %v1899
  %2035 = vmatprep.mubr.bf16.mxu0 %v1220
  %2036 = vmatmul.mubr.bf16.gmra.mxu0 %v1219
  %v2037 = vpop.f32.mrf.mxu0
  %v2038 = vadd.f32 0.0, %v2037
  %v2039 = vpop.f32.mrf.mxu0
  %v2040 = vpop.f32.mrf.mxu0
  %v2041 = vadd.f32 0.0, %v2040
  %v2042 = vpop.f32.mrf.mxu0
  %2043 = vmatprep.mubr.bf16.mxu0 %v1227
  %2044 = vmatmul.mubr.bf16.gmra.mxu0 %v1226
  %v2045 = vpop.f32.mrf.mxu0
  %v2046 = vadd.f32 0.0, %v2045
  %v2047 = vpop.f32.mrf.mxu0
  %v2048 = vpop.f32.mrf.mxu0
  %v2049 = vadd.f32 0.0, %v2048
  %v2050 = vpop.f32.mrf.mxu0
  %2051 = vmatprep.mubr.bf16.mxu0 %v1234
  %2052 = vmatmul.mubr.bf16.gmra.mxu0 %v1233
  %v2053 = vpop.f32.mrf.mxu0
  %v2054 = vadd.f32 0.0, %v2053
  %v2055 = vpop.f32.mrf.mxu0
  %v2056 = vpop.f32.mrf.mxu0
  %v2057 = vadd.f32 0.0, %v2056
  %v2058 = vpop.f32.mrf.mxu0
  %2059 = vmatprep.mubr.bf16.mxu0 %v1241
  %2060 = vmatmul.mubr.bf16.gmra.mxu0 %v1240
  %v2061 = vpop.f32.mrf.mxu0
  %v2062 = vadd.f32 0.0, %v2061
  %v2063 = vpop.f32.mrf.mxu0
  %v2064 = vpop.f32.mrf.mxu0
  %v2065 = vadd.f32 0.0, %v2064
  %v2066 = vpop.f32.mrf.mxu0
  %2067 = vmatprep.mubr.bf16.mxu0 %v1248
  %2068 = vmatmul.mubr.bf16.gmra.mxu0 %v1247
  %v2069 = vpop.f32.mrf.mxu0
  %v2070 = vadd.f32 0.0, %v2069
  %v2071 = vpop.f32.mrf.mxu0
  %v2072 = vpop.f32.mrf.mxu0
  %v2073 = vadd.f32 0.0, %v2072
  %v2074 = vpop.f32.mrf.mxu0
  %2075 = vmatprep.mubr.bf16.mxu0 %v1255
  %2076 = vmatmul.mubr.bf16.gmra.mxu0 %v1254
  %v2077 = vpop.f32.mrf.mxu0
  %v2078 = vadd.f32 0.0, %v2077
  %v2079 = vpop.f32.mrf.mxu0
  %v2080 = vpop.f32.mrf.mxu0
  %v2081 = vadd.f32 0.0, %v2080
  %v2082 = vpop.f32.mrf.mxu0
  %2083 = vmatprep.mubr.bf16.mxu0 %v1262
  %2084 = vmatmul.mubr.bf16.gmra.mxu0 %v1261
  %v2085 = vpop.f32.mrf.mxu0
  %v2086 = vadd.f32 0.0, %v2085
  %v2087 = vpop.f32.mrf.mxu0
  %v2088 = vpop.f32.mrf.mxu0
  %v2089 = vadd.f32 0.0, %v2088
  %v2090 = vpop.f32.mrf.mxu0
  %2091 = vmatprep.mubr.bf16.mxu0 %v1269
  %2092 = vmatmul.mubr.bf16.gmra.mxu0 %v1268
  %v2093 = vpop.f32.mrf.mxu0
  %v2094 = vadd.f32 0.0, %v2093
  %v2095 = vpop.f32.mrf.mxu0
  %v2096 = vpop.f32.mrf.mxu0
  %v2097 = vadd.f32 0.0, %v2096
  %v2098 = vpop.f32.mrf.mxu0
  %2099 = vmatprep.mubr.bf16.mxu0 %v1276
  %2100 = vmatmul.mubr.bf16.gmra.mxu0 %v1275
  %v2101 = vpop.f32.mrf.mxu0
  %v2102 = vadd.f32 0.0, %v2101
  %v2103 = vpop.f32.mrf.mxu0
  %v2104 = vpop.f32.mrf.mxu0
  %v2105 = vadd.f32 0.0, %v2104
  %v2106 = vpop.f32.mrf.mxu0
  %2107 = vmatprep.mubr.bf16.mxu0 %v1283
  %2108 = vmatmul.mubr.bf16.gmra.mxu0 %v1282
  %v2109 = vpop.f32.mrf.mxu0
  %v2110 = vadd.f32 0.0, %v2109
  %v2111 = vpop.f32.mrf.mxu0
  %v2112 = vpop.f32.mrf.mxu0
  %v2113 = vadd.f32 0.0, %v2112
  %v2114 = vpop.f32.mrf.mxu0
  %2115 = vmatprep.mubr.bf16.mxu0 %v1290
  %2116 = vmatmul.mubr.bf16.gmra.mxu0 %v1289
  %v2117 = vpop.f32.mrf.mxu0
  %v2118 = vadd.f32 0.0, %v2117
  %v2119 = vpop.f32.mrf.mxu0
  %v2120 = vpop.f32.mrf.mxu0
  %v2121 = vadd.f32 0.0, %v2120
  %v2122 = vpop.f32.mrf.mxu0
  %2123 = vmatprep.mubr.bf16.mxu0 %v1297
  %2124 = vmatmul.mubr.bf16.gmra.mxu0 %v1296
  %v2125 = vpop.f32.mrf.mxu0
  %v2126 = vadd.f32 0.0, %v2125
  %v2127 = vpop.f32.mrf.mxu0
  %v2128 = vpop.f32.mrf.mxu0
  %v2129 = vadd.f32 0.0, %v2128
  %v2130 = vpop.f32.mrf.mxu0
  %2131 = vmatprep.mubr.bf16.mxu0 %v1304
  %2132 = vmatmul.mubr.bf16.gmra.mxu0 %v1303
  %v2133 = vpop.f32.mrf.mxu0
  %v2134 = vadd.f32 0.0, %v2133
  %v2135 = vpop.f32.mrf.mxu0
  %v2136 = vpop.f32.mrf.mxu0
  %v2137 = vadd.f32 0.0, %v2136
  %v2138 = vpop.f32.mrf.mxu0
  %2139 = vmatprep.mubr.bf16.mxu0 %v1311
  %2140 = vmatmul.mubr.bf16.gmra.mxu0 %v1310
  %v2141 = vpop.f32.mrf.mxu0
  %v2142 = vadd.f32 0.0, %v2141
  %v2143 = vpop.f32.mrf.mxu0
  %v2144 = vpop.f32.mrf.mxu0
  %v2145 = vadd.f32 0.0, %v2144
  %v2146 = vpop.f32.mrf.mxu0
  %2147 = vmatprep.mubr.bf16.mxu0 %v1318
  %2148 = vmatmul.mubr.bf16.gmra.mxu0 %v1317
  %v2149 = vpop.f32.mrf.mxu0
  %v2150 = vadd.f32 0.0, %v2149
  %v2151 = vpop.f32.mrf.mxu0
  %v2152 = vpop.f32.mrf.mxu0
  %v2153 = vadd.f32 0.0, %v2152
  %v2154 = vpop.f32.mrf.mxu0
  %2155 = vmatprep.mubr.bf16.mxu0 %v1325
  %2156 = vmatmul.mubr.bf16.gmra.mxu0 %v1324
  %v2157 = vpop.f32.mrf.mxu0
  %v2158 = vadd.f32 0.0, %v2157
  %v2159 = vpop.f32.mrf.mxu0
  %v2160 = vpop.f32.mrf.mxu0
  %v2161 = vadd.f32 0.0, %v2160
  %v2162 = vpop.f32.mrf.mxu0
  %2163 = vmatprep.mubr.bf16.mxu0 %v1332
  %2164 = vmatmul.mubr.bf16.gmra.mxu0 %v1331
  %v2165 = vpop.f32.mrf.mxu0
  %v2166 = vadd.f32 0.0, %v2165
  %v2167 = vpop.f32.mrf.mxu0
  %v2168 = vpop.f32.mrf.mxu0
  %v2169 = vadd.f32 0.0, %v2168
  %v2170 = vpop.f32.mrf.mxu0
  %2171 = vmatprep.mubr.bf16.mxu0 %v1339
  %2172 = vmatmul.mubr.bf16.gmra.mxu0 %v1338
  %v2173 = vpop.f32.mrf.mxu0
  %v2174 = vadd.f32 0.0, %v2173
  %v2175 = vpop.f32.mrf.mxu0
  %v2176 = vpop.f32.mrf.mxu0
  %v2177 = vadd.f32 0.0, %v2176
  %v2178 = vpop.f32.mrf.mxu0
  %2179 = vmatprep.mubr.bf16.mxu0 %v1346
  %2180 = vmatmul.mubr.bf16.gmra.mxu0 %v1345
  %v2181 = vpop.f32.mrf.mxu0
  %v2182 = vadd.f32 0.0, %v2181
  %v2183 = vpop.f32.mrf.mxu0
  %v2184 = vpop.f32.mrf.mxu0
  %v2185 = vadd.f32 0.0, %v2184
  %v2186 = vpop.f32.mrf.mxu0
  %2187 = vmatprep.mubr.bf16.mxu0 %v1353
  %2188 = vmatmul.mubr.bf16.gmra.mxu0 %v1352
  %v2189 = vpop.f32.mrf.mxu0
  %v2190 = vadd.f32 0.0, %v2189
  %v2191 = vpop.f32.mrf.mxu0
  %v2192 = vpop.f32.mrf.mxu0
  %v2193 = vadd.f32 0.0, %v2192
  %v2194 = vpop.f32.mrf.mxu0
  %2195 = vmatprep.mubr.bf16.mxu0 %v1360
  %2196 = vmatmul.mubr.bf16.gmra.mxu0 %v1359
  %v2197 = vpop.f32.mrf.mxu0
  %v2198 = vadd.f32 0.0, %v2197
  %v2199 = vpop.f32.mrf.mxu0
  %v2200 = vpop.f32.mrf.mxu0
  %v2201 = vadd.f32 0.0, %v2200
  %v2202 = vpop.f32.mrf.mxu0
  %2203 = vmatprep.mubr.bf16.mxu0 %v1367
  %2204 = vmatmul.mubr.bf16.gmra.mxu0 %v1366
  %v2205 = vpop.f32.mrf.mxu0
  %v2206 = vadd.f32 0.0, %v2205
  %v2207 = vpop.f32.mrf.mxu0
  %v2208 = vpop.f32.mrf.mxu0
  %v2209 = vadd.f32 0.0, %v2208
  %v2210 = vpop.f32.mrf.mxu0
  %2211 = vmatprep.mubr.bf16.mxu0 %v1374
  %2212 = vmatmul.mubr.bf16.gmra.mxu0 %v1373
  %v2213 = vpop.f32.mrf.mxu0
  %v2214 = vadd.f32 0.0, %v2213
  %v2215 = vpop.f32.mrf.mxu0
  %v2216 = vpop.f32.mrf.mxu0
  %v2217 = vadd.f32 0.0, %v2216
  %v2218 = vpop.f32.mrf.mxu0
  %2219 = vmatprep.mubr.bf16.mxu0 %v1381
  %2220 = vmatmul.mubr.bf16.gmra.mxu0 %v1380
  %v2221 = vpop.f32.mrf.mxu0
  %v2222 = vadd.f32 0.0, %v2221
  %v2223 = vpop.f32.mrf.mxu0
  %v2224 = vpop.f32.mrf.mxu0
  %v2225 = vadd.f32 0.0, %v2224
  %v2226 = vpop.f32.mrf.mxu0
  %2227 = vmatprep.mubr.bf16.mxu0 %v1388
  %2228 = vmatmul.mubr.bf16.gmra.mxu0 %v1387
  %v2229 = vpop.f32.mrf.mxu0
  %v2230 = vadd.f32 0.0, %v2229
  %v2231 = vpop.f32.mrf.mxu0
  %v2232 = vpop.f32.mrf.mxu0
  %v2233 = vadd.f32 0.0, %v2232
  %v2234 = vpop.f32.mrf.mxu0
  %2235 = vmatprep.mubr.bf16.mxu0 %v1395
  %2236 = vmatmul.mubr.bf16.gmra.mxu0 %v1394
  %v2237 = vpop.f32.mrf.mxu0
  %v2238 = vadd.f32 0.0, %v2237
  %v2239 = vpop.f32.mrf.mxu0
  %v2240 = vpop.f32.mrf.mxu0
  %v2241 = vadd.f32 0.0, %v2240
  %v2242 = vpop.f32.mrf.mxu0
  %2243 = vmatprep.mubr.bf16.mxu0 %v1402
  %2244 = vmatmul.mubr.bf16.gmra.mxu0 %v1401
  %v2245 = vpop.f32.mrf.mxu0
  %v2246 = vadd.f32 0.0, %v2245
  %v2247 = vpop.f32.mrf.mxu0
  %v2248 = vpop.f32.mrf.mxu0
  %v2249 = vadd.f32 0.0, %v2248
  %v2250 = vpop.f32.mrf.mxu0
  %2251 = vmatprep.mubr.bf16.mxu0 %v1409
  %2252 = vmatmul.mubr.bf16.gmra.mxu0 %v1408
  %v2253 = vpop.f32.mrf.mxu0
  %v2254 = vadd.f32 0.0, %v2253
  %v2255 = vpop.f32.mrf.mxu0
  %v2256 = vpop.f32.mrf.mxu0
  %v2257 = vadd.f32 0.0, %v2256
  %v2258 = vpop.f32.mrf.mxu0
  %2259 = vmatprep.mubr.bf16.mxu0 %v1416
  %2260 = vmatmul.mubr.bf16.gmra.mxu0 %v1415
  %v2261 = vpop.f32.mrf.mxu0
  %v2262 = vadd.f32 0.0, %v2261
  %v2263 = vpop.f32.mrf.mxu0
  %v2264 = vpop.f32.mrf.mxu0
  %v2265 = vadd.f32 0.0, %v2264
  %v2266 = vpop.f32.mrf.mxu0
  %2267 = vmatprep.mubr.bf16.mxu0 %v1423
  %2268 = vmatmul.mubr.bf16.gmra.mxu0 %v1422
  %v2269 = vpop.f32.mrf.mxu0
  %v2270 = vadd.f32 0.0, %v2269
  %v2271 = vpop.f32.mrf.mxu0
  %v2272 = vpop.f32.mrf.mxu0
  %v2273 = vadd.f32 0.0, %v2272
  %v2274 = vpop.f32.mrf.mxu0
  %2275 = vmatprep.mubr.bf16.mxu0 %v1430
  %2276 = vmatmul.mubr.bf16.gmra.mxu0 %v1429
  %v2277 = vpop.f32.mrf.mxu0
  %v2278 = vadd.f32 0.0, %v2277
  %v2279 = vpop.f32.mrf.mxu0
  %v2280 = vpop.f32.mrf.mxu0
  %v2281 = vadd.f32 0.0, %v2280
  %v2282 = vpop.f32.mrf.mxu0
  %2283 = vmatprep.mubr.bf16.mxu0 %v1437
  %2284 = vmatmul.mubr.bf16.gmra.mxu0 %v1436
  %v2285 = vpop.f32.mrf.mxu0
  %v2286 = vadd.f32 0.0, %v2285
  %v2287 = vpop.f32.mrf.mxu0
  %v2288 = vpop.f32.mrf.mxu0
  %v2289 = vadd.f32 0.0, %v2288
  %v2290 = vpop.f32.mrf.mxu0
  %2291 = vdwg.mxu0
  %2292 = vmatprep.subr.bf16.mxu0 0
  %2293 = vmatpush1.bf16.msra.mxu0 %v1914
  %2294 = vmatprep.subr.bf16.mxu0 0
  %2295 = vmatpush1.bf16.msra.mxu0 %v1913
  %2296 = vmatprep.subr.bf16.mxu0 0
  %2297 = vmatpush1.bf16.msra.mxu0 %v1912
  %2298 = vmatprep.subr.bf16.mxu0 0
  %2299 = vmatpush1.bf16.msra.mxu0 %v1911
  %2300 = vmatprep.subr.bf16.mxu0 0
  %2301 = vmatpush1.bf16.msra.mxu0 %v1910
  %2302 = vmatprep.subr.bf16.mxu0 0
  %2303 = vmatpush1.bf16.msra.mxu0 %v1909
  %2304 = vmatprep.subr.bf16.mxu0 0
  %2305 = vmatpush1.bf16.msra.mxu0 %v1908
  %2306 = vmatprep.subr.bf16.mxu0 0
  %2307 = vmatpush1.bf16.msra.mxu0 %v1907
  %2308 = vmatprep.subr.bf16.mxu0 0
  %2309 = vmatpush2.bf16.msra.mxu0 %v1922
  %2310 = vmatprep.subr.bf16.mxu0 0
  %2311 = vmatpush2.bf16.msra.mxu0 %v1921
  %2312 = vmatprep.subr.bf16.mxu0 0
  %2313 = vmatpush2.bf16.msra.mxu0 %v1920
  %2314 = vmatprep.subr.bf16.mxu0 0
  %2315 = vmatpush2.bf16.msra.mxu0 %v1919
  %2316 = vmatprep.subr.bf16.mxu0 0
  %2317 = vmatpush2.bf16.msra.mxu0 %v1918
  %2318 = vmatprep.subr.bf16.mxu0 0
  %2319 = vmatpush2.bf16.msra.mxu0 %v1917
  %2320 = vmatprep.subr.bf16.mxu0 0
  %2321 = vmatpush2.bf16.msra.mxu0 %v1916
  %2322 = vmatprep.subr.bf16.mxu0 0
  %2323 = vmatpush2.bf16.msra.mxu0 %v1915
  %2324 = vmatprep.mubr.bf16.mxu0 %v1222
  %2325 = vmatmul.mubr.bf16.gmra.mxu0 %v1221
  %v2326 = vpop.f32.mrf.mxu0
  %v2327 = vadd.f32 %v2038, %v2326
  %v2328 = vpop.f32.mrf.mxu0
  %v2329 = vpop.f32.mrf.mxu0
  %v2330 = vadd.f32 %v2041, %v2329
  %v2331 = vpop.f32.mrf.mxu0
  %2332 = vmatprep.mubr.bf16.mxu0 %v1229
  %2333 = vmatmul.mubr.bf16.gmra.mxu0 %v1228
  %v2334 = vpop.f32.mrf.mxu0
  %v2335 = vadd.f32 %v2046, %v2334
  %v2336 = vpop.f32.mrf.mxu0
  %v2337 = vpop.f32.mrf.mxu0
  %v2338 = vadd.f32 %v2049, %v2337
  %v2339 = vpop.f32.mrf.mxu0
  %2340 = vmatprep.mubr.bf16.mxu0 %v1236
  %2341 = vmatmul.mubr.bf16.gmra.mxu0 %v1235
  %v2342 = vpop.f32.mrf.mxu0
  %v2343 = vadd.f32 %v2054, %v2342
  %v2344 = vpop.f32.mrf.mxu0
  %v2345 = vpop.f32.mrf.mxu0
  %v2346 = vadd.f32 %v2057, %v2345
  %v2347 = vpop.f32.mrf.mxu0
  %2348 = vmatprep.mubr.bf16.mxu0 %v1243
  %2349 = vmatmul.mubr.bf16.gmra.mxu0 %v1242
  %v2350 = vpop.f32.mrf.mxu0
  %v2351 = vadd.f32 %v2062, %v2350
  %v2352 = vpop.f32.mrf.mxu0
  %v2353 = vpop.f32.mrf.mxu0
  %v2354 = vadd.f32 %v2065, %v2353
  %v2355 = vpop.f32.mrf.mxu0
  %2356 = vmatprep.mubr.bf16.mxu0 %v1250
  %2357 = vmatmul.mubr.bf16.gmra.mxu0 %v1249
  %v2358 = vpop.f32.mrf.mxu0
  %v2359 = vadd.f32 %v2070, %v2358
  %v2360 = vpop.f32.mrf.mxu0
  %v2361 = vpop.f32.mrf.mxu0
  %v2362 = vadd.f32 %v2073, %v2361
  %v2363 = vpop.f32.mrf.mxu0
  %2364 = vmatprep.mubr.bf16.mxu0 %v1257
  %2365 = vmatmul.mubr.bf16.gmra.mxu0 %v1256
  %v2366 = vpop.f32.mrf.mxu0
  %v2367 = vadd.f32 %v2078, %v2366
  %v2368 = vpop.f32.mrf.mxu0
  %v2369 = vpop.f32.mrf.mxu0
  %v2370 = vadd.f32 %v2081, %v2369
  %v2371 = vpop.f32.mrf.mxu0
  %2372 = vmatprep.mubr.bf16.mxu0 %v1264
  %2373 = vmatmul.mubr.bf16.gmra.mxu0 %v1263
  %v2374 = vpop.f32.mrf.mxu0
  %v2375 = vadd.f32 %v2086, %v2374
  %v2376 = vpop.f32.mrf.mxu0
  %v2377 = vpop.f32.mrf.mxu0
  %v2378 = vadd.f32 %v2089, %v2377
  %v2379 = vpop.f32.mrf.mxu0
  %2380 = vmatprep.mubr.bf16.mxu0 %v1271
  %2381 = vmatmul.mubr.bf16.gmra.mxu0 %v1270
  %v2382 = vpop.f32.mrf.mxu0
  %v2383 = vadd.f32 %v2094, %v2382
  %v2384 = vpop.f32.mrf.mxu0
  %v2385 = vpop.f32.mrf.mxu0
  %v2386 = vadd.f32 %v2097, %v2385
  %v2387 = vpop.f32.mrf.mxu0
  %2388 = vmatprep.mubr.bf16.mxu0 %v1278
  %2389 = vmatmul.mubr.bf16.gmra.mxu0 %v1277
  %v2390 = vpop.f32.mrf.mxu0
  %v2391 = vadd.f32 %v2102, %v2390
  %v2392 = vpop.f32.mrf.mxu0
  %v2393 = vpop.f32.mrf.mxu0
  %v2394 = vadd.f32 %v2105, %v2393
  %v2395 = vpop.f32.mrf.mxu0
  %2396 = vmatprep.mubr.bf16.mxu0 %v1285
  %2397 = vmatmul.mubr.bf16.gmra.mxu0 %v1284
  %v2398 = vpop.f32.mrf.mxu0
  %v2399 = vadd.f32 %v2110, %v2398
  %v2400 = vpop.f32.mrf.mxu0
  %v2401 = vpop.f32.mrf.mxu0
  %v2402 = vadd.f32 %v2113, %v2401
  %v2403 = vpop.f32.mrf.mxu0
  %2404 = vmatprep.mubr.bf16.mxu0 %v1292
  %2405 = vmatmul.mubr.bf16.gmra.mxu0 %v1291
  %v2406 = vpop.f32.mrf.mxu0
  %v2407 = vadd.f32 %v2118, %v2406
  %v2408 = vpop.f32.mrf.mxu0
  %v2409 = vpop.f32.mrf.mxu0
  %v2410 = vadd.f32 %v2121, %v2409
  %v2411 = vpop.f32.mrf.mxu0
  %2412 = vmatprep.mubr.bf16.mxu0 %v1299
  %2413 = vmatmul.mubr.bf16.gmra.mxu0 %v1298
  %v2414 = vpop.f32.mrf.mxu0
  %v2415 = vadd.f32 %v2126, %v2414
  %v2416 = vpop.f32.mrf.mxu0
  %v2417 = vpop.f32.mrf.mxu0
  %v2418 = vadd.f32 %v2129, %v2417
  %v2419 = vpop.f32.mrf.mxu0
  %2420 = vmatprep.mubr.bf16.mxu0 %v1306
  %2421 = vmatmul.mubr.bf16.gmra.mxu0 %v1305
  %v2422 = vpop.f32.mrf.mxu0
  %v2423 = vadd.f32 %v2134, %v2422
  %v2424 = vpop.f32.mrf.mxu0
  %v2425 = vpop.f32.mrf.mxu0
  %v2426 = vadd.f32 %v2137, %v2425
  %v2427 = vpop.f32.mrf.mxu0
  %2428 = vmatprep.mubr.bf16.mxu0 %v1313
  %2429 = vmatmul.mubr.bf16.gmra.mxu0 %v1312
  %v2430 = vpop.f32.mrf.mxu0
  %v2431 = vadd.f32 %v2142, %v2430
  %v2432 = vpop.f32.mrf.mxu0
  %v2433 = vpop.f32.mrf.mxu0
  %v2434 = vadd.f32 %v2145, %v2433
  %v2435 = vpop.f32.mrf.mxu0
  %2436 = vmatprep.mubr.bf16.mxu0 %v1320
  %2437 = vmatmul.mubr.bf16.gmra.mxu0 %v1319
  %v2438 = vpop.f32.mrf.mxu0
  %v2439 = vadd.f32 %v2150, %v2438
  %v2440 = vpop.f32.mrf.mxu0
  %v2441 = vpop.f32.mrf.mxu0
  %v2442 = vadd.f32 %v2153, %v2441
  %v2443 = vpop.f32.mrf.mxu0
  %2444 = vmatprep.mubr.bf16.mxu0 %v1327
  %2445 = vmatmul.mubr.bf16.gmra.mxu0 %v1326
  %v2446 = vpop.f32.mrf.mxu0
  %v2447 = vadd.f32 %v2158, %v2446
  %v2448 = vpop.f32.mrf.mxu0
  %v2449 = vpop.f32.mrf.mxu0
  %v2450 = vadd.f32 %v2161, %v2449
  %v2451 = vpop.f32.mrf.mxu0
  %2452 = vmatprep.mubr.bf16.mxu0 %v1334
  %2453 = vmatmul.mubr.bf16.gmra.mxu0 %v1333
  %v2454 = vpop.f32.mrf.mxu0
  %v2455 = vadd.f32 %v2166, %v2454
  %v2456 = vpop.f32.mrf.mxu0
  %v2457 = vpop.f32.mrf.mxu0
  %v2458 = vadd.f32 %v2169, %v2457
  %v2459 = vpop.f32.mrf.mxu0
  %2460 = vmatprep.mubr.bf16.mxu0 %v1341
  %2461 = vmatmul.mubr.bf16.gmra.mxu0 %v1340
  %v2462 = vpop.f32.mrf.mxu0
  %v2463 = vadd.f32 %v2174, %v2462
  %v2464 = vpop.f32.mrf.mxu0
  %v2465 = vpop.f32.mrf.mxu0
  %v2466 = vadd.f32 %v2177, %v2465
  %v2467 = vpop.f32.mrf.mxu0
  %2468 = vmatprep.mubr.bf16.mxu0 %v1348
  %2469 = vmatmul.mubr.bf16.gmra.mxu0 %v1347
  %v2470 = vpop.f32.mrf.mxu0
  %v2471 = vadd.f32 %v2182, %v2470
  %v2472 = vpop.f32.mrf.mxu0
  %v2473 = vpop.f32.mrf.mxu0
  %v2474 = vadd.f32 %v2185, %v2473
  %v2475 = vpop.f32.mrf.mxu0
  %2476 = vmatprep.mubr.bf16.mxu0 %v1355
  %2477 = vmatmul.mubr.bf16.gmra.mxu0 %v1354
  %v2478 = vpop.f32.mrf.mxu0
  %v2479 = vadd.f32 %v2190, %v2478
  %v2480 = vpop.f32.mrf.mxu0
  %v2481 = vpop.f32.mrf.mxu0
  %v2482 = vadd.f32 %v2193, %v2481
  %v2483 = vpop.f32.mrf.mxu0
  %2484 = vmatprep.mubr.bf16.mxu0 %v1362
  %2485 = vmatmul.mubr.bf16.gmra.mxu0 %v1361
  %v2486 = vpop.f32.mrf.mxu0
  %v2487 = vadd.f32 %v2198, %v2486
  %v2488 = vpop.f32.mrf.mxu0
  %v2489 = vpop.f32.mrf.mxu0
  %v2490 = vadd.f32 %v2201, %v2489
  %v2491 = vpop.f32.mrf.mxu0
  %2492 = vmatprep.mubr.bf16.mxu0 %v1369
  %2493 = vmatmul.mubr.bf16.gmra.mxu0 %v1368
  %v2494 = vpop.f32.mrf.mxu0
  %v2495 = vadd.f32 %v2206, %v2494
  %v2496 = vpop.f32.mrf.mxu0
  %v2497 = vpop.f32.mrf.mxu0
  %v2498 = vadd.f32 %v2209, %v2497
  %v2499 = vpop.f32.mrf.mxu0
  %2500 = vmatprep.mubr.bf16.mxu0 %v1376
  %2501 = vmatmul.mubr.bf16.gmra.mxu0 %v1375
  %v2502 = vpop.f32.mrf.mxu0
  %v2503 = vadd.f32 %v2214, %v2502
  %v2504 = vpop.f32.mrf.mxu0
  %v2505 = vpop.f32.mrf.mxu0
  %v2506 = vadd.f32 %v2217, %v2505
  %v2507 = vpop.f32.mrf.mxu0
  %2508 = vmatprep.mubr.bf16.mxu0 %v1383
  %2509 = vmatmul.mubr.bf16.gmra.mxu0 %v1382
  %v2510 = vpop.f32.mrf.mxu0
  %v2511 = vadd.f32 %v2222, %v2510
  %v2512 = vpop.f32.mrf.mxu0
  %v2513 = vpop.f32.mrf.mxu0
  %v2514 = vadd.f32 %v2225, %v2513
  %v2515 = vpop.f32.mrf.mxu0
  %2516 = vmatprep.mubr.bf16.mxu0 %v1390
  %2517 = vmatmul.mubr.bf16.gmra.mxu0 %v1389
  %v2518 = vpop.f32.mrf.mxu0
  %v2519 = vadd.f32 %v2230, %v2518
  %v2520 = vpop.f32.mrf.mxu0
  %v2521 = vpop.f32.mrf.mxu0
  %v2522 = vadd.f32 %v2233, %v2521
  %v2523 = vpop.f32.mrf.mxu0
  %2524 = vmatprep.mubr.bf16.mxu0 %v1397
  %2525 = vmatmul.mubr.bf16.gmra.mxu0 %v1396
  %v2526 = vpop.f32.mrf.mxu0
  %v2527 = vadd.f32 %v2238, %v2526
  %v2528 = vpop.f32.mrf.mxu0
  %v2529 = vpop.f32.mrf.mxu0
  %v2530 = vadd.f32 %v2241, %v2529
  %v2531 = vpop.f32.mrf.mxu0
  %2532 = vmatprep.mubr.bf16.mxu0 %v1404
  %2533 = vmatmul.mubr.bf16.gmra.mxu0 %v1403
  %v2534 = vpop.f32.mrf.mxu0
  %v2535 = vadd.f32 %v2246, %v2534
  %v2536 = vpop.f32.mrf.mxu0
  %v2537 = vpop.f32.mrf.mxu0
  %v2538 = vadd.f32 %v2249, %v2537
  %v2539 = vpop.f32.mrf.mxu0
  %2540 = vmatprep.mubr.bf16.mxu0 %v1411
  %2541 = vmatmul.mubr.bf16.gmra.mxu0 %v1410
  %v2542 = vpop.f32.mrf.mxu0
  %v2543 = vadd.f32 %v2254, %v2542
  %v2544 = vpop.f32.mrf.mxu0
  %v2545 = vpop.f32.mrf.mxu0
  %v2546 = vadd.f32 %v2257, %v2545
  %v2547 = vpop.f32.mrf.mxu0
  %2548 = vmatprep.mubr.bf16.mxu0 %v1418
  %2549 = vmatmul.mubr.bf16.gmra.mxu0 %v1417
  %v2550 = vpop.f32.mrf.mxu0
  %v2551 = vadd.f32 %v2262, %v2550
  %v2552 = vpop.f32.mrf.mxu0
  %v2553 = vpop.f32.mrf.mxu0
  %v2554 = vadd.f32 %v2265, %v2553
  %v2555 = vpop.f32.mrf.mxu0
  %2556 = vmatprep.mubr.bf16.mxu0 %v1425
  %2557 = vmatmul.mubr.bf16.gmra.mxu0 %v1424
  %v2558 = vpop.f32.mrf.mxu0
  %v2559 = vadd.f32 %v2270, %v2558
  %v2560 = vpop.f32.mrf.mxu0
  %v2561 = vpop.f32.mrf.mxu0
  %v2562 = vadd.f32 %v2273, %v2561
  %v2563 = vpop.f32.mrf.mxu0
  %2564 = vmatprep.mubr.bf16.mxu0 %v1432
  %2565 = vmatmul.mubr.bf16.gmra.mxu0 %v1431
  %v2566 = vpop.f32.mrf.mxu0
  %v2567 = vadd.f32 %v2278, %v2566
  %v2568 = vpop.f32.mrf.mxu0
  %v2569 = vpop.f32.mrf.mxu0
  %v2570 = vadd.f32 %v2281, %v2569
  %v2571 = vpop.f32.mrf.mxu0
  %2572 = vmatprep.mubr.bf16.mxu0 %v1439
  %2573 = vmatmul.mubr.bf16.gmra.mxu0 %v1438
  %v2574 = vpop.f32.mrf.mxu0
  %v2575 = vadd.f32 %v2286, %v2574
  %v2576 = vpop.f32.mrf.mxu0
  %v2577 = vpop.f32.mrf.mxu0
  %v2578 = vadd.f32 %v2289, %v2577
  %v2579 = vpop.f32.mrf.mxu0
  %2580 = vdwg.mxu0
  %2581 = vmatprep.subr.bf16.mxu0 0
  %2582 = vmatpush1.bf16.msra.mxu0 %v1930
  %2583 = vmatprep.subr.bf16.mxu0 0
  %2584 = vmatpush1.bf16.msra.mxu0 %v1929
  %2585 = vmatprep.subr.bf16.mxu0 0
  %2586 = vmatpush1.bf16.msra.mxu0 %v1928
  %2587 = vmatprep.subr.bf16.mxu0 0
  %2588 = vmatpush1.bf16.msra.mxu0 %v1927
  %2589 = vmatprep.subr.bf16.mxu0 0
  %2590 = vmatpush1.bf16.msra.mxu0 %v1926
  %2591 = vmatprep.subr.bf16.mxu0 0
  %2592 = vmatpush1.bf16.msra.mxu0 %v1925
  %2593 = vmatprep.subr.bf16.mxu0 0
  %2594 = vmatpush1.bf16.msra.mxu0 %v1924
  %2595 = vmatprep.subr.bf16.mxu0 0
  %2596 = vmatpush1.bf16.msra.mxu0 %v1923
  %2597 = vmatprep.subr.bf16.mxu0 0
  %2598 = vmatpush2.bf16.msra.mxu0 %v1938
  %2599 = vmatprep.subr.bf16.mxu0 0
  %2600 = vmatpush2.bf16.msra.mxu0 %v1937
  %2601 = vmatprep.subr.bf16.mxu0 0
  %2602 = vmatpush2.bf16.msra.mxu0 %v1936
  %2603 = vmatprep.subr.bf16.mxu0 0
  %2604 = vmatpush2.bf16.msra.mxu0 %v1935
  %2605 = vmatprep.subr.bf16.mxu0 0
  %2606 = vmatpush2.bf16.msra.mxu0 %v1934
  %2607 = vmatprep.subr.bf16.mxu0 0
  %2608 = vmatpush2.bf16.msra.mxu0 %v1933
  %2609 = vmatprep.subr.bf16.mxu0 0
  %2610 = vmatpush2.bf16.msra.mxu0 %v1932
  %2611 = vmatprep.subr.bf16.mxu0 0
  %2612 = vmatpush2.bf16.msra.mxu0 %v1931
  %2613 = vmatprep.mubr.bf16.mxu0 %v1224
  %2614 = vmatmul.mubr.bf16.gmra.mxu0 %v1223
  %v2615 = vpop.f32.mrf.mxu0
  %v2616 = vadd.f32 %v2327, %v2615
  %v2617 = vpop.f32.mrf.mxu0
  %v2618 = vpop.f32.mrf.mxu0
  %v2619 = vadd.f32 %v2330, %v2618
  %v2620 = vpop.f32.mrf.mxu0
  %2621 = vmatprep.mubr.bf16.mxu0 %v1231
  %2622 = vmatmul.mubr.bf16.gmra.mxu0 %v1230
  %v2623 = vpop.f32.mrf.mxu0
  %v2624 = vadd.f32 %v2335, %v2623
  %v2625 = vpop.f32.mrf.mxu0
  %v2626 = vpop.f32.mrf.mxu0
  %v2627 = vadd.f32 %v2338, %v2626
  %v2628 = vpop.f32.mrf.mxu0
  %2629 = vmatprep.mubr.bf16.mxu0 %v1238
  %2630 = vmatmul.mubr.bf16.gmra.mxu0 %v1237
  %v2631 = vpop.f32.mrf.mxu0
  %v2632 = vadd.f32 %v2343, %v2631
  %v2633 = vpop.f32.mrf.mxu0
  %v2634 = vpop.f32.mrf.mxu0
  %v2635 = vadd.f32 %v2346, %v2634
  %v2636 = vpop.f32.mrf.mxu0
  %2637 = vmatprep.mubr.bf16.mxu0 %v1245
  %2638 = vmatmul.mubr.bf16.gmra.mxu0 %v1244
  %v2639 = vpop.f32.mrf.mxu0
  %v2640 = vadd.f32 %v2351, %v2639
  %v2641 = vpop.f32.mrf.mxu0
  %v2642 = vpop.f32.mrf.mxu0
  %v2643 = vadd.f32 %v2354, %v2642
  %v2644 = vpop.f32.mrf.mxu0
  %2645 = vmatprep.mubr.bf16.mxu0 %v1252
  %2646 = vmatmul.mubr.bf16.gmra.mxu0 %v1251
  %v2647 = vpop.f32.mrf.mxu0
  %v2648 = vadd.f32 %v2359, %v2647
  %v2649 = vpop.f32.mrf.mxu0
  %v2650 = vpop.f32.mrf.mxu0
  %v2651 = vadd.f32 %v2362, %v2650
  %v2652 = vpop.f32.mrf.mxu0
  %2653 = vmatprep.mubr.bf16.mxu0 %v1259
  %2654 = vmatmul.mubr.bf16.gmra.mxu0 %v1258
  %v2655 = vpop.f32.mrf.mxu0
  %v2656 = vadd.f32 %v2367, %v2655
  %v2657 = vpop.f32.mrf.mxu0
  %v2658 = vpop.f32.mrf.mxu0
  %v2659 = vadd.f32 %v2370, %v2658
  %v2660 = vpop.f32.mrf.mxu0
  %2661 = vmatprep.mubr.bf16.mxu0 %v1266
  %2662 = vmatmul.mubr.bf16.gmra.mxu0 %v1265
  %v2663 = vpop.f32.mrf.mxu0
  %v2664 = vadd.f32 %v2375, %v2663
  %v2665 = vpop.f32.mrf.mxu0
  %v2666 = vpop.f32.mrf.mxu0
  %v2667 = vadd.f32 %v2378, %v2666
  %v2668 = vpop.f32.mrf.mxu0
  %2669 = vmatprep.mubr.bf16.mxu0 %v1273
  %2670 = vmatmul.mubr.bf16.gmra.mxu0 %v1272
  %v2671 = vpop.f32.mrf.mxu0
  %v2672 = vadd.f32 %v2383, %v2671
  %v2673 = vpop.f32.mrf.mxu0
  %v2674 = vpop.f32.mrf.mxu0
  %v2675 = vadd.f32 %v2386, %v2674
  %v2676 = vpop.f32.mrf.mxu0
  %2677 = vmatprep.mubr.bf16.mxu0 %v1280
  %2678 = vmatmul.mubr.bf16.gmra.mxu0 %v1279
  %v2679 = vpop.f32.mrf.mxu0
  %v2680 = vadd.f32 %v2391, %v2679
  %v2681 = vpop.f32.mrf.mxu0
  %v2682 = vpop.f32.mrf.mxu0
  %v2683 = vadd.f32 %v2394, %v2682
  %v2684 = vpop.f32.mrf.mxu0
  %2685 = vmatprep.mubr.bf16.mxu0 %v1287
  %2686 = vmatmul.mubr.bf16.gmra.mxu0 %v1286
  %v2687 = vpop.f32.mrf.mxu0
  %v2688 = vadd.f32 %v2399, %v2687
  %v2689 = vpop.f32.mrf.mxu0
  %v2690 = vpop.f32.mrf.mxu0
  %v2691 = vadd.f32 %v2402, %v2690
  %v2692 = vpop.f32.mrf.mxu0
  %2693 = vmatprep.mubr.bf16.mxu0 %v1294
  %2694 = vmatmul.mubr.bf16.gmra.mxu0 %v1293
  %v2695 = vpop.f32.mrf.mxu0
  %v2696 = vadd.f32 %v2407, %v2695
  %v2697 = vpop.f32.mrf.mxu0
  %v2698 = vpop.f32.mrf.mxu0
  %v2699 = vadd.f32 %v2410, %v2698
  %v2700 = vpop.f32.mrf.mxu0
  %2701 = vmatprep.mubr.bf16.mxu0 %v1301
  %2702 = vmatmul.mubr.bf16.gmra.mxu0 %v1300
  %v2703 = vpop.f32.mrf.mxu0
  %v2704 = vadd.f32 %v2415, %v2703
  %v2705 = vpop.f32.mrf.mxu0
  %v2706 = vpop.f32.mrf.mxu0
  %v2707 = vadd.f32 %v2418, %v2706
  %v2708 = vpop.f32.mrf.mxu0
  %2709 = vmatprep.mubr.bf16.mxu0 %v1308
  %2710 = vmatmul.mubr.bf16.gmra.mxu0 %v1307
  %v2711 = vpop.f32.mrf.mxu0
  %v2712 = vadd.f32 %v2423, %v2711
  %v2713 = vpop.f32.mrf.mxu0
  %v2714 = vpop.f32.mrf.mxu0
  %v2715 = vadd.f32 %v2426, %v2714
  %v2716 = vpop.f32.mrf.mxu0
  %2717 = vmatprep.mubr.bf16.mxu0 %v1315
  %2718 = vmatmul.mubr.bf16.gmra.mxu0 %v1314
  %v2719 = vpop.f32.mrf.mxu0
  %v2720 = vadd.f32 %v2431, %v2719
  %v2721 = vpop.f32.mrf.mxu0
  %v2722 = vpop.f32.mrf.mxu0
  %v2723 = vadd.f32 %v2434, %v2722
  %v2724 = vpop.f32.mrf.mxu0
  %2725 = vmatprep.mubr.bf16.mxu0 %v1322
  %2726 = vmatmul.mubr.bf16.gmra.mxu0 %v1321
  %v2727 = vpop.f32.mrf.mxu0
  %v2728 = vadd.f32 %v2439, %v2727
  %v2729 = vpop.f32.mrf.mxu0
  %v2730 = vpop.f32.mrf.mxu0
  %v2731 = vadd.f32 %v2442, %v2730
  %v2732 = vpop.f32.mrf.mxu0
  %2733 = vmatprep.mubr.bf16.mxu0 %v1329
  %2734 = vmatmul.mubr.bf16.gmra.mxu0 %v1328
  %v2735 = vpop.f32.mrf.mxu0
  %v2736 = vadd.f32 %v2447, %v2735
  %v2737 = vpop.f32.mrf.mxu0
  %v2738 = vpop.f32.mrf.mxu0
  %v2739 = vadd.f32 %v2450, %v2738
  %v2740 = vpop.f32.mrf.mxu0
  %2741 = vmatprep.mubr.bf16.mxu0 %v1336
  %2742 = vmatmul.mubr.bf16.gmra.mxu0 %v1335
  %v2743 = vpop.f32.mrf.mxu0
  %v2744 = vadd.f32 %v2455, %v2743
  %v2745 = vpop.f32.mrf.mxu0
  %v2746 = vpop.f32.mrf.mxu0
  %v2747 = vadd.f32 %v2458, %v2746
  %v2748 = vpop.f32.mrf.mxu0
  %2749 = vmatprep.mubr.bf16.mxu0 %v1343
  %2750 = vmatmul.mubr.bf16.gmra.mxu0 %v1342
  %v2751 = vpop.f32.mrf.mxu0
  %v2752 = vadd.f32 %v2463, %v2751
  %v2753 = vpop.f32.mrf.mxu0
  %v2754 = vpop.f32.mrf.mxu0
  %v2755 = vadd.f32 %v2466, %v2754
  %v2756 = vpop.f32.mrf.mxu0
  %2757 = vmatprep.mubr.bf16.mxu0 %v1350
  %2758 = vmatmul.mubr.bf16.gmra.mxu0 %v1349
  %v2759 = vpop.f32.mrf.mxu0
  %v2760 = vadd.f32 %v2471, %v2759
  %v2761 = vpop.f32.mrf.mxu0
  %v2762 = vpop.f32.mrf.mxu0
  %v2763 = vadd.f32 %v2474, %v2762
  %v2764 = vpop.f32.mrf.mxu0
  %2765 = vmatprep.mubr.bf16.mxu0 %v1357
  %2766 = vmatmul.mubr.bf16.gmra.mxu0 %v1356
  %v2767 = vpop.f32.mrf.mxu0
  %v2768 = vadd.f32 %v2479, %v2767
  %v2769 = vpop.f32.mrf.mxu0
  %v2770 = vpop.f32.mrf.mxu0
  %v2771 = vadd.f32 %v2482, %v2770
  %v2772 = vpop.f32.mrf.mxu0
  %2773 = vmatprep.mubr.bf16.mxu0 %v1364
  %2774 = vmatmul.mubr.bf16.gmra.mxu0 %v1363
  %v2775 = vpop.f32.mrf.mxu0
  %v2776 = vadd.f32 %v2487, %v2775
  %v2777 = vpop.f32.mrf.mxu0
  %v2778 = vpop.f32.mrf.mxu0
  %v2779 = vadd.f32 %v2490, %v2778
  %v2780 = vpop.f32.mrf.mxu0
  %2781 = vmatprep.mubr.bf16.mxu0 %v1371
  %2782 = vmatmul.mubr.bf16.gmra.mxu0 %v1370
  %v2783 = vpop.f32.mrf.mxu0
  %v2784 = vadd.f32 %v2495, %v2783
  %v2785 = vpop.f32.mrf.mxu0
  %v2786 = vpop.f32.mrf.mxu0
  %v2787 = vadd.f32 %v2498, %v2786
  %v2788 = vpop.f32.mrf.mxu0
  %2789 = vmatprep.mubr.bf16.mxu0 %v1378
  %2790 = vmatmul.mubr.bf16.gmra.mxu0 %v1377
  %v2791 = vpop.f32.mrf.mxu0
  %v2792 = vadd.f32 %v2503, %v2791
  %v2793 = vpop.f32.mrf.mxu0
  %v2794 = vpop.f32.mrf.mxu0
  %v2795 = vadd.f32 %v2506, %v2794
  %v2796 = vpop.f32.mrf.mxu0
  %2797 = vmatprep.mubr.bf16.mxu0 %v1385
  %2798 = vmatmul.mubr.bf16.gmra.mxu0 %v1384
  %v2799 = vpop.f32.mrf.mxu0
  %v2800 = vadd.f32 %v2511, %v2799
  %v2801 = vpop.f32.mrf.mxu0
  %v2802 = vpop.f32.mrf.mxu0
  %v2803 = vadd.f32 %v2514, %v2802
  %v2804 = vpop.f32.mrf.mxu0
  %2805 = vmatprep.mubr.bf16.mxu0 %v1392
  %2806 = vmatmul.mubr.bf16.gmra.mxu0 %v1391
  %v2807 = vpop.f32.mrf.mxu0
  %v2808 = vadd.f32 %v2519, %v2807
  %v2809 = vpop.f32.mrf.mxu0
  %v2810 = vpop.f32.mrf.mxu0
  %v2811 = vadd.f32 %v2522, %v2810
  %v2812 = vpop.f32.mrf.mxu0
  %2813 = vmatprep.mubr.bf16.mxu0 %v1399
  %2814 = vmatmul.mubr.bf16.gmra.mxu0 %v1398
  %v2815 = vpop.f32.mrf.mxu0
  %v2816 = vadd.f32 %v2527, %v2815
  %v2817 = vpop.f32.mrf.mxu0
  %v2818 = vpop.f32.mrf.mxu0
  %v2819 = vadd.f32 %v2530, %v2818
  %v2820 = vpop.f32.mrf.mxu0
  %2821 = vmatprep.mubr.bf16.mxu0 %v1406
  %2822 = vmatmul.mubr.bf16.gmra.mxu0 %v1405
  %v2823 = vpop.f32.mrf.mxu0
  %v2824 = vadd.f32 %v2535, %v2823
  %v2825 = vpop.f32.mrf.mxu0
  %v2826 = vpop.f32.mrf.mxu0
  %v2827 = vadd.f32 %v2538, %v2826
  %v2828 = vpop.f32.mrf.mxu0
  %2829 = vmatprep.mubr.bf16.mxu0 %v1413
  %2830 = vmatmul.mubr.bf16.gmra.mxu0 %v1412
  %v2831 = vpop.f32.mrf.mxu0
  %v2832 = vadd.f32 %v2543, %v2831
  %v2833 = vpop.f32.mrf.mxu0
  %v2834 = vpop.f32.mrf.mxu0
  %v2835 = vadd.f32 %v2546, %v2834
  %v2836 = vpop.f32.mrf.mxu0
  %2837 = vmatprep.mubr.bf16.mxu0 %v1420
  %2838 = vmatmul.mubr.bf16.gmra.mxu0 %v1419
  %v2839 = vpop.f32.mrf.mxu0
  %v2840 = vadd.f32 %v2551, %v2839
  %v2841 = vpop.f32.mrf.mxu0
  %v2842 = vpop.f32.mrf.mxu0
  %v2843 = vadd.f32 %v2554, %v2842
  %v2844 = vpop.f32.mrf.mxu0
  %2845 = vmatprep.mubr.bf16.mxu0 %v1427
  %2846 = vmatmul.mubr.bf16.gmra.mxu0 %v1426
  %v2847 = vpop.f32.mrf.mxu0
  %v2848 = vadd.f32 %v2559, %v2847
  %v2849 = vpop.f32.mrf.mxu0
  %v2850 = vpop.f32.mrf.mxu0
  %v2851 = vadd.f32 %v2562, %v2850
  %v2852 = vpop.f32.mrf.mxu0
  %2853 = vmatprep.mubr.bf16.mxu0 %v1434
  %2854 = vmatmul.mubr.bf16.gmra.mxu0 %v1433
  %v2855 = vpop.f32.mrf.mxu0
  %v2856 = vadd.f32 %v2567, %v2855
  %v2857 = vpop.f32.mrf.mxu0
  %v2858 = vpop.f32.mrf.mxu0
  %v2859 = vadd.f32 %v2570, %v2858
  %v2860 = vpop.f32.mrf.mxu0
  %2861 = vmatprep.mubr.bf16.mxu0 %v1441
  %2862 = vmatmul.mubr.bf16.gmra.mxu0 %v1440
  %v2863 = vpop.f32.mrf.mxu0
  %v2864 = vadd.f32 %v2575, %v2863
  %v2865 = vpop.f32.mrf.mxu0
  %v2866 = vpop.f32.mrf.mxu0
  %v2867 = vadd.f32 %v2578, %v2866
  %v2868 = vpop.f32.mrf.mxu0
  %2869 = vdwg.mxu0
  %2870 = vmatprep.subr.bf16.mxu0 0
  %2871 = vmatpush1.bf16.msra.mxu0 %v1946
  %2872 = vmatprep.subr.bf16.mxu0 0
  %2873 = vmatpush1.bf16.msra.mxu0 %v1945
  %2874 = vmatprep.subr.bf16.mxu0 0
  %2875 = vmatpush1.bf16.msra.mxu0 %v1944
  %2876 = vmatprep.subr.bf16.mxu0 0
  %2877 = vmatpush1.bf16.msra.mxu0 %v1943
  %2878 = vmatprep.subr.bf16.mxu0 0
  %2879 = vmatpush1.bf16.msra.mxu0 %v1942
  %2880 = vmatprep.subr.bf16.mxu0 0
  %2881 = vmatpush1.bf16.msra.mxu0 %v1941
  %2882 = vmatprep.subr.bf16.mxu0 0
  %2883 = vmatpush1.bf16.msra.mxu0 %v1940
  %2884 = vmatprep.subr.bf16.mxu0 0
  %2885 = vmatpush1.bf16.msra.mxu0 %v1939
  %2886 = vmatprep.subr.bf16.mxu0 0
  %2887 = vmatpush2.bf16.msra.mxu0 0
  %2888 = vmatprep.subr.bf16.mxu0 0
  %2889 = vmatpush2.bf16.msra.mxu0 0
  %2890 = vmatprep.subr.bf16.mxu0 0
  %2891 = vmatpush2.bf16.msra.mxu0 0
  %2892 = vmatprep.subr.bf16.mxu0 0
  %2893 = vmatpush2.bf16.msra.mxu0 0
  %2894 = vmatprep.subr.bf16.mxu0 0
  %2895 = vmatpush2.bf16.msra.mxu0 0
  %2896 = vmatprep.subr.bf16.mxu0 0
  %2897 = vmatpush2.bf16.msra.mxu0 0
  %2898 = vmatprep.subr.bf16.mxu0 0
  %2899 = vmatpush2.bf16.msra.mxu0 0
  %2900 = vmatprep.subr.bf16.mxu0 0
  %2901 = vmatpush2.bf16.msra.mxu0 0
  %2902 = vmatprep.mubr.bf16.mxu0 0
  %2903 = vmatmul.mubr.bf16.gmra.mxu0 %v1225
  %v2904 = vpop.f32.mrf.mxu0
  %v2905 = vadd.f32 %v2616, %v2904
  %v2906 = vpop.f32.mrf.mxu0
  %v2907 = vpop.f32.mrf.mxu0
  %v2908 = vadd.f32 %v2619, %v2907
  %v2909 = vpop.f32.mrf.mxu0
  %2910 = vmatprep.mubr.bf16.mxu0 0
  %2911 = vmatmul.mubr.bf16.gmra.mxu0 %v1232
  %v2912 = vpop.f32.mrf.mxu0
  %v2913 = vadd.f32 %v2624, %v2912
  %v2914 = vpop.f32.mrf.mxu0
  %v2915 = vpop.f32.mrf.mxu0
  %v2916 = vadd.f32 %v2627, %v2915
  %v2917 = vpop.f32.mrf.mxu0
  %2918 = vmatprep.mubr.bf16.mxu0 0
  %2919 = vmatmul.mubr.bf16.gmra.mxu0 %v1239
  %v2920 = vpop.f32.mrf.mxu0
  %v2921 = vadd.f32 %v2632, %v2920
  %v2922 = vpop.f32.mrf.mxu0
  %v2923 = vpop.f32.mrf.mxu0
  %v2924 = vadd.f32 %v2635, %v2923
  %v2925 = vpop.f32.mrf.mxu0
  %2926 = vmatprep.mubr.bf16.mxu0 0
  %2927 = vmatmul.mubr.bf16.gmra.mxu0 %v1246
  %v2928 = vpop.f32.mrf.mxu0
  %v2929 = vadd.f32 %v2640, %v2928
  %v2930 = vpop.f32.mrf.mxu0
  %v2931 = vpop.f32.mrf.mxu0
  %v2932 = vadd.f32 %v2643, %v2931
  %v2933 = vpop.f32.mrf.mxu0
  %2934 = vmatprep.mubr.bf16.mxu0 0
  %2935 = vmatmul.mubr.bf16.gmra.mxu0 %v1253
  %v2936 = vpop.f32.mrf.mxu0
  %v2937 = vadd.f32 %v2648, %v2936
  %v2938 = vpop.f32.mrf.mxu0
  %v2939 = vpop.f32.mrf.mxu0
  %v2940 = vadd.f32 %v2651, %v2939
  %v2941 = vpop.f32.mrf.mxu0
  %2942 = vmatprep.mubr.bf16.mxu0 0
  %2943 = vmatmul.mubr.bf16.gmra.mxu0 %v1260
  %v2944 = vpop.f32.mrf.mxu0
  %v2945 = vadd.f32 %v2656, %v2944
  %v2946 = vpop.f32.mrf.mxu0
  %v2947 = vpop.f32.mrf.mxu0
  %v2948 = vadd.f32 %v2659, %v2947
  %v2949 = vpop.f32.mrf.mxu0
  %2950 = vmatprep.mubr.bf16.mxu0 0
  %2951 = vmatmul.mubr.bf16.gmra.mxu0 %v1267
  %v2952 = vpop.f32.mrf.mxu0
  %v2953 = vadd.f32 %v2664, %v2952
  %v2954 = vpop.f32.mrf.mxu0
  %v2955 = vpop.f32.mrf.mxu0
  %v2956 = vadd.f32 %v2667, %v2955
  %v2957 = vpop.f32.mrf.mxu0
  %2958 = vmatprep.mubr.bf16.mxu0 0
  %2959 = vmatmul.mubr.bf16.gmra.mxu0 %v1274
  %v2960 = vpop.f32.mrf.mxu0
  %v2961 = vadd.f32 %v2672, %v2960
  %v2962 = vpop.f32.mrf.mxu0
  %v2963 = vpop.f32.mrf.mxu0
  %v2964 = vadd.f32 %v2675, %v2963
  %v2965 = vpop.f32.mrf.mxu0
  %2966 = vmatprep.mubr.bf16.mxu0 0
  %2967 = vmatmul.mubr.bf16.gmra.mxu0 %v1281
  %v2968 = vpop.f32.mrf.mxu0
  %v2969 = vadd.f32 %v2680, %v2968
  %v2970 = vpop.f32.mrf.mxu0
  %v2971 = vpop.f32.mrf.mxu0
  %v2972 = vadd.f32 %v2683, %v2971
  %v2973 = vpop.f32.mrf.mxu0
  %2974 = vmatprep.mubr.bf16.mxu0 0
  %2975 = vmatmul.mubr.bf16.gmra.mxu0 %v1288
  %v2976 = vpop.f32.mrf.mxu0
  %v2977 = vadd.f32 %v2688, %v2976
  %v2978 = vpop.f32.mrf.mxu0
  %v2979 = vpop.f32.mrf.mxu0
  %v2980 = vadd.f32 %v2691, %v2979
  %v2981 = vpop.f32.mrf.mxu0
  %2982 = vmatprep.mubr.bf16.mxu0 0
  %2983 = vmatmul.mubr.bf16.gmra.mxu0 %v1295
  %v2984 = vpop.f32.mrf.mxu0
  %v2985 = vadd.f32 %v2696, %v2984
  %v2986 = vpop.f32.mrf.mxu0
  %v2987 = vpop.f32.mrf.mxu0
  %v2988 = vadd.f32 %v2699, %v2987
  %v2989 = vpop.f32.mrf.mxu0
  %2990 = vmatprep.mubr.bf16.mxu0 0
  %2991 = vmatmul.mubr.bf16.gmra.mxu0 %v1302
  %v2992 = vpop.f32.mrf.mxu0
  %v2993 = vadd.f32 %v2704, %v2992
  %v2994 = vpop.f32.mrf.mxu0
  %v2995 = vpop.f32.mrf.mxu0
  %v2996 = vadd.f32 %v2707, %v2995
  %v2997 = vpop.f32.mrf.mxu0
  %2998 = vmatprep.mubr.bf16.mxu0 0
  %2999 = vmatmul.mubr.bf16.gmra.mxu0 %v1309
  %v3000 = vpop.f32.mrf.mxu0
  %v3001 = vadd.f32 %v2712, %v3000
  %v3002 = vpop.f32.mrf.mxu0
  %v3003 = vpop.f32.mrf.mxu0
  %v3004 = vadd.f32 %v2715, %v3003
  %v3005 = vpop.f32.mrf.mxu0
  %3006 = vmatprep.mubr.bf16.mxu0 0
  %3007 = vmatmul.mubr.bf16.gmra.mxu0 %v1316
  %v3008 = vpop.f32.mrf.mxu0
  %v3009 = vadd.f32 %v2720, %v3008
  %v3010 = vpop.f32.mrf.mxu0
  %v3011 = vpop.f32.mrf.mxu0
  %v3012 = vadd.f32 %v2723, %v3011
  %v3013 = vpop.f32.mrf.mxu0
  %3014 = vmatprep.mubr.bf16.mxu0 0
  %3015 = vmatmul.mubr.bf16.gmra.mxu0 %v1323
  %v3016 = vpop.f32.mrf.mxu0
  %v3017 = vadd.f32 %v2728, %v3016
  %v3018 = vpop.f32.mrf.mxu0
  %v3019 = vpop.f32.mrf.mxu0
  %v3020 = vadd.f32 %v2731, %v3019
  %v3021 = vpop.f32.mrf.mxu0
  %3022 = vmatprep.mubr.bf16.mxu0 0
  %3023 = vmatmul.mubr.bf16.gmra.mxu0 %v1330
  %v3024 = vpop.f32.mrf.mxu0
  %v3025 = vadd.f32 %v2736, %v3024
  %v3026 = vpop.f32.mrf.mxu0
  %v3027 = vpop.f32.mrf.mxu0
  %v3028 = vadd.f32 %v2739, %v3027
  %v3029 = vpop.f32.mrf.mxu0
  %3030 = vmatprep.mubr.bf16.mxu0 0
  %3031 = vmatmul.mubr.bf16.gmra.mxu0 %v1337
  %v3032 = vpop.f32.mrf.mxu0
  %v3033 = vadd.f32 %v2744, %v3032
  %v3034 = vpop.f32.mrf.mxu0
  %v3035 = vpop.f32.mrf.mxu0
  %v3036 = vadd.f32 %v2747, %v3035
  %v3037 = vpop.f32.mrf.mxu0
  %3038 = vmatprep.mubr.bf16.mxu0 0
  %3039 = vmatmul.mubr.bf16.gmra.mxu0 %v1344
  %v3040 = vpop.f32.mrf.mxu0
  %v3041 = vadd.f32 %v2752, %v3040
  %v3042 = vpop.f32.mrf.mxu0
  %v3043 = vpop.f32.mrf.mxu0
  %v3044 = vadd.f32 %v2755, %v3043
  %v3045 = vpop.f32.mrf.mxu0
  %3046 = vmatprep.mubr.bf16.mxu0 0
  %3047 = vmatmul.mubr.bf16.gmra.mxu0 %v1351
  %v3048 = vpop.f32.mrf.mxu0
  %v3049 = vadd.f32 %v2760, %v3048
  %v3050 = vpop.f32.mrf.mxu0
  %v3051 = vpop.f32.mrf.mxu0
  %v3052 = vadd.f32 %v2763, %v3051
  %v3053 = vpop.f32.mrf.mxu0
  %3054 = vmatprep.mubr.bf16.mxu0 0
  %3055 = vmatmul.mubr.bf16.gmra.mxu0 %v1358
  %v3056 = vpop.f32.mrf.mxu0
  %v3057 = vadd.f32 %v2768, %v3056
  %v3058 = vpop.f32.mrf.mxu0
  %v3059 = vpop.f32.mrf.mxu0
  %v3060 = vadd.f32 %v2771, %v3059
  %v3061 = vpop.f32.mrf.mxu0
  %3062 = vmatprep.mubr.bf16.mxu0 0
  %3063 = vmatmul.mubr.bf16.gmra.mxu0 %v1365
  %v3064 = vpop.f32.mrf.mxu0
  %v3065 = vadd.f32 %v2776, %v3064
  %v3066 = vpop.f32.mrf.mxu0
  %v3067 = vpop.f32.mrf.mxu0
  %v3068 = vadd.f32 %v2779, %v3067
  %v3069 = vpop.f32.mrf.mxu0
  %3070 = vmatprep.mubr.bf16.mxu0 0
  %3071 = vmatmul.mubr.bf16.gmra.mxu0 %v1372
  %v3072 = vpop.f32.mrf.mxu0
  %v3073 = vadd.f32 %v2784, %v3072
  %v3074 = vpop.f32.mrf.mxu0
  %v3075 = vpop.f32.mrf.mxu0
  %v3076 = vadd.f32 %v2787, %v3075
  %v3077 = vpop.f32.mrf.mxu0
  %3078 = vmatprep.mubr.bf16.mxu0 0
  %3079 = vmatmul.mubr.bf16.gmra.mxu0 %v1379
  %v3080 = vpop.f32.mrf.mxu0
  %v3081 = vadd.f32 %v2792, %v3080
  %v3082 = vpop.f32.mrf.mxu0
  %v3083 = vpop.f32.mrf.mxu0
  %v3084 = vadd.f32 %v2795, %v3083
  %v3085 = vpop.f32.mrf.mxu0
  %3086 = vmatprep.mubr.bf16.mxu0 0
  %3087 = vmatmul.mubr.bf16.gmra.mxu0 %v1386
  %v3088 = vpop.f32.mrf.mxu0
  %v3089 = vadd.f32 %v2800, %v3088
  %v3090 = vpop.f32.mrf.mxu0
  %v3091 = vpop.f32.mrf.mxu0
  %v3092 = vadd.f32 %v2803, %v3091
  %v3093 = vpop.f32.mrf.mxu0
  %3094 = vmatprep.mubr.bf16.mxu0 0
  %3095 = vmatmul.mubr.bf16.gmra.mxu0 %v1393
  %v3096 = vpop.f32.mrf.mxu0
  %v3097 = vadd.f32 %v2808, %v3096
  %v3098 = vpop.f32.mrf.mxu0
  %v3099 = vpop.f32.mrf.mxu0
  %v3100 = vadd.f32 %v2811, %v3099
  %v3101 = vpop.f32.mrf.mxu0
  %3102 = vmatprep.mubr.bf16.mxu0 0
  %3103 = vmatmul.mubr.bf16.gmra.mxu0 %v1400
  %v3104 = vpop.f32.mrf.mxu0
  %v3105 = vadd.f32 %v2816, %v3104
  %v3106 = vpop.f32.mrf.mxu0
  %v3107 = vpop.f32.mrf.mxu0
  %v3108 = vadd.f32 %v2819, %v3107
  %v3109 = vpop.f32.mrf.mxu0
  %3110 = vmatprep.mubr.bf16.mxu0 0
  %3111 = vmatmul.mubr.bf16.gmra.mxu0 %v1407
  %v3112 = vpop.f32.mrf.mxu0
  %v3113 = vadd.f32 %v2824, %v3112
  %v3114 = vpop.f32.mrf.mxu0
  %v3115 = vpop.f32.mrf.mxu0
  %v3116 = vadd.f32 %v2827, %v3115
  %v3117 = vpop.f32.mrf.mxu0
  %3118 = vmatprep.mubr.bf16.mxu0 0
  %3119 = vmatmul.mubr.bf16.gmra.mxu0 %v1414
  %v3120 = vpop.f32.mrf.mxu0
  %v3121 = vadd.f32 %v2832, %v3120
  %v3122 = vpop.f32.mrf.mxu0
  %v3123 = vpop.f32.mrf.mxu0
  %v3124 = vadd.f32 %v2835, %v3123
  %v3125 = vpop.f32.mrf.mxu0
  %3126 = vmatprep.mubr.bf16.mxu0 0
  %3127 = vmatmul.mubr.bf16.gmra.mxu0 %v1421
  %v3128 = vpop.f32.mrf.mxu0
  %v3129 = vadd.f32 %v2840, %v3128
  %v3130 = vpop.f32.mrf.mxu0
  %v3131 = vpop.f32.mrf.mxu0
  %v3132 = vadd.f32 %v2843, %v3131
  %v3133 = vpop.f32.mrf.mxu0
  %3134 = vmatprep.mubr.bf16.mxu0 0
  %3135 = vmatmul.mubr.bf16.gmra.mxu0 %v1428
  %v3136 = vpop.f32.mrf.mxu0
  %v3137 = vadd.f32 %v2848, %v3136
  %v3138 = vpop.f32.mrf.mxu0
  %v3139 = vpop.f32.mrf.mxu0
  %v3140 = vadd.f32 %v2851, %v3139
  %v3141 = vpop.f32.mrf.mxu0
  %3142 = vmatprep.mubr.bf16.mxu0 0
  %3143 = vmatmul.mubr.bf16.gmra.mxu0 %v1435
  %v3144 = vpop.f32.mrf.mxu0
  %v3145 = vadd.f32 %v2856, %v3144
  %v3146 = vpop.f32.mrf.mxu0
  %v3147 = vpop.f32.mrf.mxu0
  %v3148 = vadd.f32 %v2859, %v3147
  %v3149 = vpop.f32.mrf.mxu0
  %3150 = vmatprep.mubr.bf16.mxu0 0
  %3151 = vmatmul.mubr.bf16.gmra.mxu0 %v1442
  %v3152 = vpop.f32.mrf.mxu0
  %v3153 = vadd.f32 %v2864, %v3152
  %v3154 = vpop.f32.mrf.mxu0
  %v3155 = vpop.f32.mrf.mxu0
  %v3156 = vadd.f32 %v2867, %v3155
  %v3157 = vpop.f32.mrf.mxu0
  %3158 = vdwg.mxu0
  %v3159 = vadd.f32 %v83, %v2905
  %v3160 = vadd.f32 %v84, %v2908
  %v3161 = vadd.f32 %v85, %v2913
  %v3162 = vadd.f32 %v86, %v2916
  %v3163 = vadd.f32 %v87, %v2921
  %v3164 = vadd.f32 %v88, %v2924
  %v3165 = vadd.f32 %v89, %v2929
  %v3166 = vadd.f32 %v90, %v2932
  %v3167 = vadd.f32 %v91, %v2937
  %v3168 = vadd.f32 %v92, %v2940
  %v3169 = vadd.f32 %v93, %v2945
  %v3170 = vadd.f32 %v94, %v2948
  %v3171 = vadd.f32 %v95, %v2953
  %v3172 = vadd.f32 %v96, %v2956
  %v3173 = vadd.f32 %v97, %v2961
  %v3174 = vadd.f32 %v98, %v2964
  %v3175 = vadd.f32 %v99, %v2969
  %v3176 = vadd.f32 %v100, %v2972
  %v3177 = vadd.f32 %v101, %v2977
  %v3178 = vadd.f32 %v102, %v2980
  %v3179 = vadd.f32 %v103, %v2985
  %v3180 = vadd.f32 %v104, %v2988
  %v3181 = vadd.f32 %v105, %v2993
  %v3182 = vadd.f32 %v106, %v2996
  %v3183 = vadd.f32 %v107, %v3001
  %v3184 = vadd.f32 %v108, %v3004
  %v3185 = vadd.f32 %v109, %v3009
  %v3186 = vadd.f32 %v110, %v3012
  %v3187 = vadd.f32 %v111, %v3017
  %v3188 = vadd.f32 %v112, %v3020
  %v3189 = vadd.f32 %v113, %v3025
  %v3190 = vadd.f32 %v114, %v3028
  %v3191 = vadd.f32 %v115, %v3033
  %v3192 = vadd.f32 %v116, %v3036
  %v3193 = vadd.f32 %v117, %v3041
  %v3194 = vadd.f32 %v118, %v3044
  %v3195 = vadd.f32 %v119, %v3049
  %v3196 = vadd.f32 %v120, %v3052
  %v3197 = vadd.f32 %v121, %v3057
  %v3198 = vadd.f32 %v122, %v3060
  %v3199 = vadd.f32 %v123, %v3065
  %v3200 = vadd.f32 %v124, %v3068
  %v3201 = vadd.f32 %v125, %v3073
  %v3202 = vadd.f32 %v126, %v3076
  %v3203 = vadd.f32 %v127, %v3081
  %v3204 = vadd.f32 %v128, %v3084
  %v3205 = vadd.f32 %v129, %v3089
  %v3206 = vadd.f32 %v130, %v3092
  %v3207 = vadd.f32 %v131, %v3097
  %v3208 = vadd.f32 %v132, %v3100
  %v3209 = vadd.f32 %v133, %v3105
  %v3210 = vadd.f32 %v134, %v3108
  %v3211 = vadd.f32 %v135, %v3113
  %v3212 = vadd.f32 %v136, %v3116
  %v3213 = vadd.f32 %v137, %v3121
  %v3214 = vadd.f32 %v138, %v3124
  %v3215 = vadd.f32 %v139, %v3129
  %v3216 = vadd.f32 %v140, %v3132
  %v3217 = vadd.f32 %v141, %v3137
  %v3218 = vadd.f32 %v142, %v3140
  %v3219 = vadd.f32 %v143, %v3145
  %v3220 = vadd.f32 %v144, %v3148
  %v3221 = vadd.f32 %v145, %v3153
  %v3222 = vadd.f32 %v146, %v3156
  %3223 = vst [vmem:[#allocation2] sm:$0xff] %v3159
  %3224 = vst [vmem:[#allocation2 + $0x8] sm:$0xff] %v3160
  %3225 = vst [vmem:[#allocation2 + $0x10] sm:$0xff] %v3161
  %3226 = vst [vmem:[#allocation2 + $0x18] sm:$0xff] %v3162
  %3227 = vst [vmem:[#allocation2 + $0x20] sm:$0xff] %v3163
  %3228 = vst [vmem:[#allocation2 + $0x28] sm:$0xff] %v3164
  %3229 = vst [vmem:[#allocation2 + $0x30] sm:$0xff] %v3165
  %3230 = vst [vmem:[#allocation2 + $0x38] sm:$0xff] %v3166
  %3231 = vst [vmem:[#allocation2 + $0x40] sm:$0xff] %v3167
  %3232 = vst [vmem:[#allocation2 + $0x48] sm:$0xff] %v3168
  %3233 = vst [vmem:[#allocation2 + $0x50] sm:$0xff] %v3169
  %3234 = vst [vmem:[#allocation2 + $0x58] sm:$0xff] %v3170
  %3235 = vst [vmem:[#allocation2 + $0x60] sm:$0xff] %v3171
  %3236 = vst [vmem:[#allocation2 + $0x68] sm:$0xff] %v3172
  %3237 = vst [vmem:[#allocation2 + $0x70] sm:$0xff] %v3173
  %3238 = vst [vmem:[#allocation2 + $0x78] sm:$0xff] %v3174
  %3239 = vst [vmem:[#allocation2 + $0x80] sm:$0xff] %v3175
  %3240 = vst [vmem:[#allocation2 + $0x88] sm:$0xff] %v3176
  %3241 = vst [vmem:[#allocation2 + $0x90] sm:$0xff] %v3177
  %3242 = vst [vmem:[#allocation2 + $0x98] sm:$0xff] %v3178
  %3243 = vst [vmem:[#allocation2 + $0xa0] sm:$0xff] %v3179
  %3244 = vst [vmem:[#allocation2 + $0xa8] sm:$0xff] %v3180
  %3245 = vst [vmem:[#allocation2 + $0xb0] sm:$0xff] %v3181
  %3246 = vst [vmem:[#allocation2 + $0xb8] sm:$0xff] %v3182
  %3247 = vst [vmem:[#allocation2 + $0xc0] sm:$0xff] %v3183
  %3248 = vst [vmem:[#allocation2 + $0xc8] sm:$0xff] %v3184
  %3249 = vst [vmem:[#allocation2 + $0xd0] sm:$0xff] %v3185
  %3250 = vst [vmem:[#allocation2 + $0xd8] sm:$0xff] %v3186
  %3251 = vst [vmem:[#allocation2 + $0xe0] sm:$0xff] %v3187
  %3252 = vst [vmem:[#allocation2 + $0xe8] sm:$0xff] %v3188
  %3253 = vst [vmem:[#allocation2 + $0xf0] sm:$0xff] %v3189
  %3254 = vst [vmem:[#allocation2 + $0xf8] sm:$0xff] %v3190
  %3255 = vst [vmem:[#allocation2 + $0x100] sm:$0xff] %v3191
  %3256 = vst [vmem:[#allocation2 + $0x108] sm:$0xff] %v3192
  %3257 = vst [vmem:[#allocation2 + $0x110] sm:$0xff] %v3193
  %3258 = vst [vmem:[#allocation2 + $0x118] sm:$0xff] %v3194
  %3259 = vst [vmem:[#allocation2 + $0x120] sm:$0xff] %v3195
  %3260 = vst [vmem:[#allocation2 + $0x128] sm:$0xff] %v3196
  %3261 = vst [vmem:[#allocation2 + $0x130] sm:$0xff] %v3197
  %3262 = vst [vmem:[#allocation2 + $0x138] sm:$0xff] %v3198
  %3263 = vst [vmem:[#allocation2 + $0x140] sm:$0xff] %v3199
  %3264 = vst [vmem:[#allocation2 + $0x148] sm:$0xff] %v3200
  %3265 = vst [vmem:[#allocation2 + $0x150] sm:$0xff] %v3201
  %3266 = vst [vmem:[#allocation2 + $0x158] sm:$0xff] %v3202
  %3267 = vst [vmem:[#allocation2 + $0x160] sm:$0xff] %v3203
  %3268 = vst [vmem:[#allocation2 + $0x168] sm:$0xff] %v3204
  %3269 = vst [vmem:[#allocation2 + $0x170] sm:$0xff] %v3205
  %3270 = vst [vmem:[#allocation2 + $0x178] sm:$0xff] %v3206
  %3271 = vst [vmem:[#allocation2 + $0x180] sm:$0xff] %v3207
  %3272 = vst [vmem:[#allocation2 + $0x188] sm:$0xff] %v3208
  %3273 = vst [vmem:[#allocation2 + $0x190] sm:$0xff] %v3209
  %3274 = vst [vmem:[#allocation2 + $0x198] sm:$0xff] %v3210
  %3275 = vst [vmem:[#allocation2 + $0x1a0] sm:$0xff] %v3211
  %3276 = vst [vmem:[#allocation2 + $0x1a8] sm:$0xff] %v3212
  %3277 = vst [vmem:[#allocation2 + $0x1b0] sm:$0xff] %v3213
  %3278 = vst [vmem:[#allocation2 + $0x1b8] sm:$0xff] %v3214
  %3279 = vst [vmem:[#allocation2 + $0x1c0] sm:$0xff] %v3215
  %3280 = vst [vmem:[#allocation2 + $0x1c8] sm:$0xff] %v3216
  %3281 = vst [vmem:[#allocation2 + $0x1d0] sm:$0xff] %v3217
  %3282 = vst [vmem:[#allocation2 + $0x1d8] sm:$0xff] %v3218
  %3283 = vst [vmem:[#allocation2 + $0x1e0] sm:$0xff] %v3219
  %3284 = vst [vmem:[#allocation2 + $0x1e8] sm:$0xff] %v3220
  %3285 = vst [vmem:[#allocation2 + $0x1f0] sm:$0xff] %v3221
  %3286 = vst [vmem:[#allocation2 + $0x1f8] sm:$0xff] %v3222
  // Predicated region
  $region18: #{generator_forward.73} parent=0 // pred_check
    %p3287 = pneg %p15
  $region19: #{generator_forward.73} parent=0 // pred_check_branch
    %3289 = sbr.rel (%p3287) target = $region21
  $region20: #{generator_forward.73} parent=0 // pred_region
    %v3290 = vld [vmem:[#allocation2] sm:$0xff]
    %v3291 = vld [vmem:[#allocation2 + $0x8] sm:$0xff]
    %v3292 = vld [vmem:[#allocation2 + $0x10] sm:$0xff]
    %v3293 = vld [vmem:[#allocation2 + $0x18] sm:$0xff]
    %v3294 = vld [vmem:[#allocation2 + $0x20] sm:$0xff]
    %v3295 = vld [vmem:[#allocation2 + $0x28] sm:$0xff]
    %v3296 = vld [vmem:[#allocation2 + $0x30] sm:$0xff]
    %v3297 = vld [vmem:[#allocation2 + $0x38] sm:$0xff]
    %v3298 = vld [vmem:[#allocation2 + $0x40] sm:$0xff]
    %v3299 = vld [vmem:[#allocation2 + $0x48] sm:$0xff]
    %v3300 = vld [vmem:[#allocation2 + $0x50] sm:$0xff]
    %v3301 = vld [vmem:[#allocation2 + $0x58] sm:$0xff]
    %v3302 = vld [vmem:[#allocation2 + $0x60] sm:$0xff]
    %v3303 = vld [vmem:[#allocation2 + $0x68] sm:$0xff]
    %v3304 = vld [vmem:[#allocation2 + $0x70] sm:$0xff]
    %v3305 = vld [vmem:[#allocation2 + $0x78] sm:$0xff]
    %v3306 = vld [vmem:[#allocation2 + $0x80] sm:$0xff]
    %v3307 = vld [vmem:[#allocation2 + $0x88] sm:$0xff]
    %v3308 = vld [vmem:[#allocation2 + $0x90] sm:$0xff]
    %v3309 = vld [vmem:[#allocation2 + $0x98] sm:$0xff]
    %v3310 = vld [vmem:[#allocation2 + $0xa0] sm:$0xff]
    %v3311 = vld [vmem:[#allocation2 + $0xa8] sm:$0xff]
    %v3312 = vld [vmem:[#allocation2 + $0xb0] sm:$0xff]
    %v3313 = vld [vmem:[#allocation2 + $0xb8] sm:$0xff]
    %v3314 = vld [vmem:[#allocation2 + $0xc0] sm:$0xff]
    %v3315 = vld [vmem:[#allocation2 + $0xc8] sm:$0xff]
    %v3316 = vld [vmem:[#allocation2 + $0xd0] sm:$0xff]
    %v3317 = vld [vmem:[#allocation2 + $0xd8] sm:$0xff]
    %v3318 = vld [vmem:[#allocation2 + $0xe0] sm:$0xff]
    %v3319 = vld [vmem:[#allocation2 + $0xe8] sm:$0xff]
    %v3320 = vld [vmem:[#allocation2 + $0xf0] sm:$0xff]
    %v3321 = vld [vmem:[#allocation2 + $0xf8] sm:$0xff]
    %v3322 = vld [vmem:[#allocation2 + $0x100] sm:$0xff]
    %v3323 = vld [vmem:[#allocation2 + $0x108] sm:$0xff]
    %v3324 = vld [vmem:[#allocation2 + $0x110] sm:$0xff]
    %v3325 = vld [vmem:[#allocation2 + $0x118] sm:$0xff]
    %v3326 = vld [vmem:[#allocation2 + $0x120] sm:$0xff]
    %v3327 = vld [vmem:[#allocation2 + $0x128] sm:$0xff]
    %v3328 = vld [vmem:[#allocation2 + $0x130] sm:$0xff]
    %v3329 = vld [vmem:[#allocation2 + $0x138] sm:$0xff]
    %v3330 = vld [vmem:[#allocation2 + $0x140] sm:$0xff]
    %v3331 = vld [vmem:[#allocation2 + $0x148] sm:$0xff]
    %v3332 = vld [vmem:[#allocation2 + $0x150] sm:$0xff]
    %v3333 = vld [vmem:[#allocation2 + $0x158] sm:$0xff]
    %v3334 = vld [vmem:[#allocation2 + $0x160] sm:$0xff]
    %v3335 = vld [vmem:[#allocation2 + $0x168] sm:$0xff]
    %v3336 = vld [vmem:[#allocation2 + $0x170] sm:$0xff]
    %v3337 = vld [vmem:[#allocation2 + $0x178] sm:$0xff]
    %v3338 = vld [vmem:[#allocation2 + $0x180] sm:$0xff]
    %v3339 = vld [vmem:[#allocation2 + $0x188] sm:$0xff]
    %v3340 = vld [vmem:[#allocation2 + $0x190] sm:$0xff]
    %v3341 = vld [vmem:[#allocation2 + $0x198] sm:$0xff]
    %v3342 = vld [vmem:[#allocation2 + $0x1a0] sm:$0xff]
    %v3343 = vld [vmem:[#allocation2 + $0x1a8] sm:$0xff]
    %v3344 = vld [vmem:[#allocation2 + $0x1b0] sm:$0xff]
    %v3345 = vld [vmem:[#allocation2 + $0x1b8] sm:$0xff]
    %v3346 = vld [vmem:[#allocation2 + $0x1c0] sm:$0xff]
    %v3347 = vld [vmem:[#allocation2 + $0x1c8] sm:$0xff]
    %v3348 = vld [vmem:[#allocation2 + $0x1d0] sm:$0xff]
    %v3349 = vld [vmem:[#allocation2 + $0x1d8] sm:$0xff]
    %v3350 = vld [vmem:[#allocation2 + $0x1e0] sm:$0xff]
    %v3351 = vld [vmem:[#allocation2 + $0x1e8] sm:$0xff]
    %v3352 = vld [vmem:[#allocation2 + $0x1f0] sm:$0xff]
    %v3353 = vld [vmem:[#allocation2 + $0x1f8] sm:$0xff]
    %v3354 = vld [vmem:[%s2] sm:$0x1]
    %v3356 = vlaneseq
    %v3357 = vshrl.u32 %v3356, 7
    %v3358 = vsub.s32 0, %v3357
    %v3359 = vrot.slane %v3354, %v3358
    %v3361 = vadd.f32 %v3290, %v3359
    %v3362 = vadd.f32 %v3291, %v3359
    %v3363 = vadd.f32 %v3292, %v3359
    %v3364 = vadd.f32 %v3293, %v3359
    %v3365 = vadd.f32 %v3294, %v3359
    %v3366 = vadd.f32 %v3295, %v3359
    %v3367 = vadd.f32 %v3296, %v3359
    %v3368 = vadd.f32 %v3297, %v3359
    %v3369 = vadd.f32 %v3298, %v3359
    %v3370 = vadd.f32 %v3299, %v3359
    %v3371 = vadd.f32 %v3300, %v3359
    %v3372 = vadd.f32 %v3301, %v3359
    %v3373 = vadd.f32 %v3302, %v3359
    %v3374 = vadd.f32 %v3303, %v3359
    %v3375 = vadd.f32 %v3304, %v3359
    %v3376 = vadd.f32 %v3305, %v3359
    %v3377 = vadd.f32 %v3306, %v3359
    %v3378 = vadd.f32 %v3307, %v3359
    %v3379 = vadd.f32 %v3308, %v3359
    %v3380 = vadd.f32 %v3309, %v3359
    %v3381 = vadd.f32 %v3310, %v3359
    %v3382 = vadd.f32 %v3311, %v3359
    %v3383 = vadd.f32 %v3312, %v3359
    %v3384 = vadd.f32 %v3313, %v3359
    %v3385 = vadd.f32 %v3314, %v3359
    %v3386 = vadd.f32 %v3315, %v3359
    %v3387 = vadd.f32 %v3316, %v3359
    %v3388 = vadd.f32 %v3317, %v3359
    %v3389 = vadd.f32 %v3318, %v3359
    %v3390 = vadd.f32 %v3319, %v3359
    %v3391 = vadd.f32 %v3320, %v3359
    %v3392 = vadd.f32 %v3321, %v3359
    %v3393 = vadd.f32 %v3322, %v3359
    %v3394 = vadd.f32 %v3323, %v3359
    %v3395 = vadd.f32 %v3324, %v3359
    %v3396 = vadd.f32 %v3325, %v3359
    %v3397 = vadd.f32 %v3326, %v3359
    %v3398 = vadd.f32 %v3327, %v3359
    %v3399 = vadd.f32 %v3328, %v3359
    %v3400 = vadd.f32 %v3329, %v3359
    %v3401 = vadd.f32 %v3330, %v3359
    %v3402 = vadd.f32 %v3331, %v3359
    %v3403 = vadd.f32 %v3332, %v3359
    %v3404 = vadd.f32 %v3333, %v3359
    %v3405 = vadd.f32 %v3334, %v3359
    %v3406 = vadd.f32 %v3335, %v3359
    %v3407 = vadd.f32 %v3336, %v3359
    %v3408 = vadd.f32 %v3337, %v3359
    %v3409 = vadd.f32 %v3338, %v3359
    %v3410 = vadd.f32 %v3339, %v3359
    %v3411 = vadd.f32 %v3340, %v3359
    %v3412 = vadd.f32 %v3341, %v3359
    %v3413 = vadd.f32 %v3342, %v3359
    %v3414 = vadd.f32 %v3343, %v3359
    %v3415 = vadd.f32 %v3344, %v3359
    %v3416 = vadd.f32 %v3345, %v3359
    %v3417 = vadd.f32 %v3346, %v3359
    %v3418 = vadd.f32 %v3347, %v3359
    %v3419 = vadd.f32 %v3348, %v3359
    %v3420 = vadd.f32 %v3349, %v3359
    %v3421 = vadd.f32 %v3350, %v3359
    %v3422 = vadd.f32 %v3351, %v3359
    %v3423 = vadd.f32 %v3352, %v3359
    %v3424 = vadd.f32 %v3353, %v3359
    %v3425 = vtanh.pop %v3361
    %v3426 = vtanh.pop %v3362
    %v3427 = vtanh.pop %v3363
    %v3428 = vtanh.pop %v3364
    %v3429 = vtanh.pop %v3365
    %v3430 = vtanh.pop %v3366
    %v3431 = vtanh.pop %v3367
    %v3432 = vtanh.pop %v3368
    %v3433 = vtanh.pop %v3369
    %v3434 = vtanh.pop %v3370
    %v3435 = vtanh.pop %v3371
    %v3436 = vtanh.pop %v3372
    %v3437 = vtanh.pop %v3373
    %v3438 = vtanh.pop %v3374
    %v3439 = vtanh.pop %v3375
    %v3440 = vtanh.pop %v3376
    %v3441 = vtanh.pop %v3377
    %v3442 = vtanh.pop %v3378
    %v3443 = vtanh.pop %v3379
    %v3444 = vtanh.pop %v3380
    %v3445 = vtanh.pop %v3381
    %v3446 = vtanh.pop %v3382
    %v3447 = vtanh.pop %v3383
    %v3448 = vtanh.pop %v3384
    %v3449 = vtanh.pop %v3385
    %v3450 = vtanh.pop %v3386
    %v3451 = vtanh.pop %v3387
    %v3452 = vtanh.pop %v3388
    %v3453 = vtanh.pop %v3389
    %v3454 = vtanh.pop %v3390
    %v3455 = vtanh.pop %v3391
    %v3456 = vtanh.pop %v3392
    %v3457 = vtanh.pop %v3393
    %v3458 = vtanh.pop %v3394
    %v3459 = vtanh.pop %v3395
    %v3460 = vtanh.pop %v3396
    %v3461 = vtanh.pop %v3397
    %v3462 = vtanh.pop %v3398
    %v3463 = vtanh.pop %v3399
    %v3464 = vtanh.pop %v3400
    %v3465 = vtanh.pop %v3401
    %v3466 = vtanh.pop %v3402
    %v3467 = vtanh.pop %v3403
    %v3468 = vtanh.pop %v3404
    %v3469 = vtanh.pop %v3405
    %v3470 = vtanh.pop %v3406
    %v3471 = vtanh.pop %v3407
    %v3472 = vtanh.pop %v3408
    %v3473 = vtanh.pop %v3409
    %v3474 = vtanh.pop %v3410
    %v3475 = vtanh.pop %v3411
    %v3476 = vtanh.pop %v3412
    %v3477 = vtanh.pop %v3413
    %v3478 = vtanh.pop %v3414
    %v3479 = vtanh.pop %v3415
    %v3480 = vtanh.pop %v3416
    %v3481 = vtanh.pop %v3417
    %v3482 = vtanh.pop %v3418
    %v3483 = vtanh.pop %v3419
    %v3484 = vtanh.pop %v3420
    %v3485 = vtanh.pop %v3421
    %v3486 = vtanh.pop %v3422
    %v3487 = vtanh.pop %v3423
    %v3488 = vtanh.pop %v3424
    %3489 = vst [vmem:[%s3] sm:$0xff] %v3425
    %3490 = vst [vmem:[%s3 + $0x8] sm:$0xff] %v3426
    %3491 = vst [vmem:[%s3 + $0x10] sm:$0xff] %v3427
    %3492 = vst [vmem:[%s3 + $0x18] sm:$0xff] %v3428
    %3493 = vst [vmem:[%s3 + $0x20] sm:$0xff] %v3429
    %3494 = vst [vmem:[%s3 + $0x28] sm:$0xff] %v3430
    %3495 = vst [vmem:[%s3 + $0x30] sm:$0xff] %v3431
    %3496 = vst [vmem:[%s3 + $0x38] sm:$0xff] %v3432
    %3497 = vst [vmem:[%s3 + $0x40] sm:$0xff] %v3433
    %3498 = vst [vmem:[%s3 + $0x48] sm:$0xff] %v3434
    %3499 = vst [vmem:[%s3 + $0x50] sm:$0xff] %v3435
    %3500 = vst [vmem:[%s3 + $0x58] sm:$0xff] %v3436
    %3501 = vst [vmem:[%s3 + $0x60] sm:$0xff] %v3437
    %3502 = vst [vmem:[%s3 + $0x68] sm:$0xff] %v3438
    %3503 = vst [vmem:[%s3 + $0x70] sm:$0xff] %v3439
    %3504 = vst [vmem:[%s3 + $0x78] sm:$0xff] %v3440
    %3505 = vst [vmem:[%s3 + $0x80] sm:$0xff] %v3441
    %3506 = vst [vmem:[%s3 + $0x88] sm:$0xff] %v3442
    %3507 = vst [vmem:[%s3 + $0x90] sm:$0xff] %v3443
    %3508 = vst [vmem:[%s3 + $0x98] sm:$0xff] %v3444
    %3509 = vst [vmem:[%s3 + $0xa0] sm:$0xff] %v3445
    %3510 = vst [vmem:[%s3 + $0xa8] sm:$0xff] %v3446
    %3511 = vst [vmem:[%s3 + $0xb0] sm:$0xff] %v3447
    %3512 = vst [vmem:[%s3 + $0xb8] sm:$0xff] %v3448
    %3513 = vst [vmem:[%s3 + $0xc0] sm:$0xff] %v3449
    %3514 = vst [vmem:[%s3 + $0xc8] sm:$0xff] %v3450
    %3515 = vst [vmem:[%s3 + $0xd0] sm:$0xff] %v3451
    %3516 = vst [vmem:[%s3 + $0xd8] sm:$0xff] %v3452
    %3517 = vst [vmem:[%s3 + $0xe0] sm:$0xff] %v3453
    %3518 = vst [vmem:[%s3 + $0xe8] sm:$0xff] %v3454
    %3519 = vst [vmem:[%s3 + $0xf0] sm:$0xff] %v3455
    %3520 = vst [vmem:[%s3 + $0xf8] sm:$0xff] %v3456
    %3521 = vst [vmem:[%s3 + $0x100] sm:$0xff] %v3457
    %3522 = vst [vmem:[%s3 + $0x108] sm:$0xff] %v3458
    %3523 = vst [vmem:[%s3 + $0x110] sm:$0xff] %v3459
    %3524 = vst [vmem:[%s3 + $0x118] sm:$0xff] %v3460
    %3525 = vst [vmem:[%s3 + $0x120] sm:$0xff] %v3461
    %3526 = vst [vmem:[%s3 + $0x128] sm:$0xff] %v3462
    %3527 = vst [vmem:[%s3 + $0x130] sm:$0xff] %v3463
    %3528 = vst [vmem:[%s3 + $0x138] sm:$0xff] %v3464
    %3529 = vst [vmem:[%s3 + $0x140] sm:$0xff] %v3465
    %3530 = vst [vmem:[%s3 + $0x148] sm:$0xff] %v3466
    %3531 = vst [vmem:[%s3 + $0x150] sm:$0xff] %v3467
    %3532 = vst [vmem:[%s3 + $0x158] sm:$0xff] %v3468
    %3533 = vst [vmem:[%s3 + $0x160] sm:$0xff] %v3469
    %3534 = vst [vmem:[%s3 + $0x168] sm:$0xff] %v3470
    %3535 = vst [vmem:[%s3 + $0x170] sm:$0xff] %v3471
    %3536 = vst [vmem:[%s3 + $0x178] sm:$0xff] %v3472
    %3537 = vst [vmem:[%s3 + $0x180] sm:$0xff] %v3473
    %3538 = vst [vmem:[%s3 + $0x188] sm:$0xff] %v3474
    %3539 = vst [vmem:[%s3 + $0x190] sm:$0xff] %v3475
    %3540 = vst [vmem:[%s3 + $0x198] sm:$0xff] %v3476
    %3541 = vst [vmem:[%s3 + $0x1a0] sm:$0xff] %v3477
    %3542 = vst [vmem:[%s3 + $0x1a8] sm:$0xff] %v3478
    %3543 = vst [vmem:[%s3 + $0x1b0] sm:$0xff] %v3479
    %3544 = vst [vmem:[%s3 + $0x1b8] sm:$0xff] %v3480
    %3545 = vst [vmem:[%s3 + $0x1c0] sm:$0xff] %v3481
    %3546 = vst [vmem:[%s3 + $0x1c8] sm:$0xff] %v3482
    %3547 = vst [vmem:[%s3 + $0x1d0] sm:$0xff] %v3483
    %3548 = vst [vmem:[%s3 + $0x1d8] sm:$0xff] %v3484
    %3549 = vst [vmem:[%s3 + $0x1e0] sm:$0xff] %v3485
    %3550 = vst [vmem:[%s3 + $0x1e8] sm:$0xff] %v3486
    %3551 = vst [vmem:[%s3 + $0x1f0] sm:$0xff] %v3487
    %3552 = vst [vmem:[%s3 + $0x1f8] sm:$0xff] %v3488
  $region21: #{generator_forward.73} parent=0 // pred_fallthru
    _
  // Predicated region
  $region22: #{generator_forward.73} parent=0 // pred_check
    _
  $region23: #{generator_forward.73} parent=0 // pred_check_branch
    %3554 = sbr.rel (0) target = $region25
  $region24: #{generator_forward.73} parent=0 // pred_region
    _
  $region25: #{generator_forward.73} parent=0 // pred_fallthru
    _
  // Predicated region
  $region26: #{generator_forward.73} parent=0 // pred_check
    _
  $region27: #{generator_forward.73} parent=0 // pred_check_branch
    %3556 = sbr.rel (0) target = $region29
  $region28: #{generator_forward.73} parent=0 // pred_region
    _
  $region29: #{generator_forward.73} parent=0 // pred_fallthru
    _

</llo_original>
